<compile_context>
chip_gen: v7x
topology: tpu7x:2x2x1
jax: 0.10.0
libtpu: 0.0.40
codegen_flags: <defaults>
</compile_context>

<pallas_src>
import functools

import jax
import jax.numpy as jnp
from jax.experimental import pallas as pl
from jax.experimental.pallas import tpu as pltpu

KSIZE = 7
PAD = (KSIZE - 1) // 2  # 3


def _round_up(v, m):
    return (v + m - 1) // m * m


def _spatial_gate_kernel(bn_ref, bands_ref, x_ref, o_ref, pool_scr, scale_scr,
                         *, H, W, Hp_pad):
    # bn_ref    : SMEM f32[2]                       folded eval-BN [scale, bias]
    # bands_ref : VMEM f32[2*7*Wp_pad, W]           banded Toeplitz conv weights (resident)
    # x_ref     : VMEM (C, H*W)                     one image, lane-dense
    # o_ref     : VMEM (C, H*W)
    # pool_scr  : VMEM f32[2*Hp_pad, Wp_pad]        zero-padded pooled maps (max ; mean)
    # scale_scr : VMEM f32[1, H*W]                  flattened sigmoid gate
    C = x_ref.shape[0]
    HW = H * W

    # --- ChannelPool: fused max + mean over C, computed lane-dense.  The f32 view dies
    #     right after the reductions (x_ref is re-read for the final gate multiply). ---
    xf = x_ref[...].astype(jnp.float32)                     # (C, HW)
    max_row = jnp.max(xf, axis=0, keepdims=True)            # (1, HW)
    mean_row = jnp.sum(xf, axis=0, keepdims=True) * (1.0 / C)

    # --- scatter the pooled rows into the aligned, zero-padded scratch (halo stays 0) ---
    pool_scr[...] = jnp.zeros_like(pool_scr)
    for h in range(H):                                      # static unroll: 2 tiny stores/row
        pool_scr[PAD + h:PAD + h + 1, PAD:PAD + W] = max_row[:, h * W:(h + 1) * W]
        pool_scr[Hp_pad + PAD + h:Hp_pad + PAD + h + 1, PAD:PAD + W] = \
            mean_row[:, h * W:(h + 1) * W]

    # --- 7x7 conv, 2->1 channels, no bias: single MXU matmul.
    #     LHS stacks the 14 (cin, kh) row-shifted views along the K axis (128-aligned concat);
    #     RHS is the matching stack of banded (Wp_pad, W) Toeplitz weight matrices. ---
    lhs = jnp.concatenate(
        [pool_scr[cin * Hp_pad + kh: cin * Hp_pad + kh + H, :]
         for cin in range(2) for kh in range(KSIZE)], axis=1)           # (H, 14*Wp_pad)
    acc = jnp.dot(lhs, bands_ref[...],
                  preferred_element_type=jnp.float32,
                  precision=jax.lax.Precision.HIGHEST)                  # (H, W)

    # --- folded eval-mode BatchNorm + sigmoid ---
    scale2d = jax.nn.sigmoid(acc * bn_ref[0] + bn_ref[1])               # (H, W)

    # --- relayout (H, W) -> (1, H*W) through scratch (one small map; negligible) ---
    for h in range(H):
        scale_scr[0:1, h * W:(h + 1) * W] = scale2d[h:h + 1, :]

    # --- gate: re-read x, dense broadcast multiply, lane-dense store ---
    o_ref[...] = (x_ref[...] * scale_scr[...]).astype(o_ref.dtype)


def spatial_gate(x, conv_w, bn_gamma, bn_beta, bn_mean, bn_var, eps=1e-5):
    """x: (N, C, H, W); conv_w: (1, 2, 7, 7).  BatchNorm in eval mode (folded stats)."""
    N, C, H, W = x.shape
    HW = H * W
    Hp, Wp = H + 2 * PAD, W + 2 * PAD
    Hp_pad = _round_up(Hp, 8)
    Wp_pad = _round_up(Wp, 128)

    # Fold eval-mode BatchNorm into (scale, bias).
    bn_scale = bn_gamma / jnp.sqrt(bn_var + eps)
    bn_bias = bn_beta - bn_mean * bn_scale
    bn_params = jnp.stack([bn_scale[0], bn_bias[0]]).astype(jnp.float32)      # (2,)

    # Banded Toeplitz weight matrices: B[cin,kh][w+kw, w] = conv_w[0,cin,kh,kw];
    # the kw axis of the convolution becomes the K contraction of an MXU matmul.
    w = conv_w.reshape(2, KSIZE, KSIZE).astype(jnp.float32)                   # (cin, kh, kw)
    j = jnp.arange(Wp_pad)[:, None]                # padded-column index (matmul K within a band)
    wc = jnp.arange(W)[None, :]                    # output column
    kw_idx = j - wc                                # (Wp_pad, W)
    valid = (kw_idx >= 0) & (kw_idx < KSIZE)
    bands = jnp.where(valid[None, None],
                      w[:, :, jnp.clip(kw_idx, 0, KSIZE - 1)], 0.0)           # (2,7,Wp_pad,W)
    bands2d = bands.reshape(2 * KSIZE * Wp_pad, W)                            # (cin,kh) stacked

    # Lane-dense last dim for the big DMA'd blocks and the gate store.
    x_flat = x.reshape(N, C, HW)

    # Explicit VMEM budget: double-buffered in/out blocks + resident bands + scratch + slack.
    blk = C * HW * x.dtype.itemsize
    vmem_need = 4 * blk + bands2d.size * 4 + (2 * Hp_pad * Wp_pad + HW) * 4 + (1 << 20)
    vmem_limit = int(min(max(vmem_need, 2 << 20), 64 << 20))

    kernel = functools.partial(_spatial_gate_kernel, H=H, W=W, Hp_pad=Hp_pad)

    out_flat = pl.pallas_call(
        kernel,
        out_shape=jax.ShapeDtypeStruct((N, C, HW), x.dtype),
        grid=(N,),
        in_specs=[
            pl.BlockSpec(memory_space=pltpu.MemorySpace.SMEM),                 # bn scale/bias
            pl.BlockSpec((2 * KSIZE * Wp_pad, W), lambda n: (0, 0)),           # banded weights
            pl.BlockSpec((pl.Squeezed(), C, HW), lambda n: (n, 0, 0)),         # x (lane-dense)
        ],
        out_specs=pl.BlockSpec((pl.Squeezed(), C, HW), lambda n: (n, 0, 0)),
        scratch_shapes=[
            pltpu.VMEM((2 * Hp_pad, Wp_pad), jnp.float32),   # zero-padded pooled maps
            pltpu.VMEM((1, HW), jnp.float32),                # flattened gate row
        ],
        compiler_params=pltpu.CompilerParams(
            dimension_semantics=("parallel",),
            vmem_limit_bytes=vmem_limit),
    )(bn_params, bands2d, x_flat)

    return out_flat.reshape(N, C, H, W)


def spatial_gate_reference(x, conv_w, bn_gamma, bn_beta, bn_mean, bn_var, eps=1e-5):
    x_max = jnp.max(x, axis=1, keepdims=True)
    x_mean = jnp.mean(x, axis=1, keepdims=True)
    pooled = jnp.concatenate([x_max, x_mean], axis=1)                          # (N, 2, H, W)
    conv = jax.lax.conv_general_dilated(
        pooled, conv_w, window_strides=(1, 1),
        padding=[(PAD, PAD), (PAD, PAD)],
        dimension_numbers=("NCHW", "OIHW", "NCHW"),
        precision=jax.lax.Precision.HIGHEST)                                   # (N, 1, H, W)
    bn_scale = bn_gamma / jnp.sqrt(bn_var + eps)
    bn_bias = bn_beta - bn_mean * bn_scale
    y = conv * bn_scale + bn_bias
    return x * jax.nn.sigmoid(y)


if __name__ == "__main__":
    key = jax.random.PRNGKey(0)
    kx, kw = jax.random.split(key)

    N, C, H, W = 2, 4, 16, 16
    x = jax.random.normal(kx, (N, C, H, W), dtype=jnp.float32)

    # Deterministic synthetic parameters (no checkpoint).
    conv_w = jax.random.normal(kw, (1, 2, KSIZE, KSIZE), dtype=jnp.float32) * 0.1
    # BatchNorm2d(1) in eval mode with freshly-initialized stats/affine params.
    bn_gamma = jnp.ones((1,), jnp.float32)
    bn_beta = jnp.zeros((1,), jnp.float32)
    bn_mean = jnp.zeros((1,), jnp.float32)
    bn_var = jnp.ones((1,), jnp.float32)

    out = spatial_gate(x, conv_w, bn_gamma, bn_beta, bn_mean, bn_var)
    out = jax.block_until_ready(out)

    ref = spatial_gate_reference(x, conv_w, bn_gamma, bn_beta, bn_mean, bn_var)
    assert out.shape == (N, C, H, W)
    assert jnp.allclose(out, ref, atol=1e-4, rtol=1e-4), "mismatch vs reference"

    print("KERNEL_OK")
</pallas_src>

<mosaic_0001>
module attributes {stable_mosaic.version = 11 : i64} {
  func.func @_spatial_gate_kernel(%arg0: i32, %arg1: memref<2xf32, #tpu.memory_space<smem>>, %arg2: memref<1792x16xf32, #tpu.memory_space<vmem>>, %arg3: memref<1x4x256xf32, #tpu.memory_space<vmem>>, %arg4: memref<1x4x256xf32, #tpu.memory_space<vmem>>, %arg5: memref<48x128xf32, #tpu.memory_space<vmem>>, %arg6: memref<1x256xf32, #tpu.memory_space<vmem>>) attributes {dimension_semantics = [#tpu.dimension_semantics<parallel>], iteration_bounds = array<i64: 2>, scalar_prefetch = 0 : i64, scratch_operands = 2 : i64, tpu.core_type = #tpu.core_type<tc>, window_params = [{transform_indices = @transform_0, window_bounds = array<i64: 2>}, {pipeline_mode = #tpu.pipeline_mode<synchronous>, transform_indices = @transform_1, window_bounds = array<i64: 1792, 16>}, {transform_indices = @transform_2, window_bounds = array<i64: 1, 4, 256>}, {transform_indices = @transform_3, window_bounds = array<i64: 1, 4, 256>}]} {
    %c0 = arith.constant 0 : index
    %c0_0 = arith.constant 0 : index
    %c0_1 = arith.constant 0 : index
    %0 = vector.load %arg3[%c0, %c0_0, %c0_1] : memref<1x4x256xf32, #tpu.memory_space<vmem>>, vector<1x4x256xf32>
    %1 = vector.shape_cast %0 : vector<1x4x256xf32> to vector<4x256xf32>
    %cst = arith.constant dense<0xFF800000> : vector<256xf32>
    %2 = vector.multi_reduction <maximumf>, %1, %cst [0] : vector<4x256xf32> to vector<256xf32>
    %3 = vector.shape_cast %2 : vector<256xf32> to vector<1x256xf32>
    %cst_2 = arith.constant dense<0.000000e+00> : vector<256xf32>
    %4 = vector.multi_reduction <add>, %1, %cst_2 [0] : vector<4x256xf32> to vector<256xf32>
    %5 = vector.shape_cast %4 : vector<256xf32> to vector<1x256xf32>
    %cst_3 = arith.constant 2.500000e-01 : f32
    %6 = vector.broadcast %cst_3 : f32 to vector<1x256xf32>
    %7 = arith.mulf %5, %6 : vector<1x256xf32>
    %cst_4 = arith.constant 0.000000e+00 : f32
    %8 = vector.broadcast %cst_4 : f32 to vector<48x128xf32>
    %c0_5 = arith.constant 0 : index
    %c0_6 = arith.constant 0 : index
    %9 = vector.load %arg5[%c0_5, %c0_6] : memref<48x128xf32, #tpu.memory_space<vmem>>, vector<48x128xf32>
    tpu.vector_store %arg5[%c0_5, %c0_6], %8 {strides = array<i32>} : memref<48x128xf32, #tpu.memory_space<vmem>>, vector<48x128xf32>,
    %10 = vector.extract_strided_slice %3 {offsets = [0, 0], sizes = [1, 16], strides = [1, 1]} : vector<1x256xf32> to vector<1x16xf32>
    %c3 = arith.constant 3 : index
    %c3_7 = arith.constant 3 : index
    %11 = vector.load %arg5[%c3, %c3_7] : memref<48x128xf32, #tpu.memory_space<vmem>>, vector<1x16xf32>
    tpu.vector_store %arg5[%c3, %c3_7], %10 {strides = array<i32>} : memref<48x128xf32, #tpu.memory_space<vmem>>, vector<1x16xf32>,
    %12 = vector.extract_strided_slice %7 {offsets = [0, 0], sizes = [1, 16], strides = [1, 1]} : vector<1x256xf32> to vector<1x16xf32>
    %c27 = arith.constant 27 : index
    %c3_8 = arith.constant 3 : index
    %13 = vector.load %arg5[%c27, %c3_8] : memref<48x128xf32, #tpu.memory_space<vmem>>, vector<1x16xf32>
    tpu.vector_store %arg5[%c27, %c3_8], %12 {strides = array<i32>} : memref<48x128xf32, #tpu.memory_space<vmem>>, vector<1x16xf32>,
    %14 = vector.extract_strided_slice %3 {offsets = [0, 16], sizes = [1, 16], strides = [1, 1]} : vector<1x256xf32> to vector<1x16xf32>
    %c4 = arith.constant 4 : index
    %c3_9 = arith.constant 3 : index
    %15 = vector.load %arg5[%c4, %c3_9] : memref<48x128xf32, #tpu.memory_space<vmem>>, vector<1x16xf32>
    tpu.vector_store %arg5[%c4, %c3_9], %14 {strides = array<i32>} : memref<48x128xf32, #tpu.memory_space<vmem>>, vector<1x16xf32>,
    %16 = vector.extract_strided_slice %7 {offsets = [0, 16], sizes = [1, 16], strides = [1, 1]} : vector<1x256xf32> to vector<1x16xf32>
    %c28 = arith.constant 28 : index
    %c3_10 = arith.constant 3 : index
    %17 = vector.load %arg5[%c28, %c3_10] : memref<48x128xf32, #tpu.memory_space<vmem>>, vector<1x16xf32>
    tpu.vector_store %arg5[%c28, %c3_10], %16 {strides = array<i32>} : memref<48x128xf32, #tpu.memory_space<vmem>>, vector<1x16xf32>,
    %18 = vector.extract_strided_slice %3 {offsets = [0, 32], sizes = [1, 16], strides = [1, 1]} : vector<1x256xf32> to vector<1x16xf32>
    %c5 = arith.constant 5 : index
    %c3_11 = arith.constant 3 : index
    %19 = vector.load %arg5[%c5, %c3_11] : memref<48x128xf32, #tpu.memory_space<vmem>>, vector<1x16xf32>
    tpu.vector_store %arg5[%c5, %c3_11], %18 {strides = array<i32>} : memref<48x128xf32, #tpu.memory_space<vmem>>, vector<1x16xf32>,
    %20 = vector.extract_strided_slice %7 {offsets = [0, 32], sizes = [1, 16], strides = [1, 1]} : vector<1x256xf32> to vector<1x16xf32>
    %c29 = arith.constant 29 : index
    %c3_12 = arith.constant 3 : index
    %21 = vector.load %arg5[%c29, %c3_12] : memref<48x128xf32, #tpu.memory_space<vmem>>, vector<1x16xf32>
    tpu.vector_store %arg5[%c29, %c3_12], %20 {strides = array<i32>} : memref<48x128xf32, #tpu.memory_space<vmem>>, vector<1x16xf32>,
    %22 = vector.extract_strided_slice %3 {offsets = [0, 48], sizes = [1, 16], strides = [1, 1]} : vector<1x256xf32> to vector<1x16xf32>
    %c6 = arith.constant 6 : index
    %c3_13 = arith.constant 3 : index
    %23 = vector.load %arg5[%c6, %c3_13] : memref<48x128xf32, #tpu.memory_space<vmem>>, vector<1x16xf32>
    tpu.vector_store %arg5[%c6, %c3_13], %22 {strides = array<i32>} : memref<48x128xf32, #tpu.memory_space<vmem>>, vector<1x16xf32>,
    %24 = vector.extract_strided_slice %7 {offsets = [0, 48], sizes = [1, 16], strides = [1, 1]} : vector<1x256xf32> to vector<1x16xf32>
    %c30 = arith.constant 30 : index
    %c3_14 = arith.constant 3 : index
    %25 = vector.load %arg5[%c30, %c3_14] : memref<48x128xf32, #tpu.memory_space<vmem>>, vector<1x16xf32>
    tpu.vector_store %arg5[%c30, %c3_14], %24 {strides = array<i32>} : memref<48x128xf32, #tpu.memory_space<vmem>>, vector<1x16xf32>,
    %26 = vector.extract_strided_slice %3 {offsets = [0, 64], sizes = [1, 16], strides = [1, 1]} : vector<1x256xf32> to vector<1x16xf32>
    %c7 = arith.constant 7 : index
    %c3_15 = arith.constant 3 : index
    %27 = vector.load %arg5[%c7, %c3_15] : memref<48x128xf32, #tpu.memory_space<vmem>>, vector<1x16xf32>
    tpu.vector_store %arg5[%c7, %c3_15], %26 {strides = array<i32>} : memref<48x128xf32, #tpu.memory_space<vmem>>, vector<1x16xf32>,
    %28 = vector.extract_strided_slice %7 {offsets = [0, 64], sizes = [1, 16], strides = [1, 1]} : vector<1x256xf32> to vector<1x16xf32>
    %c31 = arith.constant 31 : index
    %c3_16 = arith.constant 3 : index
    %29 = vector.load %arg5[%c31, %c3_16] : memref<48x128xf32, #tpu.memory_space<vmem>>, vector<1x16xf32>
    tpu.vector_store %arg5[%c31, %c3_16], %28 {strides = array<i32>} : memref<48x128xf32, #tpu.memory_space<vmem>>, vector<1x16xf32>,
    %30 = vector.extract_strided_slice %3 {offsets = [0, 80], sizes = [1, 16], strides = [1, 1]} : vector<1x256xf32> to vector<1x16xf32>
    %c8 = arith.constant 8 : index
    %c3_17 = arith.constant 3 : index
    %31 = vector.load %arg5[%c8, %c3_17] : memref<48x128xf32, #tpu.memory_space<vmem>>, vector<1x16xf32>
    tpu.vector_store %arg5[%c8, %c3_17], %30 {strides = array<i32>} : memref<48x128xf32, #tpu.memory_space<vmem>>, vector<1x16xf32>,
    %32 = vector.extract_strided_slice %7 {offsets = [0, 80], sizes = [1, 16], strides = [1, 1]} : vector<1x256xf32> to vector<1x16xf32>
    %c32 = arith.constant 32 : index
    %c3_18 = arith.constant 3 : index
    %33 = vector.load %arg5[%c32, %c3_18] : memref<48x128xf32, #tpu.memory_space<vmem>>, vector<1x16xf32>
    tpu.vector_store %arg5[%c32, %c3_18], %32 {strides = array<i32>} : memref<48x128xf32, #tpu.memory_space<vmem>>, vector<1x16xf32>,
    %34 = vector.extract_strided_slice %3 {offsets = [0, 96], sizes = [1, 16], strides = [1, 1]} : vector<1x256xf32> to vector<1x16xf32>
    %c9 = arith.constant 9 : index
    %c3_19 = arith.constant 3 : index
    %35 = vector.load %arg5[%c9, %c3_19] : memref<48x128xf32, #tpu.memory_space<vmem>>, vector<1x16xf32>
    tpu.vector_store %arg5[%c9, %c3_19], %34 {strides = array<i32>} : memref<48x128xf32, #tpu.memory_space<vmem>>, vector<1x16xf32>,
    %36 = vector.extract_strided_slice %7 {offsets = [0, 96], sizes = [1, 16], strides = [1, 1]} : vector<1x256xf32> to vector<1x16xf32>
    %c33 = arith.constant 33 : index
    %c3_20 = arith.constant 3 : index
    %37 = vector.load %arg5[%c33, %c3_20] : memref<48x128xf32, #tpu.memory_space<vmem>>, vector<1x16xf32>
    tpu.vector_store %arg5[%c33, %c3_20], %36 {strides = array<i32>} : memref<48x128xf32, #tpu.memory_space<vmem>>, vector<1x16xf32>,
    %38 = vector.extract_strided_slice %3 {offsets = [0, 112], sizes = [1, 16], strides = [1, 1]} : vector<1x256xf32> to vector<1x16xf32>
    %c10 = arith.constant 10 : index
    %c3_21 = arith.constant 3 : index
    %39 = vector.load %arg5[%c10, %c3_21] : memref<48x128xf32, #tpu.memory_space<vmem>>, vector<1x16xf32>
    tpu.vector_store %arg5[%c10, %c3_21], %38 {strides = array<i32>} : memref<48x128xf32, #tpu.memory_space<vmem>>, vector<1x16xf32>,
    %40 = vector.extract_strided_slice %7 {offsets = [0, 112], sizes = [1, 16], strides = [1, 1]} : vector<1x256xf32> to vector<1x16xf32>
    %c34 = arith.constant 34 : index
    %c3_22 = arith.constant 3 : index
    %41 = vector.load %arg5[%c34, %c3_22] : memref<48x128xf32, #tpu.memory_space<vmem>>, vector<1x16xf32>
    tpu.vector_store %arg5[%c34, %c3_22], %40 {strides = array<i32>} : memref<48x128xf32, #tpu.memory_space<vmem>>, vector<1x16xf32>,
    %42 = vector.extract_strided_slice %3 {offsets = [0, 128], sizes = [1, 16], strides = [1, 1]} : vector<1x256xf32> to vector<1x16xf32>
    %c11 = arith.constant 11 : index
    %c3_23 = arith.constant 3 : index
    %43 = vector.load %arg5[%c11, %c3_23] : memref<48x128xf32, #tpu.memory_space<vmem>>, vector<1x16xf32>
    tpu.vector_store %arg5[%c11, %c3_23], %42 {strides = array<i32>} : memref<48x128xf32, #tpu.memory_space<vmem>>, vector<1x16xf32>,
    %44 = vector.extract_strided_slice %7 {offsets = [0, 128], sizes = [1, 16], strides = [1, 1]} : vector<1x256xf32> to vector<1x16xf32>
    %c35 = arith.constant 35 : index
    %c3_24 = arith.constant 3 : index
    %45 = vector.load %arg5[%c35, %c3_24] : memref<48x128xf32, #tpu.memory_space<vmem>>, vector<1x16xf32>
    tpu.vector_store %arg5[%c35, %c3_24], %44 {strides = array<i32>} : memref<48x128xf32, #tpu.memory_space<vmem>>, vector<1x16xf32>,
    %46 = vector.extract_strided_slice %3 {offsets = [0, 144], sizes = [1, 16], strides = [1, 1]} : vector<1x256xf32> to vector<1x16xf32>
    %c12 = arith.constant 12 : index
    %c3_25 = arith.constant 3 : index
    %47 = vector.load %arg5[%c12, %c3_25] : memref<48x128xf32, #tpu.memory_space<vmem>>, vector<1x16xf32>
    tpu.vector_store %arg5[%c12, %c3_25], %46 {strides = array<i32>} : memref<48x128xf32, #tpu.memory_space<vmem>>, vector<1x16xf32>,
    %48 = vector.extract_strided_slice %7 {offsets = [0, 144], sizes = [1, 16], strides = [1, 1]} : vector<1x256xf32> to vector<1x16xf32>
    %c36 = arith.constant 36 : index
    %c3_26 = arith.constant 3 : index
    %49 = vector.load %arg5[%c36, %c3_26] : memref<48x128xf32, #tpu.memory_space<vmem>>, vector<1x16xf32>
    tpu.vector_store %arg5[%c36, %c3_26], %48 {strides = array<i32>} : memref<48x128xf32, #tpu.memory_space<vmem>>, vector<1x16xf32>,
    %50 = vector.extract_strided_slice %3 {offsets = [0, 160], sizes = [1, 16], strides = [1, 1]} : vector<1x256xf32> to vector<1x16xf32>
    %c13 = arith.constant 13 : index
    %c3_27 = arith.constant 3 : index
    %51 = vector.load %arg5[%c13, %c3_27] : memref<48x128xf32, #tpu.memory_space<vmem>>, vector<1x16xf32>
    tpu.vector_store %arg5[%c13, %c3_27], %50 {strides = array<i32>} : memref<48x128xf32, #tpu.memory_space<vmem>>, vector<1x16xf32>,
    %52 = vector.extract_strided_slice %7 {offsets = [0, 160], sizes = [1, 16], strides = [1, 1]} : vector<1x256xf32> to vector<1x16xf32>
    %c37 = arith.constant 37 : index
    %c3_28 = arith.constant 3 : index
    %53 = vector.load %arg5[%c37, %c3_28] : memref<48x128xf32, #tpu.memory_space<vmem>>, vector<1x16xf32>
    tpu.vector_store %arg5[%c37, %c3_28], %52 {strides = array<i32>} : memref<48x128xf32, #tpu.memory_space<vmem>>, vector<1x16xf32>,
    %54 = vector.extract_strided_slice %3 {offsets = [0, 176], sizes = [1, 16], strides = [1, 1]} : vector<1x256xf32> to vector<1x16xf32>
    %c14 = arith.constant 14 : index
    %c3_29 = arith.constant 3 : index
    %55 = vector.load %arg5[%c14, %c3_29] : memref<48x128xf32, #tpu.memory_space<vmem>>, vector<1x16xf32>
    tpu.vector_store %arg5[%c14, %c3_29], %54 {strides = array<i32>} : memref<48x128xf32, #tpu.memory_space<vmem>>, vector<1x16xf32>,
    %56 = vector.extract_strided_slice %7 {offsets = [0, 176], sizes = [1, 16], strides = [1, 1]} : vector<1x256xf32> to vector<1x16xf32>
    %c38 = arith.constant 38 : index
    %c3_30 = arith.constant 3 : index
    %57 = vector.load %arg5[%c38, %c3_30] : memref<48x128xf32, #tpu.memory_space<vmem>>, vector<1x16xf32>
    tpu.vector_store %arg5[%c38, %c3_30], %56 {strides = array<i32>} : memref<48x128xf32, #tpu.memory_space<vmem>>, vector<1x16xf32>,
    %58 = vector.extract_strided_slice %3 {offsets = [0, 192], sizes = [1, 16], strides = [1, 1]} : vector<1x256xf32> to vector<1x16xf32>
    %c15 = arith.constant 15 : index
    %c3_31 = arith.constant 3 : index
    %59 = vector.load %arg5[%c15, %c3_31] : memref<48x128xf32, #tpu.memory_space<vmem>>, vector<1x16xf32>
    tpu.vector_store %arg5[%c15, %c3_31], %58 {strides = array<i32>} : memref<48x128xf32, #tpu.memory_space<vmem>>, vector<1x16xf32>,
    %60 = vector.extract_strided_slice %7 {offsets = [0, 192], sizes = [1, 16], strides = [1, 1]} : vector<1x256xf32> to vector<1x16xf32>
    %c39 = arith.constant 39 : index
    %c3_32 = arith.constant 3 : index
    %61 = vector.load %arg5[%c39, %c3_32] : memref<48x128xf32, #tpu.memory_space<vmem>>, vector<1x16xf32>
    tpu.vector_store %arg5[%c39, %c3_32], %60 {strides = array<i32>} : memref<48x128xf32, #tpu.memory_space<vmem>>, vector<1x16xf32>,
    %62 = vector.extract_strided_slice %3 {offsets = [0, 208], sizes = [1, 16], strides = [1, 1]} : vector<1x256xf32> to vector<1x16xf32>
    %c16 = arith.constant 16 : index
    %c3_33 = arith.constant 3 : index
    %63 = vector.load %arg5[%c16, %c3_33] : memref<48x128xf32, #tpu.memory_space<vmem>>, vector<1x16xf32>
    tpu.vector_store %arg5[%c16, %c3_33], %62 {strides = array<i32>} : memref<48x128xf32, #tpu.memory_space<vmem>>, vector<1x16xf32>,
    %64 = vector.extract_strided_slice %7 {offsets = [0, 208], sizes = [1, 16], strides = [1, 1]} : vector<1x256xf32> to vector<1x16xf32>
    %c40 = arith.constant 40 : index
    %c3_34 = arith.constant 3 : index
    %65 = vector.load %arg5[%c40, %c3_34] : memref<48x128xf32, #tpu.memory_space<vmem>>, vector<1x16xf32>
    tpu.vector_store %arg5[%c40, %c3_34], %64 {strides = array<i32>} : memref<48x128xf32, #tpu.memory_space<vmem>>, vector<1x16xf32>,
    %66 = vector.extract_strided_slice %3 {offsets = [0, 224], sizes = [1, 16], strides = [1, 1]} : vector<1x256xf32> to vector<1x16xf32>
    %c17 = arith.constant 17 : index
    %c3_35 = arith.constant 3 : index
    %67 = vector.load %arg5[%c17, %c3_35] : memref<48x128xf32, #tpu.memory_space<vmem>>, vector<1x16xf32>
    tpu.vector_store %arg5[%c17, %c3_35], %66 {strides = array<i32>} : memref<48x128xf32, #tpu.memory_space<vmem>>, vector<1x16xf32>,
    %68 = vector.extract_strided_slice %7 {offsets = [0, 224], sizes = [1, 16], strides = [1, 1]} : vector<1x256xf32> to vector<1x16xf32>
    %c41 = arith.constant 41 : index
    %c3_36 = arith.constant 3 : index
    %69 = vector.load %arg5[%c41, %c3_36] : memref<48x128xf32, #tpu.memory_space<vmem>>, vector<1x16xf32>
    tpu.vector_store %arg5[%c41, %c3_36], %68 {strides = array<i32>} : memref<48x128xf32, #tpu.memory_space<vmem>>, vector<1x16xf32>,
    %70 = vector.extract_strided_slice %3 {offsets = [0, 240], sizes = [1, 16], strides = [1, 1]} : vector<1x256xf32> to vector<1x16xf32>
    %c18 = arith.constant 18 : index
    %c3_37 = arith.constant 3 : index
    %71 = vector.load %arg5[%c18, %c3_37] : memref<48x128xf32, #tpu.memory_space<vmem>>, vector<1x16xf32>
    tpu.vector_store %arg5[%c18, %c3_37], %70 {strides = array<i32>} : memref<48x128xf32, #tpu.memory_space<vmem>>, vector<1x16xf32>,
    %72 = vector.extract_strided_slice %7 {offsets = [0, 240], sizes = [1, 16], strides = [1, 1]} : vector<1x256xf32> to vector<1x16xf32>
    %c42 = arith.constant 42 : index
    %c3_38 = arith.constant 3 : index
    %73 = vector.load %arg5[%c42, %c3_38] : memref<48x128xf32, #tpu.memory_space<vmem>>, vector<1x16xf32>
    tpu.vector_store %arg5[%c42, %c3_38], %72 {strides = array<i32>} : memref<48x128xf32, #tpu.memory_space<vmem>>, vector<1x16xf32>,
    %c0_39 = arith.constant 0 : index
    %c0_40 = arith.constant 0 : index
    %74 = vector.load %arg5[%c0_39, %c0_40] : memref<48x128xf32, #tpu.memory_space<vmem>>, vector<16x128xf32>
    %c1 = arith.constant 1 : index
    %c0_41 = arith.constant 0 : index
    %75 = vector.load %arg5[%c1, %c0_41] : memref<48x128xf32, #tpu.memory_space<vmem>>, vector<16x128xf32>
    %c2 = arith.constant 2 : index
    %c0_42 = arith.constant 0 : index
    %76 = vector.load %arg5[%c2, %c0_42] : memref<48x128xf32, #tpu.memory_space<vmem>>, vector<16x128xf32>
    %c3_43 = arith.constant 3 : index
    %c0_44 = arith.constant 0 : index
    %77 = vector.load %arg5[%c3_43, %c0_44] : memref<48x128xf32, #tpu.memory_space<vmem>>, vector<16x128xf32>
    %c4_45 = arith.constant 4 : index
    %c0_46 = arith.constant 0 : index
    %78 = vector.load %arg5[%c4_45, %c0_46] : memref<48x128xf32, #tpu.memory_space<vmem>>, vector<16x128xf32>
    %c5_47 = arith.constant 5 : index
    %c0_48 = arith.constant 0 : index
    %79 = vector.load %arg5[%c5_47, %c0_48] : memref<48x128xf32, #tpu.memory_space<vmem>>, vector<16x128xf32>
    %c6_49 = arith.constant 6 : index
    %c0_50 = arith.constant 0 : index
    %80 = vector.load %arg5[%c6_49, %c0_50] : memref<48x128xf32, #tpu.memory_space<vmem>>, vector<16x128xf32>
    %c24 = arith.constant 24 : index
    %c0_51 = arith.constant 0 : index
    %81 = vector.load %arg5[%c24, %c0_51] : memref<48x128xf32, #tpu.memory_space<vmem>>, vector<16x128xf32>
    %c25 = arith.constant 25 : index
    %c0_52 = arith.constant 0 : index
    %82 = vector.load %arg5[%c25, %c0_52] : memref<48x128xf32, #tpu.memory_space<vmem>>, vector<16x128xf32>
    %c26 = arith.constant 26 : index
    %c0_53 = arith.constant 0 : index
    %83 = vector.load %arg5[%c26, %c0_53] : memref<48x128xf32, #tpu.memory_space<vmem>>, vector<16x128xf32>
    %c27_54 = arith.constant 27 : index
    %c0_55 = arith.constant 0 : index
    %84 = vector.load %arg5[%c27_54, %c0_55] : memref<48x128xf32, #tpu.memory_space<vmem>>, vector<16x128xf32>
    %c28_56 = arith.constant 28 : index
    %c0_57 = arith.constant 0 : index
    %85 = vector.load %arg5[%c28_56, %c0_57] : memref<48x128xf32, #tpu.memory_space<vmem>>, vector<16x128xf32>
    %c29_58 = arith.constant 29 : index
    %c0_59 = arith.constant 0 : index
    %86 = vector.load %arg5[%c29_58, %c0_59] : memref<48x128xf32, #tpu.memory_space<vmem>>, vector<16x128xf32>
    %c30_60 = arith.constant 30 : index
    %c0_61 = arith.constant 0 : index
    %87 = vector.load %arg5[%c30_60, %c0_61] : memref<48x128xf32, #tpu.memory_space<vmem>>, vector<16x128xf32>
    %88 = tpu.concatenate %74, %75, %76, %77, %78, %79, %80, %81, %82, %83, %84, %85, %86, %87 in 1 : vector<16x128xf32>, vector<16x128xf32>, vector<16x128xf32>, vector<16x128xf32>, vector<16x128xf32>, vector<16x128xf32>, vector<16x128xf32>, vector<16x128xf32>, vector<16x128xf32>, vector<16x128xf32>, vector<16x128xf32>, vector<16x128xf32>, vector<16x128xf32>, vector<16x128xf32> -> vector<16x1792xf32>
    %c0_62 = arith.constant 0 : index
    %c0_63 = arith.constant 0 : index
    %89 = vector.load %arg2[%c0_62, %c0_63] : memref<1792x16xf32, #tpu.memory_space<vmem>>, vector<1792x16xf32>
    %cst_64 = arith.constant dense<0.000000e+00> : vector<16x16xf32>
    %90 = tpu.matmul %88, %89, %cst_64 {dimension_numbers = #tpu.dot_dimension_numbers<[1], [0], [0], [1], [0, 0, 1, 1], [], []>, precision = #tpu.contract_precision<fp32>} : vector<16x1792xf32>, vector<1792x16xf32>, vector<16x16xf32> -> vector<16x16xf32>
    %c0_65 = arith.constant 0 : index
    %91 = memref.load %arg1[%c0_65] : memref<2xf32, #tpu.memory_space<smem>>
    %92 = vector.broadcast %91 : f32 to vector<16x16xf32>
    %93 = arith.mulf %90, %92 : vector<16x16xf32>
    %c1_66 = arith.constant 1 : index
    %94 = memref.load %arg1[%c1_66] : memref<2xf32, #tpu.memory_space<smem>>
    %95 = vector.broadcast %94 : f32 to vector<16x16xf32>
    %96 = arith.addf %93, %95 : vector<16x16xf32>
    %97 = arith.negf %96 : vector<16x16xf32>
    %98 = math.exp %97 : vector<16x16xf32>
    %cst_67 = arith.constant 1.000000e+00 : f32
    %99 = vector.broadcast %cst_67 : f32 to vector<16x16xf32>
    %100 = arith.addf %99, %98 : vector<16x16xf32>
    %101 = arith.divf %99, %100 : vector<16x16xf32>
    %102 = vector.extract_strided_slice %101 {offsets = [0, 0], sizes = [1, 16], strides = [1, 1]} : vector<16x16xf32> to vector<1x16xf32>
    %c0_68 = arith.constant 0 : index
    %c0_69 = arith.constant 0 : index
    %103 = vector.load %arg6[%c0_68, %c0_69] : memref<1x256xf32, #tpu.memory_space<vmem>>, vector<1x16xf32>
    tpu.vector_store %arg6[%c0_68, %c0_69], %102 {strides = array<i32>} : memref<1x256xf32, #tpu.memory_space<vmem>>, vector<1x16xf32>,
    %104 = vector.extract_strided_slice %101 {offsets = [1, 0], sizes = [1, 16], strides = [1, 1]} : vector<16x16xf32> to vector<1x16xf32>
    %c0_70 = arith.constant 0 : index
    %c16_71 = arith.constant 16 : index
    %105 = vector.load %arg6[%c0_70, %c16_71] : memref<1x256xf32, #tpu.memory_space<vmem>>, vector<1x16xf32>
    tpu.vector_store %arg6[%c0_70, %c16_71], %104 {strides = array<i32>} : memref<1x256xf32, #tpu.memory_space<vmem>>, vector<1x16xf32>,
    %106 = vector.extract_strided_slice %101 {offsets = [2, 0], sizes = [1, 16], strides = [1, 1]} : vector<16x16xf32> to vector<1x16xf32>
    %c0_72 = arith.constant 0 : index
    %c32_73 = arith.constant 32 : index
    %107 = vector.load %arg6[%c0_72, %c32_73] : memref<1x256xf32, #tpu.memory_space<vmem>>, vector<1x16xf32>
    tpu.vector_store %arg6[%c0_72, %c32_73], %106 {strides = array<i32>} : memref<1x256xf32, #tpu.memory_space<vmem>>, vector<1x16xf32>,
    %108 = vector.extract_strided_slice %101 {offsets = [3, 0], sizes = [1, 16], strides = [1, 1]} : vector<16x16xf32> to vector<1x16xf32>
    %c0_74 = arith.constant 0 : index
    %c48 = arith.constant 48 : index
    %109 = vector.load %arg6[%c0_74, %c48] : memref<1x256xf32, #tpu.memory_space<vmem>>, vector<1x16xf32>
    tpu.vector_store %arg6[%c0_74, %c48], %108 {strides = array<i32>} : memref<1x256xf32, #tpu.memory_space<vmem>>, vector<1x16xf32>,
    %110 = vector.extract_strided_slice %101 {offsets = [4, 0], sizes = [1, 16], strides = [1, 1]} : vector<16x16xf32> to vector<1x16xf32>
    %c0_75 = arith.constant 0 : index
    %c64 = arith.constant 64 : index
    %111 = vector.load %arg6[%c0_75, %c64] : memref<1x256xf32, #tpu.memory_space<vmem>>, vector<1x16xf32>
    tpu.vector_store %arg6[%c0_75, %c64], %110 {strides = array<i32>} : memref<1x256xf32, #tpu.memory_space<vmem>>, vector<1x16xf32>,
    %112 = vector.extract_strided_slice %101 {offsets = [5, 0], sizes = [1, 16], strides = [1, 1]} : vector<16x16xf32> to vector<1x16xf32>
    %c0_76 = arith.constant 0 : index
    %c80 = arith.constant 80 : index
    %113 = vector.load %arg6[%c0_76, %c80] : memref<1x256xf32, #tpu.memory_space<vmem>>, vector<1x16xf32>
    tpu.vector_store %arg6[%c0_76, %c80], %112 {strides = array<i32>} : memref<1x256xf32, #tpu.memory_space<vmem>>, vector<1x16xf32>,
    %114 = vector.extract_strided_slice %101 {offsets = [6, 0], sizes = [1, 16], strides = [1, 1]} : vector<16x16xf32> to vector<1x16xf32>
    %c0_77 = arith.constant 0 : index
    %c96 = arith.constant 96 : index
    %115 = vector.load %arg6[%c0_77, %c96] : memref<1x256xf32, #tpu.memory_space<vmem>>, vector<1x16xf32>
    tpu.vector_store %arg6[%c0_77, %c96], %114 {strides = array<i32>} : memref<1x256xf32, #tpu.memory_space<vmem>>, vector<1x16xf32>,
    %116 = vector.extract_strided_slice %101 {offsets = [7, 0], sizes = [1, 16], strides = [1, 1]} : vector<16x16xf32> to vector<1x16xf32>
    %c0_78 = arith.constant 0 : index
    %c112 = arith.constant 112 : index
    %117 = vector.load %arg6[%c0_78, %c112] : memref<1x256xf32, #tpu.memory_space<vmem>>, vector<1x16xf32>
    tpu.vector_store %arg6[%c0_78, %c112], %116 {strides = array<i32>} : memref<1x256xf32, #tpu.memory_space<vmem>>, vector<1x16xf32>,
    %118 = vector.extract_strided_slice %101 {offsets = [8, 0], sizes = [1, 16], strides = [1, 1]} : vector<16x16xf32> to vector<1x16xf32>
    %c0_79 = arith.constant 0 : index
    %c128 = arith.constant 128 : index
    %119 = vector.load %arg6[%c0_79, %c128] : memref<1x256xf32, #tpu.memory_space<vmem>>, vector<1x16xf32>
    tpu.vector_store %arg6[%c0_79, %c128], %118 {strides = array<i32>} : memref<1x256xf32, #tpu.memory_space<vmem>>, vector<1x16xf32>,
    %120 = vector.extract_strided_slice %101 {offsets = [9, 0], sizes = [1, 16], strides = [1, 1]} : vector<16x16xf32> to vector<1x16xf32>
    %c0_80 = arith.constant 0 : index
    %c144 = arith.constant 144 : index
    %121 = vector.load %arg6[%c0_80, %c144] : memref<1x256xf32, #tpu.memory_space<vmem>>, vector<1x16xf32>
    tpu.vector_store %arg6[%c0_80, %c144], %120 {strides = array<i32>} : memref<1x256xf32, #tpu.memory_space<vmem>>, vector<1x16xf32>,
    %122 = vector.extract_strided_slice %101 {offsets = [10, 0], sizes = [1, 16], strides = [1, 1]} : vector<16x16xf32> to vector<1x16xf32>
    %c0_81 = arith.constant 0 : index
    %c160 = arith.constant 160 : index
    %123 = vector.load %arg6[%c0_81, %c160] : memref<1x256xf32, #tpu.memory_space<vmem>>, vector<1x16xf32>
    tpu.vector_store %arg6[%c0_81, %c160], %122 {strides = array<i32>} : memref<1x256xf32, #tpu.memory_space<vmem>>, vector<1x16xf32>,
    %124 = vector.extract_strided_slice %101 {offsets = [11, 0], sizes = [1, 16], strides = [1, 1]} : vector<16x16xf32> to vector<1x16xf32>
    %c0_82 = arith.constant 0 : index
    %c176 = arith.constant 176 : index
    %125 = vector.load %arg6[%c0_82, %c176] : memref<1x256xf32, #tpu.memory_space<vmem>>, vector<1x16xf32>
    tpu.vector_store %arg6[%c0_82, %c176], %124 {strides = array<i32>} : memref<1x256xf32, #tpu.memory_space<vmem>>, vector<1x16xf32>,
    %126 = vector.extract_strided_slice %101 {offsets = [12, 0], sizes = [1, 16], strides = [1, 1]} : vector<16x16xf32> to vector<1x16xf32>
    %c0_83 = arith.constant 0 : index
    %c192 = arith.constant 192 : index
    %127 = vector.load %arg6[%c0_83, %c192] : memref<1x256xf32, #tpu.memory_space<vmem>>, vector<1x16xf32>
    tpu.vector_store %arg6[%c0_83, %c192], %126 {strides = array<i32>} : memref<1x256xf32, #tpu.memory_space<vmem>>, vector<1x16xf32>,
    %128 = vector.extract_strided_slice %101 {offsets = [13, 0], sizes = [1, 16], strides = [1, 1]} : vector<16x16xf32> to vector<1x16xf32>
    %c0_84 = arith.constant 0 : index
    %c208 = arith.constant 208 : index
    %129 = vector.load %arg6[%c0_84, %c208] : memref<1x256xf32, #tpu.memory_space<vmem>>, vector<1x16xf32>
    tpu.vector_store %arg6[%c0_84, %c208], %128 {strides = array<i32>} : memref<1x256xf32, #tpu.memory_space<vmem>>, vector<1x16xf32>,
    %130 = vector.extract_strided_slice %101 {offsets = [14, 0], sizes = [1, 16], strides = [1, 1]} : vector<16x16xf32> to vector<1x16xf32>
    %c0_85 = arith.constant 0 : index
    %c224 = arith.constant 224 : index
    %131 = vector.load %arg6[%c0_85, %c224] : memref<1x256xf32, #tpu.memory_space<vmem>>, vector<1x16xf32>
    tpu.vector_store %arg6[%c0_85, %c224], %130 {strides = array<i32>} : memref<1x256xf32, #tpu.memory_space<vmem>>, vector<1x16xf32>,
    %132 = vector.extract_strided_slice %101 {offsets = [15, 0], sizes = [1, 16], strides = [1, 1]} : vector<16x16xf32> to vector<1x16xf32>
    %c0_86 = arith.constant 0 : index
    %c240 = arith.constant 240 : index
    %133 = vector.load %arg6[%c0_86, %c240] : memref<1x256xf32, #tpu.memory_space<vmem>>, vector<1x16xf32>
    tpu.vector_store %arg6[%c0_86, %c240], %132 {strides = array<i32>} : memref<1x256xf32, #tpu.memory_space<vmem>>, vector<1x16xf32>,
    %c0_87 = arith.constant 0 : index
    %c0_88 = arith.constant 0 : index
    %c0_89 = arith.constant 0 : index
    %134 = vector.load %arg3[%c0_87, %c0_88, %c0_89] : memref<1x4x256xf32, #tpu.memory_space<vmem>>, vector<1x4x256xf32>
    %135 = vector.shape_cast %134 : vector<1x4x256xf32> to vector<4x256xf32>
    %c0_90 = arith.constant 0 : index
    %c0_91 = arith.constant 0 : index
    %136 = vector.load %arg6[%c0_90, %c0_91] : memref<1x256xf32, #tpu.memory_space<vmem>>, vector<1x256xf32>
    %137 = vector.broadcast %136 : vector<1x256xf32> to vector<4x256xf32>
    %138 = arith.mulf %135, %137 : vector<4x256xf32>
    %c0_92 = arith.constant 0 : index
    %c0_93 = arith.constant 0 : index
    %c0_94 = arith.constant 0 : index
    %139 = vector.load %arg4[%c0_92, %c0_93, %c0_94] : memref<1x4x256xf32, #tpu.memory_space<vmem>>, vector<1x4x256xf32>
    %140 = vector.shape_cast %139 : vector<1x4x256xf32> to vector<4x256xf32>
    %141 = vector.shape_cast %138 : vector<4x256xf32> to vector<1x4x256xf32>
    tpu.vector_store %arg4[%c0_92, %c0_93, %c0_94], %141 {strides = array<i32>} : memref<1x4x256xf32, #tpu.memory_space<vmem>>, vector<1x4x256xf32>,
    return
  }
  func.func @transform_0(%arg0: i32) -> i32 {
    %c0_i32 = arith.constant 0 : i32
    %c0_i32_0 = arith.constant 0 : i32
    return %c0_i32 : i32
  }
  func.func @transform_1(%arg0: i32) -> (i32, i32) {
    %c0_i32 = arith.constant 0 : i32
    %c0_i32_0 = arith.constant 0 : i32
    %c0_i32_1 = arith.constant 0 : i32
    return %c0_i32, %c0_i32_0 : i32, i32
  }
  func.func @transform_2(%arg0: i32) -> (i32, i32, i32) {
    %c0_i32 = arith.constant 0 : i32
    %c0_i32_0 = arith.constant 0 : i32
    %c0_i32_1 = arith.constant 0 : i32
    return %arg0, %c0_i32, %c0_i32_0 : i32, i32, i32
  }
  func.func @transform_3(%arg0: i32) -> (i32, i32, i32) {
    %c0_i32 = arith.constant 0 : i32
    %c0_i32_0 = arith.constant 0 : i32
    %c0_i32_1 = arith.constant 0 : i32
    return %arg0, %c0_i32, %c0_i32_0 : i32, i32, i32
  }
}

</mosaic_0001>

<llo_original>
// kernel: tpu_custom_call.1
$region0: #{tpu_custom_call.1}
  #allocation0 [shape = 'u32[]', space=smem, size = 0x4, offset = 0x4, fixed_abs, tag = 'smem constant byte address 0x4 - core index']
  #allocation1 [shape = 'u32[144,128]{1,0:T(1,128)}', space=vmem, size = 0x12000, scoped, tag = 'internal scratch']
  #allocation2 [shape = 'f32[48,128]{1,0:T(8,128)}', space=vmem, size = 0x6000, scoped, tag = 'scratch operand']
  #allocation3 [shape = 'f32[1,256]{1,0:T(1,128)}', space=vmem, size = 0x400, scoped, tag = 'scratch operand']
  %s0 = inlined_call_operand.vmem [shape: f32[2], index: 0, kind: input, shape index: {}]
  %s1 = inlined_call_operand.vmem [shape: f32[1792,16], index: 1, kind: input, shape index: {}]
  %s2 = inlined_call_operand.vmem [shape: f32[2,4,256], index: 2, kind: input, shape index: {}]
  %s3 = inlined_call_operand.hbm [shape: f32[2,4,256], index: 3, kind: output, shape index: {}]
  %s4 = sld [smem:[#allocation0]]
  $region49: #{tpu_custom_call.1} parent=0
    _
  %s6 = ssub.s32 1, %s4
  %s7 = scalar_select 0, %s6, %s4
  $region1: #{tpu_custom_call.1} parent=0
    #allocation4 [shape = 'u8[512]{0}', space=smem, size = 0x200, scoped, tag = 'input window, operand 0, single buffered']
    #allocation5 [shape = 's32[2]{0}', space=sflag, size = 0x8, scoped, tag = 'scoped memory for tpu_custom_call.1']
    #allocation6 [shape = 's32[2]{0}', space=sflag, size = 0x8, scoped, tag = 'scoped memory for tpu_custom_call.1']
    #allocation7 [shape = 'u8[8192]{0}', space=vmem, size = 0x2000, scoped, tag = 'output window, operand 0']
    %8 = vsyncpa [#allocation6], 0
    %9 = vsyncpa [#allocation5], 0
    %s10 = scalar_lea.sflag [#allocation5], 1
    %11 = vsyncpa %s10, 0
    loop: start=0, step=1, limit=4
    $region2: #{tpu_custom_call.1} parent=1 // loop_pre_header
      _
    $region3: #{tpu_custom_call.1} parent=1 // loop_header
      %s13 = sphi 0, %s17
      %p14 = scmp.ge.s32.totalorder %s13, 4
      %s21 = sphi 0, %s21
      %s23 = sphi 0, %s21
      %s24 = sphi 0, %s23
      %s38 = sphi 0, %s24
      %s42 = sphi 0, %s42
      %s44 = sphi 0, %s42
      %s45 = sphi 0, %s44
      %s59 = sphi 0, %s45
      %s65 = sphi 0, %s67
      %s68 = sphi 0, %s65
      %s69 = sphi 0, %s68
      %s85 = sphi 0, %s69
      %s91 = sphi 0, %s93
      %s94 = sphi 0, %s91
      %s95 = sphi 0, %s94
      %s111 = sphi 0, %s95
    $region4: #{tpu_custom_call.1} parent=1 // loop_header_branch
      %16 = sbr.rel (%p14) target = $region8
    $region5: #{tpu_custom_call.1} parent=1 // loop_body
      %s18 = ssub.s32 %s13, 1
      %s19 = ssub.s32 %s13, 2
      %s20 = sadd.s32 %s13, 1
      %s22 = sadd.s32 %s21, 1
      %p25 = scmp.eq.s32.totalorder %s13, 1
      %p26 = scmp.ne.s32.totalorder %s21, %s23
      %p27 = scmp.eq.s32.totalorder %s13, 0
      %p28 = por %p26, %p27
      %p29 = scmp.ne.s32.totalorder %s21, %s23
      %p30 = scmp.eq.s32.totalorder %s18, 1
      %p31 = por %p29, %p30
      %p32 = scmp.ne.s32.totalorder %s23, %s24
      %p33 = scmp.eq.s32.totalorder %s18, 0
      %p34 = por %p32, %p33
      %p35 = scmp.ne.s32.totalorder %s23, %s24
      %p36 = scmp.eq.s32.totalorder %s19, 1
      %p37 = por %p35, %p36
      %p39 = scmp.ne.s32.totalorder %s24, %s38
      %p40 = scmp.eq.s32.totalorder %s19, 0
      %p41 = por %p39, %p40
      %s43 = sadd.s32 %s42, 1
      %p46 = scmp.eq.s32.totalorder %s13, 1
      %p47 = scmp.ne.s32.totalorder %s42, %s44
      %p48 = scmp.eq.s32.totalorder %s13, 0
      %p49 = por %p47, %p48
      %p50 = scmp.ne.s32.totalorder %s42, %s44
      %p51 = scmp.eq.s32.totalorder %s18, 1
      %p52 = por %p50, %p51
      %p53 = scmp.ne.s32.totalorder %s44, %s45
      %p54 = scmp.eq.s32.totalorder %s18, 0
      %p55 = por %p53, %p54
      %p56 = scmp.ne.s32.totalorder %s44, %s45
      %p57 = scmp.eq.s32.totalorder %s19, 1
      %p58 = por %p56, %p57
      %p60 = scmp.ne.s32.totalorder %s45, %s59
      %p61 = scmp.eq.s32.totalorder %s19, 0
      %p62 = por %p60, %p61
      %s63 = ssub.s32 %s13, %s20
      %p64 = scmp.eq.s32.totalorder %s63, 0
      %s66 = sadd.s32 %s65, 1
      %s67 = scalar_select %p64, %s65, %s66
      %p70 = pneg %p64
      %p71 = scmp.eq.s32.totalorder %s13, 1
      %p72 = por %p70, %p71
      %p73 = scmp.ne.s32.totalorder %s65, %s68
      %p74 = scmp.eq.s32.totalorder %s13, 0
      %p75 = por %p73, %p74
      %p76 = scmp.ne.s32.totalorder %s65, %s68
      %p77 = scmp.eq.s32.totalorder %s18, 1
      %p78 = por %p76, %p77
      %p79 = scmp.ne.s32.totalorder %s68, %s69
      %p80 = scmp.eq.s32.totalorder %s18, 0
      %p81 = por %p79, %p80
      %p82 = scmp.ne.s32.totalorder %s68, %s69
      %p83 = scmp.eq.s32.totalorder %s19, 1
      %p84 = por %p82, %p83
      %p86 = scmp.ne.s32.totalorder %s69, %s85
      %p87 = scmp.eq.s32.totalorder %s19, 0
      %p88 = por %p86, %p87
      %s89 = ssub.s32 %s13, %s20
      %p90 = scmp.eq.s32.totalorder %s89, 0
      %s92 = sadd.s32 %s91, 1
      %s93 = scalar_select %p90, %s91, %s92
      %p96 = pneg %p90
      %p97 = scmp.eq.s32.totalorder %s13, 1
      %p98 = por %p96, %p97
      %p99 = scmp.ne.s32.totalorder %s91, %s94
      %p100 = scmp.eq.s32.totalorder %s13, 0
      %p101 = por %p99, %p100
      %p102 = scmp.ne.s32.totalorder %s91, %s94
      %p103 = scmp.eq.s32.totalorder %s18, 1
      %p104 = por %p102, %p103
      %p105 = scmp.ne.s32.totalorder %s94, %s95
      %p106 = scmp.eq.s32.totalorder %s18, 0
      %p107 = por %p105, %p106
      %p108 = scmp.ne.s32.totalorder %s94, %s95
      %p109 = scmp.eq.s32.totalorder %s19, 1
      %p110 = por %p108, %p109
      %p112 = scmp.ne.s32.totalorder %s95, %s111
      %p113 = scmp.eq.s32.totalorder %s19, 0
      %p114 = por %p112, %p113
      %p115 = scmp.le.s32.totalorder 1, %s13
      %p116 = scmp.lt.s32.totalorder %s13, 3
      %p117 = pnand %p115, %p116
      %p118 = pneg %p117
      // Predicated region
      $region9: #{tpu_custom_call.1} parent=5 // pred_check
        _
      $region10: #{tpu_custom_call.1} parent=5 // pred_check_branch
        %120 = sbr.rel (%p117) target = $region12
      $region11: #{tpu_custom_call.1} parent=5 // pred_region
        %s121 = ssub.s32 %s13, 1
        // Predicated region
        $region13: #{tpu_custom_call.1} parent=11 // pred_check
          %p122 = pneg %p34
        $region14: #{tpu_custom_call.1} parent=11 // pred_check_branch
          %124 = sbr.rel (%p122) target = $region16
        $region15: #{tpu_custom_call.1} parent=11 // pred_region
          %s126 = ssub.s32 16, 16
          %127 = vsyncadd [#allocation6], %s126
          %s129 = sshll.u32 %s0, 4
          %s130 = int_to_ptr.vmem [resolvable:$true] %s129
          %132 = dma.vmem_to_smem %s130, 16, [#allocation4], [#allocation6]
        $region16: #{tpu_custom_call.1} parent=11 // pred_fallthru
          _
        // Predicated region
        $region17: #{tpu_custom_call.1} parent=11 // pred_check
          %p133 = pneg %p55
        $region18: #{tpu_custom_call.1} parent=11 // pred_check_branch
          %135 = sbr.rel (%p133) target = $region20
        $region19: #{tpu_custom_call.1} parent=11 // pred_region
          _
        $region20: #{tpu_custom_call.1} parent=11 // pred_fallthru
          _
      $region12: #{tpu_custom_call.1} parent=5 // pred_fallthru
        _
      %p136 = scmp.lt.s32.totalorder %s13, 2
      // Predicated region
      $region21: #{tpu_custom_call.1} parent=5 // pred_check
        %p137 = pneg %p136
      $region22: #{tpu_custom_call.1} parent=5 // pred_check_branch
        %139 = sbr.rel (%p137) target = $region24
      $region23: #{tpu_custom_call.1} parent=5 // pred_region
        // Predicated region
        $region25: #{tpu_custom_call.1} parent=23 // pred_check
          %p140 = pneg %p75
        $region26: #{tpu_custom_call.1} parent=23 // pred_check_branch
          %142 = sbr.rel (%p140) target = $region28
        $region27: #{tpu_custom_call.1} parent=23 // pred_region
          %p143 = scmp.lt.s32.totalorder %s13, 1
          %s144 = scalar_select %p143, %s13, 1
          %s145 = smul.addr %s144, 2
          %s146 = smul.addr %s145, 4
          %s147 = scalar_lea.vmem %s2, %s146
        $region28: #{tpu_custom_call.1} parent=23 // pred_fallthru
          _
      $region24: #{tpu_custom_call.1} parent=5 // pred_fallthru
        _
      %p148 = scmp.le.s32.totalorder 1, %s13
      %p149 = scmp.lt.s32.totalorder %s13, 3
      %p150 = pnand %p148, %p149
      %p151 = pneg %p150
      // Predicated region
      $region29: #{tpu_custom_call.1} parent=5 // pred_check
        _
      $region30: #{tpu_custom_call.1} parent=5 // pred_check_branch
        %153 = sbr.rel (%p150) target = $region32
      $region31: #{tpu_custom_call.1} parent=5 // pred_region
        %s154 = ssub.s32 %s13, 1
        // Predicated region
        $region33: #{tpu_custom_call.1} parent=31 // pred_check
          %p155 = pneg %p34
        $region34: #{tpu_custom_call.1} parent=31 // pred_check_branch
          %157 = sbr.rel (%p155) target = $region36
        $region35: #{tpu_custom_call.1} parent=31 // pred_region
          %158 = dma.done [#allocation6], 16
        $region36: #{tpu_custom_call.1} parent=31 // pred_fallthru
          _
        %159 = sfence
        %p160 = pneg %p34
        %p161 = pneg %p31
        %p162 = pneg %p55
        %p163 = pneg %p52
        %p164 = scmp.lt.s32.totalorder %s18, 1
        %s165 = scalar_select %p164, %s18, 1
        %s166 = smul.addr %s165, 2
        %s167 = smul.addr %s166, 4
        %s168 = scalar_lea.vmem %s2, %s167
        %p169 = pneg %p81
        %p170 = pneg %p78
        %p171 = pneg %p107
        %p172 = pneg %p104
        %s173 = sand.u32 %s94, 1
        %s174 = scalar_lea.sflag [#allocation5], %s173
        %s175 = sand.u32 %s94, 1
        %s176 = smul.addr %s175, 8
        %s177 = scalar_lea.vmem [#allocation7], %s176
        %p178 = scmp.lt.s32.totalorder %s18, 1
        %s179 = scalar_select %p178, %s18, 1
        %s180 = smul.addr %s179, 2
        %s181 = smul.addr %s180, 4
        %s182 = scalar_lea.vmem %s2, %s181
        %v183 = vld [vmem:[%s182] sm:$0xff]
        %v185 = vcombine.high %v183, %v183
        %vm187 = vcmask 1043456
        %v188 = vsel %vm187, %v183, -inf
        %v189 = vrot.slane %v188, 4
        %v190 = vmax.f32 %v188, %v189
        %v191 = vrot.slane %v190, 2
        %v192 = vmax.f32 %v190, %v191
        %v193 = vrot.slane %v192, 1
        %v194 = vmax.f32 %v192, %v193
        %v195 = vsel %vm187, %v185, -inf
        %v196 = vrot.slane %v195, 4
        %v197 = vmax.f32 %v195, %v196
        %v198 = vrot.slane %v197, 2
        %v199 = vmax.f32 %v197, %v198
        %v200 = vrot.slane %v199, 1
        %v201 = vmax.f32 %v199, %v200
        %v202 = vsel %vm187, %v183, 0.0
        %v203 = vrot.slane %v202, 4
        %v204 = vadd.f32 %v202, %v203
        %v205 = vrot.slane %v204, 2
        %v206 = vadd.f32 %v204, %v205
        %v207 = vrot.slane %v206, 1
        %v208 = vadd.f32 %v206, %v207
        %v209 = vsel %vm187, %v185, 0.0
        %v210 = vrot.slane %v209, 4
        %v211 = vadd.f32 %v209, %v210
        %v212 = vrot.slane %v211, 2
        %v213 = vadd.f32 %v211, %v212
        %v214 = vrot.slane %v213, 1
        %v215 = vadd.f32 %v213, %v214
        %v216 = vmul.f32 %v208, 0.25
        %v217 = vmul.f32 %v215, 0.25
        %218 = vst [vmem:[#allocation2] sm:$0xff] 0.0
        %219 = vst [vmem:[#allocation2 + $0x8] sm:$0xff] 0.0
        %220 = vst [vmem:[#allocation2 + $0x10] sm:$0xff] 0.0
        %221 = vst [vmem:[#allocation2 + $0x18] sm:$0xff] 0.0
        %222 = vst [vmem:[#allocation2 + $0x20] sm:$0xff] 0.0
        %223 = vst [vmem:[#allocation2 + $0x28] sm:$0xff] 0.0
        %225 = vrot.lane.b32.xlu0 %v194, 3
        %v226 = vpop.permute.xlu0 %225
        %vm228 = vcmask 147480
        %229 = vst.msk [vmem:[#allocation2 + $0x3] sm:$0x1] %vm228, %v226
        %231 = vrot.lane.b32.xlu0 %v216, 3
        %v232 = vpop.permute.xlu0 %231
        %234 = vst.msk [vmem:[#allocation2 + $0x1b] sm:$0x1] %vm228, %v232
        %235 = vrot.lane.b32.xlu0 %v194, 115
        %v236 = vpop.permute.xlu0 %235
        %238 = vst.msk [vmem:[#allocation2 + $0x4] sm:$0x1] %vm228, %v236
        %239 = vrot.lane.b32.xlu0 %v216, 115
        %v240 = vpop.permute.xlu0 %239
        %242 = vst.msk [vmem:[#allocation2 + $0x1c] sm:$0x1] %vm228, %v240
        %243 = vrot.lane.b32.xlu0 %v194, 99
        %v244 = vpop.permute.xlu0 %243
        %246 = vst.msk [vmem:[#allocation2 + $0x5] sm:$0x1] %vm228, %v244
        %247 = vrot.lane.b32.xlu0 %v216, 99
        %v248 = vpop.permute.xlu0 %247
        %250 = vst.msk [vmem:[#allocation2 + $0x1d] sm:$0x1] %vm228, %v248
        %251 = vrot.lane.b32.xlu0 %v194, 83
        %v252 = vpop.permute.xlu0 %251
        %254 = vst.msk [vmem:[#allocation2 + $0x6] sm:$0x1] %vm228, %v252
        %255 = vrot.lane.b32.xlu0 %v216, 83
        %v256 = vpop.permute.xlu0 %255
        %258 = vst.msk [vmem:[#allocation2 + $0x1e] sm:$0x1] %vm228, %v256
        %259 = vrot.lane.b32.xlu0 %v194, 67
        %v260 = vpop.permute.xlu0 %259
        %262 = vst.msk [vmem:[#allocation2 + $0x7] sm:$0x1] %vm228, %v260
        %263 = vrot.lane.b32.xlu0 %v216, 67
        %v264 = vpop.permute.xlu0 %263
        %266 = vst.msk [vmem:[#allocation2 + $0x1f] sm:$0x1] %vm228, %v264
        %267 = vrot.lane.b32.xlu0 %v194, 51
        %v268 = vpop.permute.xlu0 %267
        %270 = vst.msk [vmem:[#allocation2 + $0x8] sm:$0x1] %vm228, %v268
        %271 = vrot.lane.b32.xlu0 %v216, 51
        %v272 = vpop.permute.xlu0 %271
        %274 = vst.msk [vmem:[#allocation2 + $0x20] sm:$0x1] %vm228, %v272
        %275 = vrot.lane.b32.xlu0 %v194, 35
        %v276 = vpop.permute.xlu0 %275
        %278 = vst.msk [vmem:[#allocation2 + $0x9] sm:$0x1] %vm228, %v276
        %279 = vrot.lane.b32.xlu0 %v216, 35
        %v280 = vpop.permute.xlu0 %279
        %282 = vst.msk [vmem:[#allocation2 + $0x21] sm:$0x1] %vm228, %v280
        %283 = vrot.lane.b32.xlu0 %v194, 19
        %v284 = vpop.permute.xlu0 %283
        %286 = vst.msk [vmem:[#allocation2 + $0xa] sm:$0x1] %vm228, %v284
        %287 = vrot.lane.b32.xlu0 %v216, 19
        %v288 = vpop.permute.xlu0 %287
        %290 = vst.msk [vmem:[#allocation2 + $0x22] sm:$0x1] %vm228, %v288
        %292 = vrot.lane.b32.xlu0 %v201, 3
        %v293 = vpop.permute.xlu0 %292
        %295 = vst.msk [vmem:[#allocation2 + $0xb] sm:$0x1] %vm228, %v293
        %297 = vrot.lane.b32.xlu0 %v217, 3
        %v298 = vpop.permute.xlu0 %297
        %300 = vst.msk [vmem:[#allocation2 + $0x23] sm:$0x1] %vm228, %v298
        %301 = vrot.lane.b32.xlu0 %v201, 115
        %v302 = vpop.permute.xlu0 %301
        %304 = vst.msk [vmem:[#allocation2 + $0xc] sm:$0x1] %vm228, %v302
        %305 = vrot.lane.b32.xlu0 %v217, 115
        %v306 = vpop.permute.xlu0 %305
        %308 = vst.msk [vmem:[#allocation2 + $0x24] sm:$0x1] %vm228, %v306
        %309 = vrot.lane.b32.xlu0 %v201, 99
        %v310 = vpop.permute.xlu0 %309
        %312 = vst.msk [vmem:[#allocation2 + $0xd] sm:$0x1] %vm228, %v310
        %313 = vrot.lane.b32.xlu0 %v217, 99
        %v314 = vpop.permute.xlu0 %313
        %316 = vst.msk [vmem:[#allocation2 + $0x25] sm:$0x1] %vm228, %v314
        %317 = vrot.lane.b32.xlu0 %v201, 83
        %v318 = vpop.permute.xlu0 %317
        %320 = vst.msk [vmem:[#allocation2 + $0xe] sm:$0x1] %vm228, %v318
        %321 = vrot.lane.b32.xlu0 %v217, 83
        %v322 = vpop.permute.xlu0 %321
        %324 = vst.msk [vmem:[#allocation2 + $0x26] sm:$0x1] %vm228, %v322
        %325 = vrot.lane.b32.xlu0 %v201, 67
        %v326 = vpop.permute.xlu0 %325
        %328 = vst.msk [vmem:[#allocation2 + $0xf] sm:$0x1] %vm228, %v326
        %329 = vrot.lane.b32.xlu0 %v217, 67
        %v330 = vpop.permute.xlu0 %329
        %332 = vst.msk [vmem:[#allocation2 + $0x27] sm:$0x1] %vm228, %v330
        %333 = vrot.lane.b32.xlu0 %v201, 51
        %v334 = vpop.permute.xlu0 %333
        %336 = vst.msk [vmem:[#allocation2 + $0x10] sm:$0x1] %vm228, %v334
        %337 = vrot.lane.b32.xlu0 %v217, 51
        %v338 = vpop.permute.xlu0 %337
        %340 = vst.msk [vmem:[#allocation2 + $0x28] sm:$0x1] %vm228, %v338
        %341 = vrot.lane.b32.xlu0 %v201, 35
        %v342 = vpop.permute.xlu0 %341
        %344 = vst.msk [vmem:[#allocation2 + $0x11] sm:$0x1] %vm228, %v342
        %345 = vrot.lane.b32.xlu0 %v217, 35
        %v346 = vpop.permute.xlu0 %345
        %348 = vst.msk [vmem:[#allocation2 + $0x29] sm:$0x1] %vm228, %v346
        %349 = vrot.lane.b32.xlu0 %v201, 19
        %v350 = vpop.permute.xlu0 %349
        %352 = vst.msk [vmem:[#allocation2 + $0x12] sm:$0x1] %vm228, %v350
        %353 = vrot.lane.b32.xlu0 %v217, 19
        %v354 = vpop.permute.xlu0 %353
        %356 = vst.msk [vmem:[#allocation2 + $0x2a] sm:$0x1] %vm228, %v354
        %v357 = vld [vmem:[#allocation2] sm:$0xff]
        %v358 = vld [vmem:[#allocation2 + $0x8] sm:$0xff]
        %v359 = vld [vmem:[#allocation2 + $0x1] sm:$0xff]
        %v360 = vld [vmem:[#allocation2 + $0x9] sm:$0xff]
        %v361 = vld [vmem:[#allocation2 + $0x2] sm:$0xff]
        %v362 = vld [vmem:[#allocation2 + $0xa] sm:$0xff]
        %v363 = vld [vmem:[#allocation2 + $0x3] sm:$0xff]
        %v364 = vld [vmem:[#allocation2 + $0xb] sm:$0xff]
        %v365 = vld [vmem:[#allocation2 + $0x4] sm:$0xff]
        %v366 = vld [vmem:[#allocation2 + $0xc] sm:$0xff]
        %v367 = vld [vmem:[#allocation2 + $0x5] sm:$0xff]
        %v368 = vld [vmem:[#allocation2 + $0xd] sm:$0xff]
        %v369 = vld [vmem:[#allocation2 + $0x6] sm:$0xff]
        %v370 = vld [vmem:[#allocation2 + $0xe] sm:$0xff]
        %v371 = vld [vmem:[#allocation2 + $0x18] sm:$0xff]
        %v372 = vld [vmem:[#allocation2 + $0x20] sm:$0xff]
        %v373 = vld [vmem:[#allocation2 + $0x19] sm:$0xff]
        %v374 = vld [vmem:[#allocation2 + $0x21] sm:$0xff]
        %v375 = vld [vmem:[#allocation2 + $0x1a] sm:$0xff]
        %v376 = vld [vmem:[#allocation2 + $0x22] sm:$0xff]
        %v377 = vld [vmem:[#allocation2 + $0x1b] sm:$0xff]
        %v378 = vld [vmem:[#allocation2 + $0x23] sm:$0xff]
        %v379 = vld [vmem:[#allocation2 + $0x1c] sm:$0xff]
        %v380 = vld [vmem:[#allocation2 + $0x24] sm:$0xff]
        %v381 = vld [vmem:[#allocation2 + $0x1d] sm:$0xff]
        %v382 = vld [vmem:[#allocation2 + $0x25] sm:$0xff]
        %v383 = vld [vmem:[#allocation2 + $0x1e] sm:$0xff]
        %v384 = vld [vmem:[#allocation2 + $0x26] sm:$0xff]
        %v385 = vld [vmem:[%s1] sm:$0xff]
        %v386 = vld [vmem:[%s1 + $0x8] sm:$0xff]
        %v387 = vld [vmem:[%s1 + $0x10] sm:$0xff]
        %v388 = vld [vmem:[%s1 + $0x18] sm:$0xff]
        %v389 = vld [vmem:[%s1 + $0x20] sm:$0xff]
        %v390 = vld [vmem:[%s1 + $0x28] sm:$0xff]
        %v391 = vld [vmem:[%s1 + $0x30] sm:$0xff]
        %v392 = vld [vmem:[%s1 + $0x38] sm:$0xff]
        %v393 = vld [vmem:[%s1 + $0x40] sm:$0xff]
        %v394 = vld [vmem:[%s1 + $0x48] sm:$0xff]
        %v395 = vld [vmem:[%s1 + $0x50] sm:$0xff]
        %v396 = vld [vmem:[%s1 + $0x58] sm:$0xff]
        %v397 = vld [vmem:[%s1 + $0x60] sm:$0xff]
        %v398 = vld [vmem:[%s1 + $0x68] sm:$0xff]
        %v399 = vld [vmem:[%s1 + $0x70] sm:$0xff]
        %v400 = vld [vmem:[%s1 + $0x78] sm:$0xff]
        %v401 = vld [vmem:[%s1 + $0x80] sm:$0xff]
        %v402 = vld [vmem:[%s1 + $0x88] sm:$0xff]
        %v403 = vld [vmem:[%s1 + $0x90] sm:$0xff]
        %v404 = vld [vmem:[%s1 + $0x98] sm:$0xff]
        %v405 = vld [vmem:[%s1 + $0xa0] sm:$0xff]
        %v406 = vld [vmem:[%s1 + $0xa8] sm:$0xff]
        %v407 = vld [vmem:[%s1 + $0xb0] sm:$0xff]
        %v408 = vld [vmem:[%s1 + $0xb8] sm:$0xff]
        %v409 = vld [vmem:[%s1 + $0xc0] sm:$0xff]
        %v410 = vld [vmem:[%s1 + $0xc8] sm:$0xff]
        %v411 = vld [vmem:[%s1 + $0xd0] sm:$0xff]
        %v412 = vld [vmem:[%s1 + $0xd8] sm:$0xff]
        %v413 = vld [vmem:[%s1 + $0xe0] sm:$0xff]
        %v414 = vld [vmem:[%s1 + $0xe8] sm:$0xff]
        %v415 = vld [vmem:[%s1 + $0xf0] sm:$0xff]
        %v416 = vld [vmem:[%s1 + $0xf8] sm:$0xff]
        %v417 = vld [vmem:[%s1 + $0x100] sm:$0xff]
        %v418 = vld [vmem:[%s1 + $0x108] sm:$0xff]
        %v419 = vld [vmem:[%s1 + $0x110] sm:$0xff]
        %v420 = vld [vmem:[%s1 + $0x118] sm:$0xff]
        %v421 = vld [vmem:[%s1 + $0x120] sm:$0xff]
        %v422 = vld [vmem:[%s1 + $0x128] sm:$0xff]
        %v423 = vld [vmem:[%s1 + $0x130] sm:$0xff]
        %v424 = vld [vmem:[%s1 + $0x138] sm:$0xff]
        %v425 = vld [vmem:[%s1 + $0x140] sm:$0xff]
        %v426 = vld [vmem:[%s1 + $0x148] sm:$0xff]
        %v427 = vld [vmem:[%s1 + $0x150] sm:$0xff]
        %v428 = vld [vmem:[%s1 + $0x158] sm:$0xff]
        %v429 = vld [vmem:[%s1 + $0x160] sm:$0xff]
        %v430 = vld [vmem:[%s1 + $0x168] sm:$0xff]
        %v431 = vld [vmem:[%s1 + $0x170] sm:$0xff]
        %v432 = vld [vmem:[%s1 + $0x178] sm:$0xff]
        %v433 = vld [vmem:[%s1 + $0x180] sm:$0xff]
        %v434 = vld [vmem:[%s1 + $0x188] sm:$0xff]
        %v435 = vld [vmem:[%s1 + $0x190] sm:$0xff]
        %v436 = vld [vmem:[%s1 + $0x198] sm:$0xff]
        %v437 = vld [vmem:[%s1 + $0x1a0] sm:$0xff]
        %v438 = vld [vmem:[%s1 + $0x1a8] sm:$0xff]
        %v439 = vld [vmem:[%s1 + $0x1b0] sm:$0xff]
        %v440 = vld [vmem:[%s1 + $0x1b8] sm:$0xff]
        %v441 = vld [vmem:[%s1 + $0x1c0] sm:$0xff]
        %v442 = vld [vmem:[%s1 + $0x1c8] sm:$0xff]
        %v443 = vld [vmem:[%s1 + $0x1d0] sm:$0xff]
        %v444 = vld [vmem:[%s1 + $0x1d8] sm:$0xff]
        %v445 = vld [vmem:[%s1 + $0x1e0] sm:$0xff]
        %v446 = vld [vmem:[%s1 + $0x1e8] sm:$0xff]
        %v447 = vld [vmem:[%s1 + $0x1f0] sm:$0xff]
        %v448 = vld [vmem:[%s1 + $0x1f8] sm:$0xff]
        %v449 = vld [vmem:[%s1 + $0x200] sm:$0xff]
        %v450 = vld [vmem:[%s1 + $0x208] sm:$0xff]
        %v451 = vld [vmem:[%s1 + $0x210] sm:$0xff]
        %v452 = vld [vmem:[%s1 + $0x218] sm:$0xff]
        %v453 = vld [vmem:[%s1 + $0x220] sm:$0xff]
        %v454 = vld [vmem:[%s1 + $0x228] sm:$0xff]
        %v455 = vld [vmem:[%s1 + $0x230] sm:$0xff]
        %v456 = vld [vmem:[%s1 + $0x238] sm:$0xff]
        %v457 = vld [vmem:[%s1 + $0x240] sm:$0xff]
        %v458 = vld [vmem:[%s1 + $0x248] sm:$0xff]
        %v459 = vld [vmem:[%s1 + $0x250] sm:$0xff]
        %v460 = vld [vmem:[%s1 + $0x258] sm:$0xff]
        %v461 = vld [vmem:[%s1 + $0x260] sm:$0xff]
        %v462 = vld [vmem:[%s1 + $0x268] sm:$0xff]
        %v463 = vld [vmem:[%s1 + $0x270] sm:$0xff]
        %v464 = vld [vmem:[%s1 + $0x278] sm:$0xff]
        %v465 = vld [vmem:[%s1 + $0x280] sm:$0xff]
        %v466 = vld [vmem:[%s1 + $0x288] sm:$0xff]
        %v467 = vld [vmem:[%s1 + $0x290] sm:$0xff]
        %v468 = vld [vmem:[%s1 + $0x298] sm:$0xff]
        %v469 = vld [vmem:[%s1 + $0x2a0] sm:$0xff]
        %v470 = vld [vmem:[%s1 + $0x2a8] sm:$0xff]
        %v471 = vld [vmem:[%s1 + $0x2b0] sm:$0xff]
        %v472 = vld [vmem:[%s1 + $0x2b8] sm:$0xff]
        %v473 = vld [vmem:[%s1 + $0x2c0] sm:$0xff]
        %v474 = vld [vmem:[%s1 + $0x2c8] sm:$0xff]
        %v475 = vld [vmem:[%s1 + $0x2d0] sm:$0xff]
        %v476 = vld [vmem:[%s1 + $0x2d8] sm:$0xff]
        %v477 = vld [vmem:[%s1 + $0x2e0] sm:$0xff]
        %v478 = vld [vmem:[%s1 + $0x2e8] sm:$0xff]
        %v479 = vld [vmem:[%s1 + $0x2f0] sm:$0xff]
        %v480 = vld [vmem:[%s1 + $0x2f8] sm:$0xff]
        %v481 = vld [vmem:[%s1 + $0x300] sm:$0xff]
        %v482 = vld [vmem:[%s1 + $0x308] sm:$0xff]
        %v483 = vld [vmem:[%s1 + $0x310] sm:$0xff]
        %v484 = vld [vmem:[%s1 + $0x318] sm:$0xff]
        %v485 = vld [vmem:[%s1 + $0x320] sm:$0xff]
        %v486 = vld [vmem:[%s1 + $0x328] sm:$0xff]
        %v487 = vld [vmem:[%s1 + $0x330] sm:$0xff]
        %v488 = vld [vmem:[%s1 + $0x338] sm:$0xff]
        %v489 = vld [vmem:[%s1 + $0x340] sm:$0xff]
        %v490 = vld [vmem:[%s1 + $0x348] sm:$0xff]
        %v491 = vld [vmem:[%s1 + $0x350] sm:$0xff]
        %v492 = vld [vmem:[%s1 + $0x358] sm:$0xff]
        %v493 = vld [vmem:[%s1 + $0x360] sm:$0xff]
        %v494 = vld [vmem:[%s1 + $0x368] sm:$0xff]
        %v495 = vld [vmem:[%s1 + $0x370] sm:$0xff]
        %v496 = vld [vmem:[%s1 + $0x378] sm:$0xff]
        %v497 = vld [vmem:[%s1 + $0x380] sm:$0xff]
        %v498 = vld [vmem:[%s1 + $0x388] sm:$0xff]
        %v499 = vld [vmem:[%s1 + $0x390] sm:$0xff]
        %v500 = vld [vmem:[%s1 + $0x398] sm:$0xff]
        %v501 = vld [vmem:[%s1 + $0x3a0] sm:$0xff]
        %v502 = vld [vmem:[%s1 + $0x3a8] sm:$0xff]
        %v503 = vld [vmem:[%s1 + $0x3b0] sm:$0xff]
        %v504 = vld [vmem:[%s1 + $0x3b8] sm:$0xff]
        %v505 = vld [vmem:[%s1 + $0x3c0] sm:$0xff]
        %v506 = vld [vmem:[%s1 + $0x3c8] sm:$0xff]
        %v507 = vld [vmem:[%s1 + $0x3d0] sm:$0xff]
        %v508 = vld [vmem:[%s1 + $0x3d8] sm:$0xff]
        %v509 = vld [vmem:[%s1 + $0x3e0] sm:$0xff]
        %v510 = vld [vmem:[%s1 + $0x3e8] sm:$0xff]
        %v511 = vld [vmem:[%s1 + $0x3f0] sm:$0xff]
        %v512 = vld [vmem:[%s1 + $0x3f8] sm:$0xff]
        %v513 = vld [vmem:[%s1 + $0x400] sm:$0xff]
        %v514 = vld [vmem:[%s1 + $0x408] sm:$0xff]
        %v515 = vld [vmem:[%s1 + $0x410] sm:$0xff]
        %v516 = vld [vmem:[%s1 + $0x418] sm:$0xff]
        %v517 = vld [vmem:[%s1 + $0x420] sm:$0xff]
        %v518 = vld [vmem:[%s1 + $0x428] sm:$0xff]
        %v519 = vld [vmem:[%s1 + $0x430] sm:$0xff]
        %v520 = vld [vmem:[%s1 + $0x438] sm:$0xff]
        %v521 = vld [vmem:[%s1 + $0x440] sm:$0xff]
        %v522 = vld [vmem:[%s1 + $0x448] sm:$0xff]
        %v523 = vld [vmem:[%s1 + $0x450] sm:$0xff]
        %v524 = vld [vmem:[%s1 + $0x458] sm:$0xff]
        %v525 = vld [vmem:[%s1 + $0x460] sm:$0xff]
        %v526 = vld [vmem:[%s1 + $0x468] sm:$0xff]
        %v527 = vld [vmem:[%s1 + $0x470] sm:$0xff]
        %v528 = vld [vmem:[%s1 + $0x478] sm:$0xff]
        %v529 = vld [vmem:[%s1 + $0x480] sm:$0xff]
        %v530 = vld [vmem:[%s1 + $0x488] sm:$0xff]
        %v531 = vld [vmem:[%s1 + $0x490] sm:$0xff]
        %v532 = vld [vmem:[%s1 + $0x498] sm:$0xff]
        %v533 = vld [vmem:[%s1 + $0x4a0] sm:$0xff]
        %v534 = vld [vmem:[%s1 + $0x4a8] sm:$0xff]
        %v535 = vld [vmem:[%s1 + $0x4b0] sm:$0xff]
        %v536 = vld [vmem:[%s1 + $0x4b8] sm:$0xff]
        %v537 = vld [vmem:[%s1 + $0x4c0] sm:$0xff]
        %v538 = vld [vmem:[%s1 + $0x4c8] sm:$0xff]
        %v539 = vld [vmem:[%s1 + $0x4d0] sm:$0xff]
        %v540 = vld [vmem:[%s1 + $0x4d8] sm:$0xff]
        %v541 = vld [vmem:[%s1 + $0x4e0] sm:$0xff]
        %v542 = vld [vmem:[%s1 + $0x4e8] sm:$0xff]
        %v543 = vld [vmem:[%s1 + $0x4f0] sm:$0xff]
        %v544 = vld [vmem:[%s1 + $0x4f8] sm:$0xff]
        %v545 = vld [vmem:[%s1 + $0x500] sm:$0xff]
        %v546 = vld [vmem:[%s1 + $0x508] sm:$0xff]
        %v547 = vld [vmem:[%s1 + $0x510] sm:$0xff]
        %v548 = vld [vmem:[%s1 + $0x518] sm:$0xff]
        %v549 = vld [vmem:[%s1 + $0x520] sm:$0xff]
        %v550 = vld [vmem:[%s1 + $0x528] sm:$0xff]
        %v551 = vld [vmem:[%s1 + $0x530] sm:$0xff]
        %v552 = vld [vmem:[%s1 + $0x538] sm:$0xff]
        %v553 = vld [vmem:[%s1 + $0x540] sm:$0xff]
        %v554 = vld [vmem:[%s1 + $0x548] sm:$0xff]
        %v555 = vld [vmem:[%s1 + $0x550] sm:$0xff]
        %v556 = vld [vmem:[%s1 + $0x558] sm:$0xff]
        %v557 = vld [vmem:[%s1 + $0x560] sm:$0xff]
        %v558 = vld [vmem:[%s1 + $0x568] sm:$0xff]
        %v559 = vld [vmem:[%s1 + $0x570] sm:$0xff]
        %v560 = vld [vmem:[%s1 + $0x578] sm:$0xff]
        %v561 = vld [vmem:[%s1 + $0x580] sm:$0xff]
        %v562 = vld [vmem:[%s1 + $0x588] sm:$0xff]
        %v563 = vld [vmem:[%s1 + $0x590] sm:$0xff]
        %v564 = vld [vmem:[%s1 + $0x598] sm:$0xff]
        %v565 = vld [vmem:[%s1 + $0x5a0] sm:$0xff]
        %v566 = vld [vmem:[%s1 + $0x5a8] sm:$0xff]
        %v567 = vld [vmem:[%s1 + $0x5b0] sm:$0xff]
        %v568 = vld [vmem:[%s1 + $0x5b8] sm:$0xff]
        %v569 = vld [vmem:[%s1 + $0x5c0] sm:$0xff]
        %v570 = vld [vmem:[%s1 + $0x5c8] sm:$0xff]
        %v571 = vld [vmem:[%s1 + $0x5d0] sm:$0xff]
        %v572 = vld [vmem:[%s1 + $0x5d8] sm:$0xff]
        %v573 = vld [vmem:[%s1 + $0x5e0] sm:$0xff]
        %v574 = vld [vmem:[%s1 + $0x5e8] sm:$0xff]
        %v575 = vld [vmem:[%s1 + $0x5f0] sm:$0xff]
        %v576 = vld [vmem:[%s1 + $0x5f8] sm:$0xff]
        %v577 = vld [vmem:[%s1 + $0x600] sm:$0xff]
        %v578 = vld [vmem:[%s1 + $0x608] sm:$0xff]
        %v579 = vld [vmem:[%s1 + $0x610] sm:$0xff]
        %v580 = vld [vmem:[%s1 + $0x618] sm:$0xff]
        %v581 = vld [vmem:[%s1 + $0x620] sm:$0xff]
        %v582 = vld [vmem:[%s1 + $0x628] sm:$0xff]
        %v583 = vld [vmem:[%s1 + $0x630] sm:$0xff]
        %v584 = vld [vmem:[%s1 + $0x638] sm:$0xff]
        %v585 = vld [vmem:[%s1 + $0x640] sm:$0xff]
        %v586 = vld [vmem:[%s1 + $0x648] sm:$0xff]
        %v587 = vld [vmem:[%s1 + $0x650] sm:$0xff]
        %v588 = vld [vmem:[%s1 + $0x658] sm:$0xff]
        %v589 = vld [vmem:[%s1 + $0x660] sm:$0xff]
        %v590 = vld [vmem:[%s1 + $0x668] sm:$0xff]
        %v591 = vld [vmem:[%s1 + $0x670] sm:$0xff]
        %v592 = vld [vmem:[%s1 + $0x678] sm:$0xff]
        %v593 = vld [vmem:[%s1 + $0x680] sm:$0xff]
        %v594 = vld [vmem:[%s1 + $0x688] sm:$0xff]
        %v595 = vld [vmem:[%s1 + $0x690] sm:$0xff]
        %v596 = vld [vmem:[%s1 + $0x698] sm:$0xff]
        %v597 = vld [vmem:[%s1 + $0x6a0] sm:$0xff]
        %v598 = vld [vmem:[%s1 + $0x6a8] sm:$0xff]
        %v599 = vld [vmem:[%s1 + $0x6b0] sm:$0xff]
        %v600 = vld [vmem:[%s1 + $0x6b8] sm:$0xff]
        %v601 = vld [vmem:[%s1 + $0x6c0] sm:$0xff]
        %v602 = vld [vmem:[%s1 + $0x6c8] sm:$0xff]
        %v603 = vld [vmem:[%s1 + $0x6d0] sm:$0xff]
        %v604 = vld [vmem:[%s1 + $0x6d8] sm:$0xff]
        %v605 = vld [vmem:[%s1 + $0x6e0] sm:$0xff]
        %v606 = vld [vmem:[%s1 + $0x6e8] sm:$0xff]
        %v607 = vld [vmem:[%s1 + $0x6f0] sm:$0xff]
        %v608 = vld [vmem:[%s1 + $0x6f8] sm:$0xff]
        %609 = vmatprep.subr.mxu0 0.0
        %v610 = vand.u32 %v385, 4294901760
        %611 = vmatpush1.msra.mxu0 %v610
        %612 = vmatprep.subr.mxu0 0.0
        %v613 = vand.u32 %v386, 4294901760
        %614 = vmatpush1.msra.mxu0 %v613
        %615 = vmatprep.subr.mxu0 0.0
        %v616 = vand.u32 %v387, 4294901760
        %617 = vmatpush1.msra.mxu0 %v616
        %618 = vmatprep.subr.mxu0 0.0
        %v619 = vand.u32 %v388, 4294901760
        %620 = vmatpush1.msra.mxu0 %v619
        %621 = vmatprep.subr.mxu0 0.0
        %v622 = vand.u32 %v389, 4294901760
        %623 = vmatpush1.msra.mxu0 %v622
        %624 = vmatprep.subr.mxu0 0.0
        %v625 = vand.u32 %v390, 4294901760
        %626 = vmatpush1.msra.mxu0 %v625
        %627 = vmatprep.subr.mxu0 0.0
        %v628 = vand.u32 %v391, 4294901760
        %629 = vmatpush1.msra.mxu0 %v628
        %630 = vmatprep.subr.mxu0 0.0
        %v631 = vand.u32 %v392, 4294901760
        %632 = vmatpush1.msra.mxu0 %v631
        %633 = vmatprep.subr.mxu0 0.0
        %v634 = vand.u32 %v393, 4294901760
        %635 = vmatpush1.msra.mxu0 %v634
        %636 = vmatprep.subr.mxu0 0.0
        %v637 = vand.u32 %v394, 4294901760
        %638 = vmatpush1.msra.mxu0 %v637
        %639 = vmatprep.subr.mxu0 0.0
        %v640 = vand.u32 %v395, 4294901760
        %641 = vmatpush1.msra.mxu0 %v640
        %642 = vmatprep.subr.mxu0 0.0
        %v643 = vand.u32 %v396, 4294901760
        %644 = vmatpush1.msra.mxu0 %v643
        %645 = vmatprep.subr.mxu0 0.0
        %v646 = vand.u32 %v397, 4294901760
        %647 = vmatpush1.msra.mxu0 %v646
        %648 = vmatprep.subr.mxu0 0.0
        %v649 = vand.u32 %v398, 4294901760
        %650 = vmatpush1.msra.mxu0 %v649
        %651 = vmatprep.subr.mxu0 0.0
        %v652 = vand.u32 %v399, 4294901760
        %653 = vmatpush1.msra.mxu0 %v652
        %654 = vmatprep.subr.mxu0 0.0
        %v655 = vand.u32 %v400, 4294901760
        %656 = vmatpush1.msra.mxu0 %v655
        %657 = vmatprep.subr.mxu0 0.0
        %v658 = vand.u32 %v401, 4294901760
        %659 = vmatpush1.msra.mxu0 %v658
        %660 = vmatprep.subr.mxu0 0.0
        %v661 = vand.u32 %v402, 4294901760
        %662 = vmatpush1.msra.mxu0 %v661
        %663 = vmatprep.subr.mxu0 0.0
        %v664 = vand.u32 %v403, 4294901760
        %665 = vmatpush1.msra.mxu0 %v664
        %666 = vmatprep.subr.mxu0 0.0
        %v667 = vand.u32 %v404, 4294901760
        %668 = vmatpush1.msra.mxu0 %v667
        %669 = vmatprep.subr.mxu0 0.0
        %v670 = vand.u32 %v405, 4294901760
        %671 = vmatpush1.msra.mxu0 %v670
        %672 = vmatprep.subr.mxu0 0.0
        %v673 = vand.u32 %v406, 4294901760
        %674 = vmatpush1.msra.mxu0 %v673
        %675 = vmatprep.subr.mxu0 0.0
        %v676 = vand.u32 %v407, 4294901760
        %677 = vmatpush1.msra.mxu0 %v676
        %678 = vmatprep.subr.mxu0 0.0
        %v679 = vand.u32 %v408, 4294901760
        %680 = vmatpush1.msra.mxu0 %v679
        %681 = vmatprep.subr.mxu0 0.0
        %v682 = vand.u32 %v409, 4294901760
        %683 = vmatpush1.msra.mxu0 %v682
        %684 = vmatprep.subr.mxu0 0.0
        %v685 = vand.u32 %v410, 4294901760
        %686 = vmatpush1.msra.mxu0 %v685
        %687 = vmatprep.subr.mxu0 0.0
        %v688 = vand.u32 %v411, 4294901760
        %689 = vmatpush1.msra.mxu0 %v688
        %690 = vmatprep.subr.mxu0 0.0
        %v691 = vand.u32 %v412, 4294901760
        %692 = vmatpush1.msra.mxu0 %v691
        %693 = vmatprep.subr.mxu0 0.0
        %v694 = vand.u32 %v413, 4294901760
        %695 = vmatpush1.msra.mxu0 %v694
        %696 = vmatprep.subr.mxu0 0.0
        %v697 = vand.u32 %v414, 4294901760
        %698 = vmatpush1.msra.mxu0 %v697
        %699 = vmatprep.subr.mxu0 0.0
        %v700 = vand.u32 %v415, 4294901760
        %701 = vmatpush1.msra.mxu0 %v700
        %702 = vmatprep.subr.mxu0 0.0
        %v703 = vand.u32 %v416, 4294901760
        %704 = vmatpush1.msra.mxu0 %v703
        %v705 = vand.u32 %v359, 4294901760
        %v706 = vsub.f32 %v359, %v705
        %v707 = vand.u32 %v706, 4294901760
        %v708 = vsub.f32 %v706, %v707
        %v709 = vand.u32 %v708, 4294901760
        %710 = vmatprep.mubr.f32.mxu0 %v709
        %v711 = vand.u32 %v357, 4294901760
        %v712 = vsub.f32 %v357, %v711
        %v713 = vand.u32 %v712, 4294901760
        %v714 = vsub.f32 %v712, %v713
        %v715 = vand.u32 %v714, 4294901760
        %716 = vmatmul.mubr.f32.gmra.mrb[0].mxu0 %v715
        %v717 = vpop.f32.mrb[0].mxu0
        %v718 = vadd.f32 0.0, %v717
        %v719 = vpop.f32.mrb[0].mxu0
        %v720 = vand.u32 %v360, 4294901760
        %v721 = vsub.f32 %v360, %v720
        %v722 = vand.u32 %v721, 4294901760
        %v723 = vsub.f32 %v721, %v722
        %v724 = vand.u32 %v723, 4294901760
        %725 = vmatprep.mubr.f32.mxu0 %v724
        %v726 = vand.u32 %v358, 4294901760
        %v727 = vsub.f32 %v358, %v726
        %v728 = vand.u32 %v727, 4294901760
        %v729 = vsub.f32 %v727, %v728
        %v730 = vand.u32 %v729, 4294901760
        %731 = vmatmul.mubr.f32.gmra.mrb[0].mxu0 %v730
        %v732 = vpop.f32.mrb[0].mxu0
        %v733 = vadd.f32 0.0, %v732
        %v734 = vpop.f32.mrb[0].mxu0
        %735 = vdwg.mxu0
        %736 = vmatprep.subr.mxu0 0.0
        %v737 = vand.u32 %v385, 4294901760
        %v738 = vsub.f32 %v385, %v737
        %v739 = vand.u32 %v738, 4294901760
        %v740 = vsub.f32 %v738, %v739
        %v741 = vand.u32 %v740, 4294901760
        %742 = vmatpush1.msra.mxu0 %v741
        %743 = vmatprep.subr.mxu0 0.0
        %v744 = vand.u32 %v386, 4294901760
        %v745 = vsub.f32 %v386, %v744
        %v746 = vand.u32 %v745, 4294901760
        %v747 = vsub.f32 %v745, %v746
        %v748 = vand.u32 %v747, 4294901760
        %749 = vmatpush1.msra.mxu0 %v748
        %750 = vmatprep.subr.mxu0 0.0
        %v751 = vand.u32 %v387, 4294901760
        %v752 = vsub.f32 %v387, %v751
        %v753 = vand.u32 %v752, 4294901760
        %v754 = vsub.f32 %v752, %v753
        %v755 = vand.u32 %v754, 4294901760
        %756 = vmatpush1.msra.mxu0 %v755
        %757 = vmatprep.subr.mxu0 0.0
        %v758 = vand.u32 %v388, 4294901760
        %v759 = vsub.f32 %v388, %v758
        %v760 = vand.u32 %v759, 4294901760
        %v761 = vsub.f32 %v759, %v760
        %v762 = vand.u32 %v761, 4294901760
        %763 = vmatpush1.msra.mxu0 %v762
        %764 = vmatprep.subr.mxu0 0.0
        %v765 = vand.u32 %v389, 4294901760
        %v766 = vsub.f32 %v389, %v765
        %v767 = vand.u32 %v766, 4294901760
        %v768 = vsub.f32 %v766, %v767
        %v769 = vand.u32 %v768, 4294901760
        %770 = vmatpush1.msra.mxu0 %v769
        %771 = vmatprep.subr.mxu0 0.0
        %v772 = vand.u32 %v390, 4294901760
        %v773 = vsub.f32 %v390, %v772
        %v774 = vand.u32 %v773, 4294901760
        %v775 = vsub.f32 %v773, %v774
        %v776 = vand.u32 %v775, 4294901760
        %777 = vmatpush1.msra.mxu0 %v776
        %778 = vmatprep.subr.mxu0 0.0
        %v779 = vand.u32 %v391, 4294901760
        %v780 = vsub.f32 %v391, %v779
        %v781 = vand.u32 %v780, 4294901760
        %v782 = vsub.f32 %v780, %v781
        %v783 = vand.u32 %v782, 4294901760
        %784 = vmatpush1.msra.mxu0 %v783
        %785 = vmatprep.subr.mxu0 0.0
        %v786 = vand.u32 %v392, 4294901760
        %v787 = vsub.f32 %v392, %v786
        %v788 = vand.u32 %v787, 4294901760
        %v789 = vsub.f32 %v787, %v788
        %v790 = vand.u32 %v789, 4294901760
        %791 = vmatpush1.msra.mxu0 %v790
        %792 = vmatprep.subr.mxu0 0.0
        %v793 = vand.u32 %v393, 4294901760
        %v794 = vsub.f32 %v393, %v793
        %v795 = vand.u32 %v794, 4294901760
        %v796 = vsub.f32 %v794, %v795
        %v797 = vand.u32 %v796, 4294901760
        %798 = vmatpush1.msra.mxu0 %v797
        %799 = vmatprep.subr.mxu0 0.0
        %v800 = vand.u32 %v394, 4294901760
        %v801 = vsub.f32 %v394, %v800
        %v802 = vand.u32 %v801, 4294901760
        %v803 = vsub.f32 %v801, %v802
        %v804 = vand.u32 %v803, 4294901760
        %805 = vmatpush1.msra.mxu0 %v804
        %806 = vmatprep.subr.mxu0 0.0
        %v807 = vand.u32 %v395, 4294901760
        %v808 = vsub.f32 %v395, %v807
        %v809 = vand.u32 %v808, 4294901760
        %v810 = vsub.f32 %v808, %v809
        %v811 = vand.u32 %v810, 4294901760
        %812 = vmatpush1.msra.mxu0 %v811
        %813 = vmatprep.subr.mxu0 0.0
        %v814 = vand.u32 %v396, 4294901760
        %v815 = vsub.f32 %v396, %v814
        %v816 = vand.u32 %v815, 4294901760
        %v817 = vsub.f32 %v815, %v816
        %v818 = vand.u32 %v817, 4294901760
        %819 = vmatpush1.msra.mxu0 %v818
        %820 = vmatprep.subr.mxu0 0.0
        %v821 = vand.u32 %v397, 4294901760
        %v822 = vsub.f32 %v397, %v821
        %v823 = vand.u32 %v822, 4294901760
        %v824 = vsub.f32 %v822, %v823
        %v825 = vand.u32 %v824, 4294901760
        %826 = vmatpush1.msra.mxu0 %v825
        %827 = vmatprep.subr.mxu0 0.0
        %v828 = vand.u32 %v398, 4294901760
        %v829 = vsub.f32 %v398, %v828
        %v830 = vand.u32 %v829, 4294901760
        %v831 = vsub.f32 %v829, %v830
        %v832 = vand.u32 %v831, 4294901760
        %833 = vmatpush1.msra.mxu0 %v832
        %834 = vmatprep.subr.mxu0 0.0
        %v835 = vand.u32 %v399, 4294901760
        %v836 = vsub.f32 %v399, %v835
        %v837 = vand.u32 %v836, 4294901760
        %v838 = vsub.f32 %v836, %v837
        %v839 = vand.u32 %v838, 4294901760
        %840 = vmatpush1.msra.mxu0 %v839
        %841 = vmatprep.subr.mxu0 0.0
        %v842 = vand.u32 %v400, 4294901760
        %v843 = vsub.f32 %v400, %v842
        %v844 = vand.u32 %v843, 4294901760
        %v845 = vsub.f32 %v843, %v844
        %v846 = vand.u32 %v845, 4294901760
        %847 = vmatpush1.msra.mxu0 %v846
        %848 = vmatprep.subr.mxu0 0.0
        %v849 = vand.u32 %v401, 4294901760
        %v850 = vsub.f32 %v401, %v849
        %v851 = vand.u32 %v850, 4294901760
        %v852 = vsub.f32 %v850, %v851
        %v853 = vand.u32 %v852, 4294901760
        %854 = vmatpush1.msra.mxu0 %v853
        %855 = vmatprep.subr.mxu0 0.0
        %v856 = vand.u32 %v402, 4294901760
        %v857 = vsub.f32 %v402, %v856
        %v858 = vand.u32 %v857, 4294901760
        %v859 = vsub.f32 %v857, %v858
        %v860 = vand.u32 %v859, 4294901760
        %861 = vmatpush1.msra.mxu0 %v860
        %862 = vmatprep.subr.mxu0 0.0
        %v863 = vand.u32 %v403, 4294901760
        %v864 = vsub.f32 %v403, %v863
        %v865 = vand.u32 %v864, 4294901760
        %v866 = vsub.f32 %v864, %v865
        %v867 = vand.u32 %v866, 4294901760
        %868 = vmatpush1.msra.mxu0 %v867
        %869 = vmatprep.subr.mxu0 0.0
        %v870 = vand.u32 %v404, 4294901760
        %v871 = vsub.f32 %v404, %v870
        %v872 = vand.u32 %v871, 4294901760
        %v873 = vsub.f32 %v871, %v872
        %v874 = vand.u32 %v873, 4294901760
        %875 = vmatpush1.msra.mxu0 %v874
        %876 = vmatprep.subr.mxu0 0.0
        %v877 = vand.u32 %v405, 4294901760
        %v878 = vsub.f32 %v405, %v877
        %v879 = vand.u32 %v878, 4294901760
        %v880 = vsub.f32 %v878, %v879
        %v881 = vand.u32 %v880, 4294901760
        %882 = vmatpush1.msra.mxu0 %v881
        %883 = vmatprep.subr.mxu0 0.0
        %v884 = vand.u32 %v406, 4294901760
        %v885 = vsub.f32 %v406, %v884
        %v886 = vand.u32 %v885, 4294901760
        %v887 = vsub.f32 %v885, %v886
        %v888 = vand.u32 %v887, 4294901760
        %889 = vmatpush1.msra.mxu0 %v888
        %890 = vmatprep.subr.mxu0 0.0
        %v891 = vand.u32 %v407, 4294901760
        %v892 = vsub.f32 %v407, %v891
        %v893 = vand.u32 %v892, 4294901760
        %v894 = vsub.f32 %v892, %v893
        %v895 = vand.u32 %v894, 4294901760
        %896 = vmatpush1.msra.mxu0 %v895
        %897 = vmatprep.subr.mxu0 0.0
        %v898 = vand.u32 %v408, 4294901760
        %v899 = vsub.f32 %v408, %v898
        %v900 = vand.u32 %v899, 4294901760
        %v901 = vsub.f32 %v899, %v900
        %v902 = vand.u32 %v901, 4294901760
        %903 = vmatpush1.msra.mxu0 %v902
        %904 = vmatprep.subr.mxu0 0.0
        %v905 = vand.u32 %v409, 4294901760
        %v906 = vsub.f32 %v409, %v905
        %v907 = vand.u32 %v906, 4294901760
        %v908 = vsub.f32 %v906, %v907
        %v909 = vand.u32 %v908, 4294901760
        %910 = vmatpush1.msra.mxu0 %v909
        %911 = vmatprep.subr.mxu0 0.0
        %v912 = vand.u32 %v410, 4294901760
        %v913 = vsub.f32 %v410, %v912
        %v914 = vand.u32 %v913, 4294901760
        %v915 = vsub.f32 %v913, %v914
        %v916 = vand.u32 %v915, 4294901760
        %917 = vmatpush1.msra.mxu0 %v916
        %918 = vmatprep.subr.mxu0 0.0
        %v919 = vand.u32 %v411, 4294901760
        %v920 = vsub.f32 %v411, %v919
        %v921 = vand.u32 %v920, 4294901760
        %v922 = vsub.f32 %v920, %v921
        %v923 = vand.u32 %v922, 4294901760
        %924 = vmatpush1.msra.mxu0 %v923
        %925 = vmatprep.subr.mxu0 0.0
        %v926 = vand.u32 %v412, 4294901760
        %v927 = vsub.f32 %v412, %v926
        %v928 = vand.u32 %v927, 4294901760
        %v929 = vsub.f32 %v927, %v928
        %v930 = vand.u32 %v929, 4294901760
        %931 = vmatpush1.msra.mxu0 %v930
        %932 = vmatprep.subr.mxu0 0.0
        %v933 = vand.u32 %v413, 4294901760
        %v934 = vsub.f32 %v413, %v933
        %v935 = vand.u32 %v934, 4294901760
        %v936 = vsub.f32 %v934, %v935
        %v937 = vand.u32 %v936, 4294901760
        %938 = vmatpush1.msra.mxu0 %v937
        %939 = vmatprep.subr.mxu0 0.0
        %v940 = vand.u32 %v414, 4294901760
        %v941 = vsub.f32 %v414, %v940
        %v942 = vand.u32 %v941, 4294901760
        %v943 = vsub.f32 %v941, %v942
        %v944 = vand.u32 %v943, 4294901760
        %945 = vmatpush1.msra.mxu0 %v944
        %946 = vmatprep.subr.mxu0 0.0
        %v947 = vand.u32 %v415, 4294901760
        %v948 = vsub.f32 %v415, %v947
        %v949 = vand.u32 %v948, 4294901760
        %v950 = vsub.f32 %v948, %v949
        %v951 = vand.u32 %v950, 4294901760
        %952 = vmatpush1.msra.mxu0 %v951
        %953 = vmatprep.subr.mxu0 0.0
        %v954 = vand.u32 %v416, 4294901760
        %v955 = vsub.f32 %v416, %v954
        %v956 = vand.u32 %v955, 4294901760
        %v957 = vsub.f32 %v955, %v956
        %v958 = vand.u32 %v957, 4294901760
        %959 = vmatpush1.msra.mxu0 %v958
        %v960 = vand.u32 %v359, 4294901760
        %961 = vmatprep.mubr.f32.mxu0 %v960
        %v962 = vand.u32 %v357, 4294901760
        %963 = vmatmul.mubr.f32.gmra.mrb[0].mxu0 %v962
        %v964 = vpop.f32.mrb[0].mxu0
        %v965 = vadd.f32 %v718, %v964
        %v966 = vpop.f32.mrb[0].mxu0
        %v967 = vand.u32 %v360, 4294901760
        %968 = vmatprep.mubr.f32.mxu0 %v967
        %v969 = vand.u32 %v358, 4294901760
        %970 = vmatmul.mubr.f32.gmra.mrb[0].mxu0 %v969
        %v971 = vpop.f32.mrb[0].mxu0
        %v972 = vadd.f32 %v733, %v971
        %v973 = vpop.f32.mrb[0].mxu0
        %974 = vdwg.mxu0
        %975 = vmatprep.subr.mxu0 0.0
        %v976 = vand.u32 %v385, 4294901760
        %v977 = vsub.f32 %v385, %v976
        %978 = vmatpush1.msra.mxu0 %v977
        %979 = vmatprep.subr.mxu0 0.0
        %v980 = vand.u32 %v386, 4294901760
        %v981 = vsub.f32 %v386, %v980
        %982 = vmatpush1.msra.mxu0 %v981
        %983 = vmatprep.subr.mxu0 0.0
        %v984 = vand.u32 %v387, 4294901760
        %v985 = vsub.f32 %v387, %v984
        %986 = vmatpush1.msra.mxu0 %v985
        %987 = vmatprep.subr.mxu0 0.0
        %v988 = vand.u32 %v388, 4294901760
        %v989 = vsub.f32 %v388, %v988
        %990 = vmatpush1.msra.mxu0 %v989
        %991 = vmatprep.subr.mxu0 0.0
        %v992 = vand.u32 %v389, 4294901760
        %v993 = vsub.f32 %v389, %v992
        %994 = vmatpush1.msra.mxu0 %v993
        %995 = vmatprep.subr.mxu0 0.0
        %v996 = vand.u32 %v390, 4294901760
        %v997 = vsub.f32 %v390, %v996
        %998 = vmatpush1.msra.mxu0 %v997
        %999 = vmatprep.subr.mxu0 0.0
        %v1000 = vand.u32 %v391, 4294901760
        %v1001 = vsub.f32 %v391, %v1000
        %1002 = vmatpush1.msra.mxu0 %v1001
        %1003 = vmatprep.subr.mxu0 0.0
        %v1004 = vand.u32 %v392, 4294901760
        %v1005 = vsub.f32 %v392, %v1004
        %1006 = vmatpush1.msra.mxu0 %v1005
        %1007 = vmatprep.subr.mxu0 0.0
        %v1008 = vand.u32 %v393, 4294901760
        %v1009 = vsub.f32 %v393, %v1008
        %1010 = vmatpush1.msra.mxu0 %v1009
        %1011 = vmatprep.subr.mxu0 0.0
        %v1012 = vand.u32 %v394, 4294901760
        %v1013 = vsub.f32 %v394, %v1012
        %1014 = vmatpush1.msra.mxu0 %v1013
        %1015 = vmatprep.subr.mxu0 0.0
        %v1016 = vand.u32 %v395, 4294901760
        %v1017 = vsub.f32 %v395, %v1016
        %1018 = vmatpush1.msra.mxu0 %v1017
        %1019 = vmatprep.subr.mxu0 0.0
        %v1020 = vand.u32 %v396, 4294901760
        %v1021 = vsub.f32 %v396, %v1020
        %1022 = vmatpush1.msra.mxu0 %v1021
        %1023 = vmatprep.subr.mxu0 0.0
        %v1024 = vand.u32 %v397, 4294901760
        %v1025 = vsub.f32 %v397, %v1024
        %1026 = vmatpush1.msra.mxu0 %v1025
        %1027 = vmatprep.subr.mxu0 0.0
        %v1028 = vand.u32 %v398, 4294901760
        %v1029 = vsub.f32 %v398, %v1028
        %1030 = vmatpush1.msra.mxu0 %v1029
        %1031 = vmatprep.subr.mxu0 0.0
        %v1032 = vand.u32 %v399, 4294901760
        %v1033 = vsub.f32 %v399, %v1032
        %1034 = vmatpush1.msra.mxu0 %v1033
        %1035 = vmatprep.subr.mxu0 0.0
        %v1036 = vand.u32 %v400, 4294901760
        %v1037 = vsub.f32 %v400, %v1036
        %1038 = vmatpush1.msra.mxu0 %v1037
        %1039 = vmatprep.subr.mxu0 0.0
        %v1040 = vand.u32 %v401, 4294901760
        %v1041 = vsub.f32 %v401, %v1040
        %1042 = vmatpush1.msra.mxu0 %v1041
        %1043 = vmatprep.subr.mxu0 0.0
        %v1044 = vand.u32 %v402, 4294901760
        %v1045 = vsub.f32 %v402, %v1044
        %1046 = vmatpush1.msra.mxu0 %v1045
        %1047 = vmatprep.subr.mxu0 0.0
        %v1048 = vand.u32 %v403, 4294901760
        %v1049 = vsub.f32 %v403, %v1048
        %1050 = vmatpush1.msra.mxu0 %v1049
        %1051 = vmatprep.subr.mxu0 0.0
        %v1052 = vand.u32 %v404, 4294901760
        %v1053 = vsub.f32 %v404, %v1052
        %1054 = vmatpush1.msra.mxu0 %v1053
        %1055 = vmatprep.subr.mxu0 0.0
        %v1056 = vand.u32 %v405, 4294901760
        %v1057 = vsub.f32 %v405, %v1056
        %1058 = vmatpush1.msra.mxu0 %v1057
        %1059 = vmatprep.subr.mxu0 0.0
        %v1060 = vand.u32 %v406, 4294901760
        %v1061 = vsub.f32 %v406, %v1060
        %1062 = vmatpush1.msra.mxu0 %v1061
        %1063 = vmatprep.subr.mxu0 0.0
        %v1064 = vand.u32 %v407, 4294901760
        %v1065 = vsub.f32 %v407, %v1064
        %1066 = vmatpush1.msra.mxu0 %v1065
        %1067 = vmatprep.subr.mxu0 0.0
        %v1068 = vand.u32 %v408, 4294901760
        %v1069 = vsub.f32 %v408, %v1068
        %1070 = vmatpush1.msra.mxu0 %v1069
        %1071 = vmatprep.subr.mxu0 0.0
        %v1072 = vand.u32 %v409, 4294901760
        %v1073 = vsub.f32 %v409, %v1072
        %1074 = vmatpush1.msra.mxu0 %v1073
        %1075 = vmatprep.subr.mxu0 0.0
        %v1076 = vand.u32 %v410, 4294901760
        %v1077 = vsub.f32 %v410, %v1076
        %1078 = vmatpush1.msra.mxu0 %v1077
        %1079 = vmatprep.subr.mxu0 0.0
        %v1080 = vand.u32 %v411, 4294901760
        %v1081 = vsub.f32 %v411, %v1080
        %1082 = vmatpush1.msra.mxu0 %v1081
        %1083 = vmatprep.subr.mxu0 0.0
        %v1084 = vand.u32 %v412, 4294901760
        %v1085 = vsub.f32 %v412, %v1084
        %1086 = vmatpush1.msra.mxu0 %v1085
        %1087 = vmatprep.subr.mxu0 0.0
        %v1088 = vand.u32 %v413, 4294901760
        %v1089 = vsub.f32 %v413, %v1088
        %1090 = vmatpush1.msra.mxu0 %v1089
        %1091 = vmatprep.subr.mxu0 0.0
        %v1092 = vand.u32 %v414, 4294901760
        %v1093 = vsub.f32 %v414, %v1092
        %1094 = vmatpush1.msra.mxu0 %v1093
        %1095 = vmatprep.subr.mxu0 0.0
        %v1096 = vand.u32 %v415, 4294901760
        %v1097 = vsub.f32 %v415, %v1096
        %1098 = vmatpush1.msra.mxu0 %v1097
        %1099 = vmatprep.subr.mxu0 0.0
        %v1100 = vand.u32 %v416, 4294901760
        %v1101 = vsub.f32 %v416, %v1100
        %1102 = vmatpush1.msra.mxu0 %v1101
        %v1103 = vand.u32 %v359, 4294901760
        %v1104 = vsub.f32 %v359, %v1103
        %1105 = vmatprep.mubr.f32.mxu0 %v1104
        %v1106 = vand.u32 %v357, 4294901760
        %v1107 = vsub.f32 %v357, %v1106
        %1108 = vmatmul.mubr.f32.gmra.mrb[0].mxu0 %v1107
        %v1109 = vpop.f32.mrb[0].mxu0
        %v1110 = vadd.f32 %v965, %v1109
        %v1111 = vpop.f32.mrb[0].mxu0
        %v1112 = vand.u32 %v360, 4294901760
        %v1113 = vsub.f32 %v360, %v1112
        %1114 = vmatprep.mubr.f32.mxu0 %v1113
        %v1115 = vand.u32 %v358, 4294901760
        %v1116 = vsub.f32 %v358, %v1115
        %1117 = vmatmul.mubr.f32.gmra.mrb[0].mxu0 %v1116
        %v1118 = vpop.f32.mrb[0].mxu0
        %v1119 = vadd.f32 %v972, %v1118
        %v1120 = vpop.f32.mrb[0].mxu0
        %1121 = vdwg.mxu0
        %1122 = vmatprep.subr.mxu0 0.0
        %v1123 = vand.u32 %v385, 4294901760
        %1124 = vmatpush1.msra.mxu0 %v1123
        %1125 = vmatprep.subr.mxu0 0.0
        %v1126 = vand.u32 %v386, 4294901760
        %1127 = vmatpush1.msra.mxu0 %v1126
        %1128 = vmatprep.subr.mxu0 0.0
        %v1129 = vand.u32 %v387, 4294901760
        %1130 = vmatpush1.msra.mxu0 %v1129
        %1131 = vmatprep.subr.mxu0 0.0
        %v1132 = vand.u32 %v388, 4294901760
        %1133 = vmatpush1.msra.mxu0 %v1132
        %1134 = vmatprep.subr.mxu0 0.0
        %v1135 = vand.u32 %v389, 4294901760
        %1136 = vmatpush1.msra.mxu0 %v1135
        %1137 = vmatprep.subr.mxu0 0.0
        %v1138 = vand.u32 %v390, 4294901760
        %1139 = vmatpush1.msra.mxu0 %v1138
        %1140 = vmatprep.subr.mxu0 0.0
        %v1141 = vand.u32 %v391, 4294901760
        %1142 = vmatpush1.msra.mxu0 %v1141
        %1143 = vmatprep.subr.mxu0 0.0
        %v1144 = vand.u32 %v392, 4294901760
        %1145 = vmatpush1.msra.mxu0 %v1144
        %1146 = vmatprep.subr.mxu0 0.0
        %v1147 = vand.u32 %v393, 4294901760
        %1148 = vmatpush1.msra.mxu0 %v1147
        %1149 = vmatprep.subr.mxu0 0.0
        %v1150 = vand.u32 %v394, 4294901760
        %1151 = vmatpush1.msra.mxu0 %v1150
        %1152 = vmatprep.subr.mxu0 0.0
        %v1153 = vand.u32 %v395, 4294901760
        %1154 = vmatpush1.msra.mxu0 %v1153
        %1155 = vmatprep.subr.mxu0 0.0
        %v1156 = vand.u32 %v396, 4294901760
        %1157 = vmatpush1.msra.mxu0 %v1156
        %1158 = vmatprep.subr.mxu0 0.0
        %v1159 = vand.u32 %v397, 4294901760
        %1160 = vmatpush1.msra.mxu0 %v1159
        %1161 = vmatprep.subr.mxu0 0.0
        %v1162 = vand.u32 %v398, 4294901760
        %1163 = vmatpush1.msra.mxu0 %v1162
        %1164 = vmatprep.subr.mxu0 0.0
        %v1165 = vand.u32 %v399, 4294901760
        %1166 = vmatpush1.msra.mxu0 %v1165
        %1167 = vmatprep.subr.mxu0 0.0
        %v1168 = vand.u32 %v400, 4294901760
        %1169 = vmatpush1.msra.mxu0 %v1168
        %1170 = vmatprep.subr.mxu0 0.0
        %v1171 = vand.u32 %v401, 4294901760
        %1172 = vmatpush1.msra.mxu0 %v1171
        %1173 = vmatprep.subr.mxu0 0.0
        %v1174 = vand.u32 %v402, 4294901760
        %1175 = vmatpush1.msra.mxu0 %v1174
        %1176 = vmatprep.subr.mxu0 0.0
        %v1177 = vand.u32 %v403, 4294901760
        %1178 = vmatpush1.msra.mxu0 %v1177
        %1179 = vmatprep.subr.mxu0 0.0
        %v1180 = vand.u32 %v404, 4294901760
        %1181 = vmatpush1.msra.mxu0 %v1180
        %1182 = vmatprep.subr.mxu0 0.0
        %v1183 = vand.u32 %v405, 4294901760
        %1184 = vmatpush1.msra.mxu0 %v1183
        %1185 = vmatprep.subr.mxu0 0.0
        %v1186 = vand.u32 %v406, 4294901760
        %1187 = vmatpush1.msra.mxu0 %v1186
        %1188 = vmatprep.subr.mxu0 0.0
        %v1189 = vand.u32 %v407, 4294901760
        %1190 = vmatpush1.msra.mxu0 %v1189
        %1191 = vmatprep.subr.mxu0 0.0
        %v1192 = vand.u32 %v408, 4294901760
        %1193 = vmatpush1.msra.mxu0 %v1192
        %1194 = vmatprep.subr.mxu0 0.0
        %v1195 = vand.u32 %v409, 4294901760
        %1196 = vmatpush1.msra.mxu0 %v1195
        %1197 = vmatprep.subr.mxu0 0.0
        %v1198 = vand.u32 %v410, 4294901760
        %1199 = vmatpush1.msra.mxu0 %v1198
        %1200 = vmatprep.subr.mxu0 0.0
        %v1201 = vand.u32 %v411, 4294901760
        %1202 = vmatpush1.msra.mxu0 %v1201
        %1203 = vmatprep.subr.mxu0 0.0
        %v1204 = vand.u32 %v412, 4294901760
        %1205 = vmatpush1.msra.mxu0 %v1204
        %1206 = vmatprep.subr.mxu0 0.0
        %v1207 = vand.u32 %v413, 4294901760
        %1208 = vmatpush1.msra.mxu0 %v1207
        %1209 = vmatprep.subr.mxu0 0.0
        %v1210 = vand.u32 %v414, 4294901760
        %1211 = vmatpush1.msra.mxu0 %v1210
        %1212 = vmatprep.subr.mxu0 0.0
        %v1213 = vand.u32 %v415, 4294901760
        %1214 = vmatpush1.msra.mxu0 %v1213
        %1215 = vmatprep.subr.mxu0 0.0
        %v1216 = vand.u32 %v416, 4294901760
        %1217 = vmatpush1.msra.mxu0 %v1216
        %v1218 = vand.u32 %v359, 4294901760
        %v1219 = vsub.f32 %v359, %v1218
        %v1220 = vand.u32 %v1219, 4294901760
        %1221 = vmatprep.mubr.f32.mxu0 %v1220
        %v1222 = vand.u32 %v357, 4294901760
        %v1223 = vsub.f32 %v357, %v1222
        %v1224 = vand.u32 %v1223, 4294901760
        %1225 = vmatmul.mubr.f32.gmra.mrb[0].mxu0 %v1224
        %v1226 = vpop.f32.mrb[0].mxu0
        %v1227 = vadd.f32 %v1110, %v1226
        %v1228 = vpop.f32.mrb[0].mxu0
        %v1229 = vand.u32 %v360, 4294901760
        %v1230 = vsub.f32 %v360, %v1229
        %v1231 = vand.u32 %v1230, 4294901760
        %1232 = vmatprep.mubr.f32.mxu0 %v1231
        %v1233 = vand.u32 %v358, 4294901760
        %v1234 = vsub.f32 %v358, %v1233
        %v1235 = vand.u32 %v1234, 4294901760
        %1236 = vmatmul.mubr.f32.gmra.mrb[0].mxu0 %v1235
        %v1237 = vpop.f32.mrb[0].mxu0
        %v1238 = vadd.f32 %v1119, %v1237
        %v1239 = vpop.f32.mrb[0].mxu0
        %1240 = vdwg.mxu0
        %1241 = vmatprep.subr.mxu0 0.0
        %v1242 = vand.u32 %v385, 4294901760
        %v1243 = vsub.f32 %v385, %v1242
        %v1244 = vand.u32 %v1243, 4294901760
        %1245 = vmatpush1.msra.mxu0 %v1244
        %1246 = vmatprep.subr.mxu0 0.0
        %v1247 = vand.u32 %v386, 4294901760
        %v1248 = vsub.f32 %v386, %v1247
        %v1249 = vand.u32 %v1248, 4294901760
        %1250 = vmatpush1.msra.mxu0 %v1249
        %1251 = vmatprep.subr.mxu0 0.0
        %v1252 = vand.u32 %v387, 4294901760
        %v1253 = vsub.f32 %v387, %v1252
        %v1254 = vand.u32 %v1253, 4294901760
        %1255 = vmatpush1.msra.mxu0 %v1254
        %1256 = vmatprep.subr.mxu0 0.0
        %v1257 = vand.u32 %v388, 4294901760
        %v1258 = vsub.f32 %v388, %v1257
        %v1259 = vand.u32 %v1258, 4294901760
        %1260 = vmatpush1.msra.mxu0 %v1259
        %1261 = vmatprep.subr.mxu0 0.0
        %v1262 = vand.u32 %v389, 4294901760
        %v1263 = vsub.f32 %v389, %v1262
        %v1264 = vand.u32 %v1263, 4294901760
        %1265 = vmatpush1.msra.mxu0 %v1264
        %1266 = vmatprep.subr.mxu0 0.0
        %v1267 = vand.u32 %v390, 4294901760
        %v1268 = vsub.f32 %v390, %v1267
        %v1269 = vand.u32 %v1268, 4294901760
        %1270 = vmatpush1.msra.mxu0 %v1269
        %1271 = vmatprep.subr.mxu0 0.0
        %v1272 = vand.u32 %v391, 4294901760
        %v1273 = vsub.f32 %v391, %v1272
        %v1274 = vand.u32 %v1273, 4294901760
        %1275 = vmatpush1.msra.mxu0 %v1274
        %1276 = vmatprep.subr.mxu0 0.0
        %v1277 = vand.u32 %v392, 4294901760
        %v1278 = vsub.f32 %v392, %v1277
        %v1279 = vand.u32 %v1278, 4294901760
        %1280 = vmatpush1.msra.mxu0 %v1279
        %1281 = vmatprep.subr.mxu0 0.0
        %v1282 = vand.u32 %v393, 4294901760
        %v1283 = vsub.f32 %v393, %v1282
        %v1284 = vand.u32 %v1283, 4294901760
        %1285 = vmatpush1.msra.mxu0 %v1284
        %1286 = vmatprep.subr.mxu0 0.0
        %v1287 = vand.u32 %v394, 4294901760
        %v1288 = vsub.f32 %v394, %v1287
        %v1289 = vand.u32 %v1288, 4294901760
        %1290 = vmatpush1.msra.mxu0 %v1289
        %1291 = vmatprep.subr.mxu0 0.0
        %v1292 = vand.u32 %v395, 4294901760
        %v1293 = vsub.f32 %v395, %v1292
        %v1294 = vand.u32 %v1293, 4294901760
        %1295 = vmatpush1.msra.mxu0 %v1294
        %1296 = vmatprep.subr.mxu0 0.0
        %v1297 = vand.u32 %v396, 4294901760
        %v1298 = vsub.f32 %v396, %v1297
        %v1299 = vand.u32 %v1298, 4294901760
        %1300 = vmatpush1.msra.mxu0 %v1299
        %1301 = vmatprep.subr.mxu0 0.0
        %v1302 = vand.u32 %v397, 4294901760
        %v1303 = vsub.f32 %v397, %v1302
        %v1304 = vand.u32 %v1303, 4294901760
        %1305 = vmatpush1.msra.mxu0 %v1304
        %1306 = vmatprep.subr.mxu0 0.0
        %v1307 = vand.u32 %v398, 4294901760
        %v1308 = vsub.f32 %v398, %v1307
        %v1309 = vand.u32 %v1308, 4294901760
        %1310 = vmatpush1.msra.mxu0 %v1309
        %1311 = vmatprep.subr.mxu0 0.0
        %v1312 = vand.u32 %v399, 4294901760
        %v1313 = vsub.f32 %v399, %v1312
        %v1314 = vand.u32 %v1313, 4294901760
        %1315 = vmatpush1.msra.mxu0 %v1314
        %1316 = vmatprep.subr.mxu0 0.0
        %v1317 = vand.u32 %v400, 4294901760
        %v1318 = vsub.f32 %v400, %v1317
        %v1319 = vand.u32 %v1318, 4294901760
        %1320 = vmatpush1.msra.mxu0 %v1319
        %1321 = vmatprep.subr.mxu0 0.0
        %v1322 = vand.u32 %v401, 4294901760
        %v1323 = vsub.f32 %v401, %v1322
        %v1324 = vand.u32 %v1323, 4294901760
        %1325 = vmatpush1.msra.mxu0 %v1324
        %1326 = vmatprep.subr.mxu0 0.0
        %v1327 = vand.u32 %v402, 4294901760
        %v1328 = vsub.f32 %v402, %v1327
        %v1329 = vand.u32 %v1328, 4294901760
        %1330 = vmatpush1.msra.mxu0 %v1329
        %1331 = vmatprep.subr.mxu0 0.0
        %v1332 = vand.u32 %v403, 4294901760
        %v1333 = vsub.f32 %v403, %v1332
        %v1334 = vand.u32 %v1333, 4294901760
        %1335 = vmatpush1.msra.mxu0 %v1334
        %1336 = vmatprep.subr.mxu0 0.0
        %v1337 = vand.u32 %v404, 4294901760
        %v1338 = vsub.f32 %v404, %v1337
        %v1339 = vand.u32 %v1338, 4294901760
        %1340 = vmatpush1.msra.mxu0 %v1339
        %1341 = vmatprep.subr.mxu0 0.0
        %v1342 = vand.u32 %v405, 4294901760
        %v1343 = vsub.f32 %v405, %v1342
        %v1344 = vand.u32 %v1343, 4294901760
        %1345 = vmatpush1.msra.mxu0 %v1344
        %1346 = vmatprep.subr.mxu0 0.0
        %v1347 = vand.u32 %v406, 4294901760
        %v1348 = vsub.f32 %v406, %v1347
        %v1349 = vand.u32 %v1348, 4294901760
        %1350 = vmatpush1.msra.mxu0 %v1349
        %1351 = vmatprep.subr.mxu0 0.0
        %v1352 = vand.u32 %v407, 4294901760
        %v1353 = vsub.f32 %v407, %v1352
        %v1354 = vand.u32 %v1353, 4294901760
        %1355 = vmatpush1.msra.mxu0 %v1354
        %1356 = vmatprep.subr.mxu0 0.0
        %v1357 = vand.u32 %v408, 4294901760
        %v1358 = vsub.f32 %v408, %v1357
        %v1359 = vand.u32 %v1358, 4294901760
        %1360 = vmatpush1.msra.mxu0 %v1359
        %1361 = vmatprep.subr.mxu0 0.0
        %v1362 = vand.u32 %v409, 4294901760
        %v1363 = vsub.f32 %v409, %v1362
        %v1364 = vand.u32 %v1363, 4294901760
        %1365 = vmatpush1.msra.mxu0 %v1364
        %1366 = vmatprep.subr.mxu0 0.0
        %v1367 = vand.u32 %v410, 4294901760
        %v1368 = vsub.f32 %v410, %v1367
        %v1369 = vand.u32 %v1368, 4294901760
        %1370 = vmatpush1.msra.mxu0 %v1369
        %1371 = vmatprep.subr.mxu0 0.0
        %v1372 = vand.u32 %v411, 4294901760
        %v1373 = vsub.f32 %v411, %v1372
        %v1374 = vand.u32 %v1373, 4294901760
        %1375 = vmatpush1.msra.mxu0 %v1374
        %1376 = vmatprep.subr.mxu0 0.0
        %v1377 = vand.u32 %v412, 4294901760
        %v1378 = vsub.f32 %v412, %v1377
        %v1379 = vand.u32 %v1378, 4294901760
        %1380 = vmatpush1.msra.mxu0 %v1379
        %1381 = vmatprep.subr.mxu0 0.0
        %v1382 = vand.u32 %v413, 4294901760
        %v1383 = vsub.f32 %v413, %v1382
        %v1384 = vand.u32 %v1383, 4294901760
        %1385 = vmatpush1.msra.mxu0 %v1384
        %1386 = vmatprep.subr.mxu0 0.0
        %v1387 = vand.u32 %v414, 4294901760
        %v1388 = vsub.f32 %v414, %v1387
        %v1389 = vand.u32 %v1388, 4294901760
        %1390 = vmatpush1.msra.mxu0 %v1389
        %1391 = vmatprep.subr.mxu0 0.0
        %v1392 = vand.u32 %v415, 4294901760
        %v1393 = vsub.f32 %v415, %v1392
        %v1394 = vand.u32 %v1393, 4294901760
        %1395 = vmatpush1.msra.mxu0 %v1394
        %1396 = vmatprep.subr.mxu0 0.0
        %v1397 = vand.u32 %v416, 4294901760
        %v1398 = vsub.f32 %v416, %v1397
        %v1399 = vand.u32 %v1398, 4294901760
        %1400 = vmatpush1.msra.mxu0 %v1399
        %v1401 = vand.u32 %v359, 4294901760
        %1402 = vmatprep.mubr.f32.mxu0 %v1401
        %v1403 = vand.u32 %v357, 4294901760
        %1404 = vmatmul.mubr.f32.gmra.mrb[0].mxu0 %v1403
        %v1405 = vpop.f32.mrb[0].mxu0
        %v1406 = vadd.f32 %v1227, %v1405
        %v1407 = vpop.f32.mrb[0].mxu0
        %v1408 = vand.u32 %v360, 4294901760
        %1409 = vmatprep.mubr.f32.mxu0 %v1408
        %v1410 = vand.u32 %v358, 4294901760
        %1411 = vmatmul.mubr.f32.gmra.mrb[0].mxu0 %v1410
        %v1412 = vpop.f32.mrb[0].mxu0
        %v1413 = vadd.f32 %v1238, %v1412
        %v1414 = vpop.f32.mrb[0].mxu0
        %1415 = vdwg.mxu0
        %1416 = vmatprep.subr.mxu0 0.0
        %v1417 = vand.u32 %v385, 4294901760
        %1418 = vmatpush1.msra.mxu0 %v1417
        %1419 = vmatprep.subr.mxu0 0.0
        %v1420 = vand.u32 %v386, 4294901760
        %1421 = vmatpush1.msra.mxu0 %v1420
        %1422 = vmatprep.subr.mxu0 0.0
        %v1423 = vand.u32 %v387, 4294901760
        %1424 = vmatpush1.msra.mxu0 %v1423
        %1425 = vmatprep.subr.mxu0 0.0
        %v1426 = vand.u32 %v388, 4294901760
        %1427 = vmatpush1.msra.mxu0 %v1426
        %1428 = vmatprep.subr.mxu0 0.0
        %v1429 = vand.u32 %v389, 4294901760
        %1430 = vmatpush1.msra.mxu0 %v1429
        %1431 = vmatprep.subr.mxu0 0.0
        %v1432 = vand.u32 %v390, 4294901760
        %1433 = vmatpush1.msra.mxu0 %v1432
        %1434 = vmatprep.subr.mxu0 0.0
        %v1435 = vand.u32 %v391, 4294901760
        %1436 = vmatpush1.msra.mxu0 %v1435
        %1437 = vmatprep.subr.mxu0 0.0
        %v1438 = vand.u32 %v392, 4294901760
        %1439 = vmatpush1.msra.mxu0 %v1438
        %1440 = vmatprep.subr.mxu0 0.0
        %v1441 = vand.u32 %v393, 4294901760
        %1442 = vmatpush1.msra.mxu0 %v1441
        %1443 = vmatprep.subr.mxu0 0.0
        %v1444 = vand.u32 %v394, 4294901760
        %1445 = vmatpush1.msra.mxu0 %v1444
        %1446 = vmatprep.subr.mxu0 0.0
        %v1447 = vand.u32 %v395, 4294901760
        %1448 = vmatpush1.msra.mxu0 %v1447
        %1449 = vmatprep.subr.mxu0 0.0
        %v1450 = vand.u32 %v396, 4294901760
        %1451 = vmatpush1.msra.mxu0 %v1450
        %1452 = vmatprep.subr.mxu0 0.0
        %v1453 = vand.u32 %v397, 4294901760
        %1454 = vmatpush1.msra.mxu0 %v1453
        %1455 = vmatprep.subr.mxu0 0.0
        %v1456 = vand.u32 %v398, 4294901760
        %1457 = vmatpush1.msra.mxu0 %v1456
        %1458 = vmatprep.subr.mxu0 0.0
        %v1459 = vand.u32 %v399, 4294901760
        %1460 = vmatpush1.msra.mxu0 %v1459
        %1461 = vmatprep.subr.mxu0 0.0
        %v1462 = vand.u32 %v400, 4294901760
        %1463 = vmatpush1.msra.mxu0 %v1462
        %1464 = vmatprep.subr.mxu0 0.0
        %v1465 = vand.u32 %v401, 4294901760
        %1466 = vmatpush1.msra.mxu0 %v1465
        %1467 = vmatprep.subr.mxu0 0.0
        %v1468 = vand.u32 %v402, 4294901760
        %1469 = vmatpush1.msra.mxu0 %v1468
        %1470 = vmatprep.subr.mxu0 0.0
        %v1471 = vand.u32 %v403, 4294901760
        %1472 = vmatpush1.msra.mxu0 %v1471
        %1473 = vmatprep.subr.mxu0 0.0
        %v1474 = vand.u32 %v404, 4294901760
        %1475 = vmatpush1.msra.mxu0 %v1474
        %1476 = vmatprep.subr.mxu0 0.0
        %v1477 = vand.u32 %v405, 4294901760
        %1478 = vmatpush1.msra.mxu0 %v1477
        %1479 = vmatprep.subr.mxu0 0.0
        %v1480 = vand.u32 %v406, 4294901760
        %1481 = vmatpush1.msra.mxu0 %v1480
        %1482 = vmatprep.subr.mxu0 0.0
        %v1483 = vand.u32 %v407, 4294901760
        %1484 = vmatpush1.msra.mxu0 %v1483
        %1485 = vmatprep.subr.mxu0 0.0
        %v1486 = vand.u32 %v408, 4294901760
        %1487 = vmatpush1.msra.mxu0 %v1486
        %1488 = vmatprep.subr.mxu0 0.0
        %v1489 = vand.u32 %v409, 4294901760
        %1490 = vmatpush1.msra.mxu0 %v1489
        %1491 = vmatprep.subr.mxu0 0.0
        %v1492 = vand.u32 %v410, 4294901760
        %1493 = vmatpush1.msra.mxu0 %v1492
        %1494 = vmatprep.subr.mxu0 0.0
        %v1495 = vand.u32 %v411, 4294901760
        %1496 = vmatpush1.msra.mxu0 %v1495
        %1497 = vmatprep.subr.mxu0 0.0
        %v1498 = vand.u32 %v412, 4294901760
        %1499 = vmatpush1.msra.mxu0 %v1498
        %1500 = vmatprep.subr.mxu0 0.0
        %v1501 = vand.u32 %v413, 4294901760
        %1502 = vmatpush1.msra.mxu0 %v1501
        %1503 = vmatprep.subr.mxu0 0.0
        %v1504 = vand.u32 %v414, 4294901760
        %1505 = vmatpush1.msra.mxu0 %v1504
        %1506 = vmatprep.subr.mxu0 0.0
        %v1507 = vand.u32 %v415, 4294901760
        %1508 = vmatpush1.msra.mxu0 %v1507
        %1509 = vmatprep.subr.mxu0 0.0
        %v1510 = vand.u32 %v416, 4294901760
        %1511 = vmatpush1.msra.mxu0 %v1510
        %v1512 = vand.u32 %v359, 4294901760
        %1513 = vmatprep.mubr.f32.mxu0 %v1512
        %v1514 = vand.u32 %v357, 4294901760
        %1515 = vmatmul.mubr.f32.gmra.mrb[0].mxu0 %v1514
        %v1516 = vpop.f32.mrb[0].mxu0
        %v1517 = vadd.f32 %v1406, %v1516
        %v1518 = vpop.f32.mrb[0].mxu0
        %v1519 = vand.u32 %v360, 4294901760
        %1520 = vmatprep.mubr.f32.mxu0 %v1519
        %v1521 = vand.u32 %v358, 4294901760
        %1522 = vmatmul.mubr.f32.gmra.mrb[0].mxu0 %v1521
        %v1523 = vpop.f32.mrb[0].mxu0
        %v1524 = vadd.f32 %v1413, %v1523
        %v1525 = vpop.f32.mrb[0].mxu0
        %1526 = vdwg.mxu0
        %1527 = vmatprep.subr.mxu0 0.0
        %v1528 = vand.u32 %v417, 4294901760
        %1529 = vmatpush1.msra.mxu0 %v1528
        %1530 = vmatprep.subr.mxu0 0.0
        %v1531 = vand.u32 %v418, 4294901760
        %1532 = vmatpush1.msra.mxu0 %v1531
        %1533 = vmatprep.subr.mxu0 0.0
        %v1534 = vand.u32 %v419, 4294901760
        %1535 = vmatpush1.msra.mxu0 %v1534
        %1536 = vmatprep.subr.mxu0 0.0
        %v1537 = vand.u32 %v420, 4294901760
        %1538 = vmatpush1.msra.mxu0 %v1537
        %1539 = vmatprep.subr.mxu0 0.0
        %v1540 = vand.u32 %v421, 4294901760
        %1541 = vmatpush1.msra.mxu0 %v1540
        %1542 = vmatprep.subr.mxu0 0.0
        %v1543 = vand.u32 %v422, 4294901760
        %1544 = vmatpush1.msra.mxu0 %v1543
        %1545 = vmatprep.subr.mxu0 0.0
        %v1546 = vand.u32 %v423, 4294901760
        %1547 = vmatpush1.msra.mxu0 %v1546
        %1548 = vmatprep.subr.mxu0 0.0
        %v1549 = vand.u32 %v424, 4294901760
        %1550 = vmatpush1.msra.mxu0 %v1549
        %1551 = vmatprep.subr.mxu0 0.0
        %v1552 = vand.u32 %v425, 4294901760
        %1553 = vmatpush1.msra.mxu0 %v1552
        %1554 = vmatprep.subr.mxu0 0.0
        %v1555 = vand.u32 %v426, 4294901760
        %1556 = vmatpush1.msra.mxu0 %v1555
        %1557 = vmatprep.subr.mxu0 0.0
        %v1558 = vand.u32 %v427, 4294901760
        %1559 = vmatpush1.msra.mxu0 %v1558
        %1560 = vmatprep.subr.mxu0 0.0
        %v1561 = vand.u32 %v428, 4294901760
        %1562 = vmatpush1.msra.mxu0 %v1561
        %1563 = vmatprep.subr.mxu0 0.0
        %v1564 = vand.u32 %v429, 4294901760
        %1565 = vmatpush1.msra.mxu0 %v1564
        %1566 = vmatprep.subr.mxu0 0.0
        %v1567 = vand.u32 %v430, 4294901760
        %1568 = vmatpush1.msra.mxu0 %v1567
        %1569 = vmatprep.subr.mxu0 0.0
        %v1570 = vand.u32 %v431, 4294901760
        %1571 = vmatpush1.msra.mxu0 %v1570
        %1572 = vmatprep.subr.mxu0 0.0
        %v1573 = vand.u32 %v432, 4294901760
        %1574 = vmatpush1.msra.mxu0 %v1573
        %1575 = vmatprep.subr.mxu0 0.0
        %v1576 = vand.u32 %v433, 4294901760
        %1577 = vmatpush1.msra.mxu0 %v1576
        %1578 = vmatprep.subr.mxu0 0.0
        %v1579 = vand.u32 %v434, 4294901760
        %1580 = vmatpush1.msra.mxu0 %v1579
        %1581 = vmatprep.subr.mxu0 0.0
        %v1582 = vand.u32 %v435, 4294901760
        %1583 = vmatpush1.msra.mxu0 %v1582
        %1584 = vmatprep.subr.mxu0 0.0
        %v1585 = vand.u32 %v436, 4294901760
        %1586 = vmatpush1.msra.mxu0 %v1585
        %1587 = vmatprep.subr.mxu0 0.0
        %v1588 = vand.u32 %v437, 4294901760
        %1589 = vmatpush1.msra.mxu0 %v1588
        %1590 = vmatprep.subr.mxu0 0.0
        %v1591 = vand.u32 %v438, 4294901760
        %1592 = vmatpush1.msra.mxu0 %v1591
        %1593 = vmatprep.subr.mxu0 0.0
        %v1594 = vand.u32 %v439, 4294901760
        %1595 = vmatpush1.msra.mxu0 %v1594
        %1596 = vmatprep.subr.mxu0 0.0
        %v1597 = vand.u32 %v440, 4294901760
        %1598 = vmatpush1.msra.mxu0 %v1597
        %1599 = vmatprep.subr.mxu0 0.0
        %v1600 = vand.u32 %v441, 4294901760
        %1601 = vmatpush1.msra.mxu0 %v1600
        %1602 = vmatprep.subr.mxu0 0.0
        %v1603 = vand.u32 %v442, 4294901760
        %1604 = vmatpush1.msra.mxu0 %v1603
        %1605 = vmatprep.subr.mxu0 0.0
        %v1606 = vand.u32 %v443, 4294901760
        %1607 = vmatpush1.msra.mxu0 %v1606
        %1608 = vmatprep.subr.mxu0 0.0
        %v1609 = vand.u32 %v444, 4294901760
        %1610 = vmatpush1.msra.mxu0 %v1609
        %1611 = vmatprep.subr.mxu0 0.0
        %v1612 = vand.u32 %v445, 4294901760
        %1613 = vmatpush1.msra.mxu0 %v1612
        %1614 = vmatprep.subr.mxu0 0.0
        %v1615 = vand.u32 %v446, 4294901760
        %1616 = vmatpush1.msra.mxu0 %v1615
        %1617 = vmatprep.subr.mxu0 0.0
        %v1618 = vand.u32 %v447, 4294901760
        %1619 = vmatpush1.msra.mxu0 %v1618
        %1620 = vmatprep.subr.mxu0 0.0
        %v1621 = vand.u32 %v448, 4294901760
        %1622 = vmatpush1.msra.mxu0 %v1621
        %v1623 = vand.u32 %v363, 4294901760
        %v1624 = vsub.f32 %v363, %v1623
        %v1625 = vand.u32 %v1624, 4294901760
        %v1626 = vsub.f32 %v1624, %v1625
        %v1627 = vand.u32 %v1626, 4294901760
        %1628 = vmatprep.mubr.f32.mxu0 %v1627
        %v1629 = vand.u32 %v361, 4294901760
        %v1630 = vsub.f32 %v361, %v1629
        %v1631 = vand.u32 %v1630, 4294901760
        %v1632 = vsub.f32 %v1630, %v1631
        %v1633 = vand.u32 %v1632, 4294901760
        %1634 = vmatmul.mubr.f32.gmra.mrb[0].mxu0 %v1633
        %v1635 = vpop.f32.mrb[0].mxu0
        %v1636 = vadd.f32 %v1517, %v1635
        %v1637 = vpop.f32.mrb[0].mxu0
        %v1638 = vand.u32 %v364, 4294901760
        %v1639 = vsub.f32 %v364, %v1638
        %v1640 = vand.u32 %v1639, 4294901760
        %v1641 = vsub.f32 %v1639, %v1640
        %v1642 = vand.u32 %v1641, 4294901760
        %1643 = vmatprep.mubr.f32.mxu0 %v1642
        %v1644 = vand.u32 %v362, 4294901760
        %v1645 = vsub.f32 %v362, %v1644
        %v1646 = vand.u32 %v1645, 4294901760
        %v1647 = vsub.f32 %v1645, %v1646
        %v1648 = vand.u32 %v1647, 4294901760
        %1649 = vmatmul.mubr.f32.gmra.mrb[0].mxu0 %v1648
        %v1650 = vpop.f32.mrb[0].mxu0
        %v1651 = vadd.f32 %v1524, %v1650
        %v1652 = vpop.f32.mrb[0].mxu0
        %1653 = vdwg.mxu0
        %1654 = vmatprep.subr.mxu0 0.0
        %v1655 = vand.u32 %v417, 4294901760
        %v1656 = vsub.f32 %v417, %v1655
        %v1657 = vand.u32 %v1656, 4294901760
        %v1658 = vsub.f32 %v1656, %v1657
        %v1659 = vand.u32 %v1658, 4294901760
        %1660 = vmatpush1.msra.mxu0 %v1659
        %1661 = vmatprep.subr.mxu0 0.0
        %v1662 = vand.u32 %v418, 4294901760
        %v1663 = vsub.f32 %v418, %v1662
        %v1664 = vand.u32 %v1663, 4294901760
        %v1665 = vsub.f32 %v1663, %v1664
        %v1666 = vand.u32 %v1665, 4294901760
        %1667 = vmatpush1.msra.mxu0 %v1666
        %1668 = vmatprep.subr.mxu0 0.0
        %v1669 = vand.u32 %v419, 4294901760
        %v1670 = vsub.f32 %v419, %v1669
        %v1671 = vand.u32 %v1670, 4294901760
        %v1672 = vsub.f32 %v1670, %v1671
        %v1673 = vand.u32 %v1672, 4294901760
        %1674 = vmatpush1.msra.mxu0 %v1673
        %1675 = vmatprep.subr.mxu0 0.0
        %v1676 = vand.u32 %v420, 4294901760
        %v1677 = vsub.f32 %v420, %v1676
        %v1678 = vand.u32 %v1677, 4294901760
        %v1679 = vsub.f32 %v1677, %v1678
        %v1680 = vand.u32 %v1679, 4294901760
        %1681 = vmatpush1.msra.mxu0 %v1680
        %1682 = vmatprep.subr.mxu0 0.0
        %v1683 = vand.u32 %v421, 4294901760
        %v1684 = vsub.f32 %v421, %v1683
        %v1685 = vand.u32 %v1684, 4294901760
        %v1686 = vsub.f32 %v1684, %v1685
        %v1687 = vand.u32 %v1686, 4294901760
        %1688 = vmatpush1.msra.mxu0 %v1687
        %1689 = vmatprep.subr.mxu0 0.0
        %v1690 = vand.u32 %v422, 4294901760
        %v1691 = vsub.f32 %v422, %v1690
        %v1692 = vand.u32 %v1691, 4294901760
        %v1693 = vsub.f32 %v1691, %v1692
        %v1694 = vand.u32 %v1693, 4294901760
        %1695 = vmatpush1.msra.mxu0 %v1694
        %1696 = vmatprep.subr.mxu0 0.0
        %v1697 = vand.u32 %v423, 4294901760
        %v1698 = vsub.f32 %v423, %v1697
        %v1699 = vand.u32 %v1698, 4294901760
        %v1700 = vsub.f32 %v1698, %v1699
        %v1701 = vand.u32 %v1700, 4294901760
        %1702 = vmatpush1.msra.mxu0 %v1701
        %1703 = vmatprep.subr.mxu0 0.0
        %v1704 = vand.u32 %v424, 4294901760
        %v1705 = vsub.f32 %v424, %v1704
        %v1706 = vand.u32 %v1705, 4294901760
        %v1707 = vsub.f32 %v1705, %v1706
        %v1708 = vand.u32 %v1707, 4294901760
        %1709 = vmatpush1.msra.mxu0 %v1708
        %1710 = vmatprep.subr.mxu0 0.0
        %v1711 = vand.u32 %v425, 4294901760
        %v1712 = vsub.f32 %v425, %v1711
        %v1713 = vand.u32 %v1712, 4294901760
        %v1714 = vsub.f32 %v1712, %v1713
        %v1715 = vand.u32 %v1714, 4294901760
        %1716 = vmatpush1.msra.mxu0 %v1715
        %1717 = vmatprep.subr.mxu0 0.0
        %v1718 = vand.u32 %v426, 4294901760
        %v1719 = vsub.f32 %v426, %v1718
        %v1720 = vand.u32 %v1719, 4294901760
        %v1721 = vsub.f32 %v1719, %v1720
        %v1722 = vand.u32 %v1721, 4294901760
        %1723 = vmatpush1.msra.mxu0 %v1722
        %1724 = vmatprep.subr.mxu0 0.0
        %v1725 = vand.u32 %v427, 4294901760
        %v1726 = vsub.f32 %v427, %v1725
        %v1727 = vand.u32 %v1726, 4294901760
        %v1728 = vsub.f32 %v1726, %v1727
        %v1729 = vand.u32 %v1728, 4294901760
        %1730 = vmatpush1.msra.mxu0 %v1729
        %1731 = vmatprep.subr.mxu0 0.0
        %v1732 = vand.u32 %v428, 4294901760
        %v1733 = vsub.f32 %v428, %v1732
        %v1734 = vand.u32 %v1733, 4294901760
        %v1735 = vsub.f32 %v1733, %v1734
        %v1736 = vand.u32 %v1735, 4294901760
        %1737 = vmatpush1.msra.mxu0 %v1736
        %1738 = vmatprep.subr.mxu0 0.0
        %v1739 = vand.u32 %v429, 4294901760
        %v1740 = vsub.f32 %v429, %v1739
        %v1741 = vand.u32 %v1740, 4294901760
        %v1742 = vsub.f32 %v1740, %v1741
        %v1743 = vand.u32 %v1742, 4294901760
        %1744 = vmatpush1.msra.mxu0 %v1743
        %1745 = vmatprep.subr.mxu0 0.0
        %v1746 = vand.u32 %v430, 4294901760
        %v1747 = vsub.f32 %v430, %v1746
        %v1748 = vand.u32 %v1747, 4294901760
        %v1749 = vsub.f32 %v1747, %v1748
        %v1750 = vand.u32 %v1749, 4294901760
        %1751 = vmatpush1.msra.mxu0 %v1750
        %1752 = vmatprep.subr.mxu0 0.0
        %v1753 = vand.u32 %v431, 4294901760
        %v1754 = vsub.f32 %v431, %v1753
        %v1755 = vand.u32 %v1754, 4294901760
        %v1756 = vsub.f32 %v1754, %v1755
        %v1757 = vand.u32 %v1756, 4294901760
        %1758 = vmatpush1.msra.mxu0 %v1757
        %1759 = vmatprep.subr.mxu0 0.0
        %v1760 = vand.u32 %v432, 4294901760
        %v1761 = vsub.f32 %v432, %v1760
        %v1762 = vand.u32 %v1761, 4294901760
        %v1763 = vsub.f32 %v1761, %v1762
        %v1764 = vand.u32 %v1763, 4294901760
        %1765 = vmatpush1.msra.mxu0 %v1764
        %1766 = vmatprep.subr.mxu0 0.0
        %v1767 = vand.u32 %v433, 4294901760
        %v1768 = vsub.f32 %v433, %v1767
        %v1769 = vand.u32 %v1768, 4294901760
        %v1770 = vsub.f32 %v1768, %v1769
        %v1771 = vand.u32 %v1770, 4294901760
        %1772 = vmatpush1.msra.mxu0 %v1771
        %1773 = vmatprep.subr.mxu0 0.0
        %v1774 = vand.u32 %v434, 4294901760
        %v1775 = vsub.f32 %v434, %v1774
        %v1776 = vand.u32 %v1775, 4294901760
        %v1777 = vsub.f32 %v1775, %v1776
        %v1778 = vand.u32 %v1777, 4294901760
        %1779 = vmatpush1.msra.mxu0 %v1778
        %1780 = vmatprep.subr.mxu0 0.0
        %v1781 = vand.u32 %v435, 4294901760
        %v1782 = vsub.f32 %v435, %v1781
        %v1783 = vand.u32 %v1782, 4294901760
        %v1784 = vsub.f32 %v1782, %v1783
        %v1785 = vand.u32 %v1784, 4294901760
        %1786 = vmatpush1.msra.mxu0 %v1785
        %1787 = vmatprep.subr.mxu0 0.0
        %v1788 = vand.u32 %v436, 4294901760
        %v1789 = vsub.f32 %v436, %v1788
        %v1790 = vand.u32 %v1789, 4294901760
        %v1791 = vsub.f32 %v1789, %v1790
        %v1792 = vand.u32 %v1791, 4294901760
        %1793 = vmatpush1.msra.mxu0 %v1792
        %1794 = vmatprep.subr.mxu0 0.0
        %v1795 = vand.u32 %v437, 4294901760
        %v1796 = vsub.f32 %v437, %v1795
        %v1797 = vand.u32 %v1796, 4294901760
        %v1798 = vsub.f32 %v1796, %v1797
        %v1799 = vand.u32 %v1798, 4294901760
        %1800 = vmatpush1.msra.mxu0 %v1799
        %1801 = vmatprep.subr.mxu0 0.0
        %v1802 = vand.u32 %v438, 4294901760
        %v1803 = vsub.f32 %v438, %v1802
        %v1804 = vand.u32 %v1803, 4294901760
        %v1805 = vsub.f32 %v1803, %v1804
        %v1806 = vand.u32 %v1805, 4294901760
        %1807 = vmatpush1.msra.mxu0 %v1806
        %1808 = vmatprep.subr.mxu0 0.0
        %v1809 = vand.u32 %v439, 4294901760
        %v1810 = vsub.f32 %v439, %v1809
        %v1811 = vand.u32 %v1810, 4294901760
        %v1812 = vsub.f32 %v1810, %v1811
        %v1813 = vand.u32 %v1812, 4294901760
        %1814 = vmatpush1.msra.mxu0 %v1813
        %1815 = vmatprep.subr.mxu0 0.0
        %v1816 = vand.u32 %v440, 4294901760
        %v1817 = vsub.f32 %v440, %v1816
        %v1818 = vand.u32 %v1817, 4294901760
        %v1819 = vsub.f32 %v1817, %v1818
        %v1820 = vand.u32 %v1819, 4294901760
        %1821 = vmatpush1.msra.mxu0 %v1820
        %1822 = vmatprep.subr.mxu0 0.0
        %v1823 = vand.u32 %v441, 4294901760
        %v1824 = vsub.f32 %v441, %v1823
        %v1825 = vand.u32 %v1824, 4294901760
        %v1826 = vsub.f32 %v1824, %v1825
        %v1827 = vand.u32 %v1826, 4294901760
        %1828 = vmatpush1.msra.mxu0 %v1827
        %1829 = vmatprep.subr.mxu0 0.0
        %v1830 = vand.u32 %v442, 4294901760
        %v1831 = vsub.f32 %v442, %v1830
        %v1832 = vand.u32 %v1831, 4294901760
        %v1833 = vsub.f32 %v1831, %v1832
        %v1834 = vand.u32 %v1833, 4294901760
        %1835 = vmatpush1.msra.mxu0 %v1834
        %1836 = vmatprep.subr.mxu0 0.0
        %v1837 = vand.u32 %v443, 4294901760
        %v1838 = vsub.f32 %v443, %v1837
        %v1839 = vand.u32 %v1838, 4294901760
        %v1840 = vsub.f32 %v1838, %v1839
        %v1841 = vand.u32 %v1840, 4294901760
        %1842 = vmatpush1.msra.mxu0 %v1841
        %1843 = vmatprep.subr.mxu0 0.0
        %v1844 = vand.u32 %v444, 4294901760
        %v1845 = vsub.f32 %v444, %v1844
        %v1846 = vand.u32 %v1845, 4294901760
        %v1847 = vsub.f32 %v1845, %v1846
        %v1848 = vand.u32 %v1847, 4294901760
        %1849 = vmatpush1.msra.mxu0 %v1848
        %1850 = vmatprep.subr.mxu0 0.0
        %v1851 = vand.u32 %v445, 4294901760
        %v1852 = vsub.f32 %v445, %v1851
        %v1853 = vand.u32 %v1852, 4294901760
        %v1854 = vsub.f32 %v1852, %v1853
        %v1855 = vand.u32 %v1854, 4294901760
        %1856 = vmatpush1.msra.mxu0 %v1855
        %1857 = vmatprep.subr.mxu0 0.0
        %v1858 = vand.u32 %v446, 4294901760
        %v1859 = vsub.f32 %v446, %v1858
        %v1860 = vand.u32 %v1859, 4294901760
        %v1861 = vsub.f32 %v1859, %v1860
        %v1862 = vand.u32 %v1861, 4294901760
        %1863 = vmatpush1.msra.mxu0 %v1862
        %1864 = vmatprep.subr.mxu0 0.0
        %v1865 = vand.u32 %v447, 4294901760
        %v1866 = vsub.f32 %v447, %v1865
        %v1867 = vand.u32 %v1866, 4294901760
        %v1868 = vsub.f32 %v1866, %v1867
        %v1869 = vand.u32 %v1868, 4294901760
        %1870 = vmatpush1.msra.mxu0 %v1869
        %1871 = vmatprep.subr.mxu0 0.0
        %v1872 = vand.u32 %v448, 4294901760
        %v1873 = vsub.f32 %v448, %v1872
        %v1874 = vand.u32 %v1873, 4294901760
        %v1875 = vsub.f32 %v1873, %v1874
        %v1876 = vand.u32 %v1875, 4294901760
        %1877 = vmatpush1.msra.mxu0 %v1876
        %v1878 = vand.u32 %v363, 4294901760
        %1879 = vmatprep.mubr.f32.mxu0 %v1878
        %v1880 = vand.u32 %v361, 4294901760
        %1881 = vmatmul.mubr.f32.gmra.mrb[0].mxu0 %v1880
        %v1882 = vpop.f32.mrb[0].mxu0
        %v1883 = vadd.f32 %v1636, %v1882
        %v1884 = vpop.f32.mrb[0].mxu0
        %v1885 = vand.u32 %v364, 4294901760
        %1886 = vmatprep.mubr.f32.mxu0 %v1885
        %v1887 = vand.u32 %v362, 4294901760
        %1888 = vmatmul.mubr.f32.gmra.mrb[0].mxu0 %v1887
        %v1889 = vpop.f32.mrb[0].mxu0
        %v1890 = vadd.f32 %v1651, %v1889
        %v1891 = vpop.f32.mrb[0].mxu0
        %1892 = vdwg.mxu0
        %1893 = vmatprep.subr.mxu0 0.0
        %v1894 = vand.u32 %v417, 4294901760
        %v1895 = vsub.f32 %v417, %v1894
        %1896 = vmatpush1.msra.mxu0 %v1895
        %1897 = vmatprep.subr.mxu0 0.0
        %v1898 = vand.u32 %v418, 4294901760
        %v1899 = vsub.f32 %v418, %v1898
        %1900 = vmatpush1.msra.mxu0 %v1899
        %1901 = vmatprep.subr.mxu0 0.0
        %v1902 = vand.u32 %v419, 4294901760
        %v1903 = vsub.f32 %v419, %v1902
        %1904 = vmatpush1.msra.mxu0 %v1903
        %1905 = vmatprep.subr.mxu0 0.0
        %v1906 = vand.u32 %v420, 4294901760
        %v1907 = vsub.f32 %v420, %v1906
        %1908 = vmatpush1.msra.mxu0 %v1907
        %1909 = vmatprep.subr.mxu0 0.0
        %v1910 = vand.u32 %v421, 4294901760
        %v1911 = vsub.f32 %v421, %v1910
        %1912 = vmatpush1.msra.mxu0 %v1911
        %1913 = vmatprep.subr.mxu0 0.0
        %v1914 = vand.u32 %v422, 4294901760
        %v1915 = vsub.f32 %v422, %v1914
        %1916 = vmatpush1.msra.mxu0 %v1915
        %1917 = vmatprep.subr.mxu0 0.0
        %v1918 = vand.u32 %v423, 4294901760
        %v1919 = vsub.f32 %v423, %v1918
        %1920 = vmatpush1.msra.mxu0 %v1919
        %1921 = vmatprep.subr.mxu0 0.0
        %v1922 = vand.u32 %v424, 4294901760
        %v1923 = vsub.f32 %v424, %v1922
        %1924 = vmatpush1.msra.mxu0 %v1923
        %1925 = vmatprep.subr.mxu0 0.0
        %v1926 = vand.u32 %v425, 4294901760
        %v1927 = vsub.f32 %v425, %v1926
        %1928 = vmatpush1.msra.mxu0 %v1927
        %1929 = vmatprep.subr.mxu0 0.0
        %v1930 = vand.u32 %v426, 4294901760
        %v1931 = vsub.f32 %v426, %v1930
        %1932 = vmatpush1.msra.mxu0 %v1931
        %1933 = vmatprep.subr.mxu0 0.0
        %v1934 = vand.u32 %v427, 4294901760
        %v1935 = vsub.f32 %v427, %v1934
        %1936 = vmatpush1.msra.mxu0 %v1935
        %1937 = vmatprep.subr.mxu0 0.0
        %v1938 = vand.u32 %v428, 4294901760
        %v1939 = vsub.f32 %v428, %v1938
        %1940 = vmatpush1.msra.mxu0 %v1939
        %1941 = vmatprep.subr.mxu0 0.0
        %v1942 = vand.u32 %v429, 4294901760
        %v1943 = vsub.f32 %v429, %v1942
        %1944 = vmatpush1.msra.mxu0 %v1943
        %1945 = vmatprep.subr.mxu0 0.0
        %v1946 = vand.u32 %v430, 4294901760
        %v1947 = vsub.f32 %v430, %v1946
        %1948 = vmatpush1.msra.mxu0 %v1947
        %1949 = vmatprep.subr.mxu0 0.0
        %v1950 = vand.u32 %v431, 4294901760
        %v1951 = vsub.f32 %v431, %v1950
        %1952 = vmatpush1.msra.mxu0 %v1951
        %1953 = vmatprep.subr.mxu0 0.0
        %v1954 = vand.u32 %v432, 4294901760
        %v1955 = vsub.f32 %v432, %v1954
        %1956 = vmatpush1.msra.mxu0 %v1955
        %1957 = vmatprep.subr.mxu0 0.0
        %v1958 = vand.u32 %v433, 4294901760
        %v1959 = vsub.f32 %v433, %v1958
        %1960 = vmatpush1.msra.mxu0 %v1959
        %1961 = vmatprep.subr.mxu0 0.0
        %v1962 = vand.u32 %v434, 4294901760
        %v1963 = vsub.f32 %v434, %v1962
        %1964 = vmatpush1.msra.mxu0 %v1963
        %1965 = vmatprep.subr.mxu0 0.0
        %v1966 = vand.u32 %v435, 4294901760
        %v1967 = vsub.f32 %v435, %v1966
        %1968 = vmatpush1.msra.mxu0 %v1967
        %1969 = vmatprep.subr.mxu0 0.0
        %v1970 = vand.u32 %v436, 4294901760
        %v1971 = vsub.f32 %v436, %v1970
        %1972 = vmatpush1.msra.mxu0 %v1971
        %1973 = vmatprep.subr.mxu0 0.0
        %v1974 = vand.u32 %v437, 4294901760
        %v1975 = vsub.f32 %v437, %v1974
        %1976 = vmatpush1.msra.mxu0 %v1975
        %1977 = vmatprep.subr.mxu0 0.0
        %v1978 = vand.u32 %v438, 4294901760
        %v1979 = vsub.f32 %v438, %v1978
        %1980 = vmatpush1.msra.mxu0 %v1979
        %1981 = vmatprep.subr.mxu0 0.0
        %v1982 = vand.u32 %v439, 4294901760
        %v1983 = vsub.f32 %v439, %v1982
        %1984 = vmatpush1.msra.mxu0 %v1983
        %1985 = vmatprep.subr.mxu0 0.0
        %v1986 = vand.u32 %v440, 4294901760
        %v1987 = vsub.f32 %v440, %v1986
        %1988 = vmatpush1.msra.mxu0 %v1987
        %1989 = vmatprep.subr.mxu0 0.0
        %v1990 = vand.u32 %v441, 4294901760
        %v1991 = vsub.f32 %v441, %v1990
        %1992 = vmatpush1.msra.mxu0 %v1991
        %1993 = vmatprep.subr.mxu0 0.0
        %v1994 = vand.u32 %v442, 4294901760
        %v1995 = vsub.f32 %v442, %v1994
        %1996 = vmatpush1.msra.mxu0 %v1995
        %1997 = vmatprep.subr.mxu0 0.0
        %v1998 = vand.u32 %v443, 4294901760
        %v1999 = vsub.f32 %v443, %v1998
        %2000 = vmatpush1.msra.mxu0 %v1999
        %2001 = vmatprep.subr.mxu0 0.0
        %v2002 = vand.u32 %v444, 4294901760
        %v2003 = vsub.f32 %v444, %v2002
        %2004 = vmatpush1.msra.mxu0 %v2003
        %2005 = vmatprep.subr.mxu0 0.0
        %v2006 = vand.u32 %v445, 4294901760
        %v2007 = vsub.f32 %v445, %v2006
        %2008 = vmatpush1.msra.mxu0 %v2007
        %2009 = vmatprep.subr.mxu0 0.0
        %v2010 = vand.u32 %v446, 4294901760
        %v2011 = vsub.f32 %v446, %v2010
        %2012 = vmatpush1.msra.mxu0 %v2011
        %2013 = vmatprep.subr.mxu0 0.0
        %v2014 = vand.u32 %v447, 4294901760
        %v2015 = vsub.f32 %v447, %v2014
        %2016 = vmatpush1.msra.mxu0 %v2015
        %2017 = vmatprep.subr.mxu0 0.0
        %v2018 = vand.u32 %v448, 4294901760
        %v2019 = vsub.f32 %v448, %v2018
        %2020 = vmatpush1.msra.mxu0 %v2019
        %v2021 = vand.u32 %v363, 4294901760
        %v2022 = vsub.f32 %v363, %v2021
        %2023 = vmatprep.mubr.f32.mxu0 %v2022
        %v2024 = vand.u32 %v361, 4294901760
        %v2025 = vsub.f32 %v361, %v2024
        %2026 = vmatmul.mubr.f32.gmra.mrb[0].mxu0 %v2025
        %v2027 = vpop.f32.mrb[0].mxu0
        %v2028 = vadd.f32 %v1883, %v2027
        %v2029 = vpop.f32.mrb[0].mxu0
        %v2030 = vand.u32 %v364, 4294901760
        %v2031 = vsub.f32 %v364, %v2030
        %2032 = vmatprep.mubr.f32.mxu0 %v2031
        %v2033 = vand.u32 %v362, 4294901760
        %v2034 = vsub.f32 %v362, %v2033
        %2035 = vmatmul.mubr.f32.gmra.mrb[0].mxu0 %v2034
        %v2036 = vpop.f32.mrb[0].mxu0
        %v2037 = vadd.f32 %v1890, %v2036
        %v2038 = vpop.f32.mrb[0].mxu0
        %2039 = vdwg.mxu0
        %2040 = vmatprep.subr.mxu0 0.0
        %v2041 = vand.u32 %v417, 4294901760
        %2042 = vmatpush1.msra.mxu0 %v2041
        %2043 = vmatprep.subr.mxu0 0.0
        %v2044 = vand.u32 %v418, 4294901760
        %2045 = vmatpush1.msra.mxu0 %v2044
        %2046 = vmatprep.subr.mxu0 0.0
        %v2047 = vand.u32 %v419, 4294901760
        %2048 = vmatpush1.msra.mxu0 %v2047
        %2049 = vmatprep.subr.mxu0 0.0
        %v2050 = vand.u32 %v420, 4294901760
        %2051 = vmatpush1.msra.mxu0 %v2050
        %2052 = vmatprep.subr.mxu0 0.0
        %v2053 = vand.u32 %v421, 4294901760
        %2054 = vmatpush1.msra.mxu0 %v2053
        %2055 = vmatprep.subr.mxu0 0.0
        %v2056 = vand.u32 %v422, 4294901760
        %2057 = vmatpush1.msra.mxu0 %v2056
        %2058 = vmatprep.subr.mxu0 0.0
        %v2059 = vand.u32 %v423, 4294901760
        %2060 = vmatpush1.msra.mxu0 %v2059
        %2061 = vmatprep.subr.mxu0 0.0
        %v2062 = vand.u32 %v424, 4294901760
        %2063 = vmatpush1.msra.mxu0 %v2062
        %2064 = vmatprep.subr.mxu0 0.0
        %v2065 = vand.u32 %v425, 4294901760
        %2066 = vmatpush1.msra.mxu0 %v2065
        %2067 = vmatprep.subr.mxu0 0.0
        %v2068 = vand.u32 %v426, 4294901760
        %2069 = vmatpush1.msra.mxu0 %v2068
        %2070 = vmatprep.subr.mxu0 0.0
        %v2071 = vand.u32 %v427, 4294901760
        %2072 = vmatpush1.msra.mxu0 %v2071
        %2073 = vmatprep.subr.mxu0 0.0
        %v2074 = vand.u32 %v428, 4294901760
        %2075 = vmatpush1.msra.mxu0 %v2074
        %2076 = vmatprep.subr.mxu0 0.0
        %v2077 = vand.u32 %v429, 4294901760
        %2078 = vmatpush1.msra.mxu0 %v2077
        %2079 = vmatprep.subr.mxu0 0.0
        %v2080 = vand.u32 %v430, 4294901760
        %2081 = vmatpush1.msra.mxu0 %v2080
        %2082 = vmatprep.subr.mxu0 0.0
        %v2083 = vand.u32 %v431, 4294901760
        %2084 = vmatpush1.msra.mxu0 %v2083
        %2085 = vmatprep.subr.mxu0 0.0
        %v2086 = vand.u32 %v432, 4294901760
        %2087 = vmatpush1.msra.mxu0 %v2086
        %2088 = vmatprep.subr.mxu0 0.0
        %v2089 = vand.u32 %v433, 4294901760
        %2090 = vmatpush1.msra.mxu0 %v2089
        %2091 = vmatprep.subr.mxu0 0.0
        %v2092 = vand.u32 %v434, 4294901760
        %2093 = vmatpush1.msra.mxu0 %v2092
        %2094 = vmatprep.subr.mxu0 0.0
        %v2095 = vand.u32 %v435, 4294901760
        %2096 = vmatpush1.msra.mxu0 %v2095
        %2097 = vmatprep.subr.mxu0 0.0
        %v2098 = vand.u32 %v436, 4294901760
        %2099 = vmatpush1.msra.mxu0 %v2098
        %2100 = vmatprep.subr.mxu0 0.0
        %v2101 = vand.u32 %v437, 4294901760
        %2102 = vmatpush1.msra.mxu0 %v2101
        %2103 = vmatprep.subr.mxu0 0.0
        %v2104 = vand.u32 %v438, 4294901760
        %2105 = vmatpush1.msra.mxu0 %v2104
        %2106 = vmatprep.subr.mxu0 0.0
        %v2107 = vand.u32 %v439, 4294901760
        %2108 = vmatpush1.msra.mxu0 %v2107
        %2109 = vmatprep.subr.mxu0 0.0
        %v2110 = vand.u32 %v440, 4294901760
        %2111 = vmatpush1.msra.mxu0 %v2110
        %2112 = vmatprep.subr.mxu0 0.0
        %v2113 = vand.u32 %v441, 4294901760
        %2114 = vmatpush1.msra.mxu0 %v2113
        %2115 = vmatprep.subr.mxu0 0.0
        %v2116 = vand.u32 %v442, 4294901760
        %2117 = vmatpush1.msra.mxu0 %v2116
        %2118 = vmatprep.subr.mxu0 0.0
        %v2119 = vand.u32 %v443, 4294901760
        %2120 = vmatpush1.msra.mxu0 %v2119
        %2121 = vmatprep.subr.mxu0 0.0
        %v2122 = vand.u32 %v444, 4294901760
        %2123 = vmatpush1.msra.mxu0 %v2122
        %2124 = vmatprep.subr.mxu0 0.0
        %v2125 = vand.u32 %v445, 4294901760
        %2126 = vmatpush1.msra.mxu0 %v2125
        %2127 = vmatprep.subr.mxu0 0.0
        %v2128 = vand.u32 %v446, 4294901760
        %2129 = vmatpush1.msra.mxu0 %v2128
        %2130 = vmatprep.subr.mxu0 0.0
        %v2131 = vand.u32 %v447, 4294901760
        %2132 = vmatpush1.msra.mxu0 %v2131
        %2133 = vmatprep.subr.mxu0 0.0
        %v2134 = vand.u32 %v448, 4294901760
        %2135 = vmatpush1.msra.mxu0 %v2134
        %v2136 = vand.u32 %v363, 4294901760
        %v2137 = vsub.f32 %v363, %v2136
        %v2138 = vand.u32 %v2137, 4294901760
        %2139 = vmatprep.mubr.f32.mxu0 %v2138
        %v2140 = vand.u32 %v361, 4294901760
        %v2141 = vsub.f32 %v361, %v2140
        %v2142 = vand.u32 %v2141, 4294901760
        %2143 = vmatmul.mubr.f32.gmra.mrb[0].mxu0 %v2142
        %v2144 = vpop.f32.mrb[0].mxu0
        %v2145 = vadd.f32 %v2028, %v2144
        %v2146 = vpop.f32.mrb[0].mxu0
        %v2147 = vand.u32 %v364, 4294901760
        %v2148 = vsub.f32 %v364, %v2147
        %v2149 = vand.u32 %v2148, 4294901760
        %2150 = vmatprep.mubr.f32.mxu0 %v2149
        %v2151 = vand.u32 %v362, 4294901760
        %v2152 = vsub.f32 %v362, %v2151
        %v2153 = vand.u32 %v2152, 4294901760
        %2154 = vmatmul.mubr.f32.gmra.mrb[0].mxu0 %v2153
        %v2155 = vpop.f32.mrb[0].mxu0
        %v2156 = vadd.f32 %v2037, %v2155
        %v2157 = vpop.f32.mrb[0].mxu0
        %2158 = vdwg.mxu0
        %2159 = vmatprep.subr.mxu0 0.0
        %v2160 = vand.u32 %v417, 4294901760
        %v2161 = vsub.f32 %v417, %v2160
        %v2162 = vand.u32 %v2161, 4294901760
        %2163 = vmatpush1.msra.mxu0 %v2162
        %2164 = vmatprep.subr.mxu0 0.0
        %v2165 = vand.u32 %v418, 4294901760
        %v2166 = vsub.f32 %v418, %v2165
        %v2167 = vand.u32 %v2166, 4294901760
        %2168 = vmatpush1.msra.mxu0 %v2167
        %2169 = vmatprep.subr.mxu0 0.0
        %v2170 = vand.u32 %v419, 4294901760
        %v2171 = vsub.f32 %v419, %v2170
        %v2172 = vand.u32 %v2171, 4294901760
        %2173 = vmatpush1.msra.mxu0 %v2172
        %2174 = vmatprep.subr.mxu0 0.0
        %v2175 = vand.u32 %v420, 4294901760
        %v2176 = vsub.f32 %v420, %v2175
        %v2177 = vand.u32 %v2176, 4294901760
        %2178 = vmatpush1.msra.mxu0 %v2177
        %2179 = vmatprep.subr.mxu0 0.0
        %v2180 = vand.u32 %v421, 4294901760
        %v2181 = vsub.f32 %v421, %v2180
        %v2182 = vand.u32 %v2181, 4294901760
        %2183 = vmatpush1.msra.mxu0 %v2182
        %2184 = vmatprep.subr.mxu0 0.0
        %v2185 = vand.u32 %v422, 4294901760
        %v2186 = vsub.f32 %v422, %v2185
        %v2187 = vand.u32 %v2186, 4294901760
        %2188 = vmatpush1.msra.mxu0 %v2187
        %2189 = vmatprep.subr.mxu0 0.0
        %v2190 = vand.u32 %v423, 4294901760
        %v2191 = vsub.f32 %v423, %v2190
        %v2192 = vand.u32 %v2191, 4294901760
        %2193 = vmatpush1.msra.mxu0 %v2192
        %2194 = vmatprep.subr.mxu0 0.0
        %v2195 = vand.u32 %v424, 4294901760
        %v2196 = vsub.f32 %v424, %v2195
        %v2197 = vand.u32 %v2196, 4294901760
        %2198 = vmatpush1.msra.mxu0 %v2197
        %2199 = vmatprep.subr.mxu0 0.0
        %v2200 = vand.u32 %v425, 4294901760
        %v2201 = vsub.f32 %v425, %v2200
        %v2202 = vand.u32 %v2201, 4294901760
        %2203 = vmatpush1.msra.mxu0 %v2202
        %2204 = vmatprep.subr.mxu0 0.0
        %v2205 = vand.u32 %v426, 4294901760
        %v2206 = vsub.f32 %v426, %v2205
        %v2207 = vand.u32 %v2206, 4294901760
        %2208 = vmatpush1.msra.mxu0 %v2207
        %2209 = vmatprep.subr.mxu0 0.0
        %v2210 = vand.u32 %v427, 4294901760
        %v2211 = vsub.f32 %v427, %v2210
        %v2212 = vand.u32 %v2211, 4294901760
        %2213 = vmatpush1.msra.mxu0 %v2212
        %2214 = vmatprep.subr.mxu0 0.0
        %v2215 = vand.u32 %v428, 4294901760
        %v2216 = vsub.f32 %v428, %v2215
        %v2217 = vand.u32 %v2216, 4294901760
        %2218 = vmatpush1.msra.mxu0 %v2217
        %2219 = vmatprep.subr.mxu0 0.0
        %v2220 = vand.u32 %v429, 4294901760
        %v2221 = vsub.f32 %v429, %v2220
        %v2222 = vand.u32 %v2221, 4294901760
        %2223 = vmatpush1.msra.mxu0 %v2222
        %2224 = vmatprep.subr.mxu0 0.0
        %v2225 = vand.u32 %v430, 4294901760
        %v2226 = vsub.f32 %v430, %v2225
        %v2227 = vand.u32 %v2226, 4294901760
        %2228 = vmatpush1.msra.mxu0 %v2227
        %2229 = vmatprep.subr.mxu0 0.0
        %v2230 = vand.u32 %v431, 4294901760
        %v2231 = vsub.f32 %v431, %v2230
        %v2232 = vand.u32 %v2231, 4294901760
        %2233 = vmatpush1.msra.mxu0 %v2232
        %2234 = vmatprep.subr.mxu0 0.0
        %v2235 = vand.u32 %v432, 4294901760
        %v2236 = vsub.f32 %v432, %v2235
        %v2237 = vand.u32 %v2236, 4294901760
        %2238 = vmatpush1.msra.mxu0 %v2237
        %2239 = vmatprep.subr.mxu0 0.0
        %v2240 = vand.u32 %v433, 4294901760
        %v2241 = vsub.f32 %v433, %v2240
        %v2242 = vand.u32 %v2241, 4294901760
        %2243 = vmatpush1.msra.mxu0 %v2242
        %2244 = vmatprep.subr.mxu0 0.0
        %v2245 = vand.u32 %v434, 4294901760
        %v2246 = vsub.f32 %v434, %v2245
        %v2247 = vand.u32 %v2246, 4294901760
        %2248 = vmatpush1.msra.mxu0 %v2247
        %2249 = vmatprep.subr.mxu0 0.0
        %v2250 = vand.u32 %v435, 4294901760
        %v2251 = vsub.f32 %v435, %v2250
        %v2252 = vand.u32 %v2251, 4294901760
        %2253 = vmatpush1.msra.mxu0 %v2252
        %2254 = vmatprep.subr.mxu0 0.0
        %v2255 = vand.u32 %v436, 4294901760
        %v2256 = vsub.f32 %v436, %v2255
        %v2257 = vand.u32 %v2256, 4294901760
        %2258 = vmatpush1.msra.mxu0 %v2257
        %2259 = vmatprep.subr.mxu0 0.0
        %v2260 = vand.u32 %v437, 4294901760
        %v2261 = vsub.f32 %v437, %v2260
        %v2262 = vand.u32 %v2261, 4294901760
        %2263 = vmatpush1.msra.mxu0 %v2262
        %2264 = vmatprep.subr.mxu0 0.0
        %v2265 = vand.u32 %v438, 4294901760
        %v2266 = vsub.f32 %v438, %v2265
        %v2267 = vand.u32 %v2266, 4294901760
        %2268 = vmatpush1.msra.mxu0 %v2267
        %2269 = vmatprep.subr.mxu0 0.0
        %v2270 = vand.u32 %v439, 4294901760
        %v2271 = vsub.f32 %v439, %v2270
        %v2272 = vand.u32 %v2271, 4294901760
        %2273 = vmatpush1.msra.mxu0 %v2272
        %2274 = vmatprep.subr.mxu0 0.0
        %v2275 = vand.u32 %v440, 4294901760
        %v2276 = vsub.f32 %v440, %v2275
        %v2277 = vand.u32 %v2276, 4294901760
        %2278 = vmatpush1.msra.mxu0 %v2277
        %2279 = vmatprep.subr.mxu0 0.0
        %v2280 = vand.u32 %v441, 4294901760
        %v2281 = vsub.f32 %v441, %v2280
        %v2282 = vand.u32 %v2281, 4294901760
        %2283 = vmatpush1.msra.mxu0 %v2282
        %2284 = vmatprep.subr.mxu0 0.0
        %v2285 = vand.u32 %v442, 4294901760
        %v2286 = vsub.f32 %v442, %v2285
        %v2287 = vand.u32 %v2286, 4294901760
        %2288 = vmatpush1.msra.mxu0 %v2287
        %2289 = vmatprep.subr.mxu0 0.0
        %v2290 = vand.u32 %v443, 4294901760
        %v2291 = vsub.f32 %v443, %v2290
        %v2292 = vand.u32 %v2291, 4294901760
        %2293 = vmatpush1.msra.mxu0 %v2292
        %2294 = vmatprep.subr.mxu0 0.0
        %v2295 = vand.u32 %v444, 4294901760
        %v2296 = vsub.f32 %v444, %v2295
        %v2297 = vand.u32 %v2296, 4294901760
        %2298 = vmatpush1.msra.mxu0 %v2297
        %2299 = vmatprep.subr.mxu0 0.0
        %v2300 = vand.u32 %v445, 4294901760
        %v2301 = vsub.f32 %v445, %v2300
        %v2302 = vand.u32 %v2301, 4294901760
        %2303 = vmatpush1.msra.mxu0 %v2302
        %2304 = vmatprep.subr.mxu0 0.0
        %v2305 = vand.u32 %v446, 4294901760
        %v2306 = vsub.f32 %v446, %v2305
        %v2307 = vand.u32 %v2306, 4294901760
        %2308 = vmatpush1.msra.mxu0 %v2307
        %2309 = vmatprep.subr.mxu0 0.0
        %v2310 = vand.u32 %v447, 4294901760
        %v2311 = vsub.f32 %v447, %v2310
        %v2312 = vand.u32 %v2311, 4294901760
        %2313 = vmatpush1.msra.mxu0 %v2312
        %2314 = vmatprep.subr.mxu0 0.0
        %v2315 = vand.u32 %v448, 4294901760
        %v2316 = vsub.f32 %v448, %v2315
        %v2317 = vand.u32 %v2316, 4294901760
        %2318 = vmatpush1.msra.mxu0 %v2317
        %v2319 = vand.u32 %v363, 4294901760
        %2320 = vmatprep.mubr.f32.mxu0 %v2319
        %v2321 = vand.u32 %v361, 4294901760
        %2322 = vmatmul.mubr.f32.gmra.mrb[0].mxu0 %v2321
        %v2323 = vpop.f32.mrb[0].mxu0
        %v2324 = vadd.f32 %v2145, %v2323
        %v2325 = vpop.f32.mrb[0].mxu0
        %v2326 = vand.u32 %v364, 4294901760
        %2327 = vmatprep.mubr.f32.mxu0 %v2326
        %v2328 = vand.u32 %v362, 4294901760
        %2329 = vmatmul.mubr.f32.gmra.mrb[0].mxu0 %v2328
        %v2330 = vpop.f32.mrb[0].mxu0
        %v2331 = vadd.f32 %v2156, %v2330
        %v2332 = vpop.f32.mrb[0].mxu0
        %2333 = vdwg.mxu0
        %2334 = vmatprep.subr.mxu0 0.0
        %v2335 = vand.u32 %v417, 4294901760
        %2336 = vmatpush1.msra.mxu0 %v2335
        %2337 = vmatprep.subr.mxu0 0.0
        %v2338 = vand.u32 %v418, 4294901760
        %2339 = vmatpush1.msra.mxu0 %v2338
        %2340 = vmatprep.subr.mxu0 0.0
        %v2341 = vand.u32 %v419, 4294901760
        %2342 = vmatpush1.msra.mxu0 %v2341
        %2343 = vmatprep.subr.mxu0 0.0
        %v2344 = vand.u32 %v420, 4294901760
        %2345 = vmatpush1.msra.mxu0 %v2344
        %2346 = vmatprep.subr.mxu0 0.0
        %v2347 = vand.u32 %v421, 4294901760
        %2348 = vmatpush1.msra.mxu0 %v2347
        %2349 = vmatprep.subr.mxu0 0.0
        %v2350 = vand.u32 %v422, 4294901760
        %2351 = vmatpush1.msra.mxu0 %v2350
        %2352 = vmatprep.subr.mxu0 0.0
        %v2353 = vand.u32 %v423, 4294901760
        %2354 = vmatpush1.msra.mxu0 %v2353
        %2355 = vmatprep.subr.mxu0 0.0
        %v2356 = vand.u32 %v424, 4294901760
        %2357 = vmatpush1.msra.mxu0 %v2356
        %2358 = vmatprep.subr.mxu0 0.0
        %v2359 = vand.u32 %v425, 4294901760
        %2360 = vmatpush1.msra.mxu0 %v2359
        %2361 = vmatprep.subr.mxu0 0.0
        %v2362 = vand.u32 %v426, 4294901760
        %2363 = vmatpush1.msra.mxu0 %v2362
        %2364 = vmatprep.subr.mxu0 0.0
        %v2365 = vand.u32 %v427, 4294901760
        %2366 = vmatpush1.msra.mxu0 %v2365
        %2367 = vmatprep.subr.mxu0 0.0
        %v2368 = vand.u32 %v428, 4294901760
        %2369 = vmatpush1.msra.mxu0 %v2368
        %2370 = vmatprep.subr.mxu0 0.0
        %v2371 = vand.u32 %v429, 4294901760
        %2372 = vmatpush1.msra.mxu0 %v2371
        %2373 = vmatprep.subr.mxu0 0.0
        %v2374 = vand.u32 %v430, 4294901760
        %2375 = vmatpush1.msra.mxu0 %v2374
        %2376 = vmatprep.subr.mxu0 0.0
        %v2377 = vand.u32 %v431, 4294901760
        %2378 = vmatpush1.msra.mxu0 %v2377
        %2379 = vmatprep.subr.mxu0 0.0
        %v2380 = vand.u32 %v432, 4294901760
        %2381 = vmatpush1.msra.mxu0 %v2380
        %2382 = vmatprep.subr.mxu0 0.0
        %v2383 = vand.u32 %v433, 4294901760
        %2384 = vmatpush1.msra.mxu0 %v2383
        %2385 = vmatprep.subr.mxu0 0.0
        %v2386 = vand.u32 %v434, 4294901760
        %2387 = vmatpush1.msra.mxu0 %v2386
        %2388 = vmatprep.subr.mxu0 0.0
        %v2389 = vand.u32 %v435, 4294901760
        %2390 = vmatpush1.msra.mxu0 %v2389
        %2391 = vmatprep.subr.mxu0 0.0
        %v2392 = vand.u32 %v436, 4294901760
        %2393 = vmatpush1.msra.mxu0 %v2392
        %2394 = vmatprep.subr.mxu0 0.0
        %v2395 = vand.u32 %v437, 4294901760
        %2396 = vmatpush1.msra.mxu0 %v2395
        %2397 = vmatprep.subr.mxu0 0.0
        %v2398 = vand.u32 %v438, 4294901760
        %2399 = vmatpush1.msra.mxu0 %v2398
        %2400 = vmatprep.subr.mxu0 0.0
        %v2401 = vand.u32 %v439, 4294901760
        %2402 = vmatpush1.msra.mxu0 %v2401
        %2403 = vmatprep.subr.mxu0 0.0
        %v2404 = vand.u32 %v440, 4294901760
        %2405 = vmatpush1.msra.mxu0 %v2404
        %2406 = vmatprep.subr.mxu0 0.0
        %v2407 = vand.u32 %v441, 4294901760
        %2408 = vmatpush1.msra.mxu0 %v2407
        %2409 = vmatprep.subr.mxu0 0.0
        %v2410 = vand.u32 %v442, 4294901760
        %2411 = vmatpush1.msra.mxu0 %v2410
        %2412 = vmatprep.subr.mxu0 0.0
        %v2413 = vand.u32 %v443, 4294901760
        %2414 = vmatpush1.msra.mxu0 %v2413
        %2415 = vmatprep.subr.mxu0 0.0
        %v2416 = vand.u32 %v444, 4294901760
        %2417 = vmatpush1.msra.mxu0 %v2416
        %2418 = vmatprep.subr.mxu0 0.0
        %v2419 = vand.u32 %v445, 4294901760
        %2420 = vmatpush1.msra.mxu0 %v2419
        %2421 = vmatprep.subr.mxu0 0.0
        %v2422 = vand.u32 %v446, 4294901760
        %2423 = vmatpush1.msra.mxu0 %v2422
        %2424 = vmatprep.subr.mxu0 0.0
        %v2425 = vand.u32 %v447, 4294901760
        %2426 = vmatpush1.msra.mxu0 %v2425
        %2427 = vmatprep.subr.mxu0 0.0
        %v2428 = vand.u32 %v448, 4294901760
        %2429 = vmatpush1.msra.mxu0 %v2428
        %v2430 = vand.u32 %v363, 4294901760
        %2431 = vmatprep.mubr.f32.mxu0 %v2430
        %v2432 = vand.u32 %v361, 4294901760
        %2433 = vmatmul.mubr.f32.gmra.mrb[0].mxu0 %v2432
        %v2434 = vpop.f32.mrb[0].mxu0
        %v2435 = vadd.f32 %v2324, %v2434
        %v2436 = vpop.f32.mrb[0].mxu0
        %v2437 = vand.u32 %v364, 4294901760
        %2438 = vmatprep.mubr.f32.mxu0 %v2437
        %v2439 = vand.u32 %v362, 4294901760
        %2440 = vmatmul.mubr.f32.gmra.mrb[0].mxu0 %v2439
        %v2441 = vpop.f32.mrb[0].mxu0
        %v2442 = vadd.f32 %v2331, %v2441
        %v2443 = vpop.f32.mrb[0].mxu0
        %2444 = vdwg.mxu0
        %2445 = vmatprep.subr.mxu0 0.0
        %v2446 = vand.u32 %v449, 4294901760
        %2447 = vmatpush1.msra.mxu0 %v2446
        %2448 = vmatprep.subr.mxu0 0.0
        %v2449 = vand.u32 %v450, 4294901760
        %2450 = vmatpush1.msra.mxu0 %v2449
        %2451 = vmatprep.subr.mxu0 0.0
        %v2452 = vand.u32 %v451, 4294901760
        %2453 = vmatpush1.msra.mxu0 %v2452
        %2454 = vmatprep.subr.mxu0 0.0
        %v2455 = vand.u32 %v452, 4294901760
        %2456 = vmatpush1.msra.mxu0 %v2455
        %2457 = vmatprep.subr.mxu0 0.0
        %v2458 = vand.u32 %v453, 4294901760
        %2459 = vmatpush1.msra.mxu0 %v2458
        %2460 = vmatprep.subr.mxu0 0.0
        %v2461 = vand.u32 %v454, 4294901760
        %2462 = vmatpush1.msra.mxu0 %v2461
        %2463 = vmatprep.subr.mxu0 0.0
        %v2464 = vand.u32 %v455, 4294901760
        %2465 = vmatpush1.msra.mxu0 %v2464
        %2466 = vmatprep.subr.mxu0 0.0
        %v2467 = vand.u32 %v456, 4294901760
        %2468 = vmatpush1.msra.mxu0 %v2467
        %2469 = vmatprep.subr.mxu0 0.0
        %v2470 = vand.u32 %v457, 4294901760
        %2471 = vmatpush1.msra.mxu0 %v2470
        %2472 = vmatprep.subr.mxu0 0.0
        %v2473 = vand.u32 %v458, 4294901760
        %2474 = vmatpush1.msra.mxu0 %v2473
        %2475 = vmatprep.subr.mxu0 0.0
        %v2476 = vand.u32 %v459, 4294901760
        %2477 = vmatpush1.msra.mxu0 %v2476
        %2478 = vmatprep.subr.mxu0 0.0
        %v2479 = vand.u32 %v460, 4294901760
        %2480 = vmatpush1.msra.mxu0 %v2479
        %2481 = vmatprep.subr.mxu0 0.0
        %v2482 = vand.u32 %v461, 4294901760
        %2483 = vmatpush1.msra.mxu0 %v2482
        %2484 = vmatprep.subr.mxu0 0.0
        %v2485 = vand.u32 %v462, 4294901760
        %2486 = vmatpush1.msra.mxu0 %v2485
        %2487 = vmatprep.subr.mxu0 0.0
        %v2488 = vand.u32 %v463, 4294901760
        %2489 = vmatpush1.msra.mxu0 %v2488
        %2490 = vmatprep.subr.mxu0 0.0
        %v2491 = vand.u32 %v464, 4294901760
        %2492 = vmatpush1.msra.mxu0 %v2491
        %2493 = vmatprep.subr.mxu0 0.0
        %v2494 = vand.u32 %v465, 4294901760
        %2495 = vmatpush1.msra.mxu0 %v2494
        %2496 = vmatprep.subr.mxu0 0.0
        %v2497 = vand.u32 %v466, 4294901760
        %2498 = vmatpush1.msra.mxu0 %v2497
        %2499 = vmatprep.subr.mxu0 0.0
        %v2500 = vand.u32 %v467, 4294901760
        %2501 = vmatpush1.msra.mxu0 %v2500
        %2502 = vmatprep.subr.mxu0 0.0
        %v2503 = vand.u32 %v468, 4294901760
        %2504 = vmatpush1.msra.mxu0 %v2503
        %2505 = vmatprep.subr.mxu0 0.0
        %v2506 = vand.u32 %v469, 4294901760
        %2507 = vmatpush1.msra.mxu0 %v2506
        %2508 = vmatprep.subr.mxu0 0.0
        %v2509 = vand.u32 %v470, 4294901760
        %2510 = vmatpush1.msra.mxu0 %v2509
        %2511 = vmatprep.subr.mxu0 0.0
        %v2512 = vand.u32 %v471, 4294901760
        %2513 = vmatpush1.msra.mxu0 %v2512
        %2514 = vmatprep.subr.mxu0 0.0
        %v2515 = vand.u32 %v472, 4294901760
        %2516 = vmatpush1.msra.mxu0 %v2515
        %2517 = vmatprep.subr.mxu0 0.0
        %v2518 = vand.u32 %v473, 4294901760
        %2519 = vmatpush1.msra.mxu0 %v2518
        %2520 = vmatprep.subr.mxu0 0.0
        %v2521 = vand.u32 %v474, 4294901760
        %2522 = vmatpush1.msra.mxu0 %v2521
        %2523 = vmatprep.subr.mxu0 0.0
        %v2524 = vand.u32 %v475, 4294901760
        %2525 = vmatpush1.msra.mxu0 %v2524
        %2526 = vmatprep.subr.mxu0 0.0
        %v2527 = vand.u32 %v476, 4294901760
        %2528 = vmatpush1.msra.mxu0 %v2527
        %2529 = vmatprep.subr.mxu0 0.0
        %v2530 = vand.u32 %v477, 4294901760
        %2531 = vmatpush1.msra.mxu0 %v2530
        %2532 = vmatprep.subr.mxu0 0.0
        %v2533 = vand.u32 %v478, 4294901760
        %2534 = vmatpush1.msra.mxu0 %v2533
        %2535 = vmatprep.subr.mxu0 0.0
        %v2536 = vand.u32 %v479, 4294901760
        %2537 = vmatpush1.msra.mxu0 %v2536
        %2538 = vmatprep.subr.mxu0 0.0
        %v2539 = vand.u32 %v480, 4294901760
        %2540 = vmatpush1.msra.mxu0 %v2539
        %v2541 = vand.u32 %v367, 4294901760
        %v2542 = vsub.f32 %v367, %v2541
        %v2543 = vand.u32 %v2542, 4294901760
        %v2544 = vsub.f32 %v2542, %v2543
        %v2545 = vand.u32 %v2544, 4294901760
        %2546 = vmatprep.mubr.f32.mxu0 %v2545
        %v2547 = vand.u32 %v365, 4294901760
        %v2548 = vsub.f32 %v365, %v2547
        %v2549 = vand.u32 %v2548, 4294901760
        %v2550 = vsub.f32 %v2548, %v2549
        %v2551 = vand.u32 %v2550, 4294901760
        %2552 = vmatmul.mubr.f32.gmra.mrb[0].mxu0 %v2551
        %v2553 = vpop.f32.mrb[0].mxu0
        %v2554 = vadd.f32 %v2435, %v2553
        %v2555 = vpop.f32.mrb[0].mxu0
        %v2556 = vand.u32 %v368, 4294901760
        %v2557 = vsub.f32 %v368, %v2556
        %v2558 = vand.u32 %v2557, 4294901760
        %v2559 = vsub.f32 %v2557, %v2558
        %v2560 = vand.u32 %v2559, 4294901760
        %2561 = vmatprep.mubr.f32.mxu0 %v2560
        %v2562 = vand.u32 %v366, 4294901760
        %v2563 = vsub.f32 %v366, %v2562
        %v2564 = vand.u32 %v2563, 4294901760
        %v2565 = vsub.f32 %v2563, %v2564
        %v2566 = vand.u32 %v2565, 4294901760
        %2567 = vmatmul.mubr.f32.gmra.mrb[0].mxu0 %v2566
        %v2568 = vpop.f32.mrb[0].mxu0
        %v2569 = vadd.f32 %v2442, %v2568
        %v2570 = vpop.f32.mrb[0].mxu0
        %2571 = vdwg.mxu0
        %2572 = vmatprep.subr.mxu0 0.0
        %v2573 = vand.u32 %v449, 4294901760
        %v2574 = vsub.f32 %v449, %v2573
        %v2575 = vand.u32 %v2574, 4294901760
        %v2576 = vsub.f32 %v2574, %v2575
        %v2577 = vand.u32 %v2576, 4294901760
        %2578 = vmatpush1.msra.mxu0 %v2577
        %2579 = vmatprep.subr.mxu0 0.0
        %v2580 = vand.u32 %v450, 4294901760
        %v2581 = vsub.f32 %v450, %v2580
        %v2582 = vand.u32 %v2581, 4294901760
        %v2583 = vsub.f32 %v2581, %v2582
        %v2584 = vand.u32 %v2583, 4294901760
        %2585 = vmatpush1.msra.mxu0 %v2584
        %2586 = vmatprep.subr.mxu0 0.0
        %v2587 = vand.u32 %v451, 4294901760
        %v2588 = vsub.f32 %v451, %v2587
        %v2589 = vand.u32 %v2588, 4294901760
        %v2590 = vsub.f32 %v2588, %v2589
        %v2591 = vand.u32 %v2590, 4294901760
        %2592 = vmatpush1.msra.mxu0 %v2591
        %2593 = vmatprep.subr.mxu0 0.0
        %v2594 = vand.u32 %v452, 4294901760
        %v2595 = vsub.f32 %v452, %v2594
        %v2596 = vand.u32 %v2595, 4294901760
        %v2597 = vsub.f32 %v2595, %v2596
        %v2598 = vand.u32 %v2597, 4294901760
        %2599 = vmatpush1.msra.mxu0 %v2598
        %2600 = vmatprep.subr.mxu0 0.0
        %v2601 = vand.u32 %v453, 4294901760
        %v2602 = vsub.f32 %v453, %v2601
        %v2603 = vand.u32 %v2602, 4294901760
        %v2604 = vsub.f32 %v2602, %v2603
        %v2605 = vand.u32 %v2604, 4294901760
        %2606 = vmatpush1.msra.mxu0 %v2605
        %2607 = vmatprep.subr.mxu0 0.0
        %v2608 = vand.u32 %v454, 4294901760
        %v2609 = vsub.f32 %v454, %v2608
        %v2610 = vand.u32 %v2609, 4294901760
        %v2611 = vsub.f32 %v2609, %v2610
        %v2612 = vand.u32 %v2611, 4294901760
        %2613 = vmatpush1.msra.mxu0 %v2612
        %2614 = vmatprep.subr.mxu0 0.0
        %v2615 = vand.u32 %v455, 4294901760
        %v2616 = vsub.f32 %v455, %v2615
        %v2617 = vand.u32 %v2616, 4294901760
        %v2618 = vsub.f32 %v2616, %v2617
        %v2619 = vand.u32 %v2618, 4294901760
        %2620 = vmatpush1.msra.mxu0 %v2619
        %2621 = vmatprep.subr.mxu0 0.0
        %v2622 = vand.u32 %v456, 4294901760
        %v2623 = vsub.f32 %v456, %v2622
        %v2624 = vand.u32 %v2623, 4294901760
        %v2625 = vsub.f32 %v2623, %v2624
        %v2626 = vand.u32 %v2625, 4294901760
        %2627 = vmatpush1.msra.mxu0 %v2626
        %2628 = vmatprep.subr.mxu0 0.0
        %v2629 = vand.u32 %v457, 4294901760
        %v2630 = vsub.f32 %v457, %v2629
        %v2631 = vand.u32 %v2630, 4294901760
        %v2632 = vsub.f32 %v2630, %v2631
        %v2633 = vand.u32 %v2632, 4294901760
        %2634 = vmatpush1.msra.mxu0 %v2633
        %2635 = vmatprep.subr.mxu0 0.0
        %v2636 = vand.u32 %v458, 4294901760
        %v2637 = vsub.f32 %v458, %v2636
        %v2638 = vand.u32 %v2637, 4294901760
        %v2639 = vsub.f32 %v2637, %v2638
        %v2640 = vand.u32 %v2639, 4294901760
        %2641 = vmatpush1.msra.mxu0 %v2640
        %2642 = vmatprep.subr.mxu0 0.0
        %v2643 = vand.u32 %v459, 4294901760
        %v2644 = vsub.f32 %v459, %v2643
        %v2645 = vand.u32 %v2644, 4294901760
        %v2646 = vsub.f32 %v2644, %v2645
        %v2647 = vand.u32 %v2646, 4294901760
        %2648 = vmatpush1.msra.mxu0 %v2647
        %2649 = vmatprep.subr.mxu0 0.0
        %v2650 = vand.u32 %v460, 4294901760
        %v2651 = vsub.f32 %v460, %v2650
        %v2652 = vand.u32 %v2651, 4294901760
        %v2653 = vsub.f32 %v2651, %v2652
        %v2654 = vand.u32 %v2653, 4294901760
        %2655 = vmatpush1.msra.mxu0 %v2654
        %2656 = vmatprep.subr.mxu0 0.0
        %v2657 = vand.u32 %v461, 4294901760
        %v2658 = vsub.f32 %v461, %v2657
        %v2659 = vand.u32 %v2658, 4294901760
        %v2660 = vsub.f32 %v2658, %v2659
        %v2661 = vand.u32 %v2660, 4294901760
        %2662 = vmatpush1.msra.mxu0 %v2661
        %2663 = vmatprep.subr.mxu0 0.0
        %v2664 = vand.u32 %v462, 4294901760
        %v2665 = vsub.f32 %v462, %v2664
        %v2666 = vand.u32 %v2665, 4294901760
        %v2667 = vsub.f32 %v2665, %v2666
        %v2668 = vand.u32 %v2667, 4294901760
        %2669 = vmatpush1.msra.mxu0 %v2668
        %2670 = vmatprep.subr.mxu0 0.0
        %v2671 = vand.u32 %v463, 4294901760
        %v2672 = vsub.f32 %v463, %v2671
        %v2673 = vand.u32 %v2672, 4294901760
        %v2674 = vsub.f32 %v2672, %v2673
        %v2675 = vand.u32 %v2674, 4294901760
        %2676 = vmatpush1.msra.mxu0 %v2675
        %2677 = vmatprep.subr.mxu0 0.0
        %v2678 = vand.u32 %v464, 4294901760
        %v2679 = vsub.f32 %v464, %v2678
        %v2680 = vand.u32 %v2679, 4294901760
        %v2681 = vsub.f32 %v2679, %v2680
        %v2682 = vand.u32 %v2681, 4294901760
        %2683 = vmatpush1.msra.mxu0 %v2682
        %2684 = vmatprep.subr.mxu0 0.0
        %v2685 = vand.u32 %v465, 4294901760
        %v2686 = vsub.f32 %v465, %v2685
        %v2687 = vand.u32 %v2686, 4294901760
        %v2688 = vsub.f32 %v2686, %v2687
        %v2689 = vand.u32 %v2688, 4294901760
        %2690 = vmatpush1.msra.mxu0 %v2689
        %2691 = vmatprep.subr.mxu0 0.0
        %v2692 = vand.u32 %v466, 4294901760
        %v2693 = vsub.f32 %v466, %v2692
        %v2694 = vand.u32 %v2693, 4294901760
        %v2695 = vsub.f32 %v2693, %v2694
        %v2696 = vand.u32 %v2695, 4294901760
        %2697 = vmatpush1.msra.mxu0 %v2696
        %2698 = vmatprep.subr.mxu0 0.0
        %v2699 = vand.u32 %v467, 4294901760
        %v2700 = vsub.f32 %v467, %v2699
        %v2701 = vand.u32 %v2700, 4294901760
        %v2702 = vsub.f32 %v2700, %v2701
        %v2703 = vand.u32 %v2702, 4294901760
        %2704 = vmatpush1.msra.mxu0 %v2703
        %2705 = vmatprep.subr.mxu0 0.0
        %v2706 = vand.u32 %v468, 4294901760
        %v2707 = vsub.f32 %v468, %v2706
        %v2708 = vand.u32 %v2707, 4294901760
        %v2709 = vsub.f32 %v2707, %v2708
        %v2710 = vand.u32 %v2709, 4294901760
        %2711 = vmatpush1.msra.mxu0 %v2710
        %2712 = vmatprep.subr.mxu0 0.0
        %v2713 = vand.u32 %v469, 4294901760
        %v2714 = vsub.f32 %v469, %v2713
        %v2715 = vand.u32 %v2714, 4294901760
        %v2716 = vsub.f32 %v2714, %v2715
        %v2717 = vand.u32 %v2716, 4294901760
        %2718 = vmatpush1.msra.mxu0 %v2717
        %2719 = vmatprep.subr.mxu0 0.0
        %v2720 = vand.u32 %v470, 4294901760
        %v2721 = vsub.f32 %v470, %v2720
        %v2722 = vand.u32 %v2721, 4294901760
        %v2723 = vsub.f32 %v2721, %v2722
        %v2724 = vand.u32 %v2723, 4294901760
        %2725 = vmatpush1.msra.mxu0 %v2724
        %2726 = vmatprep.subr.mxu0 0.0
        %v2727 = vand.u32 %v471, 4294901760
        %v2728 = vsub.f32 %v471, %v2727
        %v2729 = vand.u32 %v2728, 4294901760
        %v2730 = vsub.f32 %v2728, %v2729
        %v2731 = vand.u32 %v2730, 4294901760
        %2732 = vmatpush1.msra.mxu0 %v2731
        %2733 = vmatprep.subr.mxu0 0.0
        %v2734 = vand.u32 %v472, 4294901760
        %v2735 = vsub.f32 %v472, %v2734
        %v2736 = vand.u32 %v2735, 4294901760
        %v2737 = vsub.f32 %v2735, %v2736
        %v2738 = vand.u32 %v2737, 4294901760
        %2739 = vmatpush1.msra.mxu0 %v2738
        %2740 = vmatprep.subr.mxu0 0.0
        %v2741 = vand.u32 %v473, 4294901760
        %v2742 = vsub.f32 %v473, %v2741
        %v2743 = vand.u32 %v2742, 4294901760
        %v2744 = vsub.f32 %v2742, %v2743
        %v2745 = vand.u32 %v2744, 4294901760
        %2746 = vmatpush1.msra.mxu0 %v2745
        %2747 = vmatprep.subr.mxu0 0.0
        %v2748 = vand.u32 %v474, 4294901760
        %v2749 = vsub.f32 %v474, %v2748
        %v2750 = vand.u32 %v2749, 4294901760
        %v2751 = vsub.f32 %v2749, %v2750
        %v2752 = vand.u32 %v2751, 4294901760
        %2753 = vmatpush1.msra.mxu0 %v2752
        %2754 = vmatprep.subr.mxu0 0.0
        %v2755 = vand.u32 %v475, 4294901760
        %v2756 = vsub.f32 %v475, %v2755
        %v2757 = vand.u32 %v2756, 4294901760
        %v2758 = vsub.f32 %v2756, %v2757
        %v2759 = vand.u32 %v2758, 4294901760
        %2760 = vmatpush1.msra.mxu0 %v2759
        %2761 = vmatprep.subr.mxu0 0.0
        %v2762 = vand.u32 %v476, 4294901760
        %v2763 = vsub.f32 %v476, %v2762
        %v2764 = vand.u32 %v2763, 4294901760
        %v2765 = vsub.f32 %v2763, %v2764
        %v2766 = vand.u32 %v2765, 4294901760
        %2767 = vmatpush1.msra.mxu0 %v2766
        %2768 = vmatprep.subr.mxu0 0.0
        %v2769 = vand.u32 %v477, 4294901760
        %v2770 = vsub.f32 %v477, %v2769
        %v2771 = vand.u32 %v2770, 4294901760
        %v2772 = vsub.f32 %v2770, %v2771
        %v2773 = vand.u32 %v2772, 4294901760
        %2774 = vmatpush1.msra.mxu0 %v2773
        %2775 = vmatprep.subr.mxu0 0.0
        %v2776 = vand.u32 %v478, 4294901760
        %v2777 = vsub.f32 %v478, %v2776
        %v2778 = vand.u32 %v2777, 4294901760
        %v2779 = vsub.f32 %v2777, %v2778
        %v2780 = vand.u32 %v2779, 4294901760
        %2781 = vmatpush1.msra.mxu0 %v2780
        %2782 = vmatprep.subr.mxu0 0.0
        %v2783 = vand.u32 %v479, 4294901760
        %v2784 = vsub.f32 %v479, %v2783
        %v2785 = vand.u32 %v2784, 4294901760
        %v2786 = vsub.f32 %v2784, %v2785
        %v2787 = vand.u32 %v2786, 4294901760
        %2788 = vmatpush1.msra.mxu0 %v2787
        %2789 = vmatprep.subr.mxu0 0.0
        %v2790 = vand.u32 %v480, 4294901760
        %v2791 = vsub.f32 %v480, %v2790
        %v2792 = vand.u32 %v2791, 4294901760
        %v2793 = vsub.f32 %v2791, %v2792
        %v2794 = vand.u32 %v2793, 4294901760
        %2795 = vmatpush1.msra.mxu0 %v2794
        %v2796 = vand.u32 %v367, 4294901760
        %2797 = vmatprep.mubr.f32.mxu0 %v2796
        %v2798 = vand.u32 %v365, 4294901760
        %2799 = vmatmul.mubr.f32.gmra.mrb[0].mxu0 %v2798
        %v2800 = vpop.f32.mrb[0].mxu0
        %v2801 = vadd.f32 %v2554, %v2800
        %v2802 = vpop.f32.mrb[0].mxu0
        %v2803 = vand.u32 %v368, 4294901760
        %2804 = vmatprep.mubr.f32.mxu0 %v2803
        %v2805 = vand.u32 %v366, 4294901760
        %2806 = vmatmul.mubr.f32.gmra.mrb[0].mxu0 %v2805
        %v2807 = vpop.f32.mrb[0].mxu0
        %v2808 = vadd.f32 %v2569, %v2807
        %v2809 = vpop.f32.mrb[0].mxu0
        %2810 = vdwg.mxu0
        %2811 = vmatprep.subr.mxu0 0.0
        %v2812 = vand.u32 %v449, 4294901760
        %v2813 = vsub.f32 %v449, %v2812
        %2814 = vmatpush1.msra.mxu0 %v2813
        %2815 = vmatprep.subr.mxu0 0.0
        %v2816 = vand.u32 %v450, 4294901760
        %v2817 = vsub.f32 %v450, %v2816
        %2818 = vmatpush1.msra.mxu0 %v2817
        %2819 = vmatprep.subr.mxu0 0.0
        %v2820 = vand.u32 %v451, 4294901760
        %v2821 = vsub.f32 %v451, %v2820
        %2822 = vmatpush1.msra.mxu0 %v2821
        %2823 = vmatprep.subr.mxu0 0.0
        %v2824 = vand.u32 %v452, 4294901760
        %v2825 = vsub.f32 %v452, %v2824
        %2826 = vmatpush1.msra.mxu0 %v2825
        %2827 = vmatprep.subr.mxu0 0.0
        %v2828 = vand.u32 %v453, 4294901760
        %v2829 = vsub.f32 %v453, %v2828
        %2830 = vmatpush1.msra.mxu0 %v2829
        %2831 = vmatprep.subr.mxu0 0.0
        %v2832 = vand.u32 %v454, 4294901760
        %v2833 = vsub.f32 %v454, %v2832
        %2834 = vmatpush1.msra.mxu0 %v2833
        %2835 = vmatprep.subr.mxu0 0.0
        %v2836 = vand.u32 %v455, 4294901760
        %v2837 = vsub.f32 %v455, %v2836
        %2838 = vmatpush1.msra.mxu0 %v2837
        %2839 = vmatprep.subr.mxu0 0.0
        %v2840 = vand.u32 %v456, 4294901760
        %v2841 = vsub.f32 %v456, %v2840
        %2842 = vmatpush1.msra.mxu0 %v2841
        %2843 = vmatprep.subr.mxu0 0.0
        %v2844 = vand.u32 %v457, 4294901760
        %v2845 = vsub.f32 %v457, %v2844
        %2846 = vmatpush1.msra.mxu0 %v2845
        %2847 = vmatprep.subr.mxu0 0.0
        %v2848 = vand.u32 %v458, 4294901760
        %v2849 = vsub.f32 %v458, %v2848
        %2850 = vmatpush1.msra.mxu0 %v2849
        %2851 = vmatprep.subr.mxu0 0.0
        %v2852 = vand.u32 %v459, 4294901760
        %v2853 = vsub.f32 %v459, %v2852
        %2854 = vmatpush1.msra.mxu0 %v2853
        %2855 = vmatprep.subr.mxu0 0.0
        %v2856 = vand.u32 %v460, 4294901760
        %v2857 = vsub.f32 %v460, %v2856
        %2858 = vmatpush1.msra.mxu0 %v2857
        %2859 = vmatprep.subr.mxu0 0.0
        %v2860 = vand.u32 %v461, 4294901760
        %v2861 = vsub.f32 %v461, %v2860
        %2862 = vmatpush1.msra.mxu0 %v2861
        %2863 = vmatprep.subr.mxu0 0.0
        %v2864 = vand.u32 %v462, 4294901760
        %v2865 = vsub.f32 %v462, %v2864
        %2866 = vmatpush1.msra.mxu0 %v2865
        %2867 = vmatprep.subr.mxu0 0.0
        %v2868 = vand.u32 %v463, 4294901760
        %v2869 = vsub.f32 %v463, %v2868
        %2870 = vmatpush1.msra.mxu0 %v2869
        %2871 = vmatprep.subr.mxu0 0.0
        %v2872 = vand.u32 %v464, 4294901760
        %v2873 = vsub.f32 %v464, %v2872
        %2874 = vmatpush1.msra.mxu0 %v2873
        %2875 = vmatprep.subr.mxu0 0.0
        %v2876 = vand.u32 %v465, 4294901760
        %v2877 = vsub.f32 %v465, %v2876
        %2878 = vmatpush1.msra.mxu0 %v2877
        %2879 = vmatprep.subr.mxu0 0.0
        %v2880 = vand.u32 %v466, 4294901760
        %v2881 = vsub.f32 %v466, %v2880
        %2882 = vmatpush1.msra.mxu0 %v2881
        %2883 = vmatprep.subr.mxu0 0.0
        %v2884 = vand.u32 %v467, 4294901760
        %v2885 = vsub.f32 %v467, %v2884
        %2886 = vmatpush1.msra.mxu0 %v2885
        %2887 = vmatprep.subr.mxu0 0.0
        %v2888 = vand.u32 %v468, 4294901760
        %v2889 = vsub.f32 %v468, %v2888
        %2890 = vmatpush1.msra.mxu0 %v2889
        %2891 = vmatprep.subr.mxu0 0.0
        %v2892 = vand.u32 %v469, 4294901760
        %v2893 = vsub.f32 %v469, %v2892
        %2894 = vmatpush1.msra.mxu0 %v2893
        %2895 = vmatprep.subr.mxu0 0.0
        %v2896 = vand.u32 %v470, 4294901760
        %v2897 = vsub.f32 %v470, %v2896
        %2898 = vmatpush1.msra.mxu0 %v2897
        %2899 = vmatprep.subr.mxu0 0.0
        %v2900 = vand.u32 %v471, 4294901760
        %v2901 = vsub.f32 %v471, %v2900
        %2902 = vmatpush1.msra.mxu0 %v2901
        %2903 = vmatprep.subr.mxu0 0.0
        %v2904 = vand.u32 %v472, 4294901760
        %v2905 = vsub.f32 %v472, %v2904
        %2906 = vmatpush1.msra.mxu0 %v2905
        %2907 = vmatprep.subr.mxu0 0.0
        %v2908 = vand.u32 %v473, 4294901760
        %v2909 = vsub.f32 %v473, %v2908
        %2910 = vmatpush1.msra.mxu0 %v2909
        %2911 = vmatprep.subr.mxu0 0.0
        %v2912 = vand.u32 %v474, 4294901760
        %v2913 = vsub.f32 %v474, %v2912
        %2914 = vmatpush1.msra.mxu0 %v2913
        %2915 = vmatprep.subr.mxu0 0.0
        %v2916 = vand.u32 %v475, 4294901760
        %v2917 = vsub.f32 %v475, %v2916
        %2918 = vmatpush1.msra.mxu0 %v2917
        %2919 = vmatprep.subr.mxu0 0.0
        %v2920 = vand.u32 %v476, 4294901760
        %v2921 = vsub.f32 %v476, %v2920
        %2922 = vmatpush1.msra.mxu0 %v2921
        %2923 = vmatprep.subr.mxu0 0.0
        %v2924 = vand.u32 %v477, 4294901760
        %v2925 = vsub.f32 %v477, %v2924
        %2926 = vmatpush1.msra.mxu0 %v2925
        %2927 = vmatprep.subr.mxu0 0.0
        %v2928 = vand.u32 %v478, 4294901760
        %v2929 = vsub.f32 %v478, %v2928
        %2930 = vmatpush1.msra.mxu0 %v2929
        %2931 = vmatprep.subr.mxu0 0.0
        %v2932 = vand.u32 %v479, 4294901760
        %v2933 = vsub.f32 %v479, %v2932
        %2934 = vmatpush1.msra.mxu0 %v2933
        %2935 = vmatprep.subr.mxu0 0.0
        %v2936 = vand.u32 %v480, 4294901760
        %v2937 = vsub.f32 %v480, %v2936
        %2938 = vmatpush1.msra.mxu0 %v2937
        %v2939 = vand.u32 %v367, 4294901760
        %v2940 = vsub.f32 %v367, %v2939
        %2941 = vmatprep.mubr.f32.mxu0 %v2940
        %v2942 = vand.u32 %v365, 4294901760
        %v2943 = vsub.f32 %v365, %v2942
        %2944 = vmatmul.mubr.f32.gmra.mrb[0].mxu0 %v2943
        %v2945 = vpop.f32.mrb[0].mxu0
        %v2946 = vadd.f32 %v2801, %v2945
        %v2947 = vpop.f32.mrb[0].mxu0
        %v2948 = vand.u32 %v368, 4294901760
        %v2949 = vsub.f32 %v368, %v2948
        %2950 = vmatprep.mubr.f32.mxu0 %v2949
        %v2951 = vand.u32 %v366, 4294901760
        %v2952 = vsub.f32 %v366, %v2951
        %2953 = vmatmul.mubr.f32.gmra.mrb[0].mxu0 %v2952
        %v2954 = vpop.f32.mrb[0].mxu0
        %v2955 = vadd.f32 %v2808, %v2954
        %v2956 = vpop.f32.mrb[0].mxu0
        %2957 = vdwg.mxu0
        %2958 = vmatprep.subr.mxu0 0.0
        %v2959 = vand.u32 %v449, 4294901760
        %2960 = vmatpush1.msra.mxu0 %v2959
        %2961 = vmatprep.subr.mxu0 0.0
        %v2962 = vand.u32 %v450, 4294901760
        %2963 = vmatpush1.msra.mxu0 %v2962
        %2964 = vmatprep.subr.mxu0 0.0
        %v2965 = vand.u32 %v451, 4294901760
        %2966 = vmatpush1.msra.mxu0 %v2965
        %2967 = vmatprep.subr.mxu0 0.0
        %v2968 = vand.u32 %v452, 4294901760
        %2969 = vmatpush1.msra.mxu0 %v2968
        %2970 = vmatprep.subr.mxu0 0.0
        %v2971 = vand.u32 %v453, 4294901760
        %2972 = vmatpush1.msra.mxu0 %v2971
        %2973 = vmatprep.subr.mxu0 0.0
        %v2974 = vand.u32 %v454, 4294901760
        %2975 = vmatpush1.msra.mxu0 %v2974
        %2976 = vmatprep.subr.mxu0 0.0
        %v2977 = vand.u32 %v455, 4294901760
        %2978 = vmatpush1.msra.mxu0 %v2977
        %2979 = vmatprep.subr.mxu0 0.0
        %v2980 = vand.u32 %v456, 4294901760
        %2981 = vmatpush1.msra.mxu0 %v2980
        %2982 = vmatprep.subr.mxu0 0.0
        %v2983 = vand.u32 %v457, 4294901760
        %2984 = vmatpush1.msra.mxu0 %v2983
        %2985 = vmatprep.subr.mxu0 0.0
        %v2986 = vand.u32 %v458, 4294901760
        %2987 = vmatpush1.msra.mxu0 %v2986
        %2988 = vmatprep.subr.mxu0 0.0
        %v2989 = vand.u32 %v459, 4294901760
        %2990 = vmatpush1.msra.mxu0 %v2989
        %2991 = vmatprep.subr.mxu0 0.0
        %v2992 = vand.u32 %v460, 4294901760
        %2993 = vmatpush1.msra.mxu0 %v2992
        %2994 = vmatprep.subr.mxu0 0.0
        %v2995 = vand.u32 %v461, 4294901760
        %2996 = vmatpush1.msra.mxu0 %v2995
        %2997 = vmatprep.subr.mxu0 0.0
        %v2998 = vand.u32 %v462, 4294901760
        %2999 = vmatpush1.msra.mxu0 %v2998
        %3000 = vmatprep.subr.mxu0 0.0
        %v3001 = vand.u32 %v463, 4294901760
        %3002 = vmatpush1.msra.mxu0 %v3001
        %3003 = vmatprep.subr.mxu0 0.0
        %v3004 = vand.u32 %v464, 4294901760
        %3005 = vmatpush1.msra.mxu0 %v3004
        %3006 = vmatprep.subr.mxu0 0.0
        %v3007 = vand.u32 %v465, 4294901760
        %3008 = vmatpush1.msra.mxu0 %v3007
        %3009 = vmatprep.subr.mxu0 0.0
        %v3010 = vand.u32 %v466, 4294901760
        %3011 = vmatpush1.msra.mxu0 %v3010
        %3012 = vmatprep.subr.mxu0 0.0
        %v3013 = vand.u32 %v467, 4294901760
        %3014 = vmatpush1.msra.mxu0 %v3013
        %3015 = vmatprep.subr.mxu0 0.0
        %v3016 = vand.u32 %v468, 4294901760
        %3017 = vmatpush1.msra.mxu0 %v3016
        %3018 = vmatprep.subr.mxu0 0.0
        %v3019 = vand.u32 %v469, 4294901760
        %3020 = vmatpush1.msra.mxu0 %v3019
        %3021 = vmatprep.subr.mxu0 0.0
        %v3022 = vand.u32 %v470, 4294901760
        %3023 = vmatpush1.msra.mxu0 %v3022
        %3024 = vmatprep.subr.mxu0 0.0
        %v3025 = vand.u32 %v471, 4294901760
        %3026 = vmatpush1.msra.mxu0 %v3025
        %3027 = vmatprep.subr.mxu0 0.0
        %v3028 = vand.u32 %v472, 4294901760
        %3029 = vmatpush1.msra.mxu0 %v3028
        %3030 = vmatprep.subr.mxu0 0.0
        %v3031 = vand.u32 %v473, 4294901760
        %3032 = vmatpush1.msra.mxu0 %v3031
        %3033 = vmatprep.subr.mxu0 0.0
        %v3034 = vand.u32 %v474, 4294901760
        %3035 = vmatpush1.msra.mxu0 %v3034
        %3036 = vmatprep.subr.mxu0 0.0
        %v3037 = vand.u32 %v475, 4294901760
        %3038 = vmatpush1.msra.mxu0 %v3037
        %3039 = vmatprep.subr.mxu0 0.0
        %v3040 = vand.u32 %v476, 4294901760
        %3041 = vmatpush1.msra.mxu0 %v3040
        %3042 = vmatprep.subr.mxu0 0.0
        %v3043 = vand.u32 %v477, 4294901760
        %3044 = vmatpush1.msra.mxu0 %v3043
        %3045 = vmatprep.subr.mxu0 0.0
        %v3046 = vand.u32 %v478, 4294901760
        %3047 = vmatpush1.msra.mxu0 %v3046
        %3048 = vmatprep.subr.mxu0 0.0
        %v3049 = vand.u32 %v479, 4294901760
        %3050 = vmatpush1.msra.mxu0 %v3049
        %3051 = vmatprep.subr.mxu0 0.0
        %v3052 = vand.u32 %v480, 4294901760
        %3053 = vmatpush1.msra.mxu0 %v3052
        %v3054 = vand.u32 %v367, 4294901760
        %v3055 = vsub.f32 %v367, %v3054
        %v3056 = vand.u32 %v3055, 4294901760
        %3057 = vmatprep.mubr.f32.mxu0 %v3056
        %v3058 = vand.u32 %v365, 4294901760
        %v3059 = vsub.f32 %v365, %v3058
        %v3060 = vand.u32 %v3059, 4294901760
        %3061 = vmatmul.mubr.f32.gmra.mrb[0].mxu0 %v3060
        %v3062 = vpop.f32.mrb[0].mxu0
        %v3063 = vadd.f32 %v2946, %v3062
        %v3064 = vpop.f32.mrb[0].mxu0
        %v3065 = vand.u32 %v368, 4294901760
        %v3066 = vsub.f32 %v368, %v3065
        %v3067 = vand.u32 %v3066, 4294901760
        %3068 = vmatprep.mubr.f32.mxu0 %v3067
        %v3069 = vand.u32 %v366, 4294901760
        %v3070 = vsub.f32 %v366, %v3069
        %v3071 = vand.u32 %v3070, 4294901760
        %3072 = vmatmul.mubr.f32.gmra.mrb[0].mxu0 %v3071
        %v3073 = vpop.f32.mrb[0].mxu0
        %v3074 = vadd.f32 %v2955, %v3073
        %v3075 = vpop.f32.mrb[0].mxu0
        %3076 = vdwg.mxu0
        %3077 = vmatprep.subr.mxu0 0.0
        %v3078 = vand.u32 %v449, 4294901760
        %v3079 = vsub.f32 %v449, %v3078
        %v3080 = vand.u32 %v3079, 4294901760
        %3081 = vmatpush1.msra.mxu0 %v3080
        %3082 = vmatprep.subr.mxu0 0.0
        %v3083 = vand.u32 %v450, 4294901760
        %v3084 = vsub.f32 %v450, %v3083
        %v3085 = vand.u32 %v3084, 4294901760
        %3086 = vmatpush1.msra.mxu0 %v3085
        %3087 = vmatprep.subr.mxu0 0.0
        %v3088 = vand.u32 %v451, 4294901760
        %v3089 = vsub.f32 %v451, %v3088
        %v3090 = vand.u32 %v3089, 4294901760
        %3091 = vmatpush1.msra.mxu0 %v3090
        %3092 = vmatprep.subr.mxu0 0.0
        %v3093 = vand.u32 %v452, 4294901760
        %v3094 = vsub.f32 %v452, %v3093
        %v3095 = vand.u32 %v3094, 4294901760
        %3096 = vmatpush1.msra.mxu0 %v3095
        %3097 = vmatprep.subr.mxu0 0.0
        %v3098 = vand.u32 %v453, 4294901760
        %v3099 = vsub.f32 %v453, %v3098
        %v3100 = vand.u32 %v3099, 4294901760
        %3101 = vmatpush1.msra.mxu0 %v3100
        %3102 = vmatprep.subr.mxu0 0.0
        %v3103 = vand.u32 %v454, 4294901760
        %v3104 = vsub.f32 %v454, %v3103
        %v3105 = vand.u32 %v3104, 4294901760
        %3106 = vmatpush1.msra.mxu0 %v3105
        %3107 = vmatprep.subr.mxu0 0.0
        %v3108 = vand.u32 %v455, 4294901760
        %v3109 = vsub.f32 %v455, %v3108
        %v3110 = vand.u32 %v3109, 4294901760
        %3111 = vmatpush1.msra.mxu0 %v3110
        %3112 = vmatprep.subr.mxu0 0.0
        %v3113 = vand.u32 %v456, 4294901760
        %v3114 = vsub.f32 %v456, %v3113
        %v3115 = vand.u32 %v3114, 4294901760
        %3116 = vmatpush1.msra.mxu0 %v3115
        %3117 = vmatprep.subr.mxu0 0.0
        %v3118 = vand.u32 %v457, 4294901760
        %v3119 = vsub.f32 %v457, %v3118
        %v3120 = vand.u32 %v3119, 4294901760
        %3121 = vmatpush1.msra.mxu0 %v3120
        %3122 = vmatprep.subr.mxu0 0.0
        %v3123 = vand.u32 %v458, 4294901760
        %v3124 = vsub.f32 %v458, %v3123
        %v3125 = vand.u32 %v3124, 4294901760
        %3126 = vmatpush1.msra.mxu0 %v3125
        %3127 = vmatprep.subr.mxu0 0.0
        %v3128 = vand.u32 %v459, 4294901760
        %v3129 = vsub.f32 %v459, %v3128
        %v3130 = vand.u32 %v3129, 4294901760
        %3131 = vmatpush1.msra.mxu0 %v3130
        %3132 = vmatprep.subr.mxu0 0.0
        %v3133 = vand.u32 %v460, 4294901760
        %v3134 = vsub.f32 %v460, %v3133
        %v3135 = vand.u32 %v3134, 4294901760
        %3136 = vmatpush1.msra.mxu0 %v3135
        %3137 = vmatprep.subr.mxu0 0.0
        %v3138 = vand.u32 %v461, 4294901760
        %v3139 = vsub.f32 %v461, %v3138
        %v3140 = vand.u32 %v3139, 4294901760
        %3141 = vmatpush1.msra.mxu0 %v3140
        %3142 = vmatprep.subr.mxu0 0.0
        %v3143 = vand.u32 %v462, 4294901760
        %v3144 = vsub.f32 %v462, %v3143
        %v3145 = vand.u32 %v3144, 4294901760
        %3146 = vmatpush1.msra.mxu0 %v3145
        %3147 = vmatprep.subr.mxu0 0.0
        %v3148 = vand.u32 %v463, 4294901760
        %v3149 = vsub.f32 %v463, %v3148
        %v3150 = vand.u32 %v3149, 4294901760
        %3151 = vmatpush1.msra.mxu0 %v3150
        %3152 = vmatprep.subr.mxu0 0.0
        %v3153 = vand.u32 %v464, 4294901760
        %v3154 = vsub.f32 %v464, %v3153
        %v3155 = vand.u32 %v3154, 4294901760
        %3156 = vmatpush1.msra.mxu0 %v3155
        %3157 = vmatprep.subr.mxu0 0.0
        %v3158 = vand.u32 %v465, 4294901760
        %v3159 = vsub.f32 %v465, %v3158
        %v3160 = vand.u32 %v3159, 4294901760
        %3161 = vmatpush1.msra.mxu0 %v3160
        %3162 = vmatprep.subr.mxu0 0.0
        %v3163 = vand.u32 %v466, 4294901760
        %v3164 = vsub.f32 %v466, %v3163
        %v3165 = vand.u32 %v3164, 4294901760
        %3166 = vmatpush1.msra.mxu0 %v3165
        %3167 = vmatprep.subr.mxu0 0.0
        %v3168 = vand.u32 %v467, 4294901760
        %v3169 = vsub.f32 %v467, %v3168
        %v3170 = vand.u32 %v3169, 4294901760
        %3171 = vmatpush1.msra.mxu0 %v3170
        %3172 = vmatprep.subr.mxu0 0.0
        %v3173 = vand.u32 %v468, 4294901760
        %v3174 = vsub.f32 %v468, %v3173
        %v3175 = vand.u32 %v3174, 4294901760
        %3176 = vmatpush1.msra.mxu0 %v3175
        %3177 = vmatprep.subr.mxu0 0.0
        %v3178 = vand.u32 %v469, 4294901760
        %v3179 = vsub.f32 %v469, %v3178
        %v3180 = vand.u32 %v3179, 4294901760
        %3181 = vmatpush1.msra.mxu0 %v3180
        %3182 = vmatprep.subr.mxu0 0.0
        %v3183 = vand.u32 %v470, 4294901760
        %v3184 = vsub.f32 %v470, %v3183
        %v3185 = vand.u32 %v3184, 4294901760
        %3186 = vmatpush1.msra.mxu0 %v3185
        %3187 = vmatprep.subr.mxu0 0.0
        %v3188 = vand.u32 %v471, 4294901760
        %v3189 = vsub.f32 %v471, %v3188
        %v3190 = vand.u32 %v3189, 4294901760
        %3191 = vmatpush1.msra.mxu0 %v3190
        %3192 = vmatprep.subr.mxu0 0.0
        %v3193 = vand.u32 %v472, 4294901760
        %v3194 = vsub.f32 %v472, %v3193
        %v3195 = vand.u32 %v3194, 4294901760
        %3196 = vmatpush1.msra.mxu0 %v3195
        %3197 = vmatprep.subr.mxu0 0.0
        %v3198 = vand.u32 %v473, 4294901760
        %v3199 = vsub.f32 %v473, %v3198
        %v3200 = vand.u32 %v3199, 4294901760
        %3201 = vmatpush1.msra.mxu0 %v3200
        %3202 = vmatprep.subr.mxu0 0.0
        %v3203 = vand.u32 %v474, 4294901760
        %v3204 = vsub.f32 %v474, %v3203
        %v3205 = vand.u32 %v3204, 4294901760
        %3206 = vmatpush1.msra.mxu0 %v3205
        %3207 = vmatprep.subr.mxu0 0.0
        %v3208 = vand.u32 %v475, 4294901760
        %v3209 = vsub.f32 %v475, %v3208
        %v3210 = vand.u32 %v3209, 4294901760
        %3211 = vmatpush1.msra.mxu0 %v3210
        %3212 = vmatprep.subr.mxu0 0.0
        %v3213 = vand.u32 %v476, 4294901760
        %v3214 = vsub.f32 %v476, %v3213
        %v3215 = vand.u32 %v3214, 4294901760
        %3216 = vmatpush1.msra.mxu0 %v3215
        %3217 = vmatprep.subr.mxu0 0.0
        %v3218 = vand.u32 %v477, 4294901760
        %v3219 = vsub.f32 %v477, %v3218
        %v3220 = vand.u32 %v3219, 4294901760
        %3221 = vmatpush1.msra.mxu0 %v3220
        %3222 = vmatprep.subr.mxu0 0.0
        %v3223 = vand.u32 %v478, 4294901760
        %v3224 = vsub.f32 %v478, %v3223
        %v3225 = vand.u32 %v3224, 4294901760
        %3226 = vmatpush1.msra.mxu0 %v3225
        %3227 = vmatprep.subr.mxu0 0.0
        %v3228 = vand.u32 %v479, 4294901760
        %v3229 = vsub.f32 %v479, %v3228
        %v3230 = vand.u32 %v3229, 4294901760
        %3231 = vmatpush1.msra.mxu0 %v3230
        %3232 = vmatprep.subr.mxu0 0.0
        %v3233 = vand.u32 %v480, 4294901760
        %v3234 = vsub.f32 %v480, %v3233
        %v3235 = vand.u32 %v3234, 4294901760
        %3236 = vmatpush1.msra.mxu0 %v3235
        %v3237 = vand.u32 %v367, 4294901760
        %3238 = vmatprep.mubr.f32.mxu0 %v3237
        %v3239 = vand.u32 %v365, 4294901760
        %3240 = vmatmul.mubr.f32.gmra.mrb[0].mxu0 %v3239
        %v3241 = vpop.f32.mrb[0].mxu0
        %v3242 = vadd.f32 %v3063, %v3241
        %v3243 = vpop.f32.mrb[0].mxu0
        %v3244 = vand.u32 %v368, 4294901760
        %3245 = vmatprep.mubr.f32.mxu0 %v3244
        %v3246 = vand.u32 %v366, 4294901760
        %3247 = vmatmul.mubr.f32.gmra.mrb[0].mxu0 %v3246
        %v3248 = vpop.f32.mrb[0].mxu0
        %v3249 = vadd.f32 %v3074, %v3248
        %v3250 = vpop.f32.mrb[0].mxu0
        %3251 = vdwg.mxu0
        %3252 = vmatprep.subr.mxu0 0.0
        %v3253 = vand.u32 %v449, 4294901760
        %3254 = vmatpush1.msra.mxu0 %v3253
        %3255 = vmatprep.subr.mxu0 0.0
        %v3256 = vand.u32 %v450, 4294901760
        %3257 = vmatpush1.msra.mxu0 %v3256
        %3258 = vmatprep.subr.mxu0 0.0
        %v3259 = vand.u32 %v451, 4294901760
        %3260 = vmatpush1.msra.mxu0 %v3259
        %3261 = vmatprep.subr.mxu0 0.0
        %v3262 = vand.u32 %v452, 4294901760
        %3263 = vmatpush1.msra.mxu0 %v3262
        %3264 = vmatprep.subr.mxu0 0.0
        %v3265 = vand.u32 %v453, 4294901760
        %3266 = vmatpush1.msra.mxu0 %v3265
        %3267 = vmatprep.subr.mxu0 0.0
        %v3268 = vand.u32 %v454, 4294901760
        %3269 = vmatpush1.msra.mxu0 %v3268
        %3270 = vmatprep.subr.mxu0 0.0
        %v3271 = vand.u32 %v455, 4294901760
        %3272 = vmatpush1.msra.mxu0 %v3271
        %3273 = vmatprep.subr.mxu0 0.0
        %v3274 = vand.u32 %v456, 4294901760
        %3275 = vmatpush1.msra.mxu0 %v3274
        %3276 = vmatprep.subr.mxu0 0.0
        %v3277 = vand.u32 %v457, 4294901760
        %3278 = vmatpush1.msra.mxu0 %v3277
        %3279 = vmatprep.subr.mxu0 0.0
        %v3280 = vand.u32 %v458, 4294901760
        %3281 = vmatpush1.msra.mxu0 %v3280
        %3282 = vmatprep.subr.mxu0 0.0
        %v3283 = vand.u32 %v459, 4294901760
        %3284 = vmatpush1.msra.mxu0 %v3283
        %3285 = vmatprep.subr.mxu0 0.0
        %v3286 = vand.u32 %v460, 4294901760
        %3287 = vmatpush1.msra.mxu0 %v3286
        %3288 = vmatprep.subr.mxu0 0.0
        %v3289 = vand.u32 %v461, 4294901760
        %3290 = vmatpush1.msra.mxu0 %v3289
        %3291 = vmatprep.subr.mxu0 0.0
        %v3292 = vand.u32 %v462, 4294901760
        %3293 = vmatpush1.msra.mxu0 %v3292
        %3294 = vmatprep.subr.mxu0 0.0
        %v3295 = vand.u32 %v463, 4294901760
        %3296 = vmatpush1.msra.mxu0 %v3295
        %3297 = vmatprep.subr.mxu0 0.0
        %v3298 = vand.u32 %v464, 4294901760
        %3299 = vmatpush1.msra.mxu0 %v3298
        %3300 = vmatprep.subr.mxu0 0.0
        %v3301 = vand.u32 %v465, 4294901760
        %3302 = vmatpush1.msra.mxu0 %v3301
        %3303 = vmatprep.subr.mxu0 0.0
        %v3304 = vand.u32 %v466, 4294901760
        %3305 = vmatpush1.msra.mxu0 %v3304
        %3306 = vmatprep.subr.mxu0 0.0
        %v3307 = vand.u32 %v467, 4294901760
        %3308 = vmatpush1.msra.mxu0 %v3307
        %3309 = vmatprep.subr.mxu0 0.0
        %v3310 = vand.u32 %v468, 4294901760
        %3311 = vmatpush1.msra.mxu0 %v3310
        %3312 = vmatprep.subr.mxu0 0.0
        %v3313 = vand.u32 %v469, 4294901760
        %3314 = vmatpush1.msra.mxu0 %v3313
        %3315 = vmatprep.subr.mxu0 0.0
        %v3316 = vand.u32 %v470, 4294901760
        %3317 = vmatpush1.msra.mxu0 %v3316
        %3318 = vmatprep.subr.mxu0 0.0
        %v3319 = vand.u32 %v471, 4294901760
        %3320 = vmatpush1.msra.mxu0 %v3319
        %3321 = vmatprep.subr.mxu0 0.0
        %v3322 = vand.u32 %v472, 4294901760
        %3323 = vmatpush1.msra.mxu0 %v3322
        %3324 = vmatprep.subr.mxu0 0.0
        %v3325 = vand.u32 %v473, 4294901760
        %3326 = vmatpush1.msra.mxu0 %v3325
        %3327 = vmatprep.subr.mxu0 0.0
        %v3328 = vand.u32 %v474, 4294901760
        %3329 = vmatpush1.msra.mxu0 %v3328
        %3330 = vmatprep.subr.mxu0 0.0
        %v3331 = vand.u32 %v475, 4294901760
        %3332 = vmatpush1.msra.mxu0 %v3331
        %3333 = vmatprep.subr.mxu0 0.0
        %v3334 = vand.u32 %v476, 4294901760
        %3335 = vmatpush1.msra.mxu0 %v3334
        %3336 = vmatprep.subr.mxu0 0.0
        %v3337 = vand.u32 %v477, 4294901760
        %3338 = vmatpush1.msra.mxu0 %v3337
        %3339 = vmatprep.subr.mxu0 0.0
        %v3340 = vand.u32 %v478, 4294901760
        %3341 = vmatpush1.msra.mxu0 %v3340
        %3342 = vmatprep.subr.mxu0 0.0
        %v3343 = vand.u32 %v479, 4294901760
        %3344 = vmatpush1.msra.mxu0 %v3343
        %3345 = vmatprep.subr.mxu0 0.0
        %v3346 = vand.u32 %v480, 4294901760
        %3347 = vmatpush1.msra.mxu0 %v3346
        %v3348 = vand.u32 %v367, 4294901760
        %3349 = vmatprep.mubr.f32.mxu0 %v3348
        %v3350 = vand.u32 %v365, 4294901760
        %3351 = vmatmul.mubr.f32.gmra.mrb[0].mxu0 %v3350
        %v3352 = vpop.f32.mrb[0].mxu0
        %v3353 = vadd.f32 %v3242, %v3352
        %v3354 = vpop.f32.mrb[0].mxu0
        %v3355 = vand.u32 %v368, 4294901760
        %3356 = vmatprep.mubr.f32.mxu0 %v3355
        %v3357 = vand.u32 %v366, 4294901760
        %3358 = vmatmul.mubr.f32.gmra.mrb[0].mxu0 %v3357
        %v3359 = vpop.f32.mrb[0].mxu0
        %v3360 = vadd.f32 %v3249, %v3359
        %v3361 = vpop.f32.mrb[0].mxu0
        %3362 = vdwg.mxu0
        %3363 = vmatprep.subr.mxu0 0.0
        %v3364 = vand.u32 %v481, 4294901760
        %3365 = vmatpush1.msra.mxu0 %v3364
        %3366 = vmatprep.subr.mxu0 0.0
        %v3367 = vand.u32 %v482, 4294901760
        %3368 = vmatpush1.msra.mxu0 %v3367
        %3369 = vmatprep.subr.mxu0 0.0
        %v3370 = vand.u32 %v483, 4294901760
        %3371 = vmatpush1.msra.mxu0 %v3370
        %3372 = vmatprep.subr.mxu0 0.0
        %v3373 = vand.u32 %v484, 4294901760
        %3374 = vmatpush1.msra.mxu0 %v3373
        %3375 = vmatprep.subr.mxu0 0.0
        %v3376 = vand.u32 %v485, 4294901760
        %3377 = vmatpush1.msra.mxu0 %v3376
        %3378 = vmatprep.subr.mxu0 0.0
        %v3379 = vand.u32 %v486, 4294901760
        %3380 = vmatpush1.msra.mxu0 %v3379
        %3381 = vmatprep.subr.mxu0 0.0
        %v3382 = vand.u32 %v487, 4294901760
        %3383 = vmatpush1.msra.mxu0 %v3382
        %3384 = vmatprep.subr.mxu0 0.0
        %v3385 = vand.u32 %v488, 4294901760
        %3386 = vmatpush1.msra.mxu0 %v3385
        %3387 = vmatprep.subr.mxu0 0.0
        %v3388 = vand.u32 %v489, 4294901760
        %3389 = vmatpush1.msra.mxu0 %v3388
        %3390 = vmatprep.subr.mxu0 0.0
        %v3391 = vand.u32 %v490, 4294901760
        %3392 = vmatpush1.msra.mxu0 %v3391
        %3393 = vmatprep.subr.mxu0 0.0
        %v3394 = vand.u32 %v491, 4294901760
        %3395 = vmatpush1.msra.mxu0 %v3394
        %3396 = vmatprep.subr.mxu0 0.0
        %v3397 = vand.u32 %v492, 4294901760
        %3398 = vmatpush1.msra.mxu0 %v3397
        %3399 = vmatprep.subr.mxu0 0.0
        %v3400 = vand.u32 %v493, 4294901760
        %3401 = vmatpush1.msra.mxu0 %v3400
        %3402 = vmatprep.subr.mxu0 0.0
        %v3403 = vand.u32 %v494, 4294901760
        %3404 = vmatpush1.msra.mxu0 %v3403
        %3405 = vmatprep.subr.mxu0 0.0
        %v3406 = vand.u32 %v495, 4294901760
        %3407 = vmatpush1.msra.mxu0 %v3406
        %3408 = vmatprep.subr.mxu0 0.0
        %v3409 = vand.u32 %v496, 4294901760
        %3410 = vmatpush1.msra.mxu0 %v3409
        %3411 = vmatprep.subr.mxu0 0.0
        %v3412 = vand.u32 %v497, 4294901760
        %3413 = vmatpush1.msra.mxu0 %v3412
        %3414 = vmatprep.subr.mxu0 0.0
        %v3415 = vand.u32 %v498, 4294901760
        %3416 = vmatpush1.msra.mxu0 %v3415
        %3417 = vmatprep.subr.mxu0 0.0
        %v3418 = vand.u32 %v499, 4294901760
        %3419 = vmatpush1.msra.mxu0 %v3418
        %3420 = vmatprep.subr.mxu0 0.0
        %v3421 = vand.u32 %v500, 4294901760
        %3422 = vmatpush1.msra.mxu0 %v3421
        %3423 = vmatprep.subr.mxu0 0.0
        %v3424 = vand.u32 %v501, 4294901760
        %3425 = vmatpush1.msra.mxu0 %v3424
        %3426 = vmatprep.subr.mxu0 0.0
        %v3427 = vand.u32 %v502, 4294901760
        %3428 = vmatpush1.msra.mxu0 %v3427
        %3429 = vmatprep.subr.mxu0 0.0
        %v3430 = vand.u32 %v503, 4294901760
        %3431 = vmatpush1.msra.mxu0 %v3430
        %3432 = vmatprep.subr.mxu0 0.0
        %v3433 = vand.u32 %v504, 4294901760
        %3434 = vmatpush1.msra.mxu0 %v3433
        %3435 = vmatprep.subr.mxu0 0.0
        %v3436 = vand.u32 %v505, 4294901760
        %3437 = vmatpush1.msra.mxu0 %v3436
        %3438 = vmatprep.subr.mxu0 0.0
        %v3439 = vand.u32 %v506, 4294901760
        %3440 = vmatpush1.msra.mxu0 %v3439
        %3441 = vmatprep.subr.mxu0 0.0
        %v3442 = vand.u32 %v507, 4294901760
        %3443 = vmatpush1.msra.mxu0 %v3442
        %3444 = vmatprep.subr.mxu0 0.0
        %v3445 = vand.u32 %v508, 4294901760
        %3446 = vmatpush1.msra.mxu0 %v3445
        %3447 = vmatprep.subr.mxu0 0.0
        %v3448 = vand.u32 %v509, 4294901760
        %3449 = vmatpush1.msra.mxu0 %v3448
        %3450 = vmatprep.subr.mxu0 0.0
        %v3451 = vand.u32 %v510, 4294901760
        %3452 = vmatpush1.msra.mxu0 %v3451
        %3453 = vmatprep.subr.mxu0 0.0
        %v3454 = vand.u32 %v511, 4294901760
        %3455 = vmatpush1.msra.mxu0 %v3454
        %3456 = vmatprep.subr.mxu0 0.0
        %v3457 = vand.u32 %v512, 4294901760
        %3458 = vmatpush1.msra.mxu0 %v3457
        %v3459 = vand.u32 %v371, 4294901760
        %v3460 = vsub.f32 %v371, %v3459
        %v3461 = vand.u32 %v3460, 4294901760
        %v3462 = vsub.f32 %v3460, %v3461
        %v3463 = vand.u32 %v3462, 4294901760
        %3464 = vmatprep.mubr.f32.mxu0 %v3463
        %v3465 = vand.u32 %v369, 4294901760
        %v3466 = vsub.f32 %v369, %v3465
        %v3467 = vand.u32 %v3466, 4294901760
        %v3468 = vsub.f32 %v3466, %v3467
        %v3469 = vand.u32 %v3468, 4294901760
        %3470 = vmatmul.mubr.f32.gmra.mrb[0].mxu0 %v3469
        %v3471 = vpop.f32.mrb[0].mxu0
        %v3472 = vadd.f32 %v3353, %v3471
        %v3473 = vpop.f32.mrb[0].mxu0
        %v3474 = vand.u32 %v372, 4294901760
        %v3475 = vsub.f32 %v372, %v3474
        %v3476 = vand.u32 %v3475, 4294901760
        %v3477 = vsub.f32 %v3475, %v3476
        %v3478 = vand.u32 %v3477, 4294901760
        %3479 = vmatprep.mubr.f32.mxu0 %v3478
        %v3480 = vand.u32 %v370, 4294901760
        %v3481 = vsub.f32 %v370, %v3480
        %v3482 = vand.u32 %v3481, 4294901760
        %v3483 = vsub.f32 %v3481, %v3482
        %v3484 = vand.u32 %v3483, 4294901760
        %3485 = vmatmul.mubr.f32.gmra.mrb[0].mxu0 %v3484
        %v3486 = vpop.f32.mrb[0].mxu0
        %v3487 = vadd.f32 %v3360, %v3486
        %v3488 = vpop.f32.mrb[0].mxu0
        %3489 = vdwg.mxu0
        %3490 = vmatprep.subr.mxu0 0.0
        %v3491 = vand.u32 %v481, 4294901760
        %v3492 = vsub.f32 %v481, %v3491
        %v3493 = vand.u32 %v3492, 4294901760
        %v3494 = vsub.f32 %v3492, %v3493
        %v3495 = vand.u32 %v3494, 4294901760
        %3496 = vmatpush1.msra.mxu0 %v3495
        %3497 = vmatprep.subr.mxu0 0.0
        %v3498 = vand.u32 %v482, 4294901760
        %v3499 = vsub.f32 %v482, %v3498
        %v3500 = vand.u32 %v3499, 4294901760
        %v3501 = vsub.f32 %v3499, %v3500
        %v3502 = vand.u32 %v3501, 4294901760
        %3503 = vmatpush1.msra.mxu0 %v3502
        %3504 = vmatprep.subr.mxu0 0.0
        %v3505 = vand.u32 %v483, 4294901760
        %v3506 = vsub.f32 %v483, %v3505
        %v3507 = vand.u32 %v3506, 4294901760
        %v3508 = vsub.f32 %v3506, %v3507
        %v3509 = vand.u32 %v3508, 4294901760
        %3510 = vmatpush1.msra.mxu0 %v3509
        %3511 = vmatprep.subr.mxu0 0.0
        %v3512 = vand.u32 %v484, 4294901760
        %v3513 = vsub.f32 %v484, %v3512
        %v3514 = vand.u32 %v3513, 4294901760
        %v3515 = vsub.f32 %v3513, %v3514
        %v3516 = vand.u32 %v3515, 4294901760
        %3517 = vmatpush1.msra.mxu0 %v3516
        %3518 = vmatprep.subr.mxu0 0.0
        %v3519 = vand.u32 %v485, 4294901760
        %v3520 = vsub.f32 %v485, %v3519
        %v3521 = vand.u32 %v3520, 4294901760
        %v3522 = vsub.f32 %v3520, %v3521
        %v3523 = vand.u32 %v3522, 4294901760
        %3524 = vmatpush1.msra.mxu0 %v3523
        %3525 = vmatprep.subr.mxu0 0.0
        %v3526 = vand.u32 %v486, 4294901760
        %v3527 = vsub.f32 %v486, %v3526
        %v3528 = vand.u32 %v3527, 4294901760
        %v3529 = vsub.f32 %v3527, %v3528
        %v3530 = vand.u32 %v3529, 4294901760
        %3531 = vmatpush1.msra.mxu0 %v3530
        %3532 = vmatprep.subr.mxu0 0.0
        %v3533 = vand.u32 %v487, 4294901760
        %v3534 = vsub.f32 %v487, %v3533
        %v3535 = vand.u32 %v3534, 4294901760
        %v3536 = vsub.f32 %v3534, %v3535
        %v3537 = vand.u32 %v3536, 4294901760
        %3538 = vmatpush1.msra.mxu0 %v3537
        %3539 = vmatprep.subr.mxu0 0.0
        %v3540 = vand.u32 %v488, 4294901760
        %v3541 = vsub.f32 %v488, %v3540
        %v3542 = vand.u32 %v3541, 4294901760
        %v3543 = vsub.f32 %v3541, %v3542
        %v3544 = vand.u32 %v3543, 4294901760
        %3545 = vmatpush1.msra.mxu0 %v3544
        %3546 = vmatprep.subr.mxu0 0.0
        %v3547 = vand.u32 %v489, 4294901760
        %v3548 = vsub.f32 %v489, %v3547
        %v3549 = vand.u32 %v3548, 4294901760
        %v3550 = vsub.f32 %v3548, %v3549
        %v3551 = vand.u32 %v3550, 4294901760
        %3552 = vmatpush1.msra.mxu0 %v3551
        %3553 = vmatprep.subr.mxu0 0.0
        %v3554 = vand.u32 %v490, 4294901760
        %v3555 = vsub.f32 %v490, %v3554
        %v3556 = vand.u32 %v3555, 4294901760
        %v3557 = vsub.f32 %v3555, %v3556
        %v3558 = vand.u32 %v3557, 4294901760
        %3559 = vmatpush1.msra.mxu0 %v3558
        %3560 = vmatprep.subr.mxu0 0.0
        %v3561 = vand.u32 %v491, 4294901760
        %v3562 = vsub.f32 %v491, %v3561
        %v3563 = vand.u32 %v3562, 4294901760
        %v3564 = vsub.f32 %v3562, %v3563
        %v3565 = vand.u32 %v3564, 4294901760
        %3566 = vmatpush1.msra.mxu0 %v3565
        %3567 = vmatprep.subr.mxu0 0.0
        %v3568 = vand.u32 %v492, 4294901760
        %v3569 = vsub.f32 %v492, %v3568
        %v3570 = vand.u32 %v3569, 4294901760
        %v3571 = vsub.f32 %v3569, %v3570
        %v3572 = vand.u32 %v3571, 4294901760
        %3573 = vmatpush1.msra.mxu0 %v3572
        %3574 = vmatprep.subr.mxu0 0.0
        %v3575 = vand.u32 %v493, 4294901760
        %v3576 = vsub.f32 %v493, %v3575
        %v3577 = vand.u32 %v3576, 4294901760
        %v3578 = vsub.f32 %v3576, %v3577
        %v3579 = vand.u32 %v3578, 4294901760
        %3580 = vmatpush1.msra.mxu0 %v3579
        %3581 = vmatprep.subr.mxu0 0.0
        %v3582 = vand.u32 %v494, 4294901760
        %v3583 = vsub.f32 %v494, %v3582
        %v3584 = vand.u32 %v3583, 4294901760
        %v3585 = vsub.f32 %v3583, %v3584
        %v3586 = vand.u32 %v3585, 4294901760
        %3587 = vmatpush1.msra.mxu0 %v3586
        %3588 = vmatprep.subr.mxu0 0.0
        %v3589 = vand.u32 %v495, 4294901760
        %v3590 = vsub.f32 %v495, %v3589
        %v3591 = vand.u32 %v3590, 4294901760
        %v3592 = vsub.f32 %v3590, %v3591
        %v3593 = vand.u32 %v3592, 4294901760
        %3594 = vmatpush1.msra.mxu0 %v3593
        %3595 = vmatprep.subr.mxu0 0.0
        %v3596 = vand.u32 %v496, 4294901760
        %v3597 = vsub.f32 %v496, %v3596
        %v3598 = vand.u32 %v3597, 4294901760
        %v3599 = vsub.f32 %v3597, %v3598
        %v3600 = vand.u32 %v3599, 4294901760
        %3601 = vmatpush1.msra.mxu0 %v3600
        %3602 = vmatprep.subr.mxu0 0.0
        %v3603 = vand.u32 %v497, 4294901760
        %v3604 = vsub.f32 %v497, %v3603
        %v3605 = vand.u32 %v3604, 4294901760
        %v3606 = vsub.f32 %v3604, %v3605
        %v3607 = vand.u32 %v3606, 4294901760
        %3608 = vmatpush1.msra.mxu0 %v3607
        %3609 = vmatprep.subr.mxu0 0.0
        %v3610 = vand.u32 %v498, 4294901760
        %v3611 = vsub.f32 %v498, %v3610
        %v3612 = vand.u32 %v3611, 4294901760
        %v3613 = vsub.f32 %v3611, %v3612
        %v3614 = vand.u32 %v3613, 4294901760
        %3615 = vmatpush1.msra.mxu0 %v3614
        %3616 = vmatprep.subr.mxu0 0.0
        %v3617 = vand.u32 %v499, 4294901760
        %v3618 = vsub.f32 %v499, %v3617
        %v3619 = vand.u32 %v3618, 4294901760
        %v3620 = vsub.f32 %v3618, %v3619
        %v3621 = vand.u32 %v3620, 4294901760
        %3622 = vmatpush1.msra.mxu0 %v3621
        %3623 = vmatprep.subr.mxu0 0.0
        %v3624 = vand.u32 %v500, 4294901760
        %v3625 = vsub.f32 %v500, %v3624
        %v3626 = vand.u32 %v3625, 4294901760
        %v3627 = vsub.f32 %v3625, %v3626
        %v3628 = vand.u32 %v3627, 4294901760
        %3629 = vmatpush1.msra.mxu0 %v3628
        %3630 = vmatprep.subr.mxu0 0.0
        %v3631 = vand.u32 %v501, 4294901760
        %v3632 = vsub.f32 %v501, %v3631
        %v3633 = vand.u32 %v3632, 4294901760
        %v3634 = vsub.f32 %v3632, %v3633
        %v3635 = vand.u32 %v3634, 4294901760
        %3636 = vmatpush1.msra.mxu0 %v3635
        %3637 = vmatprep.subr.mxu0 0.0
        %v3638 = vand.u32 %v502, 4294901760
        %v3639 = vsub.f32 %v502, %v3638
        %v3640 = vand.u32 %v3639, 4294901760
        %v3641 = vsub.f32 %v3639, %v3640
        %v3642 = vand.u32 %v3641, 4294901760
        %3643 = vmatpush1.msra.mxu0 %v3642
        %3644 = vmatprep.subr.mxu0 0.0
        %v3645 = vand.u32 %v503, 4294901760
        %v3646 = vsub.f32 %v503, %v3645
        %v3647 = vand.u32 %v3646, 4294901760
        %v3648 = vsub.f32 %v3646, %v3647
        %v3649 = vand.u32 %v3648, 4294901760
        %3650 = vmatpush1.msra.mxu0 %v3649
        %3651 = vmatprep.subr.mxu0 0.0
        %v3652 = vand.u32 %v504, 4294901760
        %v3653 = vsub.f32 %v504, %v3652
        %v3654 = vand.u32 %v3653, 4294901760
        %v3655 = vsub.f32 %v3653, %v3654
        %v3656 = vand.u32 %v3655, 4294901760
        %3657 = vmatpush1.msra.mxu0 %v3656
        %3658 = vmatprep.subr.mxu0 0.0
        %v3659 = vand.u32 %v505, 4294901760
        %v3660 = vsub.f32 %v505, %v3659
        %v3661 = vand.u32 %v3660, 4294901760
        %v3662 = vsub.f32 %v3660, %v3661
        %v3663 = vand.u32 %v3662, 4294901760
        %3664 = vmatpush1.msra.mxu0 %v3663
        %3665 = vmatprep.subr.mxu0 0.0
        %v3666 = vand.u32 %v506, 4294901760
        %v3667 = vsub.f32 %v506, %v3666
        %v3668 = vand.u32 %v3667, 4294901760
        %v3669 = vsub.f32 %v3667, %v3668
        %v3670 = vand.u32 %v3669, 4294901760
        %3671 = vmatpush1.msra.mxu0 %v3670
        %3672 = vmatprep.subr.mxu0 0.0
        %v3673 = vand.u32 %v507, 4294901760
        %v3674 = vsub.f32 %v507, %v3673
        %v3675 = vand.u32 %v3674, 4294901760
        %v3676 = vsub.f32 %v3674, %v3675
        %v3677 = vand.u32 %v3676, 4294901760
        %3678 = vmatpush1.msra.mxu0 %v3677
        %3679 = vmatprep.subr.mxu0 0.0
        %v3680 = vand.u32 %v508, 4294901760
        %v3681 = vsub.f32 %v508, %v3680
        %v3682 = vand.u32 %v3681, 4294901760
        %v3683 = vsub.f32 %v3681, %v3682
        %v3684 = vand.u32 %v3683, 4294901760
        %3685 = vmatpush1.msra.mxu0 %v3684
        %3686 = vmatprep.subr.mxu0 0.0
        %v3687 = vand.u32 %v509, 4294901760
        %v3688 = vsub.f32 %v509, %v3687
        %v3689 = vand.u32 %v3688, 4294901760
        %v3690 = vsub.f32 %v3688, %v3689
        %v3691 = vand.u32 %v3690, 4294901760
        %3692 = vmatpush1.msra.mxu0 %v3691
        %3693 = vmatprep.subr.mxu0 0.0
        %v3694 = vand.u32 %v510, 4294901760
        %v3695 = vsub.f32 %v510, %v3694
        %v3696 = vand.u32 %v3695, 4294901760
        %v3697 = vsub.f32 %v3695, %v3696
        %v3698 = vand.u32 %v3697, 4294901760
        %3699 = vmatpush1.msra.mxu0 %v3698
        %3700 = vmatprep.subr.mxu0 0.0
        %v3701 = vand.u32 %v511, 4294901760
        %v3702 = vsub.f32 %v511, %v3701
        %v3703 = vand.u32 %v3702, 4294901760
        %v3704 = vsub.f32 %v3702, %v3703
        %v3705 = vand.u32 %v3704, 4294901760
        %3706 = vmatpush1.msra.mxu0 %v3705
        %3707 = vmatprep.subr.mxu0 0.0
        %v3708 = vand.u32 %v512, 4294901760
        %v3709 = vsub.f32 %v512, %v3708
        %v3710 = vand.u32 %v3709, 4294901760
        %v3711 = vsub.f32 %v3709, %v3710
        %v3712 = vand.u32 %v3711, 4294901760
        %3713 = vmatpush1.msra.mxu0 %v3712
        %v3714 = vand.u32 %v371, 4294901760
        %3715 = vmatprep.mubr.f32.mxu0 %v3714
        %v3716 = vand.u32 %v369, 4294901760
        %3717 = vmatmul.mubr.f32.gmra.mrb[0].mxu0 %v3716
        %v3718 = vpop.f32.mrb[0].mxu0
        %v3719 = vadd.f32 %v3472, %v3718
        %v3720 = vpop.f32.mrb[0].mxu0
        %v3721 = vand.u32 %v372, 4294901760
        %3722 = vmatprep.mubr.f32.mxu0 %v3721
        %v3723 = vand.u32 %v370, 4294901760
        %3724 = vmatmul.mubr.f32.gmra.mrb[0].mxu0 %v3723
        %v3725 = vpop.f32.mrb[0].mxu0
        %v3726 = vadd.f32 %v3487, %v3725
        %v3727 = vpop.f32.mrb[0].mxu0
        %3728 = vdwg.mxu0
        %3729 = vmatprep.subr.mxu0 0.0
        %v3730 = vand.u32 %v481, 4294901760
        %v3731 = vsub.f32 %v481, %v3730
        %3732 = vmatpush1.msra.mxu0 %v3731
        %3733 = vmatprep.subr.mxu0 0.0
        %v3734 = vand.u32 %v482, 4294901760
        %v3735 = vsub.f32 %v482, %v3734
        %3736 = vmatpush1.msra.mxu0 %v3735
        %3737 = vmatprep.subr.mxu0 0.0
        %v3738 = vand.u32 %v483, 4294901760
        %v3739 = vsub.f32 %v483, %v3738
        %3740 = vmatpush1.msra.mxu0 %v3739
        %3741 = vmatprep.subr.mxu0 0.0
        %v3742 = vand.u32 %v484, 4294901760
        %v3743 = vsub.f32 %v484, %v3742
        %3744 = vmatpush1.msra.mxu0 %v3743
        %3745 = vmatprep.subr.mxu0 0.0
        %v3746 = vand.u32 %v485, 4294901760
        %v3747 = vsub.f32 %v485, %v3746
        %3748 = vmatpush1.msra.mxu0 %v3747
        %3749 = vmatprep.subr.mxu0 0.0
        %v3750 = vand.u32 %v486, 4294901760
        %v3751 = vsub.f32 %v486, %v3750
        %3752 = vmatpush1.msra.mxu0 %v3751
        %3753 = vmatprep.subr.mxu0 0.0
        %v3754 = vand.u32 %v487, 4294901760
        %v3755 = vsub.f32 %v487, %v3754
        %3756 = vmatpush1.msra.mxu0 %v3755
        %3757 = vmatprep.subr.mxu0 0.0
        %v3758 = vand.u32 %v488, 4294901760
        %v3759 = vsub.f32 %v488, %v3758
        %3760 = vmatpush1.msra.mxu0 %v3759
        %3761 = vmatprep.subr.mxu0 0.0
        %v3762 = vand.u32 %v489, 4294901760
        %v3763 = vsub.f32 %v489, %v3762
        %3764 = vmatpush1.msra.mxu0 %v3763
        %3765 = vmatprep.subr.mxu0 0.0
        %v3766 = vand.u32 %v490, 4294901760
        %v3767 = vsub.f32 %v490, %v3766
        %3768 = vmatpush1.msra.mxu0 %v3767
        %3769 = vmatprep.subr.mxu0 0.0
        %v3770 = vand.u32 %v491, 4294901760
        %v3771 = vsub.f32 %v491, %v3770
        %3772 = vmatpush1.msra.mxu0 %v3771
        %3773 = vmatprep.subr.mxu0 0.0
        %v3774 = vand.u32 %v492, 4294901760
        %v3775 = vsub.f32 %v492, %v3774
        %3776 = vmatpush1.msra.mxu0 %v3775
        %3777 = vmatprep.subr.mxu0 0.0
        %v3778 = vand.u32 %v493, 4294901760
        %v3779 = vsub.f32 %v493, %v3778
        %3780 = vmatpush1.msra.mxu0 %v3779
        %3781 = vmatprep.subr.mxu0 0.0
        %v3782 = vand.u32 %v494, 4294901760
        %v3783 = vsub.f32 %v494, %v3782
        %3784 = vmatpush1.msra.mxu0 %v3783
        %3785 = vmatprep.subr.mxu0 0.0
        %v3786 = vand.u32 %v495, 4294901760
        %v3787 = vsub.f32 %v495, %v3786
        %3788 = vmatpush1.msra.mxu0 %v3787
        %3789 = vmatprep.subr.mxu0 0.0
        %v3790 = vand.u32 %v496, 4294901760
        %v3791 = vsub.f32 %v496, %v3790
        %3792 = vmatpush1.msra.mxu0 %v3791
        %3793 = vmatprep.subr.mxu0 0.0
        %v3794 = vand.u32 %v497, 4294901760
        %v3795 = vsub.f32 %v497, %v3794
        %3796 = vmatpush1.msra.mxu0 %v3795
        %3797 = vmatprep.subr.mxu0 0.0
        %v3798 = vand.u32 %v498, 4294901760
        %v3799 = vsub.f32 %v498, %v3798
        %3800 = vmatpush1.msra.mxu0 %v3799
        %3801 = vmatprep.subr.mxu0 0.0
        %v3802 = vand.u32 %v499, 4294901760
        %v3803 = vsub.f32 %v499, %v3802
        %3804 = vmatpush1.msra.mxu0 %v3803
        %3805 = vmatprep.subr.mxu0 0.0
        %v3806 = vand.u32 %v500, 4294901760
        %v3807 = vsub.f32 %v500, %v3806
        %3808 = vmatpush1.msra.mxu0 %v3807
        %3809 = vmatprep.subr.mxu0 0.0
        %v3810 = vand.u32 %v501, 4294901760
        %v3811 = vsub.f32 %v501, %v3810
        %3812 = vmatpush1.msra.mxu0 %v3811
        %3813 = vmatprep.subr.mxu0 0.0
        %v3814 = vand.u32 %v502, 4294901760
        %v3815 = vsub.f32 %v502, %v3814
        %3816 = vmatpush1.msra.mxu0 %v3815
        %3817 = vmatprep.subr.mxu0 0.0
        %v3818 = vand.u32 %v503, 4294901760
        %v3819 = vsub.f32 %v503, %v3818
        %3820 = vmatpush1.msra.mxu0 %v3819
        %3821 = vmatprep.subr.mxu0 0.0
        %v3822 = vand.u32 %v504, 4294901760
        %v3823 = vsub.f32 %v504, %v3822
        %3824 = vmatpush1.msra.mxu0 %v3823
        %3825 = vmatprep.subr.mxu0 0.0
        %v3826 = vand.u32 %v505, 4294901760
        %v3827 = vsub.f32 %v505, %v3826
        %3828 = vmatpush1.msra.mxu0 %v3827
        %3829 = vmatprep.subr.mxu0 0.0
        %v3830 = vand.u32 %v506, 4294901760
        %v3831 = vsub.f32 %v506, %v3830
        %3832 = vmatpush1.msra.mxu0 %v3831
        %3833 = vmatprep.subr.mxu0 0.0
        %v3834 = vand.u32 %v507, 4294901760
        %v3835 = vsub.f32 %v507, %v3834
        %3836 = vmatpush1.msra.mxu0 %v3835
        %3837 = vmatprep.subr.mxu0 0.0
        %v3838 = vand.u32 %v508, 4294901760
        %v3839 = vsub.f32 %v508, %v3838
        %3840 = vmatpush1.msra.mxu0 %v3839
        %3841 = vmatprep.subr.mxu0 0.0
        %v3842 = vand.u32 %v509, 4294901760
        %v3843 = vsub.f32 %v509, %v3842
        %3844 = vmatpush1.msra.mxu0 %v3843
        %3845 = vmatprep.subr.mxu0 0.0
        %v3846 = vand.u32 %v510, 4294901760
        %v3847 = vsub.f32 %v510, %v3846
        %3848 = vmatpush1.msra.mxu0 %v3847
        %3849 = vmatprep.subr.mxu0 0.0
        %v3850 = vand.u32 %v511, 4294901760
        %v3851 = vsub.f32 %v511, %v3850
        %3852 = vmatpush1.msra.mxu0 %v3851
        %3853 = vmatprep.subr.mxu0 0.0
        %v3854 = vand.u32 %v512, 4294901760
        %v3855 = vsub.f32 %v512, %v3854
        %3856 = vmatpush1.msra.mxu0 %v3855
        %v3857 = vand.u32 %v371, 4294901760
        %v3858 = vsub.f32 %v371, %v3857
        %3859 = vmatprep.mubr.f32.mxu0 %v3858
        %v3860 = vand.u32 %v369, 4294901760
        %v3861 = vsub.f32 %v369, %v3860
        %3862 = vmatmul.mubr.f32.gmra.mrb[0].mxu0 %v3861
        %v3863 = vpop.f32.mrb[0].mxu0
        %v3864 = vadd.f32 %v3719, %v3863
        %v3865 = vpop.f32.mrb[0].mxu0
        %v3866 = vand.u32 %v372, 4294901760
        %v3867 = vsub.f32 %v372, %v3866
        %3868 = vmatprep.mubr.f32.mxu0 %v3867
        %v3869 = vand.u32 %v370, 4294901760
        %v3870 = vsub.f32 %v370, %v3869
        %3871 = vmatmul.mubr.f32.gmra.mrb[0].mxu0 %v3870
        %v3872 = vpop.f32.mrb[0].mxu0
        %v3873 = vadd.f32 %v3726, %v3872
        %v3874 = vpop.f32.mrb[0].mxu0
        %3875 = vdwg.mxu0
        %3876 = vmatprep.subr.mxu0 0.0
        %v3877 = vand.u32 %v481, 4294901760
        %3878 = vmatpush1.msra.mxu0 %v3877
        %3879 = vmatprep.subr.mxu0 0.0
        %v3880 = vand.u32 %v482, 4294901760
        %3881 = vmatpush1.msra.mxu0 %v3880
        %3882 = vmatprep.subr.mxu0 0.0
        %v3883 = vand.u32 %v483, 4294901760
        %3884 = vmatpush1.msra.mxu0 %v3883
        %3885 = vmatprep.subr.mxu0 0.0
        %v3886 = vand.u32 %v484, 4294901760
        %3887 = vmatpush1.msra.mxu0 %v3886
        %3888 = vmatprep.subr.mxu0 0.0
        %v3889 = vand.u32 %v485, 4294901760
        %3890 = vmatpush1.msra.mxu0 %v3889
        %3891 = vmatprep.subr.mxu0 0.0
        %v3892 = vand.u32 %v486, 4294901760
        %3893 = vmatpush1.msra.mxu0 %v3892
        %3894 = vmatprep.subr.mxu0 0.0
        %v3895 = vand.u32 %v487, 4294901760
        %3896 = vmatpush1.msra.mxu0 %v3895
        %3897 = vmatprep.subr.mxu0 0.0
        %v3898 = vand.u32 %v488, 4294901760
        %3899 = vmatpush1.msra.mxu0 %v3898
        %3900 = vmatprep.subr.mxu0 0.0
        %v3901 = vand.u32 %v489, 4294901760
        %3902 = vmatpush1.msra.mxu0 %v3901
        %3903 = vmatprep.subr.mxu0 0.0
        %v3904 = vand.u32 %v490, 4294901760
        %3905 = vmatpush1.msra.mxu0 %v3904
        %3906 = vmatprep.subr.mxu0 0.0
        %v3907 = vand.u32 %v491, 4294901760
        %3908 = vmatpush1.msra.mxu0 %v3907
        %3909 = vmatprep.subr.mxu0 0.0
        %v3910 = vand.u32 %v492, 4294901760
        %3911 = vmatpush1.msra.mxu0 %v3910
        %3912 = vmatprep.subr.mxu0 0.0
        %v3913 = vand.u32 %v493, 4294901760
        %3914 = vmatpush1.msra.mxu0 %v3913
        %3915 = vmatprep.subr.mxu0 0.0
        %v3916 = vand.u32 %v494, 4294901760
        %3917 = vmatpush1.msra.mxu0 %v3916
        %3918 = vmatprep.subr.mxu0 0.0
        %v3919 = vand.u32 %v495, 4294901760
        %3920 = vmatpush1.msra.mxu0 %v3919
        %3921 = vmatprep.subr.mxu0 0.0
        %v3922 = vand.u32 %v496, 4294901760
        %3923 = vmatpush1.msra.mxu0 %v3922
        %3924 = vmatprep.subr.mxu0 0.0
        %v3925 = vand.u32 %v497, 4294901760
        %3926 = vmatpush1.msra.mxu0 %v3925
        %3927 = vmatprep.subr.mxu0 0.0
        %v3928 = vand.u32 %v498, 4294901760
        %3929 = vmatpush1.msra.mxu0 %v3928
        %3930 = vmatprep.subr.mxu0 0.0
        %v3931 = vand.u32 %v499, 4294901760
        %3932 = vmatpush1.msra.mxu0 %v3931
        %3933 = vmatprep.subr.mxu0 0.0
        %v3934 = vand.u32 %v500, 4294901760
        %3935 = vmatpush1.msra.mxu0 %v3934
        %3936 = vmatprep.subr.mxu0 0.0
        %v3937 = vand.u32 %v501, 4294901760
        %3938 = vmatpush1.msra.mxu0 %v3937
        %3939 = vmatprep.subr.mxu0 0.0
        %v3940 = vand.u32 %v502, 4294901760
        %3941 = vmatpush1.msra.mxu0 %v3940
        %3942 = vmatprep.subr.mxu0 0.0
        %v3943 = vand.u32 %v503, 4294901760
        %3944 = vmatpush1.msra.mxu0 %v3943
        %3945 = vmatprep.subr.mxu0 0.0
        %v3946 = vand.u32 %v504, 4294901760
        %3947 = vmatpush1.msra.mxu0 %v3946
        %3948 = vmatprep.subr.mxu0 0.0
        %v3949 = vand.u32 %v505, 4294901760
        %3950 = vmatpush1.msra.mxu0 %v3949
        %3951 = vmatprep.subr.mxu0 0.0
        %v3952 = vand.u32 %v506, 4294901760
        %3953 = vmatpush1.msra.mxu0 %v3952
        %3954 = vmatprep.subr.mxu0 0.0
        %v3955 = vand.u32 %v507, 4294901760
        %3956 = vmatpush1.msra.mxu0 %v3955
        %3957 = vmatprep.subr.mxu0 0.0
        %v3958 = vand.u32 %v508, 4294901760
        %3959 = vmatpush1.msra.mxu0 %v3958
        %3960 = vmatprep.subr.mxu0 0.0
        %v3961 = vand.u32 %v509, 4294901760
        %3962 = vmatpush1.msra.mxu0 %v3961
        %3963 = vmatprep.subr.mxu0 0.0
        %v3964 = vand.u32 %v510, 4294901760
        %3965 = vmatpush1.msra.mxu0 %v3964
        %3966 = vmatprep.subr.mxu0 0.0
        %v3967 = vand.u32 %v511, 4294901760
        %3968 = vmatpush1.msra.mxu0 %v3967
        %3969 = vmatprep.subr.mxu0 0.0
        %v3970 = vand.u32 %v512, 4294901760
        %3971 = vmatpush1.msra.mxu0 %v3970
        %v3972 = vand.u32 %v371, 4294901760
        %v3973 = vsub.f32 %v371, %v3972
        %v3974 = vand.u32 %v3973, 4294901760
        %3975 = vmatprep.mubr.f32.mxu0 %v3974
        %v3976 = vand.u32 %v369, 4294901760
        %v3977 = vsub.f32 %v369, %v3976
        %v3978 = vand.u32 %v3977, 4294901760
        %3979 = vmatmul.mubr.f32.gmra.mrb[0].mxu0 %v3978
        %v3980 = vpop.f32.mrb[0].mxu0
        %v3981 = vadd.f32 %v3864, %v3980
        %v3982 = vpop.f32.mrb[0].mxu0
        %v3983 = vand.u32 %v372, 4294901760
        %v3984 = vsub.f32 %v372, %v3983
        %v3985 = vand.u32 %v3984, 4294901760
        %3986 = vmatprep.mubr.f32.mxu0 %v3985
        %v3987 = vand.u32 %v370, 4294901760
        %v3988 = vsub.f32 %v370, %v3987
        %v3989 = vand.u32 %v3988, 4294901760
        %3990 = vmatmul.mubr.f32.gmra.mrb[0].mxu0 %v3989
        %v3991 = vpop.f32.mrb[0].mxu0
        %v3992 = vadd.f32 %v3873, %v3991
        %v3993 = vpop.f32.mrb[0].mxu0
        %3994 = vdwg.mxu0
        %3995 = vmatprep.subr.mxu0 0.0
        %v3996 = vand.u32 %v481, 4294901760
        %v3997 = vsub.f32 %v481, %v3996
        %v3998 = vand.u32 %v3997, 4294901760
        %3999 = vmatpush1.msra.mxu0 %v3998
        %4000 = vmatprep.subr.mxu0 0.0
        %v4001 = vand.u32 %v482, 4294901760
        %v4002 = vsub.f32 %v482, %v4001
        %v4003 = vand.u32 %v4002, 4294901760
        %4004 = vmatpush1.msra.mxu0 %v4003
        %4005 = vmatprep.subr.mxu0 0.0
        %v4006 = vand.u32 %v483, 4294901760
        %v4007 = vsub.f32 %v483, %v4006
        %v4008 = vand.u32 %v4007, 4294901760
        %4009 = vmatpush1.msra.mxu0 %v4008
        %4010 = vmatprep.subr.mxu0 0.0
        %v4011 = vand.u32 %v484, 4294901760
        %v4012 = vsub.f32 %v484, %v4011
        %v4013 = vand.u32 %v4012, 4294901760
        %4014 = vmatpush1.msra.mxu0 %v4013
        %4015 = vmatprep.subr.mxu0 0.0
        %v4016 = vand.u32 %v485, 4294901760
        %v4017 = vsub.f32 %v485, %v4016
        %v4018 = vand.u32 %v4017, 4294901760
        %4019 = vmatpush1.msra.mxu0 %v4018
        %4020 = vmatprep.subr.mxu0 0.0
        %v4021 = vand.u32 %v486, 4294901760
        %v4022 = vsub.f32 %v486, %v4021
        %v4023 = vand.u32 %v4022, 4294901760
        %4024 = vmatpush1.msra.mxu0 %v4023
        %4025 = vmatprep.subr.mxu0 0.0
        %v4026 = vand.u32 %v487, 4294901760
        %v4027 = vsub.f32 %v487, %v4026
        %v4028 = vand.u32 %v4027, 4294901760
        %4029 = vmatpush1.msra.mxu0 %v4028
        %4030 = vmatprep.subr.mxu0 0.0
        %v4031 = vand.u32 %v488, 4294901760
        %v4032 = vsub.f32 %v488, %v4031
        %v4033 = vand.u32 %v4032, 4294901760
        %4034 = vmatpush1.msra.mxu0 %v4033
        %4035 = vmatprep.subr.mxu0 0.0
        %v4036 = vand.u32 %v489, 4294901760
        %v4037 = vsub.f32 %v489, %v4036
        %v4038 = vand.u32 %v4037, 4294901760
        %4039 = vmatpush1.msra.mxu0 %v4038
        %4040 = vmatprep.subr.mxu0 0.0
        %v4041 = vand.u32 %v490, 4294901760
        %v4042 = vsub.f32 %v490, %v4041
        %v4043 = vand.u32 %v4042, 4294901760
        %4044 = vmatpush1.msra.mxu0 %v4043
        %4045 = vmatprep.subr.mxu0 0.0
        %v4046 = vand.u32 %v491, 4294901760
        %v4047 = vsub.f32 %v491, %v4046
        %v4048 = vand.u32 %v4047, 4294901760
        %4049 = vmatpush1.msra.mxu0 %v4048
        %4050 = vmatprep.subr.mxu0 0.0
        %v4051 = vand.u32 %v492, 4294901760
        %v4052 = vsub.f32 %v492, %v4051
        %v4053 = vand.u32 %v4052, 4294901760
        %4054 = vmatpush1.msra.mxu0 %v4053
        %4055 = vmatprep.subr.mxu0 0.0
        %v4056 = vand.u32 %v493, 4294901760
        %v4057 = vsub.f32 %v493, %v4056
        %v4058 = vand.u32 %v4057, 4294901760
        %4059 = vmatpush1.msra.mxu0 %v4058
        %4060 = vmatprep.subr.mxu0 0.0
        %v4061 = vand.u32 %v494, 4294901760
        %v4062 = vsub.f32 %v494, %v4061
        %v4063 = vand.u32 %v4062, 4294901760
        %4064 = vmatpush1.msra.mxu0 %v4063
        %4065 = vmatprep.subr.mxu0 0.0
        %v4066 = vand.u32 %v495, 4294901760
        %v4067 = vsub.f32 %v495, %v4066
        %v4068 = vand.u32 %v4067, 4294901760
        %4069 = vmatpush1.msra.mxu0 %v4068
        %4070 = vmatprep.subr.mxu0 0.0
        %v4071 = vand.u32 %v496, 4294901760
        %v4072 = vsub.f32 %v496, %v4071
        %v4073 = vand.u32 %v4072, 4294901760
        %4074 = vmatpush1.msra.mxu0 %v4073
        %4075 = vmatprep.subr.mxu0 0.0
        %v4076 = vand.u32 %v497, 4294901760
        %v4077 = vsub.f32 %v497, %v4076
        %v4078 = vand.u32 %v4077, 4294901760
        %4079 = vmatpush1.msra.mxu0 %v4078
        %4080 = vmatprep.subr.mxu0 0.0
        %v4081 = vand.u32 %v498, 4294901760
        %v4082 = vsub.f32 %v498, %v4081
        %v4083 = vand.u32 %v4082, 4294901760
        %4084 = vmatpush1.msra.mxu0 %v4083
        %4085 = vmatprep.subr.mxu0 0.0
        %v4086 = vand.u32 %v499, 4294901760
        %v4087 = vsub.f32 %v499, %v4086
        %v4088 = vand.u32 %v4087, 4294901760
        %4089 = vmatpush1.msra.mxu0 %v4088
        %4090 = vmatprep.subr.mxu0 0.0
        %v4091 = vand.u32 %v500, 4294901760
        %v4092 = vsub.f32 %v500, %v4091
        %v4093 = vand.u32 %v4092, 4294901760
        %4094 = vmatpush1.msra.mxu0 %v4093
        %4095 = vmatprep.subr.mxu0 0.0
        %v4096 = vand.u32 %v501, 4294901760
        %v4097 = vsub.f32 %v501, %v4096
        %v4098 = vand.u32 %v4097, 4294901760
        %4099 = vmatpush1.msra.mxu0 %v4098
        %4100 = vmatprep.subr.mxu0 0.0
        %v4101 = vand.u32 %v502, 4294901760
        %v4102 = vsub.f32 %v502, %v4101
        %v4103 = vand.u32 %v4102, 4294901760
        %4104 = vmatpush1.msra.mxu0 %v4103
        %4105 = vmatprep.subr.mxu0 0.0
        %v4106 = vand.u32 %v503, 4294901760
        %v4107 = vsub.f32 %v503, %v4106
        %v4108 = vand.u32 %v4107, 4294901760
        %4109 = vmatpush1.msra.mxu0 %v4108
        %4110 = vmatprep.subr.mxu0 0.0
        %v4111 = vand.u32 %v504, 4294901760
        %v4112 = vsub.f32 %v504, %v4111
        %v4113 = vand.u32 %v4112, 4294901760
        %4114 = vmatpush1.msra.mxu0 %v4113
        %4115 = vmatprep.subr.mxu0 0.0
        %v4116 = vand.u32 %v505, 4294901760
        %v4117 = vsub.f32 %v505, %v4116
        %v4118 = vand.u32 %v4117, 4294901760
        %4119 = vmatpush1.msra.mxu0 %v4118
        %4120 = vmatprep.subr.mxu0 0.0
        %v4121 = vand.u32 %v506, 4294901760
        %v4122 = vsub.f32 %v506, %v4121
        %v4123 = vand.u32 %v4122, 4294901760
        %4124 = vmatpush1.msra.mxu0 %v4123
        %4125 = vmatprep.subr.mxu0 0.0
        %v4126 = vand.u32 %v507, 4294901760
        %v4127 = vsub.f32 %v507, %v4126
        %v4128 = vand.u32 %v4127, 4294901760
        %4129 = vmatpush1.msra.mxu0 %v4128
        %4130 = vmatprep.subr.mxu0 0.0
        %v4131 = vand.u32 %v508, 4294901760
        %v4132 = vsub.f32 %v508, %v4131
        %v4133 = vand.u32 %v4132, 4294901760
        %4134 = vmatpush1.msra.mxu0 %v4133
        %4135 = vmatprep.subr.mxu0 0.0
        %v4136 = vand.u32 %v509, 4294901760
        %v4137 = vsub.f32 %v509, %v4136
        %v4138 = vand.u32 %v4137, 4294901760
        %4139 = vmatpush1.msra.mxu0 %v4138
        %4140 = vmatprep.subr.mxu0 0.0
        %v4141 = vand.u32 %v510, 4294901760
        %v4142 = vsub.f32 %v510, %v4141
        %v4143 = vand.u32 %v4142, 4294901760
        %4144 = vmatpush1.msra.mxu0 %v4143
        %4145 = vmatprep.subr.mxu0 0.0
        %v4146 = vand.u32 %v511, 4294901760
        %v4147 = vsub.f32 %v511, %v4146
        %v4148 = vand.u32 %v4147, 4294901760
        %4149 = vmatpush1.msra.mxu0 %v4148
        %4150 = vmatprep.subr.mxu0 0.0
        %v4151 = vand.u32 %v512, 4294901760
        %v4152 = vsub.f32 %v512, %v4151
        %v4153 = vand.u32 %v4152, 4294901760
        %4154 = vmatpush1.msra.mxu0 %v4153
        %v4155 = vand.u32 %v371, 4294901760
        %4156 = vmatprep.mubr.f32.mxu0 %v4155
        %v4157 = vand.u32 %v369, 4294901760
        %4158 = vmatmul.mubr.f32.gmra.mrb[0].mxu0 %v4157
        %v4159 = vpop.f32.mrb[0].mxu0
        %v4160 = vadd.f32 %v3981, %v4159
        %v4161 = vpop.f32.mrb[0].mxu0
        %v4162 = vand.u32 %v372, 4294901760
        %4163 = vmatprep.mubr.f32.mxu0 %v4162
        %v4164 = vand.u32 %v370, 4294901760
        %4165 = vmatmul.mubr.f32.gmra.mrb[0].mxu0 %v4164
        %v4166 = vpop.f32.mrb[0].mxu0
        %v4167 = vadd.f32 %v3992, %v4166
        %v4168 = vpop.f32.mrb[0].mxu0
        %4169 = vdwg.mxu0
        %4170 = vmatprep.subr.mxu0 0.0
        %v4171 = vand.u32 %v481, 4294901760
        %4172 = vmatpush1.msra.mxu0 %v4171
        %4173 = vmatprep.subr.mxu0 0.0
        %v4174 = vand.u32 %v482, 4294901760
        %4175 = vmatpush1.msra.mxu0 %v4174
        %4176 = vmatprep.subr.mxu0 0.0
        %v4177 = vand.u32 %v483, 4294901760
        %4178 = vmatpush1.msra.mxu0 %v4177
        %4179 = vmatprep.subr.mxu0 0.0
        %v4180 = vand.u32 %v484, 4294901760
        %4181 = vmatpush1.msra.mxu0 %v4180
        %4182 = vmatprep.subr.mxu0 0.0
        %v4183 = vand.u32 %v485, 4294901760
        %4184 = vmatpush1.msra.mxu0 %v4183
        %4185 = vmatprep.subr.mxu0 0.0
        %v4186 = vand.u32 %v486, 4294901760
        %4187 = vmatpush1.msra.mxu0 %v4186
        %4188 = vmatprep.subr.mxu0 0.0
        %v4189 = vand.u32 %v487, 4294901760
        %4190 = vmatpush1.msra.mxu0 %v4189
        %4191 = vmatprep.subr.mxu0 0.0
        %v4192 = vand.u32 %v488, 4294901760
        %4193 = vmatpush1.msra.mxu0 %v4192
        %4194 = vmatprep.subr.mxu0 0.0
        %v4195 = vand.u32 %v489, 4294901760
        %4196 = vmatpush1.msra.mxu0 %v4195
        %4197 = vmatprep.subr.mxu0 0.0
        %v4198 = vand.u32 %v490, 4294901760
        %4199 = vmatpush1.msra.mxu0 %v4198
        %4200 = vmatprep.subr.mxu0 0.0
        %v4201 = vand.u32 %v491, 4294901760
        %4202 = vmatpush1.msra.mxu0 %v4201
        %4203 = vmatprep.subr.mxu0 0.0
        %v4204 = vand.u32 %v492, 4294901760
        %4205 = vmatpush1.msra.mxu0 %v4204
        %4206 = vmatprep.subr.mxu0 0.0
        %v4207 = vand.u32 %v493, 4294901760
        %4208 = vmatpush1.msra.mxu0 %v4207
        %4209 = vmatprep.subr.mxu0 0.0
        %v4210 = vand.u32 %v494, 4294901760
        %4211 = vmatpush1.msra.mxu0 %v4210
        %4212 = vmatprep.subr.mxu0 0.0
        %v4213 = vand.u32 %v495, 4294901760
        %4214 = vmatpush1.msra.mxu0 %v4213
        %4215 = vmatprep.subr.mxu0 0.0
        %v4216 = vand.u32 %v496, 4294901760
        %4217 = vmatpush1.msra.mxu0 %v4216
        %4218 = vmatprep.subr.mxu0 0.0
        %v4219 = vand.u32 %v497, 4294901760
        %4220 = vmatpush1.msra.mxu0 %v4219
        %4221 = vmatprep.subr.mxu0 0.0
        %v4222 = vand.u32 %v498, 4294901760
        %4223 = vmatpush1.msra.mxu0 %v4222
        %4224 = vmatprep.subr.mxu0 0.0
        %v4225 = vand.u32 %v499, 4294901760
        %4226 = vmatpush1.msra.mxu0 %v4225
        %4227 = vmatprep.subr.mxu0 0.0
        %v4228 = vand.u32 %v500, 4294901760
        %4229 = vmatpush1.msra.mxu0 %v4228
        %4230 = vmatprep.subr.mxu0 0.0
        %v4231 = vand.u32 %v501, 4294901760
        %4232 = vmatpush1.msra.mxu0 %v4231
        %4233 = vmatprep.subr.mxu0 0.0
        %v4234 = vand.u32 %v502, 4294901760
        %4235 = vmatpush1.msra.mxu0 %v4234
        %4236 = vmatprep.subr.mxu0 0.0
        %v4237 = vand.u32 %v503, 4294901760
        %4238 = vmatpush1.msra.mxu0 %v4237
        %4239 = vmatprep.subr.mxu0 0.0
        %v4240 = vand.u32 %v504, 4294901760
        %4241 = vmatpush1.msra.mxu0 %v4240
        %4242 = vmatprep.subr.mxu0 0.0
        %v4243 = vand.u32 %v505, 4294901760
        %4244 = vmatpush1.msra.mxu0 %v4243
        %4245 = vmatprep.subr.mxu0 0.0
        %v4246 = vand.u32 %v506, 4294901760
        %4247 = vmatpush1.msra.mxu0 %v4246
        %4248 = vmatprep.subr.mxu0 0.0
        %v4249 = vand.u32 %v507, 4294901760
        %4250 = vmatpush1.msra.mxu0 %v4249
        %4251 = vmatprep.subr.mxu0 0.0
        %v4252 = vand.u32 %v508, 4294901760
        %4253 = vmatpush1.msra.mxu0 %v4252
        %4254 = vmatprep.subr.mxu0 0.0
        %v4255 = vand.u32 %v509, 4294901760
        %4256 = vmatpush1.msra.mxu0 %v4255
        %4257 = vmatprep.subr.mxu0 0.0
        %v4258 = vand.u32 %v510, 4294901760
        %4259 = vmatpush1.msra.mxu0 %v4258
        %4260 = vmatprep.subr.mxu0 0.0
        %v4261 = vand.u32 %v511, 4294901760
        %4262 = vmatpush1.msra.mxu0 %v4261
        %4263 = vmatprep.subr.mxu0 0.0
        %v4264 = vand.u32 %v512, 4294901760
        %4265 = vmatpush1.msra.mxu0 %v4264
        %v4266 = vand.u32 %v371, 4294901760
        %4267 = vmatprep.mubr.f32.mxu0 %v4266
        %v4268 = vand.u32 %v369, 4294901760
        %4269 = vmatmul.mubr.f32.gmra.mrb[0].mxu0 %v4268
        %v4270 = vpop.f32.mrb[0].mxu0
        %v4271 = vadd.f32 %v4160, %v4270
        %v4272 = vpop.f32.mrb[0].mxu0
        %v4273 = vand.u32 %v372, 4294901760
        %4274 = vmatprep.mubr.f32.mxu0 %v4273
        %v4275 = vand.u32 %v370, 4294901760
        %4276 = vmatmul.mubr.f32.gmra.mrb[0].mxu0 %v4275
        %v4277 = vpop.f32.mrb[0].mxu0
        %v4278 = vadd.f32 %v4167, %v4277
        %v4279 = vpop.f32.mrb[0].mxu0
        %4280 = vdwg.mxu0
        %4281 = vmatprep.subr.mxu0 0.0
        %v4282 = vand.u32 %v513, 4294901760
        %4283 = vmatpush1.msra.mxu0 %v4282
        %4284 = vmatprep.subr.mxu0 0.0
        %v4285 = vand.u32 %v514, 4294901760
        %4286 = vmatpush1.msra.mxu0 %v4285
        %4287 = vmatprep.subr.mxu0 0.0
        %v4288 = vand.u32 %v515, 4294901760
        %4289 = vmatpush1.msra.mxu0 %v4288
        %4290 = vmatprep.subr.mxu0 0.0
        %v4291 = vand.u32 %v516, 4294901760
        %4292 = vmatpush1.msra.mxu0 %v4291
        %4293 = vmatprep.subr.mxu0 0.0
        %v4294 = vand.u32 %v517, 4294901760
        %4295 = vmatpush1.msra.mxu0 %v4294
        %4296 = vmatprep.subr.mxu0 0.0
        %v4297 = vand.u32 %v518, 4294901760
        %4298 = vmatpush1.msra.mxu0 %v4297
        %4299 = vmatprep.subr.mxu0 0.0
        %v4300 = vand.u32 %v519, 4294901760
        %4301 = vmatpush1.msra.mxu0 %v4300
        %4302 = vmatprep.subr.mxu0 0.0
        %v4303 = vand.u32 %v520, 4294901760
        %4304 = vmatpush1.msra.mxu0 %v4303
        %4305 = vmatprep.subr.mxu0 0.0
        %v4306 = vand.u32 %v521, 4294901760
        %4307 = vmatpush1.msra.mxu0 %v4306
        %4308 = vmatprep.subr.mxu0 0.0
        %v4309 = vand.u32 %v522, 4294901760
        %4310 = vmatpush1.msra.mxu0 %v4309
        %4311 = vmatprep.subr.mxu0 0.0
        %v4312 = vand.u32 %v523, 4294901760
        %4313 = vmatpush1.msra.mxu0 %v4312
        %4314 = vmatprep.subr.mxu0 0.0
        %v4315 = vand.u32 %v524, 4294901760
        %4316 = vmatpush1.msra.mxu0 %v4315
        %4317 = vmatprep.subr.mxu0 0.0
        %v4318 = vand.u32 %v525, 4294901760
        %4319 = vmatpush1.msra.mxu0 %v4318
        %4320 = vmatprep.subr.mxu0 0.0
        %v4321 = vand.u32 %v526, 4294901760
        %4322 = vmatpush1.msra.mxu0 %v4321
        %4323 = vmatprep.subr.mxu0 0.0
        %v4324 = vand.u32 %v527, 4294901760
        %4325 = vmatpush1.msra.mxu0 %v4324
        %4326 = vmatprep.subr.mxu0 0.0
        %v4327 = vand.u32 %v528, 4294901760
        %4328 = vmatpush1.msra.mxu0 %v4327
        %4329 = vmatprep.subr.mxu0 0.0
        %v4330 = vand.u32 %v529, 4294901760
        %4331 = vmatpush1.msra.mxu0 %v4330
        %4332 = vmatprep.subr.mxu0 0.0
        %v4333 = vand.u32 %v530, 4294901760
        %4334 = vmatpush1.msra.mxu0 %v4333
        %4335 = vmatprep.subr.mxu0 0.0
        %v4336 = vand.u32 %v531, 4294901760
        %4337 = vmatpush1.msra.mxu0 %v4336
        %4338 = vmatprep.subr.mxu0 0.0
        %v4339 = vand.u32 %v532, 4294901760
        %4340 = vmatpush1.msra.mxu0 %v4339
        %4341 = vmatprep.subr.mxu0 0.0
        %v4342 = vand.u32 %v533, 4294901760
        %4343 = vmatpush1.msra.mxu0 %v4342
        %4344 = vmatprep.subr.mxu0 0.0
        %v4345 = vand.u32 %v534, 4294901760
        %4346 = vmatpush1.msra.mxu0 %v4345
        %4347 = vmatprep.subr.mxu0 0.0
        %v4348 = vand.u32 %v535, 4294901760
        %4349 = vmatpush1.msra.mxu0 %v4348
        %4350 = vmatprep.subr.mxu0 0.0
        %v4351 = vand.u32 %v536, 4294901760
        %4352 = vmatpush1.msra.mxu0 %v4351
        %4353 = vmatprep.subr.mxu0 0.0
        %v4354 = vand.u32 %v537, 4294901760
        %4355 = vmatpush1.msra.mxu0 %v4354
        %4356 = vmatprep.subr.mxu0 0.0
        %v4357 = vand.u32 %v538, 4294901760
        %4358 = vmatpush1.msra.mxu0 %v4357
        %4359 = vmatprep.subr.mxu0 0.0
        %v4360 = vand.u32 %v539, 4294901760
        %4361 = vmatpush1.msra.mxu0 %v4360
        %4362 = vmatprep.subr.mxu0 0.0
        %v4363 = vand.u32 %v540, 4294901760
        %4364 = vmatpush1.msra.mxu0 %v4363
        %4365 = vmatprep.subr.mxu0 0.0
        %v4366 = vand.u32 %v541, 4294901760
        %4367 = vmatpush1.msra.mxu0 %v4366
        %4368 = vmatprep.subr.mxu0 0.0
        %v4369 = vand.u32 %v542, 4294901760
        %4370 = vmatpush1.msra.mxu0 %v4369
        %4371 = vmatprep.subr.mxu0 0.0
        %v4372 = vand.u32 %v543, 4294901760
        %4373 = vmatpush1.msra.mxu0 %v4372
        %4374 = vmatprep.subr.mxu0 0.0
        %v4375 = vand.u32 %v544, 4294901760
        %4376 = vmatpush1.msra.mxu0 %v4375
        %v4377 = vand.u32 %v375, 4294901760
        %v4378 = vsub.f32 %v375, %v4377
        %v4379 = vand.u32 %v4378, 4294901760
        %v4380 = vsub.f32 %v4378, %v4379
        %v4381 = vand.u32 %v4380, 4294901760
        %4382 = vmatprep.mubr.f32.mxu0 %v4381
        %v4383 = vand.u32 %v373, 4294901760
        %v4384 = vsub.f32 %v373, %v4383
        %v4385 = vand.u32 %v4384, 4294901760
        %v4386 = vsub.f32 %v4384, %v4385
        %v4387 = vand.u32 %v4386, 4294901760
        %4388 = vmatmul.mubr.f32.gmra.mrb[0].mxu0 %v4387
        %v4389 = vpop.f32.mrb[0].mxu0
        %v4390 = vadd.f32 %v4271, %v4389
        %v4391 = vpop.f32.mrb[0].mxu0
        %v4392 = vand.u32 %v376, 4294901760
        %v4393 = vsub.f32 %v376, %v4392
        %v4394 = vand.u32 %v4393, 4294901760
        %v4395 = vsub.f32 %v4393, %v4394
        %v4396 = vand.u32 %v4395, 4294901760
        %4397 = vmatprep.mubr.f32.mxu0 %v4396
        %v4398 = vand.u32 %v374, 4294901760
        %v4399 = vsub.f32 %v374, %v4398
        %v4400 = vand.u32 %v4399, 4294901760
        %v4401 = vsub.f32 %v4399, %v4400
        %v4402 = vand.u32 %v4401, 4294901760
        %4403 = vmatmul.mubr.f32.gmra.mrb[0].mxu0 %v4402
        %v4404 = vpop.f32.mrb[0].mxu0
        %v4405 = vadd.f32 %v4278, %v4404
        %v4406 = vpop.f32.mrb[0].mxu0
        %4407 = vdwg.mxu0
        %4408 = vmatprep.subr.mxu0 0.0
        %v4409 = vand.u32 %v513, 4294901760
        %v4410 = vsub.f32 %v513, %v4409
        %v4411 = vand.u32 %v4410, 4294901760
        %v4412 = vsub.f32 %v4410, %v4411
        %v4413 = vand.u32 %v4412, 4294901760
        %4414 = vmatpush1.msra.mxu0 %v4413
        %4415 = vmatprep.subr.mxu0 0.0
        %v4416 = vand.u32 %v514, 4294901760
        %v4417 = vsub.f32 %v514, %v4416
        %v4418 = vand.u32 %v4417, 4294901760
        %v4419 = vsub.f32 %v4417, %v4418
        %v4420 = vand.u32 %v4419, 4294901760
        %4421 = vmatpush1.msra.mxu0 %v4420
        %4422 = vmatprep.subr.mxu0 0.0
        %v4423 = vand.u32 %v515, 4294901760
        %v4424 = vsub.f32 %v515, %v4423
        %v4425 = vand.u32 %v4424, 4294901760
        %v4426 = vsub.f32 %v4424, %v4425
        %v4427 = vand.u32 %v4426, 4294901760
        %4428 = vmatpush1.msra.mxu0 %v4427
        %4429 = vmatprep.subr.mxu0 0.0
        %v4430 = vand.u32 %v516, 4294901760
        %v4431 = vsub.f32 %v516, %v4430
        %v4432 = vand.u32 %v4431, 4294901760
        %v4433 = vsub.f32 %v4431, %v4432
        %v4434 = vand.u32 %v4433, 4294901760
        %4435 = vmatpush1.msra.mxu0 %v4434
        %4436 = vmatprep.subr.mxu0 0.0
        %v4437 = vand.u32 %v517, 4294901760
        %v4438 = vsub.f32 %v517, %v4437
        %v4439 = vand.u32 %v4438, 4294901760
        %v4440 = vsub.f32 %v4438, %v4439
        %v4441 = vand.u32 %v4440, 4294901760
        %4442 = vmatpush1.msra.mxu0 %v4441
        %4443 = vmatprep.subr.mxu0 0.0
        %v4444 = vand.u32 %v518, 4294901760
        %v4445 = vsub.f32 %v518, %v4444
        %v4446 = vand.u32 %v4445, 4294901760
        %v4447 = vsub.f32 %v4445, %v4446
        %v4448 = vand.u32 %v4447, 4294901760
        %4449 = vmatpush1.msra.mxu0 %v4448
        %4450 = vmatprep.subr.mxu0 0.0
        %v4451 = vand.u32 %v519, 4294901760
        %v4452 = vsub.f32 %v519, %v4451
        %v4453 = vand.u32 %v4452, 4294901760
        %v4454 = vsub.f32 %v4452, %v4453
        %v4455 = vand.u32 %v4454, 4294901760
        %4456 = vmatpush1.msra.mxu0 %v4455
        %4457 = vmatprep.subr.mxu0 0.0
        %v4458 = vand.u32 %v520, 4294901760
        %v4459 = vsub.f32 %v520, %v4458
        %v4460 = vand.u32 %v4459, 4294901760
        %v4461 = vsub.f32 %v4459, %v4460
        %v4462 = vand.u32 %v4461, 4294901760
        %4463 = vmatpush1.msra.mxu0 %v4462
        %4464 = vmatprep.subr.mxu0 0.0
        %v4465 = vand.u32 %v521, 4294901760
        %v4466 = vsub.f32 %v521, %v4465
        %v4467 = vand.u32 %v4466, 4294901760
        %v4468 = vsub.f32 %v4466, %v4467
        %v4469 = vand.u32 %v4468, 4294901760
        %4470 = vmatpush1.msra.mxu0 %v4469
        %4471 = vmatprep.subr.mxu0 0.0
        %v4472 = vand.u32 %v522, 4294901760
        %v4473 = vsub.f32 %v522, %v4472
        %v4474 = vand.u32 %v4473, 4294901760
        %v4475 = vsub.f32 %v4473, %v4474
        %v4476 = vand.u32 %v4475, 4294901760
        %4477 = vmatpush1.msra.mxu0 %v4476
        %4478 = vmatprep.subr.mxu0 0.0
        %v4479 = vand.u32 %v523, 4294901760
        %v4480 = vsub.f32 %v523, %v4479
        %v4481 = vand.u32 %v4480, 4294901760
        %v4482 = vsub.f32 %v4480, %v4481
        %v4483 = vand.u32 %v4482, 4294901760
        %4484 = vmatpush1.msra.mxu0 %v4483
        %4485 = vmatprep.subr.mxu0 0.0
        %v4486 = vand.u32 %v524, 4294901760
        %v4487 = vsub.f32 %v524, %v4486
        %v4488 = vand.u32 %v4487, 4294901760
        %v4489 = vsub.f32 %v4487, %v4488
        %v4490 = vand.u32 %v4489, 4294901760
        %4491 = vmatpush1.msra.mxu0 %v4490
        %4492 = vmatprep.subr.mxu0 0.0
        %v4493 = vand.u32 %v525, 4294901760
        %v4494 = vsub.f32 %v525, %v4493
        %v4495 = vand.u32 %v4494, 4294901760
        %v4496 = vsub.f32 %v4494, %v4495
        %v4497 = vand.u32 %v4496, 4294901760
        %4498 = vmatpush1.msra.mxu0 %v4497
        %4499 = vmatprep.subr.mxu0 0.0
        %v4500 = vand.u32 %v526, 4294901760
        %v4501 = vsub.f32 %v526, %v4500
        %v4502 = vand.u32 %v4501, 4294901760
        %v4503 = vsub.f32 %v4501, %v4502
        %v4504 = vand.u32 %v4503, 4294901760
        %4505 = vmatpush1.msra.mxu0 %v4504
        %4506 = vmatprep.subr.mxu0 0.0
        %v4507 = vand.u32 %v527, 4294901760
        %v4508 = vsub.f32 %v527, %v4507
        %v4509 = vand.u32 %v4508, 4294901760
        %v4510 = vsub.f32 %v4508, %v4509
        %v4511 = vand.u32 %v4510, 4294901760
        %4512 = vmatpush1.msra.mxu0 %v4511
        %4513 = vmatprep.subr.mxu0 0.0
        %v4514 = vand.u32 %v528, 4294901760
        %v4515 = vsub.f32 %v528, %v4514
        %v4516 = vand.u32 %v4515, 4294901760
        %v4517 = vsub.f32 %v4515, %v4516
        %v4518 = vand.u32 %v4517, 4294901760
        %4519 = vmatpush1.msra.mxu0 %v4518
        %4520 = vmatprep.subr.mxu0 0.0
        %v4521 = vand.u32 %v529, 4294901760
        %v4522 = vsub.f32 %v529, %v4521
        %v4523 = vand.u32 %v4522, 4294901760
        %v4524 = vsub.f32 %v4522, %v4523
        %v4525 = vand.u32 %v4524, 4294901760
        %4526 = vmatpush1.msra.mxu0 %v4525
        %4527 = vmatprep.subr.mxu0 0.0
        %v4528 = vand.u32 %v530, 4294901760
        %v4529 = vsub.f32 %v530, %v4528
        %v4530 = vand.u32 %v4529, 4294901760
        %v4531 = vsub.f32 %v4529, %v4530
        %v4532 = vand.u32 %v4531, 4294901760
        %4533 = vmatpush1.msra.mxu0 %v4532
        %4534 = vmatprep.subr.mxu0 0.0
        %v4535 = vand.u32 %v531, 4294901760
        %v4536 = vsub.f32 %v531, %v4535
        %v4537 = vand.u32 %v4536, 4294901760
        %v4538 = vsub.f32 %v4536, %v4537
        %v4539 = vand.u32 %v4538, 4294901760
        %4540 = vmatpush1.msra.mxu0 %v4539
        %4541 = vmatprep.subr.mxu0 0.0
        %v4542 = vand.u32 %v532, 4294901760
        %v4543 = vsub.f32 %v532, %v4542
        %v4544 = vand.u32 %v4543, 4294901760
        %v4545 = vsub.f32 %v4543, %v4544
        %v4546 = vand.u32 %v4545, 4294901760
        %4547 = vmatpush1.msra.mxu0 %v4546
        %4548 = vmatprep.subr.mxu0 0.0
        %v4549 = vand.u32 %v533, 4294901760
        %v4550 = vsub.f32 %v533, %v4549
        %v4551 = vand.u32 %v4550, 4294901760
        %v4552 = vsub.f32 %v4550, %v4551
        %v4553 = vand.u32 %v4552, 4294901760
        %4554 = vmatpush1.msra.mxu0 %v4553
        %4555 = vmatprep.subr.mxu0 0.0
        %v4556 = vand.u32 %v534, 4294901760
        %v4557 = vsub.f32 %v534, %v4556
        %v4558 = vand.u32 %v4557, 4294901760
        %v4559 = vsub.f32 %v4557, %v4558
        %v4560 = vand.u32 %v4559, 4294901760
        %4561 = vmatpush1.msra.mxu0 %v4560
        %4562 = vmatprep.subr.mxu0 0.0
        %v4563 = vand.u32 %v535, 4294901760
        %v4564 = vsub.f32 %v535, %v4563
        %v4565 = vand.u32 %v4564, 4294901760
        %v4566 = vsub.f32 %v4564, %v4565
        %v4567 = vand.u32 %v4566, 4294901760
        %4568 = vmatpush1.msra.mxu0 %v4567
        %4569 = vmatprep.subr.mxu0 0.0
        %v4570 = vand.u32 %v536, 4294901760
        %v4571 = vsub.f32 %v536, %v4570
        %v4572 = vand.u32 %v4571, 4294901760
        %v4573 = vsub.f32 %v4571, %v4572
        %v4574 = vand.u32 %v4573, 4294901760
        %4575 = vmatpush1.msra.mxu0 %v4574
        %4576 = vmatprep.subr.mxu0 0.0
        %v4577 = vand.u32 %v537, 4294901760
        %v4578 = vsub.f32 %v537, %v4577
        %v4579 = vand.u32 %v4578, 4294901760
        %v4580 = vsub.f32 %v4578, %v4579
        %v4581 = vand.u32 %v4580, 4294901760
        %4582 = vmatpush1.msra.mxu0 %v4581
        %4583 = vmatprep.subr.mxu0 0.0
        %v4584 = vand.u32 %v538, 4294901760
        %v4585 = vsub.f32 %v538, %v4584
        %v4586 = vand.u32 %v4585, 4294901760
        %v4587 = vsub.f32 %v4585, %v4586
        %v4588 = vand.u32 %v4587, 4294901760
        %4589 = vmatpush1.msra.mxu0 %v4588
        %4590 = vmatprep.subr.mxu0 0.0
        %v4591 = vand.u32 %v539, 4294901760
        %v4592 = vsub.f32 %v539, %v4591
        %v4593 = vand.u32 %v4592, 4294901760
        %v4594 = vsub.f32 %v4592, %v4593
        %v4595 = vand.u32 %v4594, 4294901760
        %4596 = vmatpush1.msra.mxu0 %v4595
        %4597 = vmatprep.subr.mxu0 0.0
        %v4598 = vand.u32 %v540, 4294901760
        %v4599 = vsub.f32 %v540, %v4598
        %v4600 = vand.u32 %v4599, 4294901760
        %v4601 = vsub.f32 %v4599, %v4600
        %v4602 = vand.u32 %v4601, 4294901760
        %4603 = vmatpush1.msra.mxu0 %v4602
        %4604 = vmatprep.subr.mxu0 0.0
        %v4605 = vand.u32 %v541, 4294901760
        %v4606 = vsub.f32 %v541, %v4605
        %v4607 = vand.u32 %v4606, 4294901760
        %v4608 = vsub.f32 %v4606, %v4607
        %v4609 = vand.u32 %v4608, 4294901760
        %4610 = vmatpush1.msra.mxu0 %v4609
        %4611 = vmatprep.subr.mxu0 0.0
        %v4612 = vand.u32 %v542, 4294901760
        %v4613 = vsub.f32 %v542, %v4612
        %v4614 = vand.u32 %v4613, 4294901760
        %v4615 = vsub.f32 %v4613, %v4614
        %v4616 = vand.u32 %v4615, 4294901760
        %4617 = vmatpush1.msra.mxu0 %v4616
        %4618 = vmatprep.subr.mxu0 0.0
        %v4619 = vand.u32 %v543, 4294901760
        %v4620 = vsub.f32 %v543, %v4619
        %v4621 = vand.u32 %v4620, 4294901760
        %v4622 = vsub.f32 %v4620, %v4621
        %v4623 = vand.u32 %v4622, 4294901760
        %4624 = vmatpush1.msra.mxu0 %v4623
        %4625 = vmatprep.subr.mxu0 0.0
        %v4626 = vand.u32 %v544, 4294901760
        %v4627 = vsub.f32 %v544, %v4626
        %v4628 = vand.u32 %v4627, 4294901760
        %v4629 = vsub.f32 %v4627, %v4628
        %v4630 = vand.u32 %v4629, 4294901760
        %4631 = vmatpush1.msra.mxu0 %v4630
        %v4632 = vand.u32 %v375, 4294901760
        %4633 = vmatprep.mubr.f32.mxu0 %v4632
        %v4634 = vand.u32 %v373, 4294901760
        %4635 = vmatmul.mubr.f32.gmra.mrb[0].mxu0 %v4634
        %v4636 = vpop.f32.mrb[0].mxu0
        %v4637 = vadd.f32 %v4390, %v4636
        %v4638 = vpop.f32.mrb[0].mxu0
        %v4639 = vand.u32 %v376, 4294901760
        %4640 = vmatprep.mubr.f32.mxu0 %v4639
        %v4641 = vand.u32 %v374, 4294901760
        %4642 = vmatmul.mubr.f32.gmra.mrb[0].mxu0 %v4641
        %v4643 = vpop.f32.mrb[0].mxu0
        %v4644 = vadd.f32 %v4405, %v4643
        %v4645 = vpop.f32.mrb[0].mxu0
        %4646 = vdwg.mxu0
        %4647 = vmatprep.subr.mxu0 0.0
        %v4648 = vand.u32 %v513, 4294901760
        %v4649 = vsub.f32 %v513, %v4648
        %4650 = vmatpush1.msra.mxu0 %v4649
        %4651 = vmatprep.subr.mxu0 0.0
        %v4652 = vand.u32 %v514, 4294901760
        %v4653 = vsub.f32 %v514, %v4652
        %4654 = vmatpush1.msra.mxu0 %v4653
        %4655 = vmatprep.subr.mxu0 0.0
        %v4656 = vand.u32 %v515, 4294901760
        %v4657 = vsub.f32 %v515, %v4656
        %4658 = vmatpush1.msra.mxu0 %v4657
        %4659 = vmatprep.subr.mxu0 0.0
        %v4660 = vand.u32 %v516, 4294901760
        %v4661 = vsub.f32 %v516, %v4660
        %4662 = vmatpush1.msra.mxu0 %v4661
        %4663 = vmatprep.subr.mxu0 0.0
        %v4664 = vand.u32 %v517, 4294901760
        %v4665 = vsub.f32 %v517, %v4664
        %4666 = vmatpush1.msra.mxu0 %v4665
        %4667 = vmatprep.subr.mxu0 0.0
        %v4668 = vand.u32 %v518, 4294901760
        %v4669 = vsub.f32 %v518, %v4668
        %4670 = vmatpush1.msra.mxu0 %v4669
        %4671 = vmatprep.subr.mxu0 0.0
        %v4672 = vand.u32 %v519, 4294901760
        %v4673 = vsub.f32 %v519, %v4672
        %4674 = vmatpush1.msra.mxu0 %v4673
        %4675 = vmatprep.subr.mxu0 0.0
        %v4676 = vand.u32 %v520, 4294901760
        %v4677 = vsub.f32 %v520, %v4676
        %4678 = vmatpush1.msra.mxu0 %v4677
        %4679 = vmatprep.subr.mxu0 0.0
        %v4680 = vand.u32 %v521, 4294901760
        %v4681 = vsub.f32 %v521, %v4680
        %4682 = vmatpush1.msra.mxu0 %v4681
        %4683 = vmatprep.subr.mxu0 0.0
        %v4684 = vand.u32 %v522, 4294901760
        %v4685 = vsub.f32 %v522, %v4684
        %4686 = vmatpush1.msra.mxu0 %v4685
        %4687 = vmatprep.subr.mxu0 0.0
        %v4688 = vand.u32 %v523, 4294901760
        %v4689 = vsub.f32 %v523, %v4688
        %4690 = vmatpush1.msra.mxu0 %v4689
        %4691 = vmatprep.subr.mxu0 0.0
        %v4692 = vand.u32 %v524, 4294901760
        %v4693 = vsub.f32 %v524, %v4692
        %4694 = vmatpush1.msra.mxu0 %v4693
        %4695 = vmatprep.subr.mxu0 0.0
        %v4696 = vand.u32 %v525, 4294901760
        %v4697 = vsub.f32 %v525, %v4696
        %4698 = vmatpush1.msra.mxu0 %v4697
        %4699 = vmatprep.subr.mxu0 0.0
        %v4700 = vand.u32 %v526, 4294901760
        %v4701 = vsub.f32 %v526, %v4700
        %4702 = vmatpush1.msra.mxu0 %v4701
        %4703 = vmatprep.subr.mxu0 0.0
        %v4704 = vand.u32 %v527, 4294901760
        %v4705 = vsub.f32 %v527, %v4704
        %4706 = vmatpush1.msra.mxu0 %v4705
        %4707 = vmatprep.subr.mxu0 0.0
        %v4708 = vand.u32 %v528, 4294901760
        %v4709 = vsub.f32 %v528, %v4708
        %4710 = vmatpush1.msra.mxu0 %v4709
        %4711 = vmatprep.subr.mxu0 0.0
        %v4712 = vand.u32 %v529, 4294901760
        %v4713 = vsub.f32 %v529, %v4712
        %4714 = vmatpush1.msra.mxu0 %v4713
        %4715 = vmatprep.subr.mxu0 0.0
        %v4716 = vand.u32 %v530, 4294901760
        %v4717 = vsub.f32 %v530, %v4716
        %4718 = vmatpush1.msra.mxu0 %v4717
        %4719 = vmatprep.subr.mxu0 0.0
        %v4720 = vand.u32 %v531, 4294901760
        %v4721 = vsub.f32 %v531, %v4720
        %4722 = vmatpush1.msra.mxu0 %v4721
        %4723 = vmatprep.subr.mxu0 0.0
        %v4724 = vand.u32 %v532, 4294901760
        %v4725 = vsub.f32 %v532, %v4724
        %4726 = vmatpush1.msra.mxu0 %v4725
        %4727 = vmatprep.subr.mxu0 0.0
        %v4728 = vand.u32 %v533, 4294901760
        %v4729 = vsub.f32 %v533, %v4728
        %4730 = vmatpush1.msra.mxu0 %v4729
        %4731 = vmatprep.subr.mxu0 0.0
        %v4732 = vand.u32 %v534, 4294901760
        %v4733 = vsub.f32 %v534, %v4732
        %4734 = vmatpush1.msra.mxu0 %v4733
        %4735 = vmatprep.subr.mxu0 0.0
        %v4736 = vand.u32 %v535, 4294901760
        %v4737 = vsub.f32 %v535, %v4736
        %4738 = vmatpush1.msra.mxu0 %v4737
        %4739 = vmatprep.subr.mxu0 0.0
        %v4740 = vand.u32 %v536, 4294901760
        %v4741 = vsub.f32 %v536, %v4740
        %4742 = vmatpush1.msra.mxu0 %v4741
        %4743 = vmatprep.subr.mxu0 0.0
        %v4744 = vand.u32 %v537, 4294901760
        %v4745 = vsub.f32 %v537, %v4744
        %4746 = vmatpush1.msra.mxu0 %v4745
        %4747 = vmatprep.subr.mxu0 0.0
        %v4748 = vand.u32 %v538, 4294901760
        %v4749 = vsub.f32 %v538, %v4748
        %4750 = vmatpush1.msra.mxu0 %v4749
        %4751 = vmatprep.subr.mxu0 0.0
        %v4752 = vand.u32 %v539, 4294901760
        %v4753 = vsub.f32 %v539, %v4752
        %4754 = vmatpush1.msra.mxu0 %v4753
        %4755 = vmatprep.subr.mxu0 0.0
        %v4756 = vand.u32 %v540, 4294901760
        %v4757 = vsub.f32 %v540, %v4756
        %4758 = vmatpush1.msra.mxu0 %v4757
        %4759 = vmatprep.subr.mxu0 0.0
        %v4760 = vand.u32 %v541, 4294901760
        %v4761 = vsub.f32 %v541, %v4760
        %4762 = vmatpush1.msra.mxu0 %v4761
        %4763 = vmatprep.subr.mxu0 0.0
        %v4764 = vand.u32 %v542, 4294901760
        %v4765 = vsub.f32 %v542, %v4764
        %4766 = vmatpush1.msra.mxu0 %v4765
        %4767 = vmatprep.subr.mxu0 0.0
        %v4768 = vand.u32 %v543, 4294901760
        %v4769 = vsub.f32 %v543, %v4768
        %4770 = vmatpush1.msra.mxu0 %v4769
        %4771 = vmatprep.subr.mxu0 0.0
        %v4772 = vand.u32 %v544, 4294901760
        %v4773 = vsub.f32 %v544, %v4772
        %4774 = vmatpush1.msra.mxu0 %v4773
        %v4775 = vand.u32 %v375, 4294901760
        %v4776 = vsub.f32 %v375, %v4775
        %4777 = vmatprep.mubr.f32.mxu0 %v4776
        %v4778 = vand.u32 %v373, 4294901760
        %v4779 = vsub.f32 %v373, %v4778
        %4780 = vmatmul.mubr.f32.gmra.mrb[0].mxu0 %v4779
        %v4781 = vpop.f32.mrb[0].mxu0
        %v4782 = vadd.f32 %v4637, %v4781
        %v4783 = vpop.f32.mrb[0].mxu0
        %v4784 = vand.u32 %v376, 4294901760
        %v4785 = vsub.f32 %v376, %v4784
        %4786 = vmatprep.mubr.f32.mxu0 %v4785
        %v4787 = vand.u32 %v374, 4294901760
        %v4788 = vsub.f32 %v374, %v4787
        %4789 = vmatmul.mubr.f32.gmra.mrb[0].mxu0 %v4788
        %v4790 = vpop.f32.mrb[0].mxu0
        %v4791 = vadd.f32 %v4644, %v4790
        %v4792 = vpop.f32.mrb[0].mxu0
        %4793 = vdwg.mxu0
        %4794 = vmatprep.subr.mxu0 0.0
        %v4795 = vand.u32 %v513, 4294901760
        %4796 = vmatpush1.msra.mxu0 %v4795
        %4797 = vmatprep.subr.mxu0 0.0
        %v4798 = vand.u32 %v514, 4294901760
        %4799 = vmatpush1.msra.mxu0 %v4798
        %4800 = vmatprep.subr.mxu0 0.0
        %v4801 = vand.u32 %v515, 4294901760
        %4802 = vmatpush1.msra.mxu0 %v4801
        %4803 = vmatprep.subr.mxu0 0.0
        %v4804 = vand.u32 %v516, 4294901760
        %4805 = vmatpush1.msra.mxu0 %v4804
        %4806 = vmatprep.subr.mxu0 0.0
        %v4807 = vand.u32 %v517, 4294901760
        %4808 = vmatpush1.msra.mxu0 %v4807
        %4809 = vmatprep.subr.mxu0 0.0
        %v4810 = vand.u32 %v518, 4294901760
        %4811 = vmatpush1.msra.mxu0 %v4810
        %4812 = vmatprep.subr.mxu0 0.0
        %v4813 = vand.u32 %v519, 4294901760
        %4814 = vmatpush1.msra.mxu0 %v4813
        %4815 = vmatprep.subr.mxu0 0.0
        %v4816 = vand.u32 %v520, 4294901760
        %4817 = vmatpush1.msra.mxu0 %v4816
        %4818 = vmatprep.subr.mxu0 0.0
        %v4819 = vand.u32 %v521, 4294901760
        %4820 = vmatpush1.msra.mxu0 %v4819
        %4821 = vmatprep.subr.mxu0 0.0
        %v4822 = vand.u32 %v522, 4294901760
        %4823 = vmatpush1.msra.mxu0 %v4822
        %4824 = vmatprep.subr.mxu0 0.0
        %v4825 = vand.u32 %v523, 4294901760
        %4826 = vmatpush1.msra.mxu0 %v4825
        %4827 = vmatprep.subr.mxu0 0.0
        %v4828 = vand.u32 %v524, 4294901760
        %4829 = vmatpush1.msra.mxu0 %v4828
        %4830 = vmatprep.subr.mxu0 0.0
        %v4831 = vand.u32 %v525, 4294901760
        %4832 = vmatpush1.msra.mxu0 %v4831
        %4833 = vmatprep.subr.mxu0 0.0
        %v4834 = vand.u32 %v526, 4294901760
        %4835 = vmatpush1.msra.mxu0 %v4834
        %4836 = vmatprep.subr.mxu0 0.0
        %v4837 = vand.u32 %v527, 4294901760
        %4838 = vmatpush1.msra.mxu0 %v4837
        %4839 = vmatprep.subr.mxu0 0.0
        %v4840 = vand.u32 %v528, 4294901760
        %4841 = vmatpush1.msra.mxu0 %v4840
        %4842 = vmatprep.subr.mxu0 0.0
        %v4843 = vand.u32 %v529, 4294901760
        %4844 = vmatpush1.msra.mxu0 %v4843
        %4845 = vmatprep.subr.mxu0 0.0
        %v4846 = vand.u32 %v530, 4294901760
        %4847 = vmatpush1.msra.mxu0 %v4846
        %4848 = vmatprep.subr.mxu0 0.0
        %v4849 = vand.u32 %v531, 4294901760
        %4850 = vmatpush1.msra.mxu0 %v4849
        %4851 = vmatprep.subr.mxu0 0.0
        %v4852 = vand.u32 %v532, 4294901760
        %4853 = vmatpush1.msra.mxu0 %v4852
        %4854 = vmatprep.subr.mxu0 0.0
        %v4855 = vand.u32 %v533, 4294901760
        %4856 = vmatpush1.msra.mxu0 %v4855
        %4857 = vmatprep.subr.mxu0 0.0
        %v4858 = vand.u32 %v534, 4294901760
        %4859 = vmatpush1.msra.mxu0 %v4858
        %4860 = vmatprep.subr.mxu0 0.0
        %v4861 = vand.u32 %v535, 4294901760
        %4862 = vmatpush1.msra.mxu0 %v4861
        %4863 = vmatprep.subr.mxu0 0.0
        %v4864 = vand.u32 %v536, 4294901760
        %4865 = vmatpush1.msra.mxu0 %v4864
        %4866 = vmatprep.subr.mxu0 0.0
        %v4867 = vand.u32 %v537, 4294901760
        %4868 = vmatpush1.msra.mxu0 %v4867
        %4869 = vmatprep.subr.mxu0 0.0
        %v4870 = vand.u32 %v538, 4294901760
        %4871 = vmatpush1.msra.mxu0 %v4870
        %4872 = vmatprep.subr.mxu0 0.0
        %v4873 = vand.u32 %v539, 4294901760
        %4874 = vmatpush1.msra.mxu0 %v4873
        %4875 = vmatprep.subr.mxu0 0.0
        %v4876 = vand.u32 %v540, 4294901760
        %4877 = vmatpush1.msra.mxu0 %v4876
        %4878 = vmatprep.subr.mxu0 0.0
        %v4879 = vand.u32 %v541, 4294901760
        %4880 = vmatpush1.msra.mxu0 %v4879
        %4881 = vmatprep.subr.mxu0 0.0
        %v4882 = vand.u32 %v542, 4294901760
        %4883 = vmatpush1.msra.mxu0 %v4882
        %4884 = vmatprep.subr.mxu0 0.0
        %v4885 = vand.u32 %v543, 4294901760
        %4886 = vmatpush1.msra.mxu0 %v4885
        %4887 = vmatprep.subr.mxu0 0.0
        %v4888 = vand.u32 %v544, 4294901760
        %4889 = vmatpush1.msra.mxu0 %v4888
        %v4890 = vand.u32 %v375, 4294901760
        %v4891 = vsub.f32 %v375, %v4890
        %v4892 = vand.u32 %v4891, 4294901760
        %4893 = vmatprep.mubr.f32.mxu0 %v4892
        %v4894 = vand.u32 %v373, 4294901760
        %v4895 = vsub.f32 %v373, %v4894
        %v4896 = vand.u32 %v4895, 4294901760
        %4897 = vmatmul.mubr.f32.gmra.mrb[0].mxu0 %v4896
        %v4898 = vpop.f32.mrb[0].mxu0
        %v4899 = vadd.f32 %v4782, %v4898
        %v4900 = vpop.f32.mrb[0].mxu0
        %v4901 = vand.u32 %v376, 4294901760
        %v4902 = vsub.f32 %v376, %v4901
        %v4903 = vand.u32 %v4902, 4294901760
        %4904 = vmatprep.mubr.f32.mxu0 %v4903
        %v4905 = vand.u32 %v374, 4294901760
        %v4906 = vsub.f32 %v374, %v4905
        %v4907 = vand.u32 %v4906, 4294901760
        %4908 = vmatmul.mubr.f32.gmra.mrb[0].mxu0 %v4907
        %v4909 = vpop.f32.mrb[0].mxu0
        %v4910 = vadd.f32 %v4791, %v4909
        %v4911 = vpop.f32.mrb[0].mxu0
        %4912 = vdwg.mxu0
        %4913 = vmatprep.subr.mxu0 0.0
        %v4914 = vand.u32 %v513, 4294901760
        %v4915 = vsub.f32 %v513, %v4914
        %v4916 = vand.u32 %v4915, 4294901760
        %4917 = vmatpush1.msra.mxu0 %v4916
        %4918 = vmatprep.subr.mxu0 0.0
        %v4919 = vand.u32 %v514, 4294901760
        %v4920 = vsub.f32 %v514, %v4919
        %v4921 = vand.u32 %v4920, 4294901760
        %4922 = vmatpush1.msra.mxu0 %v4921
        %4923 = vmatprep.subr.mxu0 0.0
        %v4924 = vand.u32 %v515, 4294901760
        %v4925 = vsub.f32 %v515, %v4924
        %v4926 = vand.u32 %v4925, 4294901760
        %4927 = vmatpush1.msra.mxu0 %v4926
        %4928 = vmatprep.subr.mxu0 0.0
        %v4929 = vand.u32 %v516, 4294901760
        %v4930 = vsub.f32 %v516, %v4929
        %v4931 = vand.u32 %v4930, 4294901760
        %4932 = vmatpush1.msra.mxu0 %v4931
        %4933 = vmatprep.subr.mxu0 0.0
        %v4934 = vand.u32 %v517, 4294901760
        %v4935 = vsub.f32 %v517, %v4934
        %v4936 = vand.u32 %v4935, 4294901760
        %4937 = vmatpush1.msra.mxu0 %v4936
        %4938 = vmatprep.subr.mxu0 0.0
        %v4939 = vand.u32 %v518, 4294901760
        %v4940 = vsub.f32 %v518, %v4939
        %v4941 = vand.u32 %v4940, 4294901760
        %4942 = vmatpush1.msra.mxu0 %v4941
        %4943 = vmatprep.subr.mxu0 0.0
        %v4944 = vand.u32 %v519, 4294901760
        %v4945 = vsub.f32 %v519, %v4944
        %v4946 = vand.u32 %v4945, 4294901760
        %4947 = vmatpush1.msra.mxu0 %v4946
        %4948 = vmatprep.subr.mxu0 0.0
        %v4949 = vand.u32 %v520, 4294901760
        %v4950 = vsub.f32 %v520, %v4949
        %v4951 = vand.u32 %v4950, 4294901760
        %4952 = vmatpush1.msra.mxu0 %v4951
        %4953 = vmatprep.subr.mxu0 0.0
        %v4954 = vand.u32 %v521, 4294901760
        %v4955 = vsub.f32 %v521, %v4954
        %v4956 = vand.u32 %v4955, 4294901760
        %4957 = vmatpush1.msra.mxu0 %v4956
        %4958 = vmatprep.subr.mxu0 0.0
        %v4959 = vand.u32 %v522, 4294901760
        %v4960 = vsub.f32 %v522, %v4959
        %v4961 = vand.u32 %v4960, 4294901760
        %4962 = vmatpush1.msra.mxu0 %v4961
        %4963 = vmatprep.subr.mxu0 0.0
        %v4964 = vand.u32 %v523, 4294901760
        %v4965 = vsub.f32 %v523, %v4964
        %v4966 = vand.u32 %v4965, 4294901760
        %4967 = vmatpush1.msra.mxu0 %v4966
        %4968 = vmatprep.subr.mxu0 0.0
        %v4969 = vand.u32 %v524, 4294901760
        %v4970 = vsub.f32 %v524, %v4969
        %v4971 = vand.u32 %v4970, 4294901760
        %4972 = vmatpush1.msra.mxu0 %v4971
        %4973 = vmatprep.subr.mxu0 0.0
        %v4974 = vand.u32 %v525, 4294901760
        %v4975 = vsub.f32 %v525, %v4974
        %v4976 = vand.u32 %v4975, 4294901760
        %4977 = vmatpush1.msra.mxu0 %v4976
        %4978 = vmatprep.subr.mxu0 0.0
        %v4979 = vand.u32 %v526, 4294901760
        %v4980 = vsub.f32 %v526, %v4979
        %v4981 = vand.u32 %v4980, 4294901760
        %4982 = vmatpush1.msra.mxu0 %v4981
        %4983 = vmatprep.subr.mxu0 0.0
        %v4984 = vand.u32 %v527, 4294901760
        %v4985 = vsub.f32 %v527, %v4984
        %v4986 = vand.u32 %v4985, 4294901760
        %4987 = vmatpush1.msra.mxu0 %v4986
        %4988 = vmatprep.subr.mxu0 0.0
        %v4989 = vand.u32 %v528, 4294901760
        %v4990 = vsub.f32 %v528, %v4989
        %v4991 = vand.u32 %v4990, 4294901760
        %4992 = vmatpush1.msra.mxu0 %v4991
        %4993 = vmatprep.subr.mxu0 0.0
        %v4994 = vand.u32 %v529, 4294901760
        %v4995 = vsub.f32 %v529, %v4994
        %v4996 = vand.u32 %v4995, 4294901760
        %4997 = vmatpush1.msra.mxu0 %v4996
        %4998 = vmatprep.subr.mxu0 0.0
        %v4999 = vand.u32 %v530, 4294901760
        %v5000 = vsub.f32 %v530, %v4999
        %v5001 = vand.u32 %v5000, 4294901760
        %5002 = vmatpush1.msra.mxu0 %v5001
        %5003 = vmatprep.subr.mxu0 0.0
        %v5004 = vand.u32 %v531, 4294901760
        %v5005 = vsub.f32 %v531, %v5004
        %v5006 = vand.u32 %v5005, 4294901760
        %5007 = vmatpush1.msra.mxu0 %v5006
        %5008 = vmatprep.subr.mxu0 0.0
        %v5009 = vand.u32 %v532, 4294901760
        %v5010 = vsub.f32 %v532, %v5009
        %v5011 = vand.u32 %v5010, 4294901760
        %5012 = vmatpush1.msra.mxu0 %v5011
        %5013 = vmatprep.subr.mxu0 0.0
        %v5014 = vand.u32 %v533, 4294901760
        %v5015 = vsub.f32 %v533, %v5014
        %v5016 = vand.u32 %v5015, 4294901760
        %5017 = vmatpush1.msra.mxu0 %v5016
        %5018 = vmatprep.subr.mxu0 0.0
        %v5019 = vand.u32 %v534, 4294901760
        %v5020 = vsub.f32 %v534, %v5019
        %v5021 = vand.u32 %v5020, 4294901760
        %5022 = vmatpush1.msra.mxu0 %v5021
        %5023 = vmatprep.subr.mxu0 0.0
        %v5024 = vand.u32 %v535, 4294901760
        %v5025 = vsub.f32 %v535, %v5024
        %v5026 = vand.u32 %v5025, 4294901760
        %5027 = vmatpush1.msra.mxu0 %v5026
        %5028 = vmatprep.subr.mxu0 0.0
        %v5029 = vand.u32 %v536, 4294901760
        %v5030 = vsub.f32 %v536, %v5029
        %v5031 = vand.u32 %v5030, 4294901760
        %5032 = vmatpush1.msra.mxu0 %v5031
        %5033 = vmatprep.subr.mxu0 0.0
        %v5034 = vand.u32 %v537, 4294901760
        %v5035 = vsub.f32 %v537, %v5034
        %v5036 = vand.u32 %v5035, 4294901760
        %5037 = vmatpush1.msra.mxu0 %v5036
        %5038 = vmatprep.subr.mxu0 0.0
        %v5039 = vand.u32 %v538, 4294901760
        %v5040 = vsub.f32 %v538, %v5039
        %v5041 = vand.u32 %v5040, 4294901760
        %5042 = vmatpush1.msra.mxu0 %v5041
        %5043 = vmatprep.subr.mxu0 0.0
        %v5044 = vand.u32 %v539, 4294901760
        %v5045 = vsub.f32 %v539, %v5044
        %v5046 = vand.u32 %v5045, 4294901760
        %5047 = vmatpush1.msra.mxu0 %v5046
        %5048 = vmatprep.subr.mxu0 0.0
        %v5049 = vand.u32 %v540, 4294901760
        %v5050 = vsub.f32 %v540, %v5049
        %v5051 = vand.u32 %v5050, 4294901760
        %5052 = vmatpush1.msra.mxu0 %v5051
        %5053 = vmatprep.subr.mxu0 0.0
        %v5054 = vand.u32 %v541, 4294901760
        %v5055 = vsub.f32 %v541, %v5054
        %v5056 = vand.u32 %v5055, 4294901760
        %5057 = vmatpush1.msra.mxu0 %v5056
        %5058 = vmatprep.subr.mxu0 0.0
        %v5059 = vand.u32 %v542, 4294901760
        %v5060 = vsub.f32 %v542, %v5059
        %v5061 = vand.u32 %v5060, 4294901760
        %5062 = vmatpush1.msra.mxu0 %v5061
        %5063 = vmatprep.subr.mxu0 0.0
        %v5064 = vand.u32 %v543, 4294901760
        %v5065 = vsub.f32 %v543, %v5064
        %v5066 = vand.u32 %v5065, 4294901760
        %5067 = vmatpush1.msra.mxu0 %v5066
        %5068 = vmatprep.subr.mxu0 0.0
        %v5069 = vand.u32 %v544, 4294901760
        %v5070 = vsub.f32 %v544, %v5069
        %v5071 = vand.u32 %v5070, 4294901760
        %5072 = vmatpush1.msra.mxu0 %v5071
        %v5073 = vand.u32 %v375, 4294901760
        %5074 = vmatprep.mubr.f32.mxu0 %v5073
        %v5075 = vand.u32 %v373, 4294901760
        %5076 = vmatmul.mubr.f32.gmra.mrb[0].mxu0 %v5075
        %v5077 = vpop.f32.mrb[0].mxu0
        %v5078 = vadd.f32 %v4899, %v5077
        %v5079 = vpop.f32.mrb[0].mxu0
        %v5080 = vand.u32 %v376, 4294901760
        %5081 = vmatprep.mubr.f32.mxu0 %v5080
        %v5082 = vand.u32 %v374, 4294901760
        %5083 = vmatmul.mubr.f32.gmra.mrb[0].mxu0 %v5082
        %v5084 = vpop.f32.mrb[0].mxu0
        %v5085 = vadd.f32 %v4910, %v5084
        %v5086 = vpop.f32.mrb[0].mxu0
        %5087 = vdwg.mxu0
        %5088 = vmatprep.subr.mxu0 0.0
        %v5089 = vand.u32 %v513, 4294901760
        %5090 = vmatpush1.msra.mxu0 %v5089
        %5091 = vmatprep.subr.mxu0 0.0
        %v5092 = vand.u32 %v514, 4294901760
        %5093 = vmatpush1.msra.mxu0 %v5092
        %5094 = vmatprep.subr.mxu0 0.0
        %v5095 = vand.u32 %v515, 4294901760
        %5096 = vmatpush1.msra.mxu0 %v5095
        %5097 = vmatprep.subr.mxu0 0.0
        %v5098 = vand.u32 %v516, 4294901760
        %5099 = vmatpush1.msra.mxu0 %v5098
        %5100 = vmatprep.subr.mxu0 0.0
        %v5101 = vand.u32 %v517, 4294901760
        %5102 = vmatpush1.msra.mxu0 %v5101
        %5103 = vmatprep.subr.mxu0 0.0
        %v5104 = vand.u32 %v518, 4294901760
        %5105 = vmatpush1.msra.mxu0 %v5104
        %5106 = vmatprep.subr.mxu0 0.0
        %v5107 = vand.u32 %v519, 4294901760
        %5108 = vmatpush1.msra.mxu0 %v5107
        %5109 = vmatprep.subr.mxu0 0.0
        %v5110 = vand.u32 %v520, 4294901760
        %5111 = vmatpush1.msra.mxu0 %v5110
        %5112 = vmatprep.subr.mxu0 0.0
        %v5113 = vand.u32 %v521, 4294901760
        %5114 = vmatpush1.msra.mxu0 %v5113
        %5115 = vmatprep.subr.mxu0 0.0
        %v5116 = vand.u32 %v522, 4294901760
        %5117 = vmatpush1.msra.mxu0 %v5116
        %5118 = vmatprep.subr.mxu0 0.0
        %v5119 = vand.u32 %v523, 4294901760
        %5120 = vmatpush1.msra.mxu0 %v5119
        %5121 = vmatprep.subr.mxu0 0.0
        %v5122 = vand.u32 %v524, 4294901760
        %5123 = vmatpush1.msra.mxu0 %v5122
        %5124 = vmatprep.subr.mxu0 0.0
        %v5125 = vand.u32 %v525, 4294901760
        %5126 = vmatpush1.msra.mxu0 %v5125
        %5127 = vmatprep.subr.mxu0 0.0
        %v5128 = vand.u32 %v526, 4294901760
        %5129 = vmatpush1.msra.mxu0 %v5128
        %5130 = vmatprep.subr.mxu0 0.0
        %v5131 = vand.u32 %v527, 4294901760
        %5132 = vmatpush1.msra.mxu0 %v5131
        %5133 = vmatprep.subr.mxu0 0.0
        %v5134 = vand.u32 %v528, 4294901760
        %5135 = vmatpush1.msra.mxu0 %v5134
        %5136 = vmatprep.subr.mxu0 0.0
        %v5137 = vand.u32 %v529, 4294901760
        %5138 = vmatpush1.msra.mxu0 %v5137
        %5139 = vmatprep.subr.mxu0 0.0
        %v5140 = vand.u32 %v530, 4294901760
        %5141 = vmatpush1.msra.mxu0 %v5140
        %5142 = vmatprep.subr.mxu0 0.0
        %v5143 = vand.u32 %v531, 4294901760
        %5144 = vmatpush1.msra.mxu0 %v5143
        %5145 = vmatprep.subr.mxu0 0.0
        %v5146 = vand.u32 %v532, 4294901760
        %5147 = vmatpush1.msra.mxu0 %v5146
        %5148 = vmatprep.subr.mxu0 0.0
        %v5149 = vand.u32 %v533, 4294901760
        %5150 = vmatpush1.msra.mxu0 %v5149
        %5151 = vmatprep.subr.mxu0 0.0
        %v5152 = vand.u32 %v534, 4294901760
        %5153 = vmatpush1.msra.mxu0 %v5152
        %5154 = vmatprep.subr.mxu0 0.0
        %v5155 = vand.u32 %v535, 4294901760
        %5156 = vmatpush1.msra.mxu0 %v5155
        %5157 = vmatprep.subr.mxu0 0.0
        %v5158 = vand.u32 %v536, 4294901760
        %5159 = vmatpush1.msra.mxu0 %v5158
        %5160 = vmatprep.subr.mxu0 0.0
        %v5161 = vand.u32 %v537, 4294901760
        %5162 = vmatpush1.msra.mxu0 %v5161
        %5163 = vmatprep.subr.mxu0 0.0
        %v5164 = vand.u32 %v538, 4294901760
        %5165 = vmatpush1.msra.mxu0 %v5164
        %5166 = vmatprep.subr.mxu0 0.0
        %v5167 = vand.u32 %v539, 4294901760
        %5168 = vmatpush1.msra.mxu0 %v5167
        %5169 = vmatprep.subr.mxu0 0.0
        %v5170 = vand.u32 %v540, 4294901760
        %5171 = vmatpush1.msra.mxu0 %v5170
        %5172 = vmatprep.subr.mxu0 0.0
        %v5173 = vand.u32 %v541, 4294901760
        %5174 = vmatpush1.msra.mxu0 %v5173
        %5175 = vmatprep.subr.mxu0 0.0
        %v5176 = vand.u32 %v542, 4294901760
        %5177 = vmatpush1.msra.mxu0 %v5176
        %5178 = vmatprep.subr.mxu0 0.0
        %v5179 = vand.u32 %v543, 4294901760
        %5180 = vmatpush1.msra.mxu0 %v5179
        %5181 = vmatprep.subr.mxu0 0.0
        %v5182 = vand.u32 %v544, 4294901760
        %5183 = vmatpush1.msra.mxu0 %v5182
        %v5184 = vand.u32 %v375, 4294901760
        %5185 = vmatprep.mubr.f32.mxu0 %v5184
        %v5186 = vand.u32 %v373, 4294901760
        %5187 = vmatmul.mubr.f32.gmra.mrb[0].mxu0 %v5186
        %v5188 = vpop.f32.mrb[0].mxu0
        %v5189 = vadd.f32 %v5078, %v5188
        %v5190 = vpop.f32.mrb[0].mxu0
        %v5191 = vand.u32 %v376, 4294901760
        %5192 = vmatprep.mubr.f32.mxu0 %v5191
        %v5193 = vand.u32 %v374, 4294901760
        %5194 = vmatmul.mubr.f32.gmra.mrb[0].mxu0 %v5193
        %v5195 = vpop.f32.mrb[0].mxu0
        %v5196 = vadd.f32 %v5085, %v5195
        %v5197 = vpop.f32.mrb[0].mxu0
        %5198 = vdwg.mxu0
        %5199 = vmatprep.subr.mxu0 0.0
        %v5200 = vand.u32 %v545, 4294901760
        %5201 = vmatpush1.msra.mxu0 %v5200
        %5202 = vmatprep.subr.mxu0 0.0
        %v5203 = vand.u32 %v546, 4294901760
        %5204 = vmatpush1.msra.mxu0 %v5203
        %5205 = vmatprep.subr.mxu0 0.0
        %v5206 = vand.u32 %v547, 4294901760
        %5207 = vmatpush1.msra.mxu0 %v5206
        %5208 = vmatprep.subr.mxu0 0.0
        %v5209 = vand.u32 %v548, 4294901760
        %5210 = vmatpush1.msra.mxu0 %v5209
        %5211 = vmatprep.subr.mxu0 0.0
        %v5212 = vand.u32 %v549, 4294901760
        %5213 = vmatpush1.msra.mxu0 %v5212
        %5214 = vmatprep.subr.mxu0 0.0
        %v5215 = vand.u32 %v550, 4294901760
        %5216 = vmatpush1.msra.mxu0 %v5215
        %5217 = vmatprep.subr.mxu0 0.0
        %v5218 = vand.u32 %v551, 4294901760
        %5219 = vmatpush1.msra.mxu0 %v5218
        %5220 = vmatprep.subr.mxu0 0.0
        %v5221 = vand.u32 %v552, 4294901760
        %5222 = vmatpush1.msra.mxu0 %v5221
        %5223 = vmatprep.subr.mxu0 0.0
        %v5224 = vand.u32 %v553, 4294901760
        %5225 = vmatpush1.msra.mxu0 %v5224
        %5226 = vmatprep.subr.mxu0 0.0
        %v5227 = vand.u32 %v554, 4294901760
        %5228 = vmatpush1.msra.mxu0 %v5227
        %5229 = vmatprep.subr.mxu0 0.0
        %v5230 = vand.u32 %v555, 4294901760
        %5231 = vmatpush1.msra.mxu0 %v5230
        %5232 = vmatprep.subr.mxu0 0.0
        %v5233 = vand.u32 %v556, 4294901760
        %5234 = vmatpush1.msra.mxu0 %v5233
        %5235 = vmatprep.subr.mxu0 0.0
        %v5236 = vand.u32 %v557, 4294901760
        %5237 = vmatpush1.msra.mxu0 %v5236
        %5238 = vmatprep.subr.mxu0 0.0
        %v5239 = vand.u32 %v558, 4294901760
        %5240 = vmatpush1.msra.mxu0 %v5239
        %5241 = vmatprep.subr.mxu0 0.0
        %v5242 = vand.u32 %v559, 4294901760
        %5243 = vmatpush1.msra.mxu0 %v5242
        %5244 = vmatprep.subr.mxu0 0.0
        %v5245 = vand.u32 %v560, 4294901760
        %5246 = vmatpush1.msra.mxu0 %v5245
        %5247 = vmatprep.subr.mxu0 0.0
        %v5248 = vand.u32 %v561, 4294901760
        %5249 = vmatpush1.msra.mxu0 %v5248
        %5250 = vmatprep.subr.mxu0 0.0
        %v5251 = vand.u32 %v562, 4294901760
        %5252 = vmatpush1.msra.mxu0 %v5251
        %5253 = vmatprep.subr.mxu0 0.0
        %v5254 = vand.u32 %v563, 4294901760
        %5255 = vmatpush1.msra.mxu0 %v5254
        %5256 = vmatprep.subr.mxu0 0.0
        %v5257 = vand.u32 %v564, 4294901760
        %5258 = vmatpush1.msra.mxu0 %v5257
        %5259 = vmatprep.subr.mxu0 0.0
        %v5260 = vand.u32 %v565, 4294901760
        %5261 = vmatpush1.msra.mxu0 %v5260
        %5262 = vmatprep.subr.mxu0 0.0
        %v5263 = vand.u32 %v566, 4294901760
        %5264 = vmatpush1.msra.mxu0 %v5263
        %5265 = vmatprep.subr.mxu0 0.0
        %v5266 = vand.u32 %v567, 4294901760
        %5267 = vmatpush1.msra.mxu0 %v5266
        %5268 = vmatprep.subr.mxu0 0.0
        %v5269 = vand.u32 %v568, 4294901760
        %5270 = vmatpush1.msra.mxu0 %v5269
        %5271 = vmatprep.subr.mxu0 0.0
        %v5272 = vand.u32 %v569, 4294901760
        %5273 = vmatpush1.msra.mxu0 %v5272
        %5274 = vmatprep.subr.mxu0 0.0
        %v5275 = vand.u32 %v570, 4294901760
        %5276 = vmatpush1.msra.mxu0 %v5275
        %5277 = vmatprep.subr.mxu0 0.0
        %v5278 = vand.u32 %v571, 4294901760
        %5279 = vmatpush1.msra.mxu0 %v5278
        %5280 = vmatprep.subr.mxu0 0.0
        %v5281 = vand.u32 %v572, 4294901760
        %5282 = vmatpush1.msra.mxu0 %v5281
        %5283 = vmatprep.subr.mxu0 0.0
        %v5284 = vand.u32 %v573, 4294901760
        %5285 = vmatpush1.msra.mxu0 %v5284
        %5286 = vmatprep.subr.mxu0 0.0
        %v5287 = vand.u32 %v574, 4294901760
        %5288 = vmatpush1.msra.mxu0 %v5287
        %5289 = vmatprep.subr.mxu0 0.0
        %v5290 = vand.u32 %v575, 4294901760
        %5291 = vmatpush1.msra.mxu0 %v5290
        %5292 = vmatprep.subr.mxu0 0.0
        %v5293 = vand.u32 %v576, 4294901760
        %5294 = vmatpush1.msra.mxu0 %v5293
        %v5295 = vand.u32 %v379, 4294901760
        %v5296 = vsub.f32 %v379, %v5295
        %v5297 = vand.u32 %v5296, 4294901760
        %v5298 = vsub.f32 %v5296, %v5297
        %v5299 = vand.u32 %v5298, 4294901760
        %5300 = vmatprep.mubr.f32.mxu0 %v5299
        %v5301 = vand.u32 %v377, 4294901760
        %v5302 = vsub.f32 %v377, %v5301
        %v5303 = vand.u32 %v5302, 4294901760
        %v5304 = vsub.f32 %v5302, %v5303
        %v5305 = vand.u32 %v5304, 4294901760
        %5306 = vmatmul.mubr.f32.gmra.mrb[0].mxu0 %v5305
        %v5307 = vpop.f32.mrb[0].mxu0
        %v5308 = vadd.f32 %v5189, %v5307
        %v5309 = vpop.f32.mrb[0].mxu0
        %v5310 = vand.u32 %v380, 4294901760
        %v5311 = vsub.f32 %v380, %v5310
        %v5312 = vand.u32 %v5311, 4294901760
        %v5313 = vsub.f32 %v5311, %v5312
        %v5314 = vand.u32 %v5313, 4294901760
        %5315 = vmatprep.mubr.f32.mxu0 %v5314
        %v5316 = vand.u32 %v378, 4294901760
        %v5317 = vsub.f32 %v378, %v5316
        %v5318 = vand.u32 %v5317, 4294901760
        %v5319 = vsub.f32 %v5317, %v5318
        %v5320 = vand.u32 %v5319, 4294901760
        %5321 = vmatmul.mubr.f32.gmra.mrb[0].mxu0 %v5320
        %v5322 = vpop.f32.mrb[0].mxu0
        %v5323 = vadd.f32 %v5196, %v5322
        %v5324 = vpop.f32.mrb[0].mxu0
        %5325 = vdwg.mxu0
        %5326 = vmatprep.subr.mxu0 0.0
        %v5327 = vand.u32 %v545, 4294901760
        %v5328 = vsub.f32 %v545, %v5327
        %v5329 = vand.u32 %v5328, 4294901760
        %v5330 = vsub.f32 %v5328, %v5329
        %v5331 = vand.u32 %v5330, 4294901760
        %5332 = vmatpush1.msra.mxu0 %v5331
        %5333 = vmatprep.subr.mxu0 0.0
        %v5334 = vand.u32 %v546, 4294901760
        %v5335 = vsub.f32 %v546, %v5334
        %v5336 = vand.u32 %v5335, 4294901760
        %v5337 = vsub.f32 %v5335, %v5336
        %v5338 = vand.u32 %v5337, 4294901760
        %5339 = vmatpush1.msra.mxu0 %v5338
        %5340 = vmatprep.subr.mxu0 0.0
        %v5341 = vand.u32 %v547, 4294901760
        %v5342 = vsub.f32 %v547, %v5341
        %v5343 = vand.u32 %v5342, 4294901760
        %v5344 = vsub.f32 %v5342, %v5343
        %v5345 = vand.u32 %v5344, 4294901760
        %5346 = vmatpush1.msra.mxu0 %v5345
        %5347 = vmatprep.subr.mxu0 0.0
        %v5348 = vand.u32 %v548, 4294901760
        %v5349 = vsub.f32 %v548, %v5348
        %v5350 = vand.u32 %v5349, 4294901760
        %v5351 = vsub.f32 %v5349, %v5350
        %v5352 = vand.u32 %v5351, 4294901760
        %5353 = vmatpush1.msra.mxu0 %v5352
        %5354 = vmatprep.subr.mxu0 0.0
        %v5355 = vand.u32 %v549, 4294901760
        %v5356 = vsub.f32 %v549, %v5355
        %v5357 = vand.u32 %v5356, 4294901760
        %v5358 = vsub.f32 %v5356, %v5357
        %v5359 = vand.u32 %v5358, 4294901760
        %5360 = vmatpush1.msra.mxu0 %v5359
        %5361 = vmatprep.subr.mxu0 0.0
        %v5362 = vand.u32 %v550, 4294901760
        %v5363 = vsub.f32 %v550, %v5362
        %v5364 = vand.u32 %v5363, 4294901760
        %v5365 = vsub.f32 %v5363, %v5364
        %v5366 = vand.u32 %v5365, 4294901760
        %5367 = vmatpush1.msra.mxu0 %v5366
        %5368 = vmatprep.subr.mxu0 0.0
        %v5369 = vand.u32 %v551, 4294901760
        %v5370 = vsub.f32 %v551, %v5369
        %v5371 = vand.u32 %v5370, 4294901760
        %v5372 = vsub.f32 %v5370, %v5371
        %v5373 = vand.u32 %v5372, 4294901760
        %5374 = vmatpush1.msra.mxu0 %v5373
        %5375 = vmatprep.subr.mxu0 0.0
        %v5376 = vand.u32 %v552, 4294901760
        %v5377 = vsub.f32 %v552, %v5376
        %v5378 = vand.u32 %v5377, 4294901760
        %v5379 = vsub.f32 %v5377, %v5378
        %v5380 = vand.u32 %v5379, 4294901760
        %5381 = vmatpush1.msra.mxu0 %v5380
        %5382 = vmatprep.subr.mxu0 0.0
        %v5383 = vand.u32 %v553, 4294901760
        %v5384 = vsub.f32 %v553, %v5383
        %v5385 = vand.u32 %v5384, 4294901760
        %v5386 = vsub.f32 %v5384, %v5385
        %v5387 = vand.u32 %v5386, 4294901760
        %5388 = vmatpush1.msra.mxu0 %v5387
        %5389 = vmatprep.subr.mxu0 0.0
        %v5390 = vand.u32 %v554, 4294901760
        %v5391 = vsub.f32 %v554, %v5390
        %v5392 = vand.u32 %v5391, 4294901760
        %v5393 = vsub.f32 %v5391, %v5392
        %v5394 = vand.u32 %v5393, 4294901760
        %5395 = vmatpush1.msra.mxu0 %v5394
        %5396 = vmatprep.subr.mxu0 0.0
        %v5397 = vand.u32 %v555, 4294901760
        %v5398 = vsub.f32 %v555, %v5397
        %v5399 = vand.u32 %v5398, 4294901760
        %v5400 = vsub.f32 %v5398, %v5399
        %v5401 = vand.u32 %v5400, 4294901760
        %5402 = vmatpush1.msra.mxu0 %v5401
        %5403 = vmatprep.subr.mxu0 0.0
        %v5404 = vand.u32 %v556, 4294901760
        %v5405 = vsub.f32 %v556, %v5404
        %v5406 = vand.u32 %v5405, 4294901760
        %v5407 = vsub.f32 %v5405, %v5406
        %v5408 = vand.u32 %v5407, 4294901760
        %5409 = vmatpush1.msra.mxu0 %v5408
        %5410 = vmatprep.subr.mxu0 0.0
        %v5411 = vand.u32 %v557, 4294901760
        %v5412 = vsub.f32 %v557, %v5411
        %v5413 = vand.u32 %v5412, 4294901760
        %v5414 = vsub.f32 %v5412, %v5413
        %v5415 = vand.u32 %v5414, 4294901760
        %5416 = vmatpush1.msra.mxu0 %v5415
        %5417 = vmatprep.subr.mxu0 0.0
        %v5418 = vand.u32 %v558, 4294901760
        %v5419 = vsub.f32 %v558, %v5418
        %v5420 = vand.u32 %v5419, 4294901760
        %v5421 = vsub.f32 %v5419, %v5420
        %v5422 = vand.u32 %v5421, 4294901760
        %5423 = vmatpush1.msra.mxu0 %v5422
        %5424 = vmatprep.subr.mxu0 0.0
        %v5425 = vand.u32 %v559, 4294901760
        %v5426 = vsub.f32 %v559, %v5425
        %v5427 = vand.u32 %v5426, 4294901760
        %v5428 = vsub.f32 %v5426, %v5427
        %v5429 = vand.u32 %v5428, 4294901760
        %5430 = vmatpush1.msra.mxu0 %v5429
        %5431 = vmatprep.subr.mxu0 0.0
        %v5432 = vand.u32 %v560, 4294901760
        %v5433 = vsub.f32 %v560, %v5432
        %v5434 = vand.u32 %v5433, 4294901760
        %v5435 = vsub.f32 %v5433, %v5434
        %v5436 = vand.u32 %v5435, 4294901760
        %5437 = vmatpush1.msra.mxu0 %v5436
        %5438 = vmatprep.subr.mxu0 0.0
        %v5439 = vand.u32 %v561, 4294901760
        %v5440 = vsub.f32 %v561, %v5439
        %v5441 = vand.u32 %v5440, 4294901760
        %v5442 = vsub.f32 %v5440, %v5441
        %v5443 = vand.u32 %v5442, 4294901760
        %5444 = vmatpush1.msra.mxu0 %v5443
        %5445 = vmatprep.subr.mxu0 0.0
        %v5446 = vand.u32 %v562, 4294901760
        %v5447 = vsub.f32 %v562, %v5446
        %v5448 = vand.u32 %v5447, 4294901760
        %v5449 = vsub.f32 %v5447, %v5448
        %v5450 = vand.u32 %v5449, 4294901760
        %5451 = vmatpush1.msra.mxu0 %v5450
        %5452 = vmatprep.subr.mxu0 0.0
        %v5453 = vand.u32 %v563, 4294901760
        %v5454 = vsub.f32 %v563, %v5453
        %v5455 = vand.u32 %v5454, 4294901760
        %v5456 = vsub.f32 %v5454, %v5455
        %v5457 = vand.u32 %v5456, 4294901760
        %5458 = vmatpush1.msra.mxu0 %v5457
        %5459 = vmatprep.subr.mxu0 0.0
        %v5460 = vand.u32 %v564, 4294901760
        %v5461 = vsub.f32 %v564, %v5460
        %v5462 = vand.u32 %v5461, 4294901760
        %v5463 = vsub.f32 %v5461, %v5462
        %v5464 = vand.u32 %v5463, 4294901760
        %5465 = vmatpush1.msra.mxu0 %v5464
        %5466 = vmatprep.subr.mxu0 0.0
        %v5467 = vand.u32 %v565, 4294901760
        %v5468 = vsub.f32 %v565, %v5467
        %v5469 = vand.u32 %v5468, 4294901760
        %v5470 = vsub.f32 %v5468, %v5469
        %v5471 = vand.u32 %v5470, 4294901760
        %5472 = vmatpush1.msra.mxu0 %v5471
        %5473 = vmatprep.subr.mxu0 0.0
        %v5474 = vand.u32 %v566, 4294901760
        %v5475 = vsub.f32 %v566, %v5474
        %v5476 = vand.u32 %v5475, 4294901760
        %v5477 = vsub.f32 %v5475, %v5476
        %v5478 = vand.u32 %v5477, 4294901760
        %5479 = vmatpush1.msra.mxu0 %v5478
        %5480 = vmatprep.subr.mxu0 0.0
        %v5481 = vand.u32 %v567, 4294901760
        %v5482 = vsub.f32 %v567, %v5481
        %v5483 = vand.u32 %v5482, 4294901760
        %v5484 = vsub.f32 %v5482, %v5483
        %v5485 = vand.u32 %v5484, 4294901760
        %5486 = vmatpush1.msra.mxu0 %v5485
        %5487 = vmatprep.subr.mxu0 0.0
        %v5488 = vand.u32 %v568, 4294901760
        %v5489 = vsub.f32 %v568, %v5488
        %v5490 = vand.u32 %v5489, 4294901760
        %v5491 = vsub.f32 %v5489, %v5490
        %v5492 = vand.u32 %v5491, 4294901760
        %5493 = vmatpush1.msra.mxu0 %v5492
        %5494 = vmatprep.subr.mxu0 0.0
        %v5495 = vand.u32 %v569, 4294901760
        %v5496 = vsub.f32 %v569, %v5495
        %v5497 = vand.u32 %v5496, 4294901760
        %v5498 = vsub.f32 %v5496, %v5497
        %v5499 = vand.u32 %v5498, 4294901760
        %5500 = vmatpush1.msra.mxu0 %v5499
        %5501 = vmatprep.subr.mxu0 0.0
        %v5502 = vand.u32 %v570, 4294901760
        %v5503 = vsub.f32 %v570, %v5502
        %v5504 = vand.u32 %v5503, 4294901760
        %v5505 = vsub.f32 %v5503, %v5504
        %v5506 = vand.u32 %v5505, 4294901760
        %5507 = vmatpush1.msra.mxu0 %v5506
        %5508 = vmatprep.subr.mxu0 0.0
        %v5509 = vand.u32 %v571, 4294901760
        %v5510 = vsub.f32 %v571, %v5509
        %v5511 = vand.u32 %v5510, 4294901760
        %v5512 = vsub.f32 %v5510, %v5511
        %v5513 = vand.u32 %v5512, 4294901760
        %5514 = vmatpush1.msra.mxu0 %v5513
        %5515 = vmatprep.subr.mxu0 0.0
        %v5516 = vand.u32 %v572, 4294901760
        %v5517 = vsub.f32 %v572, %v5516
        %v5518 = vand.u32 %v5517, 4294901760
        %v5519 = vsub.f32 %v5517, %v5518
        %v5520 = vand.u32 %v5519, 4294901760
        %5521 = vmatpush1.msra.mxu0 %v5520
        %5522 = vmatprep.subr.mxu0 0.0
        %v5523 = vand.u32 %v573, 4294901760
        %v5524 = vsub.f32 %v573, %v5523
        %v5525 = vand.u32 %v5524, 4294901760
        %v5526 = vsub.f32 %v5524, %v5525
        %v5527 = vand.u32 %v5526, 4294901760
        %5528 = vmatpush1.msra.mxu0 %v5527
        %5529 = vmatprep.subr.mxu0 0.0
        %v5530 = vand.u32 %v574, 4294901760
        %v5531 = vsub.f32 %v574, %v5530
        %v5532 = vand.u32 %v5531, 4294901760
        %v5533 = vsub.f32 %v5531, %v5532
        %v5534 = vand.u32 %v5533, 4294901760
        %5535 = vmatpush1.msra.mxu0 %v5534
        %5536 = vmatprep.subr.mxu0 0.0
        %v5537 = vand.u32 %v575, 4294901760
        %v5538 = vsub.f32 %v575, %v5537
        %v5539 = vand.u32 %v5538, 4294901760
        %v5540 = vsub.f32 %v5538, %v5539
        %v5541 = vand.u32 %v5540, 4294901760
        %5542 = vmatpush1.msra.mxu0 %v5541
        %5543 = vmatprep.subr.mxu0 0.0
        %v5544 = vand.u32 %v576, 4294901760
        %v5545 = vsub.f32 %v576, %v5544
        %v5546 = vand.u32 %v5545, 4294901760
        %v5547 = vsub.f32 %v5545, %v5546
        %v5548 = vand.u32 %v5547, 4294901760
        %5549 = vmatpush1.msra.mxu0 %v5548
        %v5550 = vand.u32 %v379, 4294901760
        %5551 = vmatprep.mubr.f32.mxu0 %v5550
        %v5552 = vand.u32 %v377, 4294901760
        %5553 = vmatmul.mubr.f32.gmra.mrb[0].mxu0 %v5552
        %v5554 = vpop.f32.mrb[0].mxu0
        %v5555 = vadd.f32 %v5308, %v5554
        %v5556 = vpop.f32.mrb[0].mxu0
        %v5557 = vand.u32 %v380, 4294901760
        %5558 = vmatprep.mubr.f32.mxu0 %v5557
        %v5559 = vand.u32 %v378, 4294901760
        %5560 = vmatmul.mubr.f32.gmra.mrb[0].mxu0 %v5559
        %v5561 = vpop.f32.mrb[0].mxu0
        %v5562 = vadd.f32 %v5323, %v5561
        %v5563 = vpop.f32.mrb[0].mxu0
        %5564 = vdwg.mxu0
        %5565 = vmatprep.subr.mxu0 0.0
        %v5566 = vand.u32 %v545, 4294901760
        %v5567 = vsub.f32 %v545, %v5566
        %5568 = vmatpush1.msra.mxu0 %v5567
        %5569 = vmatprep.subr.mxu0 0.0
        %v5570 = vand.u32 %v546, 4294901760
        %v5571 = vsub.f32 %v546, %v5570
        %5572 = vmatpush1.msra.mxu0 %v5571
        %5573 = vmatprep.subr.mxu0 0.0
        %v5574 = vand.u32 %v547, 4294901760
        %v5575 = vsub.f32 %v547, %v5574
        %5576 = vmatpush1.msra.mxu0 %v5575
        %5577 = vmatprep.subr.mxu0 0.0
        %v5578 = vand.u32 %v548, 4294901760
        %v5579 = vsub.f32 %v548, %v5578
        %5580 = vmatpush1.msra.mxu0 %v5579
        %5581 = vmatprep.subr.mxu0 0.0
        %v5582 = vand.u32 %v549, 4294901760
        %v5583 = vsub.f32 %v549, %v5582
        %5584 = vmatpush1.msra.mxu0 %v5583
        %5585 = vmatprep.subr.mxu0 0.0
        %v5586 = vand.u32 %v550, 4294901760
        %v5587 = vsub.f32 %v550, %v5586
        %5588 = vmatpush1.msra.mxu0 %v5587
        %5589 = vmatprep.subr.mxu0 0.0
        %v5590 = vand.u32 %v551, 4294901760
        %v5591 = vsub.f32 %v551, %v5590
        %5592 = vmatpush1.msra.mxu0 %v5591
        %5593 = vmatprep.subr.mxu0 0.0
        %v5594 = vand.u32 %v552, 4294901760
        %v5595 = vsub.f32 %v552, %v5594
        %5596 = vmatpush1.msra.mxu0 %v5595
        %5597 = vmatprep.subr.mxu0 0.0
        %v5598 = vand.u32 %v553, 4294901760
        %v5599 = vsub.f32 %v553, %v5598
        %5600 = vmatpush1.msra.mxu0 %v5599
        %5601 = vmatprep.subr.mxu0 0.0
        %v5602 = vand.u32 %v554, 4294901760
        %v5603 = vsub.f32 %v554, %v5602
        %5604 = vmatpush1.msra.mxu0 %v5603
        %5605 = vmatprep.subr.mxu0 0.0
        %v5606 = vand.u32 %v555, 4294901760
        %v5607 = vsub.f32 %v555, %v5606
        %5608 = vmatpush1.msra.mxu0 %v5607
        %5609 = vmatprep.subr.mxu0 0.0
        %v5610 = vand.u32 %v556, 4294901760
        %v5611 = vsub.f32 %v556, %v5610
        %5612 = vmatpush1.msra.mxu0 %v5611
        %5613 = vmatprep.subr.mxu0 0.0
        %v5614 = vand.u32 %v557, 4294901760
        %v5615 = vsub.f32 %v557, %v5614
        %5616 = vmatpush1.msra.mxu0 %v5615
        %5617 = vmatprep.subr.mxu0 0.0
        %v5618 = vand.u32 %v558, 4294901760
        %v5619 = vsub.f32 %v558, %v5618
        %5620 = vmatpush1.msra.mxu0 %v5619
        %5621 = vmatprep.subr.mxu0 0.0
        %v5622 = vand.u32 %v559, 4294901760
        %v5623 = vsub.f32 %v559, %v5622
        %5624 = vmatpush1.msra.mxu0 %v5623
        %5625 = vmatprep.subr.mxu0 0.0
        %v5626 = vand.u32 %v560, 4294901760
        %v5627 = vsub.f32 %v560, %v5626
        %5628 = vmatpush1.msra.mxu0 %v5627
        %5629 = vmatprep.subr.mxu0 0.0
        %v5630 = vand.u32 %v561, 4294901760
        %v5631 = vsub.f32 %v561, %v5630
        %5632 = vmatpush1.msra.mxu0 %v5631
        %5633 = vmatprep.subr.mxu0 0.0
        %v5634 = vand.u32 %v562, 4294901760
        %v5635 = vsub.f32 %v562, %v5634
        %5636 = vmatpush1.msra.mxu0 %v5635
        %5637 = vmatprep.subr.mxu0 0.0
        %v5638 = vand.u32 %v563, 4294901760
        %v5639 = vsub.f32 %v563, %v5638
        %5640 = vmatpush1.msra.mxu0 %v5639
        %5641 = vmatprep.subr.mxu0 0.0
        %v5642 = vand.u32 %v564, 4294901760
        %v5643 = vsub.f32 %v564, %v5642
        %5644 = vmatpush1.msra.mxu0 %v5643
        %5645 = vmatprep.subr.mxu0 0.0
        %v5646 = vand.u32 %v565, 4294901760
        %v5647 = vsub.f32 %v565, %v5646
        %5648 = vmatpush1.msra.mxu0 %v5647
        %5649 = vmatprep.subr.mxu0 0.0
        %v5650 = vand.u32 %v566, 4294901760
        %v5651 = vsub.f32 %v566, %v5650
        %5652 = vmatpush1.msra.mxu0 %v5651
        %5653 = vmatprep.subr.mxu0 0.0
        %v5654 = vand.u32 %v567, 4294901760
        %v5655 = vsub.f32 %v567, %v5654
        %5656 = vmatpush1.msra.mxu0 %v5655
        %5657 = vmatprep.subr.mxu0 0.0
        %v5658 = vand.u32 %v568, 4294901760
        %v5659 = vsub.f32 %v568, %v5658
        %5660 = vmatpush1.msra.mxu0 %v5659
        %5661 = vmatprep.subr.mxu0 0.0
        %v5662 = vand.u32 %v569, 4294901760
        %v5663 = vsub.f32 %v569, %v5662
        %5664 = vmatpush1.msra.mxu0 %v5663
        %5665 = vmatprep.subr.mxu0 0.0
        %v5666 = vand.u32 %v570, 4294901760
        %v5667 = vsub.f32 %v570, %v5666
        %5668 = vmatpush1.msra.mxu0 %v5667
        %5669 = vmatprep.subr.mxu0 0.0
        %v5670 = vand.u32 %v571, 4294901760
        %v5671 = vsub.f32 %v571, %v5670
        %5672 = vmatpush1.msra.mxu0 %v5671
        %5673 = vmatprep.subr.mxu0 0.0
        %v5674 = vand.u32 %v572, 4294901760
        %v5675 = vsub.f32 %v572, %v5674
        %5676 = vmatpush1.msra.mxu0 %v5675
        %5677 = vmatprep.subr.mxu0 0.0
        %v5678 = vand.u32 %v573, 4294901760
        %v5679 = vsub.f32 %v573, %v5678
        %5680 = vmatpush1.msra.mxu0 %v5679
        %5681 = vmatprep.subr.mxu0 0.0
        %v5682 = vand.u32 %v574, 4294901760
        %v5683 = vsub.f32 %v574, %v5682
        %5684 = vmatpush1.msra.mxu0 %v5683
        %5685 = vmatprep.subr.mxu0 0.0
        %v5686 = vand.u32 %v575, 4294901760
        %v5687 = vsub.f32 %v575, %v5686
        %5688 = vmatpush1.msra.mxu0 %v5687
        %5689 = vmatprep.subr.mxu0 0.0
        %v5690 = vand.u32 %v576, 4294901760
        %v5691 = vsub.f32 %v576, %v5690
        %5692 = vmatpush1.msra.mxu0 %v5691
        %v5693 = vand.u32 %v379, 4294901760
        %v5694 = vsub.f32 %v379, %v5693
        %5695 = vmatprep.mubr.f32.mxu0 %v5694
        %v5696 = vand.u32 %v377, 4294901760
        %v5697 = vsub.f32 %v377, %v5696
        %5698 = vmatmul.mubr.f32.gmra.mrb[0].mxu0 %v5697
        %v5699 = vpop.f32.mrb[0].mxu0
        %v5700 = vadd.f32 %v5555, %v5699
        %v5701 = vpop.f32.mrb[0].mxu0
        %v5702 = vand.u32 %v380, 4294901760
        %v5703 = vsub.f32 %v380, %v5702
        %5704 = vmatprep.mubr.f32.mxu0 %v5703
        %v5705 = vand.u32 %v378, 4294901760
        %v5706 = vsub.f32 %v378, %v5705
        %5707 = vmatmul.mubr.f32.gmra.mrb[0].mxu0 %v5706
        %v5708 = vpop.f32.mrb[0].mxu0
        %v5709 = vadd.f32 %v5562, %v5708
        %v5710 = vpop.f32.mrb[0].mxu0
        %5711 = vdwg.mxu0
        %5712 = vmatprep.subr.mxu0 0.0
        %v5713 = vand.u32 %v545, 4294901760
        %5714 = vmatpush1.msra.mxu0 %v5713
        %5715 = vmatprep.subr.mxu0 0.0
        %v5716 = vand.u32 %v546, 4294901760
        %5717 = vmatpush1.msra.mxu0 %v5716
        %5718 = vmatprep.subr.mxu0 0.0
        %v5719 = vand.u32 %v547, 4294901760
        %5720 = vmatpush1.msra.mxu0 %v5719
        %5721 = vmatprep.subr.mxu0 0.0
        %v5722 = vand.u32 %v548, 4294901760
        %5723 = vmatpush1.msra.mxu0 %v5722
        %5724 = vmatprep.subr.mxu0 0.0
        %v5725 = vand.u32 %v549, 4294901760
        %5726 = vmatpush1.msra.mxu0 %v5725
        %5727 = vmatprep.subr.mxu0 0.0
        %v5728 = vand.u32 %v550, 4294901760
        %5729 = vmatpush1.msra.mxu0 %v5728
        %5730 = vmatprep.subr.mxu0 0.0
        %v5731 = vand.u32 %v551, 4294901760
        %5732 = vmatpush1.msra.mxu0 %v5731
        %5733 = vmatprep.subr.mxu0 0.0
        %v5734 = vand.u32 %v552, 4294901760
        %5735 = vmatpush1.msra.mxu0 %v5734
        %5736 = vmatprep.subr.mxu0 0.0
        %v5737 = vand.u32 %v553, 4294901760
        %5738 = vmatpush1.msra.mxu0 %v5737
        %5739 = vmatprep.subr.mxu0 0.0
        %v5740 = vand.u32 %v554, 4294901760
        %5741 = vmatpush1.msra.mxu0 %v5740
        %5742 = vmatprep.subr.mxu0 0.0
        %v5743 = vand.u32 %v555, 4294901760
        %5744 = vmatpush1.msra.mxu0 %v5743
        %5745 = vmatprep.subr.mxu0 0.0
        %v5746 = vand.u32 %v556, 4294901760
        %5747 = vmatpush1.msra.mxu0 %v5746
        %5748 = vmatprep.subr.mxu0 0.0
        %v5749 = vand.u32 %v557, 4294901760
        %5750 = vmatpush1.msra.mxu0 %v5749
        %5751 = vmatprep.subr.mxu0 0.0
        %v5752 = vand.u32 %v558, 4294901760
        %5753 = vmatpush1.msra.mxu0 %v5752
        %5754 = vmatprep.subr.mxu0 0.0
        %v5755 = vand.u32 %v559, 4294901760
        %5756 = vmatpush1.msra.mxu0 %v5755
        %5757 = vmatprep.subr.mxu0 0.0
        %v5758 = vand.u32 %v560, 4294901760
        %5759 = vmatpush1.msra.mxu0 %v5758
        %5760 = vmatprep.subr.mxu0 0.0
        %v5761 = vand.u32 %v561, 4294901760
        %5762 = vmatpush1.msra.mxu0 %v5761
        %5763 = vmatprep.subr.mxu0 0.0
        %v5764 = vand.u32 %v562, 4294901760
        %5765 = vmatpush1.msra.mxu0 %v5764
        %5766 = vmatprep.subr.mxu0 0.0
        %v5767 = vand.u32 %v563, 4294901760
        %5768 = vmatpush1.msra.mxu0 %v5767
        %5769 = vmatprep.subr.mxu0 0.0
        %v5770 = vand.u32 %v564, 4294901760
        %5771 = vmatpush1.msra.mxu0 %v5770
        %5772 = vmatprep.subr.mxu0 0.0
        %v5773 = vand.u32 %v565, 4294901760
        %5774 = vmatpush1.msra.mxu0 %v5773
        %5775 = vmatprep.subr.mxu0 0.0
        %v5776 = vand.u32 %v566, 4294901760
        %5777 = vmatpush1.msra.mxu0 %v5776
        %5778 = vmatprep.subr.mxu0 0.0
        %v5779 = vand.u32 %v567, 4294901760
        %5780 = vmatpush1.msra.mxu0 %v5779
        %5781 = vmatprep.subr.mxu0 0.0
        %v5782 = vand.u32 %v568, 4294901760
        %5783 = vmatpush1.msra.mxu0 %v5782
        %5784 = vmatprep.subr.mxu0 0.0
        %v5785 = vand.u32 %v569, 4294901760
        %5786 = vmatpush1.msra.mxu0 %v5785
        %5787 = vmatprep.subr.mxu0 0.0
        %v5788 = vand.u32 %v570, 4294901760
        %5789 = vmatpush1.msra.mxu0 %v5788
        %5790 = vmatprep.subr.mxu0 0.0
        %v5791 = vand.u32 %v571, 4294901760
        %5792 = vmatpush1.msra.mxu0 %v5791
        %5793 = vmatprep.subr.mxu0 0.0
        %v5794 = vand.u32 %v572, 4294901760
        %5795 = vmatpush1.msra.mxu0 %v5794
        %5796 = vmatprep.subr.mxu0 0.0
        %v5797 = vand.u32 %v573, 4294901760
        %5798 = vmatpush1.msra.mxu0 %v5797
        %5799 = vmatprep.subr.mxu0 0.0
        %v5800 = vand.u32 %v574, 4294901760
        %5801 = vmatpush1.msra.mxu0 %v5800
        %5802 = vmatprep.subr.mxu0 0.0
        %v5803 = vand.u32 %v575, 4294901760
        %5804 = vmatpush1.msra.mxu0 %v5803
        %5805 = vmatprep.subr.mxu0 0.0
        %v5806 = vand.u32 %v576, 4294901760
        %5807 = vmatpush1.msra.mxu0 %v5806
        %v5808 = vand.u32 %v379, 4294901760
        %v5809 = vsub.f32 %v379, %v5808
        %v5810 = vand.u32 %v5809, 4294901760
        %5811 = vmatprep.mubr.f32.mxu0 %v5810
        %v5812 = vand.u32 %v377, 4294901760
        %v5813 = vsub.f32 %v377, %v5812
        %v5814 = vand.u32 %v5813, 4294901760
        %5815 = vmatmul.mubr.f32.gmra.mrb[0].mxu0 %v5814
        %v5816 = vpop.f32.mrb[0].mxu0
        %v5817 = vadd.f32 %v5700, %v5816
        %v5818 = vpop.f32.mrb[0].mxu0
        %v5819 = vand.u32 %v380, 4294901760
        %v5820 = vsub.f32 %v380, %v5819
        %v5821 = vand.u32 %v5820, 4294901760
        %5822 = vmatprep.mubr.f32.mxu0 %v5821
        %v5823 = vand.u32 %v378, 4294901760
        %v5824 = vsub.f32 %v378, %v5823
        %v5825 = vand.u32 %v5824, 4294901760
        %5826 = vmatmul.mubr.f32.gmra.mrb[0].mxu0 %v5825
        %v5827 = vpop.f32.mrb[0].mxu0
        %v5828 = vadd.f32 %v5709, %v5827
        %v5829 = vpop.f32.mrb[0].mxu0
        %5830 = vdwg.mxu0
        %5831 = vmatprep.subr.mxu0 0.0
        %v5832 = vand.u32 %v545, 4294901760
        %v5833 = vsub.f32 %v545, %v5832
        %v5834 = vand.u32 %v5833, 4294901760
        %5835 = vmatpush1.msra.mxu0 %v5834
        %5836 = vmatprep.subr.mxu0 0.0
        %v5837 = vand.u32 %v546, 4294901760
        %v5838 = vsub.f32 %v546, %v5837
        %v5839 = vand.u32 %v5838, 4294901760
        %5840 = vmatpush1.msra.mxu0 %v5839
        %5841 = vmatprep.subr.mxu0 0.0
        %v5842 = vand.u32 %v547, 4294901760
        %v5843 = vsub.f32 %v547, %v5842
        %v5844 = vand.u32 %v5843, 4294901760
        %5845 = vmatpush1.msra.mxu0 %v5844
        %5846 = vmatprep.subr.mxu0 0.0
        %v5847 = vand.u32 %v548, 4294901760
        %v5848 = vsub.f32 %v548, %v5847
        %v5849 = vand.u32 %v5848, 4294901760
        %5850 = vmatpush1.msra.mxu0 %v5849
        %5851 = vmatprep.subr.mxu0 0.0
        %v5852 = vand.u32 %v549, 4294901760
        %v5853 = vsub.f32 %v549, %v5852
        %v5854 = vand.u32 %v5853, 4294901760
        %5855 = vmatpush1.msra.mxu0 %v5854
        %5856 = vmatprep.subr.mxu0 0.0
        %v5857 = vand.u32 %v550, 4294901760
        %v5858 = vsub.f32 %v550, %v5857
        %v5859 = vand.u32 %v5858, 4294901760
        %5860 = vmatpush1.msra.mxu0 %v5859
        %5861 = vmatprep.subr.mxu0 0.0
        %v5862 = vand.u32 %v551, 4294901760
        %v5863 = vsub.f32 %v551, %v5862
        %v5864 = vand.u32 %v5863, 4294901760
        %5865 = vmatpush1.msra.mxu0 %v5864
        %5866 = vmatprep.subr.mxu0 0.0
        %v5867 = vand.u32 %v552, 4294901760
        %v5868 = vsub.f32 %v552, %v5867
        %v5869 = vand.u32 %v5868, 4294901760
        %5870 = vmatpush1.msra.mxu0 %v5869
        %5871 = vmatprep.subr.mxu0 0.0
        %v5872 = vand.u32 %v553, 4294901760
        %v5873 = vsub.f32 %v553, %v5872
        %v5874 = vand.u32 %v5873, 4294901760
        %5875 = vmatpush1.msra.mxu0 %v5874
        %5876 = vmatprep.subr.mxu0 0.0
        %v5877 = vand.u32 %v554, 4294901760
        %v5878 = vsub.f32 %v554, %v5877
        %v5879 = vand.u32 %v5878, 4294901760
        %5880 = vmatpush1.msra.mxu0 %v5879
        %5881 = vmatprep.subr.mxu0 0.0
        %v5882 = vand.u32 %v555, 4294901760
        %v5883 = vsub.f32 %v555, %v5882
        %v5884 = vand.u32 %v5883, 4294901760
        %5885 = vmatpush1.msra.mxu0 %v5884
        %5886 = vmatprep.subr.mxu0 0.0
        %v5887 = vand.u32 %v556, 4294901760
        %v5888 = vsub.f32 %v556, %v5887
        %v5889 = vand.u32 %v5888, 4294901760
        %5890 = vmatpush1.msra.mxu0 %v5889
        %5891 = vmatprep.subr.mxu0 0.0
        %v5892 = vand.u32 %v557, 4294901760
        %v5893 = vsub.f32 %v557, %v5892
        %v5894 = vand.u32 %v5893, 4294901760
        %5895 = vmatpush1.msra.mxu0 %v5894
        %5896 = vmatprep.subr.mxu0 0.0
        %v5897 = vand.u32 %v558, 4294901760
        %v5898 = vsub.f32 %v558, %v5897
        %v5899 = vand.u32 %v5898, 4294901760
        %5900 = vmatpush1.msra.mxu0 %v5899
        %5901 = vmatprep.subr.mxu0 0.0
        %v5902 = vand.u32 %v559, 4294901760
        %v5903 = vsub.f32 %v559, %v5902
        %v5904 = vand.u32 %v5903, 4294901760
        %5905 = vmatpush1.msra.mxu0 %v5904
        %5906 = vmatprep.subr.mxu0 0.0
        %v5907 = vand.u32 %v560, 4294901760
        %v5908 = vsub.f32 %v560, %v5907
        %v5909 = vand.u32 %v5908, 4294901760
        %5910 = vmatpush1.msra.mxu0 %v5909
        %5911 = vmatprep.subr.mxu0 0.0
        %v5912 = vand.u32 %v561, 4294901760
        %v5913 = vsub.f32 %v561, %v5912
        %v5914 = vand.u32 %v5913, 4294901760
        %5915 = vmatpush1.msra.mxu0 %v5914
        %5916 = vmatprep.subr.mxu0 0.0
        %v5917 = vand.u32 %v562, 4294901760
        %v5918 = vsub.f32 %v562, %v5917
        %v5919 = vand.u32 %v5918, 4294901760
        %5920 = vmatpush1.msra.mxu0 %v5919
        %5921 = vmatprep.subr.mxu0 0.0
        %v5922 = vand.u32 %v563, 4294901760
        %v5923 = vsub.f32 %v563, %v5922
        %v5924 = vand.u32 %v5923, 4294901760
        %5925 = vmatpush1.msra.mxu0 %v5924
        %5926 = vmatprep.subr.mxu0 0.0
        %v5927 = vand.u32 %v564, 4294901760
        %v5928 = vsub.f32 %v564, %v5927
        %v5929 = vand.u32 %v5928, 4294901760
        %5930 = vmatpush1.msra.mxu0 %v5929
        %5931 = vmatprep.subr.mxu0 0.0
        %v5932 = vand.u32 %v565, 4294901760
        %v5933 = vsub.f32 %v565, %v5932
        %v5934 = vand.u32 %v5933, 4294901760
        %5935 = vmatpush1.msra.mxu0 %v5934
        %5936 = vmatprep.subr.mxu0 0.0
        %v5937 = vand.u32 %v566, 4294901760
        %v5938 = vsub.f32 %v566, %v5937
        %v5939 = vand.u32 %v5938, 4294901760
        %5940 = vmatpush1.msra.mxu0 %v5939
        %5941 = vmatprep.subr.mxu0 0.0
        %v5942 = vand.u32 %v567, 4294901760
        %v5943 = vsub.f32 %v567, %v5942
        %v5944 = vand.u32 %v5943, 4294901760
        %5945 = vmatpush1.msra.mxu0 %v5944
        %5946 = vmatprep.subr.mxu0 0.0
        %v5947 = vand.u32 %v568, 4294901760
        %v5948 = vsub.f32 %v568, %v5947
        %v5949 = vand.u32 %v5948, 4294901760
        %5950 = vmatpush1.msra.mxu0 %v5949
        %5951 = vmatprep.subr.mxu0 0.0
        %v5952 = vand.u32 %v569, 4294901760
        %v5953 = vsub.f32 %v569, %v5952
        %v5954 = vand.u32 %v5953, 4294901760
        %5955 = vmatpush1.msra.mxu0 %v5954
        %5956 = vmatprep.subr.mxu0 0.0
        %v5957 = vand.u32 %v570, 4294901760
        %v5958 = vsub.f32 %v570, %v5957
        %v5959 = vand.u32 %v5958, 4294901760
        %5960 = vmatpush1.msra.mxu0 %v5959
        %5961 = vmatprep.subr.mxu0 0.0
        %v5962 = vand.u32 %v571, 4294901760
        %v5963 = vsub.f32 %v571, %v5962
        %v5964 = vand.u32 %v5963, 4294901760
        %5965 = vmatpush1.msra.mxu0 %v5964
        %5966 = vmatprep.subr.mxu0 0.0
        %v5967 = vand.u32 %v572, 4294901760
        %v5968 = vsub.f32 %v572, %v5967
        %v5969 = vand.u32 %v5968, 4294901760
        %5970 = vmatpush1.msra.mxu0 %v5969
        %5971 = vmatprep.subr.mxu0 0.0
        %v5972 = vand.u32 %v573, 4294901760
        %v5973 = vsub.f32 %v573, %v5972
        %v5974 = vand.u32 %v5973, 4294901760
        %5975 = vmatpush1.msra.mxu0 %v5974
        %5976 = vmatprep.subr.mxu0 0.0
        %v5977 = vand.u32 %v574, 4294901760
        %v5978 = vsub.f32 %v574, %v5977
        %v5979 = vand.u32 %v5978, 4294901760
        %5980 = vmatpush1.msra.mxu0 %v5979
        %5981 = vmatprep.subr.mxu0 0.0
        %v5982 = vand.u32 %v575, 4294901760
        %v5983 = vsub.f32 %v575, %v5982
        %v5984 = vand.u32 %v5983, 4294901760
        %5985 = vmatpush1.msra.mxu0 %v5984
        %5986 = vmatprep.subr.mxu0 0.0
        %v5987 = vand.u32 %v576, 4294901760
        %v5988 = vsub.f32 %v576, %v5987
        %v5989 = vand.u32 %v5988, 4294901760
        %5990 = vmatpush1.msra.mxu0 %v5989
        %v5991 = vand.u32 %v379, 4294901760
        %5992 = vmatprep.mubr.f32.mxu0 %v5991
        %v5993 = vand.u32 %v377, 4294901760
        %5994 = vmatmul.mubr.f32.gmra.mrb[0].mxu0 %v5993
        %v5995 = vpop.f32.mrb[0].mxu0
        %v5996 = vadd.f32 %v5817, %v5995
        %v5997 = vpop.f32.mrb[0].mxu0
        %v5998 = vand.u32 %v380, 4294901760
        %5999 = vmatprep.mubr.f32.mxu0 %v5998
        %v6000 = vand.u32 %v378, 4294901760
        %6001 = vmatmul.mubr.f32.gmra.mrb[0].mxu0 %v6000
        %v6002 = vpop.f32.mrb[0].mxu0
        %v6003 = vadd.f32 %v5828, %v6002
        %v6004 = vpop.f32.mrb[0].mxu0
        %6005 = vdwg.mxu0
        %6006 = vmatprep.subr.mxu0 0.0
        %v6007 = vand.u32 %v545, 4294901760
        %6008 = vmatpush1.msra.mxu0 %v6007
        %6009 = vmatprep.subr.mxu0 0.0
        %v6010 = vand.u32 %v546, 4294901760
        %6011 = vmatpush1.msra.mxu0 %v6010
        %6012 = vmatprep.subr.mxu0 0.0
        %v6013 = vand.u32 %v547, 4294901760
        %6014 = vmatpush1.msra.mxu0 %v6013
        %6015 = vmatprep.subr.mxu0 0.0
        %v6016 = vand.u32 %v548, 4294901760
        %6017 = vmatpush1.msra.mxu0 %v6016
        %6018 = vmatprep.subr.mxu0 0.0
        %v6019 = vand.u32 %v549, 4294901760
        %6020 = vmatpush1.msra.mxu0 %v6019
        %6021 = vmatprep.subr.mxu0 0.0
        %v6022 = vand.u32 %v550, 4294901760
        %6023 = vmatpush1.msra.mxu0 %v6022
        %6024 = vmatprep.subr.mxu0 0.0
        %v6025 = vand.u32 %v551, 4294901760
        %6026 = vmatpush1.msra.mxu0 %v6025
        %6027 = vmatprep.subr.mxu0 0.0
        %v6028 = vand.u32 %v552, 4294901760
        %6029 = vmatpush1.msra.mxu0 %v6028
        %6030 = vmatprep.subr.mxu0 0.0
        %v6031 = vand.u32 %v553, 4294901760
        %6032 = vmatpush1.msra.mxu0 %v6031
        %6033 = vmatprep.subr.mxu0 0.0
        %v6034 = vand.u32 %v554, 4294901760
        %6035 = vmatpush1.msra.mxu0 %v6034
        %6036 = vmatprep.subr.mxu0 0.0
        %v6037 = vand.u32 %v555, 4294901760
        %6038 = vmatpush1.msra.mxu0 %v6037
        %6039 = vmatprep.subr.mxu0 0.0
        %v6040 = vand.u32 %v556, 4294901760
        %6041 = vmatpush1.msra.mxu0 %v6040
        %6042 = vmatprep.subr.mxu0 0.0
        %v6043 = vand.u32 %v557, 4294901760
        %6044 = vmatpush1.msra.mxu0 %v6043
        %6045 = vmatprep.subr.mxu0 0.0
        %v6046 = vand.u32 %v558, 4294901760
        %6047 = vmatpush1.msra.mxu0 %v6046
        %6048 = vmatprep.subr.mxu0 0.0
        %v6049 = vand.u32 %v559, 4294901760
        %6050 = vmatpush1.msra.mxu0 %v6049
        %6051 = vmatprep.subr.mxu0 0.0
        %v6052 = vand.u32 %v560, 4294901760
        %6053 = vmatpush1.msra.mxu0 %v6052
        %6054 = vmatprep.subr.mxu0 0.0
        %v6055 = vand.u32 %v561, 4294901760
        %6056 = vmatpush1.msra.mxu0 %v6055
        %6057 = vmatprep.subr.mxu0 0.0
        %v6058 = vand.u32 %v562, 4294901760
        %6059 = vmatpush1.msra.mxu0 %v6058
        %6060 = vmatprep.subr.mxu0 0.0
        %v6061 = vand.u32 %v563, 4294901760
        %6062 = vmatpush1.msra.mxu0 %v6061
        %6063 = vmatprep.subr.mxu0 0.0
        %v6064 = vand.u32 %v564, 4294901760
        %6065 = vmatpush1.msra.mxu0 %v6064
        %6066 = vmatprep.subr.mxu0 0.0
        %v6067 = vand.u32 %v565, 4294901760
        %6068 = vmatpush1.msra.mxu0 %v6067
        %6069 = vmatprep.subr.mxu0 0.0
        %v6070 = vand.u32 %v566, 4294901760
        %6071 = vmatpush1.msra.mxu0 %v6070
        %6072 = vmatprep.subr.mxu0 0.0
        %v6073 = vand.u32 %v567, 4294901760
        %6074 = vmatpush1.msra.mxu0 %v6073
        %6075 = vmatprep.subr.mxu0 0.0
        %v6076 = vand.u32 %v568, 4294901760
        %6077 = vmatpush1.msra.mxu0 %v6076
        %6078 = vmatprep.subr.mxu0 0.0
        %v6079 = vand.u32 %v569, 4294901760
        %6080 = vmatpush1.msra.mxu0 %v6079
        %6081 = vmatprep.subr.mxu0 0.0
        %v6082 = vand.u32 %v570, 4294901760
        %6083 = vmatpush1.msra.mxu0 %v6082
        %6084 = vmatprep.subr.mxu0 0.0
        %v6085 = vand.u32 %v571, 4294901760
        %6086 = vmatpush1.msra.mxu0 %v6085
        %6087 = vmatprep.subr.mxu0 0.0
        %v6088 = vand.u32 %v572, 4294901760
        %6089 = vmatpush1.msra.mxu0 %v6088
        %6090 = vmatprep.subr.mxu0 0.0
        %v6091 = vand.u32 %v573, 4294901760
        %6092 = vmatpush1.msra.mxu0 %v6091
        %6093 = vmatprep.subr.mxu0 0.0
        %v6094 = vand.u32 %v574, 4294901760
        %6095 = vmatpush1.msra.mxu0 %v6094
        %6096 = vmatprep.subr.mxu0 0.0
        %v6097 = vand.u32 %v575, 4294901760
        %6098 = vmatpush1.msra.mxu0 %v6097
        %6099 = vmatprep.subr.mxu0 0.0
        %v6100 = vand.u32 %v576, 4294901760
        %6101 = vmatpush1.msra.mxu0 %v6100
        %v6102 = vand.u32 %v379, 4294901760
        %6103 = vmatprep.mubr.f32.mxu0 %v6102
        %v6104 = vand.u32 %v377, 4294901760
        %6105 = vmatmul.mubr.f32.gmra.mrb[0].mxu0 %v6104
        %v6106 = vpop.f32.mrb[0].mxu0
        %v6107 = vadd.f32 %v5996, %v6106
        %v6108 = vpop.f32.mrb[0].mxu0
        %v6109 = vand.u32 %v380, 4294901760
        %6110 = vmatprep.mubr.f32.mxu0 %v6109
        %v6111 = vand.u32 %v378, 4294901760
        %6112 = vmatmul.mubr.f32.gmra.mrb[0].mxu0 %v6111
        %v6113 = vpop.f32.mrb[0].mxu0
        %v6114 = vadd.f32 %v6003, %v6113
        %v6115 = vpop.f32.mrb[0].mxu0
        %6116 = vdwg.mxu0
        %6117 = vmatprep.subr.mxu0 0.0
        %v6118 = vand.u32 %v577, 4294901760
        %6119 = vmatpush1.msra.mxu0 %v6118
        %6120 = vmatprep.subr.mxu0 0.0
        %v6121 = vand.u32 %v578, 4294901760
        %6122 = vmatpush1.msra.mxu0 %v6121
        %6123 = vmatprep.subr.mxu0 0.0
        %v6124 = vand.u32 %v579, 4294901760
        %6125 = vmatpush1.msra.mxu0 %v6124
        %6126 = vmatprep.subr.mxu0 0.0
        %v6127 = vand.u32 %v580, 4294901760
        %6128 = vmatpush1.msra.mxu0 %v6127
        %6129 = vmatprep.subr.mxu0 0.0
        %v6130 = vand.u32 %v581, 4294901760
        %6131 = vmatpush1.msra.mxu0 %v6130
        %6132 = vmatprep.subr.mxu0 0.0
        %v6133 = vand.u32 %v582, 4294901760
        %6134 = vmatpush1.msra.mxu0 %v6133
        %6135 = vmatprep.subr.mxu0 0.0
        %v6136 = vand.u32 %v583, 4294901760
        %6137 = vmatpush1.msra.mxu0 %v6136
        %6138 = vmatprep.subr.mxu0 0.0
        %v6139 = vand.u32 %v584, 4294901760
        %6140 = vmatpush1.msra.mxu0 %v6139
        %6141 = vmatprep.subr.mxu0 0.0
        %v6142 = vand.u32 %v585, 4294901760
        %6143 = vmatpush1.msra.mxu0 %v6142
        %6144 = vmatprep.subr.mxu0 0.0
        %v6145 = vand.u32 %v586, 4294901760
        %6146 = vmatpush1.msra.mxu0 %v6145
        %6147 = vmatprep.subr.mxu0 0.0
        %v6148 = vand.u32 %v587, 4294901760
        %6149 = vmatpush1.msra.mxu0 %v6148
        %6150 = vmatprep.subr.mxu0 0.0
        %v6151 = vand.u32 %v588, 4294901760
        %6152 = vmatpush1.msra.mxu0 %v6151
        %6153 = vmatprep.subr.mxu0 0.0
        %v6154 = vand.u32 %v589, 4294901760
        %6155 = vmatpush1.msra.mxu0 %v6154
        %6156 = vmatprep.subr.mxu0 0.0
        %v6157 = vand.u32 %v590, 4294901760
        %6158 = vmatpush1.msra.mxu0 %v6157
        %6159 = vmatprep.subr.mxu0 0.0
        %v6160 = vand.u32 %v591, 4294901760
        %6161 = vmatpush1.msra.mxu0 %v6160
        %6162 = vmatprep.subr.mxu0 0.0
        %v6163 = vand.u32 %v592, 4294901760
        %6164 = vmatpush1.msra.mxu0 %v6163
        %6165 = vmatprep.subr.mxu0 0.0
        %v6166 = vand.u32 %v593, 4294901760
        %6167 = vmatpush1.msra.mxu0 %v6166
        %6168 = vmatprep.subr.mxu0 0.0
        %v6169 = vand.u32 %v594, 4294901760
        %6170 = vmatpush1.msra.mxu0 %v6169
        %6171 = vmatprep.subr.mxu0 0.0
        %v6172 = vand.u32 %v595, 4294901760
        %6173 = vmatpush1.msra.mxu0 %v6172
        %6174 = vmatprep.subr.mxu0 0.0
        %v6175 = vand.u32 %v596, 4294901760
        %6176 = vmatpush1.msra.mxu0 %v6175
        %6177 = vmatprep.subr.mxu0 0.0
        %v6178 = vand.u32 %v597, 4294901760
        %6179 = vmatpush1.msra.mxu0 %v6178
        %6180 = vmatprep.subr.mxu0 0.0
        %v6181 = vand.u32 %v598, 4294901760
        %6182 = vmatpush1.msra.mxu0 %v6181
        %6183 = vmatprep.subr.mxu0 0.0
        %v6184 = vand.u32 %v599, 4294901760
        %6185 = vmatpush1.msra.mxu0 %v6184
        %6186 = vmatprep.subr.mxu0 0.0
        %v6187 = vand.u32 %v600, 4294901760
        %6188 = vmatpush1.msra.mxu0 %v6187
        %6189 = vmatprep.subr.mxu0 0.0
        %v6190 = vand.u32 %v601, 4294901760
        %6191 = vmatpush1.msra.mxu0 %v6190
        %6192 = vmatprep.subr.mxu0 0.0
        %v6193 = vand.u32 %v602, 4294901760
        %6194 = vmatpush1.msra.mxu0 %v6193
        %6195 = vmatprep.subr.mxu0 0.0
        %v6196 = vand.u32 %v603, 4294901760
        %6197 = vmatpush1.msra.mxu0 %v6196
        %6198 = vmatprep.subr.mxu0 0.0
        %v6199 = vand.u32 %v604, 4294901760
        %6200 = vmatpush1.msra.mxu0 %v6199
        %6201 = vmatprep.subr.mxu0 0.0
        %v6202 = vand.u32 %v605, 4294901760
        %6203 = vmatpush1.msra.mxu0 %v6202
        %6204 = vmatprep.subr.mxu0 0.0
        %v6205 = vand.u32 %v606, 4294901760
        %6206 = vmatpush1.msra.mxu0 %v6205
        %6207 = vmatprep.subr.mxu0 0.0
        %v6208 = vand.u32 %v607, 4294901760
        %6209 = vmatpush1.msra.mxu0 %v6208
        %6210 = vmatprep.subr.mxu0 0.0
        %v6211 = vand.u32 %v608, 4294901760
        %6212 = vmatpush1.msra.mxu0 %v6211
        %v6213 = vand.u32 %v383, 4294901760
        %v6214 = vsub.f32 %v383, %v6213
        %v6215 = vand.u32 %v6214, 4294901760
        %v6216 = vsub.f32 %v6214, %v6215
        %v6217 = vand.u32 %v6216, 4294901760
        %6218 = vmatprep.mubr.f32.mxu0 %v6217
        %v6219 = vand.u32 %v381, 4294901760
        %v6220 = vsub.f32 %v381, %v6219
        %v6221 = vand.u32 %v6220, 4294901760
        %v6222 = vsub.f32 %v6220, %v6221
        %v6223 = vand.u32 %v6222, 4294901760
        %6224 = vmatmul.mubr.f32.gmra.mrb[0].mxu0 %v6223
        %v6225 = vpop.f32.mrb[0].mxu0
        %v6226 = vadd.f32 %v6107, %v6225
        %v6227 = vpop.f32.mrb[0].mxu0
        %v6228 = vand.u32 %v384, 4294901760
        %v6229 = vsub.f32 %v384, %v6228
        %v6230 = vand.u32 %v6229, 4294901760
        %v6231 = vsub.f32 %v6229, %v6230
        %v6232 = vand.u32 %v6231, 4294901760
        %6233 = vmatprep.mubr.f32.mxu0 %v6232
        %v6234 = vand.u32 %v382, 4294901760
        %v6235 = vsub.f32 %v382, %v6234
        %v6236 = vand.u32 %v6235, 4294901760
        %v6237 = vsub.f32 %v6235, %v6236
        %v6238 = vand.u32 %v6237, 4294901760
        %6239 = vmatmul.mubr.f32.gmra.mrb[0].mxu0 %v6238
        %v6240 = vpop.f32.mrb[0].mxu0
        %v6241 = vadd.f32 %v6114, %v6240
        %v6242 = vpop.f32.mrb[0].mxu0
        %6243 = vdwg.mxu0
        %6244 = vmatprep.subr.mxu0 0.0
        %v6245 = vand.u32 %v577, 4294901760
        %v6246 = vsub.f32 %v577, %v6245
        %v6247 = vand.u32 %v6246, 4294901760
        %v6248 = vsub.f32 %v6246, %v6247
        %v6249 = vand.u32 %v6248, 4294901760
        %6250 = vmatpush1.msra.mxu0 %v6249
        %6251 = vmatprep.subr.mxu0 0.0
        %v6252 = vand.u32 %v578, 4294901760
        %v6253 = vsub.f32 %v578, %v6252
        %v6254 = vand.u32 %v6253, 4294901760
        %v6255 = vsub.f32 %v6253, %v6254
        %v6256 = vand.u32 %v6255, 4294901760
        %6257 = vmatpush1.msra.mxu0 %v6256
        %6258 = vmatprep.subr.mxu0 0.0
        %v6259 = vand.u32 %v579, 4294901760
        %v6260 = vsub.f32 %v579, %v6259
        %v6261 = vand.u32 %v6260, 4294901760
        %v6262 = vsub.f32 %v6260, %v6261
        %v6263 = vand.u32 %v6262, 4294901760
        %6264 = vmatpush1.msra.mxu0 %v6263
        %6265 = vmatprep.subr.mxu0 0.0
        %v6266 = vand.u32 %v580, 4294901760
        %v6267 = vsub.f32 %v580, %v6266
        %v6268 = vand.u32 %v6267, 4294901760
        %v6269 = vsub.f32 %v6267, %v6268
        %v6270 = vand.u32 %v6269, 4294901760
        %6271 = vmatpush1.msra.mxu0 %v6270
        %6272 = vmatprep.subr.mxu0 0.0
        %v6273 = vand.u32 %v581, 4294901760
        %v6274 = vsub.f32 %v581, %v6273
        %v6275 = vand.u32 %v6274, 4294901760
        %v6276 = vsub.f32 %v6274, %v6275
        %v6277 = vand.u32 %v6276, 4294901760
        %6278 = vmatpush1.msra.mxu0 %v6277
        %6279 = vmatprep.subr.mxu0 0.0
        %v6280 = vand.u32 %v582, 4294901760
        %v6281 = vsub.f32 %v582, %v6280
        %v6282 = vand.u32 %v6281, 4294901760
        %v6283 = vsub.f32 %v6281, %v6282
        %v6284 = vand.u32 %v6283, 4294901760
        %6285 = vmatpush1.msra.mxu0 %v6284
        %6286 = vmatprep.subr.mxu0 0.0
        %v6287 = vand.u32 %v583, 4294901760
        %v6288 = vsub.f32 %v583, %v6287
        %v6289 = vand.u32 %v6288, 4294901760
        %v6290 = vsub.f32 %v6288, %v6289
        %v6291 = vand.u32 %v6290, 4294901760
        %6292 = vmatpush1.msra.mxu0 %v6291
        %6293 = vmatprep.subr.mxu0 0.0
        %v6294 = vand.u32 %v584, 4294901760
        %v6295 = vsub.f32 %v584, %v6294
        %v6296 = vand.u32 %v6295, 4294901760
        %v6297 = vsub.f32 %v6295, %v6296
        %v6298 = vand.u32 %v6297, 4294901760
        %6299 = vmatpush1.msra.mxu0 %v6298
        %6300 = vmatprep.subr.mxu0 0.0
        %v6301 = vand.u32 %v585, 4294901760
        %v6302 = vsub.f32 %v585, %v6301
        %v6303 = vand.u32 %v6302, 4294901760
        %v6304 = vsub.f32 %v6302, %v6303
        %v6305 = vand.u32 %v6304, 4294901760
        %6306 = vmatpush1.msra.mxu0 %v6305
        %6307 = vmatprep.subr.mxu0 0.0
        %v6308 = vand.u32 %v586, 4294901760
        %v6309 = vsub.f32 %v586, %v6308
        %v6310 = vand.u32 %v6309, 4294901760
        %v6311 = vsub.f32 %v6309, %v6310
        %v6312 = vand.u32 %v6311, 4294901760
        %6313 = vmatpush1.msra.mxu0 %v6312
        %6314 = vmatprep.subr.mxu0 0.0
        %v6315 = vand.u32 %v587, 4294901760
        %v6316 = vsub.f32 %v587, %v6315
        %v6317 = vand.u32 %v6316, 4294901760
        %v6318 = vsub.f32 %v6316, %v6317
        %v6319 = vand.u32 %v6318, 4294901760
        %6320 = vmatpush1.msra.mxu0 %v6319
        %6321 = vmatprep.subr.mxu0 0.0
        %v6322 = vand.u32 %v588, 4294901760
        %v6323 = vsub.f32 %v588, %v6322
        %v6324 = vand.u32 %v6323, 4294901760
        %v6325 = vsub.f32 %v6323, %v6324
        %v6326 = vand.u32 %v6325, 4294901760
        %6327 = vmatpush1.msra.mxu0 %v6326
        %6328 = vmatprep.subr.mxu0 0.0
        %v6329 = vand.u32 %v589, 4294901760
        %v6330 = vsub.f32 %v589, %v6329
        %v6331 = vand.u32 %v6330, 4294901760
        %v6332 = vsub.f32 %v6330, %v6331
        %v6333 = vand.u32 %v6332, 4294901760
        %6334 = vmatpush1.msra.mxu0 %v6333
        %6335 = vmatprep.subr.mxu0 0.0
        %v6336 = vand.u32 %v590, 4294901760
        %v6337 = vsub.f32 %v590, %v6336
        %v6338 = vand.u32 %v6337, 4294901760
        %v6339 = vsub.f32 %v6337, %v6338
        %v6340 = vand.u32 %v6339, 4294901760
        %6341 = vmatpush1.msra.mxu0 %v6340
        %6342 = vmatprep.subr.mxu0 0.0
        %v6343 = vand.u32 %v591, 4294901760
        %v6344 = vsub.f32 %v591, %v6343
        %v6345 = vand.u32 %v6344, 4294901760
        %v6346 = vsub.f32 %v6344, %v6345
        %v6347 = vand.u32 %v6346, 4294901760
        %6348 = vmatpush1.msra.mxu0 %v6347
        %6349 = vmatprep.subr.mxu0 0.0
        %v6350 = vand.u32 %v592, 4294901760
        %v6351 = vsub.f32 %v592, %v6350
        %v6352 = vand.u32 %v6351, 4294901760
        %v6353 = vsub.f32 %v6351, %v6352
        %v6354 = vand.u32 %v6353, 4294901760
        %6355 = vmatpush1.msra.mxu0 %v6354
        %6356 = vmatprep.subr.mxu0 0.0
        %v6357 = vand.u32 %v593, 4294901760
        %v6358 = vsub.f32 %v593, %v6357
        %v6359 = vand.u32 %v6358, 4294901760
        %v6360 = vsub.f32 %v6358, %v6359
        %v6361 = vand.u32 %v6360, 4294901760
        %6362 = vmatpush1.msra.mxu0 %v6361
        %6363 = vmatprep.subr.mxu0 0.0
        %v6364 = vand.u32 %v594, 4294901760
        %v6365 = vsub.f32 %v594, %v6364
        %v6366 = vand.u32 %v6365, 4294901760
        %v6367 = vsub.f32 %v6365, %v6366
        %v6368 = vand.u32 %v6367, 4294901760
        %6369 = vmatpush1.msra.mxu0 %v6368
        %6370 = vmatprep.subr.mxu0 0.0
        %v6371 = vand.u32 %v595, 4294901760
        %v6372 = vsub.f32 %v595, %v6371
        %v6373 = vand.u32 %v6372, 4294901760
        %v6374 = vsub.f32 %v6372, %v6373
        %v6375 = vand.u32 %v6374, 4294901760
        %6376 = vmatpush1.msra.mxu0 %v6375
        %6377 = vmatprep.subr.mxu0 0.0
        %v6378 = vand.u32 %v596, 4294901760
        %v6379 = vsub.f32 %v596, %v6378
        %v6380 = vand.u32 %v6379, 4294901760
        %v6381 = vsub.f32 %v6379, %v6380
        %v6382 = vand.u32 %v6381, 4294901760
        %6383 = vmatpush1.msra.mxu0 %v6382
        %6384 = vmatprep.subr.mxu0 0.0
        %v6385 = vand.u32 %v597, 4294901760
        %v6386 = vsub.f32 %v597, %v6385
        %v6387 = vand.u32 %v6386, 4294901760
        %v6388 = vsub.f32 %v6386, %v6387
        %v6389 = vand.u32 %v6388, 4294901760
        %6390 = vmatpush1.msra.mxu0 %v6389
        %6391 = vmatprep.subr.mxu0 0.0
        %v6392 = vand.u32 %v598, 4294901760
        %v6393 = vsub.f32 %v598, %v6392
        %v6394 = vand.u32 %v6393, 4294901760
        %v6395 = vsub.f32 %v6393, %v6394
        %v6396 = vand.u32 %v6395, 4294901760
        %6397 = vmatpush1.msra.mxu0 %v6396
        %6398 = vmatprep.subr.mxu0 0.0
        %v6399 = vand.u32 %v599, 4294901760
        %v6400 = vsub.f32 %v599, %v6399
        %v6401 = vand.u32 %v6400, 4294901760
        %v6402 = vsub.f32 %v6400, %v6401
        %v6403 = vand.u32 %v6402, 4294901760
        %6404 = vmatpush1.msra.mxu0 %v6403
        %6405 = vmatprep.subr.mxu0 0.0
        %v6406 = vand.u32 %v600, 4294901760
        %v6407 = vsub.f32 %v600, %v6406
        %v6408 = vand.u32 %v6407, 4294901760
        %v6409 = vsub.f32 %v6407, %v6408
        %v6410 = vand.u32 %v6409, 4294901760
        %6411 = vmatpush1.msra.mxu0 %v6410
        %6412 = vmatprep.subr.mxu0 0.0
        %v6413 = vand.u32 %v601, 4294901760
        %v6414 = vsub.f32 %v601, %v6413
        %v6415 = vand.u32 %v6414, 4294901760
        %v6416 = vsub.f32 %v6414, %v6415
        %v6417 = vand.u32 %v6416, 4294901760
        %6418 = vmatpush1.msra.mxu0 %v6417
        %6419 = vmatprep.subr.mxu0 0.0
        %v6420 = vand.u32 %v602, 4294901760
        %v6421 = vsub.f32 %v602, %v6420
        %v6422 = vand.u32 %v6421, 4294901760
        %v6423 = vsub.f32 %v6421, %v6422
        %v6424 = vand.u32 %v6423, 4294901760
        %6425 = vmatpush1.msra.mxu0 %v6424
        %6426 = vmatprep.subr.mxu0 0.0
        %v6427 = vand.u32 %v603, 4294901760
        %v6428 = vsub.f32 %v603, %v6427
        %v6429 = vand.u32 %v6428, 4294901760
        %v6430 = vsub.f32 %v6428, %v6429
        %v6431 = vand.u32 %v6430, 4294901760
        %6432 = vmatpush1.msra.mxu0 %v6431
        %6433 = vmatprep.subr.mxu0 0.0
        %v6434 = vand.u32 %v604, 4294901760
        %v6435 = vsub.f32 %v604, %v6434
        %v6436 = vand.u32 %v6435, 4294901760
        %v6437 = vsub.f32 %v6435, %v6436
        %v6438 = vand.u32 %v6437, 4294901760
        %6439 = vmatpush1.msra.mxu0 %v6438
        %6440 = vmatprep.subr.mxu0 0.0
        %v6441 = vand.u32 %v605, 4294901760
        %v6442 = vsub.f32 %v605, %v6441
        %v6443 = vand.u32 %v6442, 4294901760
        %v6444 = vsub.f32 %v6442, %v6443
        %v6445 = vand.u32 %v6444, 4294901760
        %6446 = vmatpush1.msra.mxu0 %v6445
        %6447 = vmatprep.subr.mxu0 0.0
        %v6448 = vand.u32 %v606, 4294901760
        %v6449 = vsub.f32 %v606, %v6448
        %v6450 = vand.u32 %v6449, 4294901760
        %v6451 = vsub.f32 %v6449, %v6450
        %v6452 = vand.u32 %v6451, 4294901760
        %6453 = vmatpush1.msra.mxu0 %v6452
        %6454 = vmatprep.subr.mxu0 0.0
        %v6455 = vand.u32 %v607, 4294901760
        %v6456 = vsub.f32 %v607, %v6455
        %v6457 = vand.u32 %v6456, 4294901760
        %v6458 = vsub.f32 %v6456, %v6457
        %v6459 = vand.u32 %v6458, 4294901760
        %6460 = vmatpush1.msra.mxu0 %v6459
        %6461 = vmatprep.subr.mxu0 0.0
        %v6462 = vand.u32 %v608, 4294901760
        %v6463 = vsub.f32 %v608, %v6462
        %v6464 = vand.u32 %v6463, 4294901760
        %v6465 = vsub.f32 %v6463, %v6464
        %v6466 = vand.u32 %v6465, 4294901760
        %6467 = vmatpush1.msra.mxu0 %v6466
        %v6468 = vand.u32 %v383, 4294901760
        %6469 = vmatprep.mubr.f32.mxu0 %v6468
        %v6470 = vand.u32 %v381, 4294901760
        %6471 = vmatmul.mubr.f32.gmra.mrb[0].mxu0 %v6470
        %v6472 = vpop.f32.mrb[0].mxu0
        %v6473 = vadd.f32 %v6226, %v6472
        %v6474 = vpop.f32.mrb[0].mxu0
        %v6475 = vand.u32 %v384, 4294901760
        %6476 = vmatprep.mubr.f32.mxu0 %v6475
        %v6477 = vand.u32 %v382, 4294901760
        %6478 = vmatmul.mubr.f32.gmra.mrb[0].mxu0 %v6477
        %v6479 = vpop.f32.mrb[0].mxu0
        %v6480 = vadd.f32 %v6241, %v6479
        %v6481 = vpop.f32.mrb[0].mxu0
        %6482 = vdwg.mxu0
        %6483 = vmatprep.subr.mxu0 0.0
        %v6484 = vand.u32 %v577, 4294901760
        %v6485 = vsub.f32 %v577, %v6484
        %6486 = vmatpush1.msra.mxu0 %v6485
        %6487 = vmatprep.subr.mxu0 0.0
        %v6488 = vand.u32 %v578, 4294901760
        %v6489 = vsub.f32 %v578, %v6488
        %6490 = vmatpush1.msra.mxu0 %v6489
        %6491 = vmatprep.subr.mxu0 0.0
        %v6492 = vand.u32 %v579, 4294901760
        %v6493 = vsub.f32 %v579, %v6492
        %6494 = vmatpush1.msra.mxu0 %v6493
        %6495 = vmatprep.subr.mxu0 0.0
        %v6496 = vand.u32 %v580, 4294901760
        %v6497 = vsub.f32 %v580, %v6496
        %6498 = vmatpush1.msra.mxu0 %v6497
        %6499 = vmatprep.subr.mxu0 0.0
        %v6500 = vand.u32 %v581, 4294901760
        %v6501 = vsub.f32 %v581, %v6500
        %6502 = vmatpush1.msra.mxu0 %v6501
        %6503 = vmatprep.subr.mxu0 0.0
        %v6504 = vand.u32 %v582, 4294901760
        %v6505 = vsub.f32 %v582, %v6504
        %6506 = vmatpush1.msra.mxu0 %v6505
        %6507 = vmatprep.subr.mxu0 0.0
        %v6508 = vand.u32 %v583, 4294901760
        %v6509 = vsub.f32 %v583, %v6508
        %6510 = vmatpush1.msra.mxu0 %v6509
        %6511 = vmatprep.subr.mxu0 0.0
        %v6512 = vand.u32 %v584, 4294901760
        %v6513 = vsub.f32 %v584, %v6512
        %6514 = vmatpush1.msra.mxu0 %v6513
        %6515 = vmatprep.subr.mxu0 0.0
        %v6516 = vand.u32 %v585, 4294901760
        %v6517 = vsub.f32 %v585, %v6516
        %6518 = vmatpush1.msra.mxu0 %v6517
        %6519 = vmatprep.subr.mxu0 0.0
        %v6520 = vand.u32 %v586, 4294901760
        %v6521 = vsub.f32 %v586, %v6520
        %6522 = vmatpush1.msra.mxu0 %v6521
        %6523 = vmatprep.subr.mxu0 0.0
        %v6524 = vand.u32 %v587, 4294901760
        %v6525 = vsub.f32 %v587, %v6524
        %6526 = vmatpush1.msra.mxu0 %v6525
        %6527 = vmatprep.subr.mxu0 0.0
        %v6528 = vand.u32 %v588, 4294901760
        %v6529 = vsub.f32 %v588, %v6528
        %6530 = vmatpush1.msra.mxu0 %v6529
        %6531 = vmatprep.subr.mxu0 0.0
        %v6532 = vand.u32 %v589, 4294901760
        %v6533 = vsub.f32 %v589, %v6532
        %6534 = vmatpush1.msra.mxu0 %v6533
        %6535 = vmatprep.subr.mxu0 0.0
        %v6536 = vand.u32 %v590, 4294901760
        %v6537 = vsub.f32 %v590, %v6536
        %6538 = vmatpush1.msra.mxu0 %v6537
        %6539 = vmatprep.subr.mxu0 0.0
        %v6540 = vand.u32 %v591, 4294901760
        %v6541 = vsub.f32 %v591, %v6540
        %6542 = vmatpush1.msra.mxu0 %v6541
        %6543 = vmatprep.subr.mxu0 0.0
        %v6544 = vand.u32 %v592, 4294901760
        %v6545 = vsub.f32 %v592, %v6544
        %6546 = vmatpush1.msra.mxu0 %v6545
        %6547 = vmatprep.subr.mxu0 0.0
        %v6548 = vand.u32 %v593, 4294901760
        %v6549 = vsub.f32 %v593, %v6548
        %6550 = vmatpush1.msra.mxu0 %v6549
        %6551 = vmatprep.subr.mxu0 0.0
        %v6552 = vand.u32 %v594, 4294901760
        %v6553 = vsub.f32 %v594, %v6552
        %6554 = vmatpush1.msra.mxu0 %v6553
        %6555 = vmatprep.subr.mxu0 0.0
        %v6556 = vand.u32 %v595, 4294901760
        %v6557 = vsub.f32 %v595, %v6556
        %6558 = vmatpush1.msra.mxu0 %v6557
        %6559 = vmatprep.subr.mxu0 0.0
        %v6560 = vand.u32 %v596, 4294901760
        %v6561 = vsub.f32 %v596, %v6560
        %6562 = vmatpush1.msra.mxu0 %v6561
        %6563 = vmatprep.subr.mxu0 0.0
        %v6564 = vand.u32 %v597, 4294901760
        %v6565 = vsub.f32 %v597, %v6564
        %6566 = vmatpush1.msra.mxu0 %v6565
        %6567 = vmatprep.subr.mxu0 0.0
        %v6568 = vand.u32 %v598, 4294901760
        %v6569 = vsub.f32 %v598, %v6568
        %6570 = vmatpush1.msra.mxu0 %v6569
        %6571 = vmatprep.subr.mxu0 0.0
        %v6572 = vand.u32 %v599, 4294901760
        %v6573 = vsub.f32 %v599, %v6572
        %6574 = vmatpush1.msra.mxu0 %v6573
        %6575 = vmatprep.subr.mxu0 0.0
        %v6576 = vand.u32 %v600, 4294901760
        %v6577 = vsub.f32 %v600, %v6576
        %6578 = vmatpush1.msra.mxu0 %v6577
        %6579 = vmatprep.subr.mxu0 0.0
        %v6580 = vand.u32 %v601, 4294901760
        %v6581 = vsub.f32 %v601, %v6580
        %6582 = vmatpush1.msra.mxu0 %v6581
        %6583 = vmatprep.subr.mxu0 0.0
        %v6584 = vand.u32 %v602, 4294901760
        %v6585 = vsub.f32 %v602, %v6584
        %6586 = vmatpush1.msra.mxu0 %v6585
        %6587 = vmatprep.subr.mxu0 0.0
        %v6588 = vand.u32 %v603, 4294901760
        %v6589 = vsub.f32 %v603, %v6588
        %6590 = vmatpush1.msra.mxu0 %v6589
        %6591 = vmatprep.subr.mxu0 0.0
        %v6592 = vand.u32 %v604, 4294901760
        %v6593 = vsub.f32 %v604, %v6592
        %6594 = vmatpush1.msra.mxu0 %v6593
        %6595 = vmatprep.subr.mxu0 0.0
        %v6596 = vand.u32 %v605, 4294901760
        %v6597 = vsub.f32 %v605, %v6596
        %6598 = vmatpush1.msra.mxu0 %v6597
        %6599 = vmatprep.subr.mxu0 0.0
        %v6600 = vand.u32 %v606, 4294901760
        %v6601 = vsub.f32 %v606, %v6600
        %6602 = vmatpush1.msra.mxu0 %v6601
        %6603 = vmatprep.subr.mxu0 0.0
        %v6604 = vand.u32 %v607, 4294901760
        %v6605 = vsub.f32 %v607, %v6604
        %6606 = vmatpush1.msra.mxu0 %v6605
        %6607 = vmatprep.subr.mxu0 0.0
        %v6608 = vand.u32 %v608, 4294901760
        %v6609 = vsub.f32 %v608, %v6608
        %6610 = vmatpush1.msra.mxu0 %v6609
        %v6611 = vand.u32 %v383, 4294901760
        %v6612 = vsub.f32 %v383, %v6611
        %6613 = vmatprep.mubr.f32.mxu0 %v6612
        %v6614 = vand.u32 %v381, 4294901760
        %v6615 = vsub.f32 %v381, %v6614
        %6616 = vmatmul.mubr.f32.gmra.mrb[0].mxu0 %v6615
        %v6617 = vpop.f32.mrb[0].mxu0
        %v6618 = vadd.f32 %v6473, %v6617
        %v6619 = vpop.f32.mrb[0].mxu0
        %v6620 = vand.u32 %v384, 4294901760
        %v6621 = vsub.f32 %v384, %v6620
        %6622 = vmatprep.mubr.f32.mxu0 %v6621
        %v6623 = vand.u32 %v382, 4294901760
        %v6624 = vsub.f32 %v382, %v6623
        %6625 = vmatmul.mubr.f32.gmra.mrb[0].mxu0 %v6624
        %v6626 = vpop.f32.mrb[0].mxu0
        %v6627 = vadd.f32 %v6480, %v6626
        %v6628 = vpop.f32.mrb[0].mxu0
        %6629 = vdwg.mxu0
        %6630 = vmatprep.subr.mxu0 0.0
        %v6631 = vand.u32 %v577, 4294901760
        %6632 = vmatpush1.msra.mxu0 %v6631
        %6633 = vmatprep.subr.mxu0 0.0
        %v6634 = vand.u32 %v578, 4294901760
        %6635 = vmatpush1.msra.mxu0 %v6634
        %6636 = vmatprep.subr.mxu0 0.0
        %v6637 = vand.u32 %v579, 4294901760
        %6638 = vmatpush1.msra.mxu0 %v6637
        %6639 = vmatprep.subr.mxu0 0.0
        %v6640 = vand.u32 %v580, 4294901760
        %6641 = vmatpush1.msra.mxu0 %v6640
        %6642 = vmatprep.subr.mxu0 0.0
        %v6643 = vand.u32 %v581, 4294901760
        %6644 = vmatpush1.msra.mxu0 %v6643
        %6645 = vmatprep.subr.mxu0 0.0
        %v6646 = vand.u32 %v582, 4294901760
        %6647 = vmatpush1.msra.mxu0 %v6646
        %6648 = vmatprep.subr.mxu0 0.0
        %v6649 = vand.u32 %v583, 4294901760
        %6650 = vmatpush1.msra.mxu0 %v6649
        %6651 = vmatprep.subr.mxu0 0.0
        %v6652 = vand.u32 %v584, 4294901760
        %6653 = vmatpush1.msra.mxu0 %v6652
        %6654 = vmatprep.subr.mxu0 0.0
        %v6655 = vand.u32 %v585, 4294901760
        %6656 = vmatpush1.msra.mxu0 %v6655
        %6657 = vmatprep.subr.mxu0 0.0
        %v6658 = vand.u32 %v586, 4294901760
        %6659 = vmatpush1.msra.mxu0 %v6658
        %6660 = vmatprep.subr.mxu0 0.0
        %v6661 = vand.u32 %v587, 4294901760
        %6662 = vmatpush1.msra.mxu0 %v6661
        %6663 = vmatprep.subr.mxu0 0.0
        %v6664 = vand.u32 %v588, 4294901760
        %6665 = vmatpush1.msra.mxu0 %v6664
        %6666 = vmatprep.subr.mxu0 0.0
        %v6667 = vand.u32 %v589, 4294901760
        %6668 = vmatpush1.msra.mxu0 %v6667
        %6669 = vmatprep.subr.mxu0 0.0
        %v6670 = vand.u32 %v590, 4294901760
        %6671 = vmatpush1.msra.mxu0 %v6670
        %6672 = vmatprep.subr.mxu0 0.0
        %v6673 = vand.u32 %v591, 4294901760
        %6674 = vmatpush1.msra.mxu0 %v6673
        %6675 = vmatprep.subr.mxu0 0.0
        %v6676 = vand.u32 %v592, 4294901760
        %6677 = vmatpush1.msra.mxu0 %v6676
        %6678 = vmatprep.subr.mxu0 0.0
        %v6679 = vand.u32 %v593, 4294901760
        %6680 = vmatpush1.msra.mxu0 %v6679
        %6681 = vmatprep.subr.mxu0 0.0
        %v6682 = vand.u32 %v594, 4294901760
        %6683 = vmatpush1.msra.mxu0 %v6682
        %6684 = vmatprep.subr.mxu0 0.0
        %v6685 = vand.u32 %v595, 4294901760
        %6686 = vmatpush1.msra.mxu0 %v6685
        %6687 = vmatprep.subr.mxu0 0.0
        %v6688 = vand.u32 %v596, 4294901760
        %6689 = vmatpush1.msra.mxu0 %v6688
        %6690 = vmatprep.subr.mxu0 0.0
        %v6691 = vand.u32 %v597, 4294901760
        %6692 = vmatpush1.msra.mxu0 %v6691
        %6693 = vmatprep.subr.mxu0 0.0
        %v6694 = vand.u32 %v598, 4294901760
        %6695 = vmatpush1.msra.mxu0 %v6694
        %6696 = vmatprep.subr.mxu0 0.0
        %v6697 = vand.u32 %v599, 4294901760
        %6698 = vmatpush1.msra.mxu0 %v6697
        %6699 = vmatprep.subr.mxu0 0.0
        %v6700 = vand.u32 %v600, 4294901760
        %6701 = vmatpush1.msra.mxu0 %v6700
        %6702 = vmatprep.subr.mxu0 0.0
        %v6703 = vand.u32 %v601, 4294901760
        %6704 = vmatpush1.msra.mxu0 %v6703
        %6705 = vmatprep.subr.mxu0 0.0
        %v6706 = vand.u32 %v602, 4294901760
        %6707 = vmatpush1.msra.mxu0 %v6706
        %6708 = vmatprep.subr.mxu0 0.0
        %v6709 = vand.u32 %v603, 4294901760
        %6710 = vmatpush1.msra.mxu0 %v6709
        %6711 = vmatprep.subr.mxu0 0.0
        %v6712 = vand.u32 %v604, 4294901760
        %6713 = vmatpush1.msra.mxu0 %v6712
        %6714 = vmatprep.subr.mxu0 0.0
        %v6715 = vand.u32 %v605, 4294901760
        %6716 = vmatpush1.msra.mxu0 %v6715
        %6717 = vmatprep.subr.mxu0 0.0
        %v6718 = vand.u32 %v606, 4294901760
        %6719 = vmatpush1.msra.mxu0 %v6718
        %6720 = vmatprep.subr.mxu0 0.0
        %v6721 = vand.u32 %v607, 4294901760
        %6722 = vmatpush1.msra.mxu0 %v6721
        %6723 = vmatprep.subr.mxu0 0.0
        %v6724 = vand.u32 %v608, 4294901760
        %6725 = vmatpush1.msra.mxu0 %v6724
        %v6726 = vand.u32 %v383, 4294901760
        %v6727 = vsub.f32 %v383, %v6726
        %v6728 = vand.u32 %v6727, 4294901760
        %6729 = vmatprep.mubr.f32.mxu0 %v6728
        %v6730 = vand.u32 %v381, 4294901760
        %v6731 = vsub.f32 %v381, %v6730
        %v6732 = vand.u32 %v6731, 4294901760
        %6733 = vmatmul.mubr.f32.gmra.mrb[0].mxu0 %v6732
        %v6734 = vpop.f32.mrb[0].mxu0
        %v6735 = vadd.f32 %v6618, %v6734
        %v6736 = vpop.f32.mrb[0].mxu0
        %v6737 = vand.u32 %v384, 4294901760
        %v6738 = vsub.f32 %v384, %v6737
        %v6739 = vand.u32 %v6738, 4294901760
        %6740 = vmatprep.mubr.f32.mxu0 %v6739
        %v6741 = vand.u32 %v382, 4294901760
        %v6742 = vsub.f32 %v382, %v6741
        %v6743 = vand.u32 %v6742, 4294901760
        %6744 = vmatmul.mubr.f32.gmra.mrb[0].mxu0 %v6743
        %v6745 = vpop.f32.mrb[0].mxu0
        %v6746 = vadd.f32 %v6627, %v6745
        %v6747 = vpop.f32.mrb[0].mxu0
        %6748 = vdwg.mxu0
        %6749 = vmatprep.subr.mxu0 0.0
        %v6750 = vand.u32 %v577, 4294901760
        %v6751 = vsub.f32 %v577, %v6750
        %v6752 = vand.u32 %v6751, 4294901760
        %6753 = vmatpush1.msra.mxu0 %v6752
        %6754 = vmatprep.subr.mxu0 0.0
        %v6755 = vand.u32 %v578, 4294901760
        %v6756 = vsub.f32 %v578, %v6755
        %v6757 = vand.u32 %v6756, 4294901760
        %6758 = vmatpush1.msra.mxu0 %v6757
        %6759 = vmatprep.subr.mxu0 0.0
        %v6760 = vand.u32 %v579, 4294901760
        %v6761 = vsub.f32 %v579, %v6760
        %v6762 = vand.u32 %v6761, 4294901760
        %6763 = vmatpush1.msra.mxu0 %v6762
        %6764 = vmatprep.subr.mxu0 0.0
        %v6765 = vand.u32 %v580, 4294901760
        %v6766 = vsub.f32 %v580, %v6765
        %v6767 = vand.u32 %v6766, 4294901760
        %6768 = vmatpush1.msra.mxu0 %v6767
        %6769 = vmatprep.subr.mxu0 0.0
        %v6770 = vand.u32 %v581, 4294901760
        %v6771 = vsub.f32 %v581, %v6770
        %v6772 = vand.u32 %v6771, 4294901760
        %6773 = vmatpush1.msra.mxu0 %v6772
        %6774 = vmatprep.subr.mxu0 0.0
        %v6775 = vand.u32 %v582, 4294901760
        %v6776 = vsub.f32 %v582, %v6775
        %v6777 = vand.u32 %v6776, 4294901760
        %6778 = vmatpush1.msra.mxu0 %v6777
        %6779 = vmatprep.subr.mxu0 0.0
        %v6780 = vand.u32 %v583, 4294901760
        %v6781 = vsub.f32 %v583, %v6780
        %v6782 = vand.u32 %v6781, 4294901760
        %6783 = vmatpush1.msra.mxu0 %v6782
        %6784 = vmatprep.subr.mxu0 0.0
        %v6785 = vand.u32 %v584, 4294901760
        %v6786 = vsub.f32 %v584, %v6785
        %v6787 = vand.u32 %v6786, 4294901760
        %6788 = vmatpush1.msra.mxu0 %v6787
        %6789 = vmatprep.subr.mxu0 0.0
        %v6790 = vand.u32 %v585, 4294901760
        %v6791 = vsub.f32 %v585, %v6790
        %v6792 = vand.u32 %v6791, 4294901760
        %6793 = vmatpush1.msra.mxu0 %v6792
        %6794 = vmatprep.subr.mxu0 0.0
        %v6795 = vand.u32 %v586, 4294901760
        %v6796 = vsub.f32 %v586, %v6795
        %v6797 = vand.u32 %v6796, 4294901760
        %6798 = vmatpush1.msra.mxu0 %v6797
        %6799 = vmatprep.subr.mxu0 0.0
        %v6800 = vand.u32 %v587, 4294901760
        %v6801 = vsub.f32 %v587, %v6800
        %v6802 = vand.u32 %v6801, 4294901760
        %6803 = vmatpush1.msra.mxu0 %v6802
        %6804 = vmatprep.subr.mxu0 0.0
        %v6805 = vand.u32 %v588, 4294901760
        %v6806 = vsub.f32 %v588, %v6805
        %v6807 = vand.u32 %v6806, 4294901760
        %6808 = vmatpush1.msra.mxu0 %v6807
        %6809 = vmatprep.subr.mxu0 0.0
        %v6810 = vand.u32 %v589, 4294901760
        %v6811 = vsub.f32 %v589, %v6810
        %v6812 = vand.u32 %v6811, 4294901760
        %6813 = vmatpush1.msra.mxu0 %v6812
        %6814 = vmatprep.subr.mxu0 0.0
        %v6815 = vand.u32 %v590, 4294901760
        %v6816 = vsub.f32 %v590, %v6815
        %v6817 = vand.u32 %v6816, 4294901760
        %6818 = vmatpush1.msra.mxu0 %v6817
        %6819 = vmatprep.subr.mxu0 0.0
        %v6820 = vand.u32 %v591, 4294901760
        %v6821 = vsub.f32 %v591, %v6820
        %v6822 = vand.u32 %v6821, 4294901760
        %6823 = vmatpush1.msra.mxu0 %v6822
        %6824 = vmatprep.subr.mxu0 0.0
        %v6825 = vand.u32 %v592, 4294901760
        %v6826 = vsub.f32 %v592, %v6825
        %v6827 = vand.u32 %v6826, 4294901760
        %6828 = vmatpush1.msra.mxu0 %v6827
        %6829 = vmatprep.subr.mxu0 0.0
        %v6830 = vand.u32 %v593, 4294901760
        %v6831 = vsub.f32 %v593, %v6830
        %v6832 = vand.u32 %v6831, 4294901760
        %6833 = vmatpush1.msra.mxu0 %v6832
        %6834 = vmatprep.subr.mxu0 0.0
        %v6835 = vand.u32 %v594, 4294901760
        %v6836 = vsub.f32 %v594, %v6835
        %v6837 = vand.u32 %v6836, 4294901760
        %6838 = vmatpush1.msra.mxu0 %v6837
        %6839 = vmatprep.subr.mxu0 0.0
        %v6840 = vand.u32 %v595, 4294901760
        %v6841 = vsub.f32 %v595, %v6840
        %v6842 = vand.u32 %v6841, 4294901760
        %6843 = vmatpush1.msra.mxu0 %v6842
        %6844 = vmatprep.subr.mxu0 0.0
        %v6845 = vand.u32 %v596, 4294901760
        %v6846 = vsub.f32 %v596, %v6845
        %v6847 = vand.u32 %v6846, 4294901760
        %6848 = vmatpush1.msra.mxu0 %v6847
        %6849 = vmatprep.subr.mxu0 0.0
        %v6850 = vand.u32 %v597, 4294901760
        %v6851 = vsub.f32 %v597, %v6850
        %v6852 = vand.u32 %v6851, 4294901760
        %6853 = vmatpush1.msra.mxu0 %v6852
        %6854 = vmatprep.subr.mxu0 0.0
        %v6855 = vand.u32 %v598, 4294901760
        %v6856 = vsub.f32 %v598, %v6855
        %v6857 = vand.u32 %v6856, 4294901760
        %6858 = vmatpush1.msra.mxu0 %v6857
        %6859 = vmatprep.subr.mxu0 0.0
        %v6860 = vand.u32 %v599, 4294901760
        %v6861 = vsub.f32 %v599, %v6860
        %v6862 = vand.u32 %v6861, 4294901760
        %6863 = vmatpush1.msra.mxu0 %v6862
        %6864 = vmatprep.subr.mxu0 0.0
        %v6865 = vand.u32 %v600, 4294901760
        %v6866 = vsub.f32 %v600, %v6865
        %v6867 = vand.u32 %v6866, 4294901760
        %6868 = vmatpush1.msra.mxu0 %v6867
        %6869 = vmatprep.subr.mxu0 0.0
        %v6870 = vand.u32 %v601, 4294901760
        %v6871 = vsub.f32 %v601, %v6870
        %v6872 = vand.u32 %v6871, 4294901760
        %6873 = vmatpush1.msra.mxu0 %v6872
        %6874 = vmatprep.subr.mxu0 0.0
        %v6875 = vand.u32 %v602, 4294901760
        %v6876 = vsub.f32 %v602, %v6875
        %v6877 = vand.u32 %v6876, 4294901760
        %6878 = vmatpush1.msra.mxu0 %v6877
        %6879 = vmatprep.subr.mxu0 0.0
        %v6880 = vand.u32 %v603, 4294901760
        %v6881 = vsub.f32 %v603, %v6880
        %v6882 = vand.u32 %v6881, 4294901760
        %6883 = vmatpush1.msra.mxu0 %v6882
        %6884 = vmatprep.subr.mxu0 0.0
        %v6885 = vand.u32 %v604, 4294901760
        %v6886 = vsub.f32 %v604, %v6885
        %v6887 = vand.u32 %v6886, 4294901760
        %6888 = vmatpush1.msra.mxu0 %v6887
        %6889 = vmatprep.subr.mxu0 0.0
        %v6890 = vand.u32 %v605, 4294901760
        %v6891 = vsub.f32 %v605, %v6890
        %v6892 = vand.u32 %v6891, 4294901760
        %6893 = vmatpush1.msra.mxu0 %v6892
        %6894 = vmatprep.subr.mxu0 0.0
        %v6895 = vand.u32 %v606, 4294901760
        %v6896 = vsub.f32 %v606, %v6895
        %v6897 = vand.u32 %v6896, 4294901760
        %6898 = vmatpush1.msra.mxu0 %v6897
        %6899 = vmatprep.subr.mxu0 0.0
        %v6900 = vand.u32 %v607, 4294901760
        %v6901 = vsub.f32 %v607, %v6900
        %v6902 = vand.u32 %v6901, 4294901760
        %6903 = vmatpush1.msra.mxu0 %v6902
        %6904 = vmatprep.subr.mxu0 0.0
        %v6905 = vand.u32 %v608, 4294901760
        %v6906 = vsub.f32 %v608, %v6905
        %v6907 = vand.u32 %v6906, 4294901760
        %6908 = vmatpush1.msra.mxu0 %v6907
        %v6909 = vand.u32 %v383, 4294901760
        %6910 = vmatprep.mubr.f32.mxu0 %v6909
        %v6911 = vand.u32 %v381, 4294901760
        %6912 = vmatmul.mubr.f32.gmra.mrb[0].mxu0 %v6911
        %v6913 = vpop.f32.mrb[0].mxu0
        %v6914 = vadd.f32 %v6735, %v6913
        %v6915 = vpop.f32.mrb[0].mxu0
        %v6916 = vand.u32 %v384, 4294901760
        %6917 = vmatprep.mubr.f32.mxu0 %v6916
        %v6918 = vand.u32 %v382, 4294901760
        %6919 = vmatmul.mubr.f32.gmra.mrb[0].mxu0 %v6918
        %v6920 = vpop.f32.mrb[0].mxu0
        %v6921 = vadd.f32 %v6746, %v6920
        %v6922 = vpop.f32.mrb[0].mxu0
        %6923 = vdwg.mxu0
        %6924 = vmatprep.subr.mxu0 0.0
        %v6925 = vand.u32 %v577, 4294901760
        %6926 = vmatpush1.msra.mxu0 %v6925
        %6927 = vmatprep.subr.mxu0 0.0
        %v6928 = vand.u32 %v578, 4294901760
        %6929 = vmatpush1.msra.mxu0 %v6928
        %6930 = vmatprep.subr.mxu0 0.0
        %v6931 = vand.u32 %v579, 4294901760
        %6932 = vmatpush1.msra.mxu0 %v6931
        %6933 = vmatprep.subr.mxu0 0.0
        %v6934 = vand.u32 %v580, 4294901760
        %6935 = vmatpush1.msra.mxu0 %v6934
        %6936 = vmatprep.subr.mxu0 0.0
        %v6937 = vand.u32 %v581, 4294901760
        %6938 = vmatpush1.msra.mxu0 %v6937
        %6939 = vmatprep.subr.mxu0 0.0
        %v6940 = vand.u32 %v582, 4294901760
        %6941 = vmatpush1.msra.mxu0 %v6940
        %6942 = vmatprep.subr.mxu0 0.0
        %v6943 = vand.u32 %v583, 4294901760
        %6944 = vmatpush1.msra.mxu0 %v6943
        %6945 = vmatprep.subr.mxu0 0.0
        %v6946 = vand.u32 %v584, 4294901760
        %6947 = vmatpush1.msra.mxu0 %v6946
        %6948 = vmatprep.subr.mxu0 0.0
        %v6949 = vand.u32 %v585, 4294901760
        %6950 = vmatpush1.msra.mxu0 %v6949
        %6951 = vmatprep.subr.mxu0 0.0
        %v6952 = vand.u32 %v586, 4294901760
        %6953 = vmatpush1.msra.mxu0 %v6952
        %6954 = vmatprep.subr.mxu0 0.0
        %v6955 = vand.u32 %v587, 4294901760
        %6956 = vmatpush1.msra.mxu0 %v6955
        %6957 = vmatprep.subr.mxu0 0.0
        %v6958 = vand.u32 %v588, 4294901760
        %6959 = vmatpush1.msra.mxu0 %v6958
        %6960 = vmatprep.subr.mxu0 0.0
        %v6961 = vand.u32 %v589, 4294901760
        %6962 = vmatpush1.msra.mxu0 %v6961
        %6963 = vmatprep.subr.mxu0 0.0
        %v6964 = vand.u32 %v590, 4294901760
        %6965 = vmatpush1.msra.mxu0 %v6964
        %6966 = vmatprep.subr.mxu0 0.0
        %v6967 = vand.u32 %v591, 4294901760
        %6968 = vmatpush1.msra.mxu0 %v6967
        %6969 = vmatprep.subr.mxu0 0.0
        %v6970 = vand.u32 %v592, 4294901760
        %6971 = vmatpush1.msra.mxu0 %v6970
        %6972 = vmatprep.subr.mxu0 0.0
        %v6973 = vand.u32 %v593, 4294901760
        %6974 = vmatpush1.msra.mxu0 %v6973
        %6975 = vmatprep.subr.mxu0 0.0
        %v6976 = vand.u32 %v594, 4294901760
        %6977 = vmatpush1.msra.mxu0 %v6976
        %6978 = vmatprep.subr.mxu0 0.0
        %v6979 = vand.u32 %v595, 4294901760
        %6980 = vmatpush1.msra.mxu0 %v6979
        %6981 = vmatprep.subr.mxu0 0.0
        %v6982 = vand.u32 %v596, 4294901760
        %6983 = vmatpush1.msra.mxu0 %v6982
        %6984 = vmatprep.subr.mxu0 0.0
        %v6985 = vand.u32 %v597, 4294901760
        %6986 = vmatpush1.msra.mxu0 %v6985
        %6987 = vmatprep.subr.mxu0 0.0
        %v6988 = vand.u32 %v598, 4294901760
        %6989 = vmatpush1.msra.mxu0 %v6988
        %6990 = vmatprep.subr.mxu0 0.0
        %v6991 = vand.u32 %v599, 4294901760
        %6992 = vmatpush1.msra.mxu0 %v6991
        %6993 = vmatprep.subr.mxu0 0.0
        %v6994 = vand.u32 %v600, 4294901760
        %6995 = vmatpush1.msra.mxu0 %v6994
        %6996 = vmatprep.subr.mxu0 0.0
        %v6997 = vand.u32 %v601, 4294901760
        %6998 = vmatpush1.msra.mxu0 %v6997
        %6999 = vmatprep.subr.mxu0 0.0
        %v7000 = vand.u32 %v602, 4294901760
        %7001 = vmatpush1.msra.mxu0 %v7000
        %7002 = vmatprep.subr.mxu0 0.0
        %v7003 = vand.u32 %v603, 4294901760
        %7004 = vmatpush1.msra.mxu0 %v7003
        %7005 = vmatprep.subr.mxu0 0.0
        %v7006 = vand.u32 %v604, 4294901760
        %7007 = vmatpush1.msra.mxu0 %v7006
        %7008 = vmatprep.subr.mxu0 0.0
        %v7009 = vand.u32 %v605, 4294901760
        %7010 = vmatpush1.msra.mxu0 %v7009
        %7011 = vmatprep.subr.mxu0 0.0
        %v7012 = vand.u32 %v606, 4294901760
        %7013 = vmatpush1.msra.mxu0 %v7012
        %7014 = vmatprep.subr.mxu0 0.0
        %v7015 = vand.u32 %v607, 4294901760
        %7016 = vmatpush1.msra.mxu0 %v7015
        %7017 = vmatprep.subr.mxu0 0.0
        %v7018 = vand.u32 %v608, 4294901760
        %7019 = vmatpush1.msra.mxu0 %v7018
        %v7020 = vand.u32 %v383, 4294901760
        %7021 = vmatprep.mubr.f32.mxu0 %v7020
        %v7022 = vand.u32 %v381, 4294901760
        %7023 = vmatmul.mubr.f32.gmra.mrb[0].mxu0 %v7022
        %v7024 = vpop.f32.mrb[0].mxu0
        %v7025 = vadd.f32 %v6914, %v7024
        %v7026 = vpop.f32.mrb[0].mxu0
        %v7027 = vand.u32 %v384, 4294901760
        %7028 = vmatprep.mubr.f32.mxu0 %v7027
        %v7029 = vand.u32 %v382, 4294901760
        %7030 = vmatmul.mubr.f32.gmra.mrb[0].mxu0 %v7029
        %v7031 = vpop.f32.mrb[0].mxu0
        %v7032 = vadd.f32 %v6921, %v7031
        %v7033 = vpop.f32.mrb[0].mxu0
        %7034 = vdwg.mxu0
        %s7035 = sld [smem:[#allocation4]]
        %v7036 = vstv %s7035
        %v7037 = vmul.f32 %v7025, %v7036
        %v7038 = vmul.f32 %v7032, %v7036
        %s7039 = sld [smem:[#allocation4 + $0x1]]
        %v7040 = vstv %s7039
        %v7041 = vadd.f32 %v7037, %v7040
        %v7042 = vadd.f32 %v7038, %v7040
        %v7043 = vxor.u32 %v7041, 2147483648
        %v7044 = vxor.u32 %v7042, 2147483648
        %v7045 = vmul.f32 %v7043, 1.442695
        %v7046 = vpow.pop %v7045
        %v7047 = vmul.f32 %v7044, 1.442695
        %v7048 = vpow.pop %v7047
        %v7049 = vadd.f32 %v7046, 1.0
        %v7050 = vadd.f32 %v7048, 1.0
        %v7051 = vrcp.pop %v7049
        %v7052 = vmul.f32 1.0, %v7051
        %v7053 = vrcp.pop %v7050
        %v7054 = vmul.f32 1.0, %v7053
        %v7055 = vlaneseq
        %vm7056 = vcmp.ge.s32.totalorder %v7055, 0
        %vm7057 = vcmp.lt.s32.totalorder %v7055, 16
        %vm7058 = vmand %vm7056, %vm7057
        %7059 = vst.msk [vmem:[#allocation3] sm:$0x1] %vm7058, %v7052
        %v7062 = vunpack.c.l.s4 1966171168
        %v7063 = vunpack.c.0.s8 %v7062
        %v7064 = vlaneseq
        %v7065 = vshrl.u32 %v7064, 7
        %v7066 = vsub.s32 %v7063, %v7065
        %v7067 = vrot.slane %v7052, %v7066
        %v7068 = vcombine.high %v7067, %v7067
        %v7070 = vunpack.c.l.s4 1966171168
        %v7071 = vunpack.c.0.s8 %v7070
        %v7072 = vlaneseq
        %v7073 = vshrl.u32 %v7072, 7
        %v7074 = vsub.s32 %v7071, %v7073
        %v7075 = vrot.slane %v7067, %v7074
        %v7077 = vunpack.c.l.s4 1966171168
        %v7078 = vunpack.c.0.s8 %v7077
        %v7079 = vlaneseq
        %v7080 = vshrl.u32 %v7079, 7
        %v7081 = vsub.s32 %v7078, %v7080
        %v7082 = vrot.slane %v7068, %v7081
        %7083 = vrot.lane.b32.xlu0 %v7082, 16
        %v7084 = vpop.permute.xlu0 %7083
        %vm7086 = vcmp.ge.s32.totalorder %v7055, 16
        %vm7087 = vcmp.lt.s32.totalorder %v7055, 32
        %vm7088 = vmand %vm7086, %vm7087
        %7089 = vst.msk [vmem:[#allocation3] sm:$0x1] %vm7088, %v7084
        %v7090 = vcombine.high %v7075, %v7075
        %7091 = vrot.lane.b32.xlu0 %v7090, 32
        %v7092 = vpop.permute.xlu0 %7091
        %vm7094 = vcmp.ge.s32.totalorder %v7055, 32
        %vm7095 = vcmp.lt.s32.totalorder %v7055, 48
        %vm7096 = vmand %vm7094, %vm7095
        %7097 = vst.msk [vmem:[#allocation3] sm:$0x1] %vm7096, %v7092
        %v7098 = vcombine.high %v7082, %v7082
        %7099 = vrot.lane.b32.xlu0 %v7098, 48
        %v7100 = vpop.permute.xlu0 %7099
        %vm7102 = vcmp.ge.s32.totalorder %v7055, 48
        %vm7103 = vcmp.lt.s32.totalorder %v7055, 64
        %vm7104 = vmand %vm7102, %vm7103
        %7105 = vst.msk [vmem:[#allocation3] sm:$0x1] %vm7104, %v7100
        %v7106 = vcombine.high %v7052, %v7052
        %v7108 = vunpack.c.l.s4 1966171168
        %v7109 = vunpack.c.0.s8 %v7108
        %v7110 = vlaneseq
        %v7111 = vshrl.u32 %v7110, 7
        %v7112 = vsub.s32 %v7109, %v7111
        %v7113 = vrot.slane %v7106, %v7112
        %v7115 = vunpack.c.l.s4 1966171168
        %v7116 = vunpack.c.0.s8 %v7115
        %v7117 = vlaneseq
        %v7118 = vshrl.u32 %v7117, 7
        %v7119 = vsub.s32 %v7116, %v7118
        %v7120 = vrot.slane %v7113, %v7119
        %7121 = vrot.lane.b32.xlu0 %v7120, 64
        %v7122 = vpop.permute.xlu0 %7121
        %vm7124 = vcmp.ge.s32.totalorder %v7055, 64
        %vm7125 = vcmp.lt.s32.totalorder %v7055, 80
        %vm7126 = vmand %vm7124, %vm7125
        %7127 = vst.msk [vmem:[#allocation3] sm:$0x1] %vm7126, %v7122
        %v7128 = vcombine.high %v7113, %v7113
        %v7130 = vunpack.c.l.s4 1966171168
        %v7131 = vunpack.c.0.s8 %v7130
        %v7132 = vlaneseq
        %v7133 = vshrl.u32 %v7132, 7
        %v7134 = vsub.s32 %v7131, %v7133
        %v7135 = vrot.slane %v7128, %v7134
        %7136 = vrot.lane.b32.xlu0 %v7135, 80
        %v7137 = vpop.permute.xlu0 %7136
        %vm7139 = vcmp.ge.s32.totalorder %v7055, 80
        %vm7140 = vcmp.lt.s32.totalorder %v7055, 96
        %vm7141 = vmand %vm7139, %vm7140
        %7142 = vst.msk [vmem:[#allocation3] sm:$0x1] %vm7141, %v7137
        %v7143 = vcombine.high %v7120, %v7120
        %7144 = vrot.lane.b32.xlu0 %v7143, 96
        %v7145 = vpop.permute.xlu0 %7144
        %vm7147 = vcmp.ge.s32.totalorder %v7055, 96
        %vm7148 = vcmp.lt.s32.totalorder %v7055, 112
        %vm7149 = vmand %vm7147, %vm7148
        %7150 = vst.msk [vmem:[#allocation3] sm:$0x1] %vm7149, %v7145
        %v7151 = vcombine.high %v7135, %v7135
        %7152 = vrot.lane.b32.xlu0 %v7151, 112
        %v7153 = vpop.permute.xlu0 %7152
        %vm7155 = vcmp.ge.s32.totalorder %v7055, 112
        %vm7156 = vcmp.lt.s32.totalorder %v7055, 128
        %vm7157 = vmand %vm7155, %vm7156
        %7158 = vst.msk [vmem:[#allocation3] sm:$0x1] %vm7157, %v7153
        %7159 = vst.msk [vmem:[#allocation3 + $0x1] sm:$0x1] %vm7058, %v7054
        %v7162 = vunpack.c.l.s4 1966171168
        %v7163 = vunpack.c.0.s8 %v7162
        %v7164 = vlaneseq
        %v7165 = vshrl.u32 %v7164, 7
        %v7166 = vsub.s32 %v7163, %v7165
        %v7167 = vrot.slane %v7054, %v7166
        %v7168 = vcombine.high %v7167, %v7167
        %v7170 = vunpack.c.l.s4 1966171168
        %v7171 = vunpack.c.0.s8 %v7170
        %v7172 = vlaneseq
        %v7173 = vshrl.u32 %v7172, 7
        %v7174 = vsub.s32 %v7171, %v7173
        %v7175 = vrot.slane %v7167, %v7174
        %v7177 = vunpack.c.l.s4 1966171168
        %v7178 = vunpack.c.0.s8 %v7177
        %v7179 = vlaneseq
        %v7180 = vshrl.u32 %v7179, 7
        %v7181 = vsub.s32 %v7178, %v7180
        %v7182 = vrot.slane %v7168, %v7181
        %7183 = vrot.lane.b32.xlu0 %v7182, 16
        %v7184 = vpop.permute.xlu0 %7183
        %7186 = vst.msk [vmem:[#allocation3 + $0x1] sm:$0x1] %vm7088, %v7184
        %v7187 = vcombine.high %v7175, %v7175
        %7188 = vrot.lane.b32.xlu0 %v7187, 32
        %v7189 = vpop.permute.xlu0 %7188
        %7191 = vst.msk [vmem:[#allocation3 + $0x1] sm:$0x1] %vm7096, %v7189
        %v7192 = vcombine.high %v7182, %v7182
        %7193 = vrot.lane.b32.xlu0 %v7192, 48
        %v7194 = vpop.permute.xlu0 %7193
        %7196 = vst.msk [vmem:[#allocation3 + $0x1] sm:$0x1] %vm7104, %v7194
        %v7197 = vcombine.high %v7054, %v7054
        %v7199 = vunpack.c.l.s4 1966171168
        %v7200 = vunpack.c.0.s8 %v7199
        %v7201 = vlaneseq
        %v7202 = vshrl.u32 %v7201, 7
        %v7203 = vsub.s32 %v7200, %v7202
        %v7204 = vrot.slane %v7197, %v7203
        %v7206 = vunpack.c.l.s4 1966171168
        %v7207 = vunpack.c.0.s8 %v7206
        %v7208 = vlaneseq
        %v7209 = vshrl.u32 %v7208, 7
        %v7210 = vsub.s32 %v7207, %v7209
        %v7211 = vrot.slane %v7204, %v7210
        %7212 = vrot.lane.b32.xlu0 %v7211, 64
        %v7213 = vpop.permute.xlu0 %7212
        %7215 = vst.msk [vmem:[#allocation3 + $0x1] sm:$0x1] %vm7126, %v7213
        %v7216 = vcombine.high %v7204, %v7204
        %v7218 = vunpack.c.l.s4 1966171168
        %v7219 = vunpack.c.0.s8 %v7218
        %v7220 = vlaneseq
        %v7221 = vshrl.u32 %v7220, 7
        %v7222 = vsub.s32 %v7219, %v7221
        %v7223 = vrot.slane %v7216, %v7222
        %7224 = vrot.lane.b32.xlu0 %v7223, 80
        %v7225 = vpop.permute.xlu0 %7224
        %7227 = vst.msk [vmem:[#allocation3 + $0x1] sm:$0x1] %vm7141, %v7225
        %v7228 = vcombine.high %v7211, %v7211
        %7229 = vrot.lane.b32.xlu0 %v7228, 96
        %v7230 = vpop.permute.xlu0 %7229
        %7232 = vst.msk [vmem:[#allocation3 + $0x1] sm:$0x1] %vm7149, %v7230
        %v7233 = vcombine.high %v7223, %v7223
        %7234 = vrot.lane.b32.xlu0 %v7233, 112
        %v7235 = vpop.permute.xlu0 %7234
        %7237 = vst.msk [vmem:[#allocation3 + $0x1] sm:$0x1] %vm7157, %v7235
        %v7238 = vld [vmem:[%s182] sm:$0xff]
        %v7239 = vld [vmem:[#allocation3] sm:$0x3]
        %v7241 = vlaneseq
        %v7242 = vshrl.u32 %v7241, 7
        %v7243 = vsub.s32 0, %v7242
        %v7244 = vrot.slane %v7239, %v7243
        %v7245 = vlaneseq
        %v7246 = vshrl.u32 %v7245, 7
        %v7247 = vsub.s32 1, %v7246
        %v7248 = vrot.slane %v7239, %v7247
        %v7249 = vcombine.low %v7244, %v7248
        %v7251 = vmul.f32 %v7238, %v7249
        %7252 = vst [vmem:[%s177] sm:$0xff] %v7251
        %s7253 = sand.u32 %s94, 1
        %s7254 = scalar_lea.sflag [#allocation5], %s7253
        %s7255 = sand.u32 %s94, 1
        %s7256 = smul.addr %s7255, 8
        %s7257 = scalar_lea.vmem [#allocation7], %s7256
        // Predicated region
        $region37: #{tpu_custom_call.1} parent=31 // pred_check
          %p7258 = pneg %p104
        $region38: #{tpu_custom_call.1} parent=31 // pred_check_branch
          %7260 = sbr.rel (%p7258) target = $region40
        $region39: #{tpu_custom_call.1} parent=31 // pred_region
          %s7262 = ssub.s32 128, 128
          %7263 = vsyncadd %s7254, %s7262
          %s7264 = smul.addr %s18, 2
          %s7265 = smul.addr %s7264, 64
          %s7266 = scalar_lea.hbm %s3, %s7265
          %s7268 = sshll.u32 %s7257, 4
          %s7269 = int_to_ptr.vmem [resolvable:$true] %s7268
          %7271 = dma.vmem_to_hbm [thread:$0]  %s7269, 128, %s7266, %s7254
        $region40: #{tpu_custom_call.1} parent=31 // pred_fallthru
          _
      $region32: #{tpu_custom_call.1} parent=5 // pred_fallthru
        _
      %p7272 = scmp.le.s32.totalorder 2, %s13
      // Predicated region
      $region41: #{tpu_custom_call.1} parent=5 // pred_check
        %p7273 = pneg %p7272
      $region42: #{tpu_custom_call.1} parent=5 // pred_check_branch
        %7275 = sbr.rel (%p7273) target = $region44
      $region43: #{tpu_custom_call.1} parent=5 // pred_region
        %s7276 = ssub.s32 %s13, 2
        // Predicated region
        $region45: #{tpu_custom_call.1} parent=43 // pred_check
          %p7277 = pneg %p110
        $region46: #{tpu_custom_call.1} parent=43 // pred_check_branch
          %7279 = sbr.rel (%p7277) target = $region48
        $region47: #{tpu_custom_call.1} parent=43 // pred_region
          %s7280 = sand.u32 %s95, 1
          %s7281 = scalar_lea.sflag [#allocation5], %s7280
          %s7282 = sand.u32 %s95, 1
          %s7283 = smul.addr %s7282, 8
          %s7284 = scalar_lea.vmem [#allocation7], %s7283
          %7285 = dma.done %s7281, 128
        $region48: #{tpu_custom_call.1} parent=43 // pred_fallthru
          _
      $region44: #{tpu_custom_call.1} parent=5 // pred_fallthru
        _
    $region6: #{tpu_custom_call.1} parent=1 // loop_footer
      %s17 = sadd.s32 1, %s13
    $region7: #{tpu_custom_call.1} parent=1 // loop_footer_branch
      %12 = sbr.rel target = $region3
    $region8: #{tpu_custom_call.1} parent=1 // loop_exit
      _
    %7286 = vsyncpa [#allocation5], 1
    %s7287 = scalar_lea.sflag [#allocation5], 1
    %7288 = vsyncpa %s7287, 1
    %7289 = vsyncpa [#allocation6], 1
    %s7290 = scalar_lea.sflag [#allocation6], 1
    %7291 = vsyncpa %s7290, 1

</llo_original>
